<compile_context>
chip_gen: v7x
topology: tpu7x:2x2x1
jax: 0.10.0
libtpu: 0.0.40
codegen_flags: <defaults>
</compile_context>

<pallas_src>
import math
from functools import partial

import jax
import jax.numpy as jnp
from jax.experimental import pallas as pl
from jax.experimental.pallas import tpu as pltpu


def _vmem_bytes():
    try:
        info = pltpu.get_tpu_info()
        return int(getattr(info, "vmem_capacity_bytes", 128 << 20))
    except Exception:
        return 128 << 20


_VMEM_CAP = _vmem_bytes()
_MAX_TILE = 512 if _VMEM_CAP >= (96 << 20) else 256          # v7x has 64 MiB VMEM

_PAR = pltpu.CompilerParams(dimension_semantics=("parallel",),
                            vmem_limit_bytes=min(_VMEM_CAP // 2, 64 << 20))
_ARB = pltpu.CompilerParams(dimension_semantics=("arbitrary",))


def _const_spec(shape):
    n = len(shape)
    return pl.BlockSpec(shape, lambda i, _n=n: (0,) * _n)


def _row_tile(m, max_tile=None):
    """Row tile that exactly divides m; prefer >=2 tiles so both v7x TCs get work."""
    if max_tile is None:
        max_tile = _MAX_TILE
    cap = min(max_tile, m)
    if m >= 16:
        cap = min(cap, max(8, ((m // 2) // 8) * 8))
    t = (cap // 8) * 8
    if t < 8:
        return m, 1
    while t >= 8:
        if m % t == 0:
            return t, m // t
        t -= 8
    return m, 1


# ----------------------------- Pallas kernels ------------------------------

def _mlp_first_kv_kernel(x_ref, w0_ref, b0_ref, w1_ref, b1_ref,
                         kw_ref, kb_ref, vw_ref, vb_ref,
                         f_ref, k_ref, v_ref):
    # mlp_first (Linear/ReLU/Linear) fused with the first block's K/V projection
    h = jnp.maximum(jnp.dot(x_ref[...], w0_ref[...],
                            preferred_element_type=jnp.float32) + b0_ref[...], 0.0)
    f = jnp.dot(h, w1_ref[...], preferred_element_type=jnp.float32) + b1_ref[...]
    f_ref[...] = f
    k_ref[...] = (jnp.dot(f, kw_ref[...], preferred_element_type=jnp.float32)
                  + kb_ref[...]).astype(k_ref.dtype)
    v_ref[...] = (jnp.dot(f, vw_ref[...], preferred_element_type=jnp.float32)
                  + vb_ref[...]).astype(v_ref.dtype)


def _td_kv_kernel(x_ref, w_ref, b_ref, kw_ref, kb_ref, vw_ref, vb_ref,
                  f_ref, k_ref, v_ref, *, k_nn):
    # shared Linear+ReLU over all (k*t) grouped rows (free leading-dim collapse),
    # local max-pool over the k neighbors, then the NEXT block's K/V projection.
    _, t, c = x_ref.shape
    x = x_ref[...].reshape(k_nn * t, c)
    h = jnp.maximum(jnp.dot(x, w_ref[...], preferred_element_type=jnp.float32)
                    + b_ref[...], 0.0)
    h = h.reshape(k_nn, t, h.shape[-1])
    f = h[0]
    for j in range(1, k_nn):
        f = jnp.maximum(f, h[j])
    f_ref[...] = f
    k_ref[...] = (jnp.dot(f, kw_ref[...], preferred_element_type=jnp.float32)
                  + kb_ref[...]).astype(k_ref.dtype)
    v_ref[...] = (jnp.dot(f, vw_ref[...], preferred_element_type=jnp.float32)
                  + vb_ref[...]).astype(v_ref.dtype)


def _attn_kernel(f_ref, k_ref, v_ref, rel_ref,
                 qw_ref, qb_ref, dw1_ref, db1_ref, dw2_ref, db2_ref,
                 gw1_ref, gb1_ref, gw2_ref, gb2_ref, fc2w_ref, fc2b_ref,
                 o_ref, *, k_nn, d_model):
    d = d_model
    feats = f_ref[...]                                       # (t, d_points), residual + q input

    # q = w_q(fc1(feats)) folded into one matmul (weights pre-folded wrapper-side)
    q = jnp.dot(feats, qw_ref[...], preferred_element_type=jnp.float32) + qb_ref[...]
    q_t = jnp.concatenate([q] * k_nn, axis=-1)               # (t, k*d), neighbors on lanes

    # fc_delta on lane-packed relative positions via block-diagonal weights:
    # one lane-dense matmul per layer instead of k tiny ones.
    rel = rel_ref[...].astype(jnp.float32)                   # (t, k*3)
    h = jnp.maximum(jnp.dot(rel, dw1_ref[...], preferred_element_type=jnp.float32)
                    + db1_ref[...], 0.0)
    pos = jnp.dot(h, dw2_ref[...], preferred_element_type=jnp.float32) + db2_ref[...]

    # fc_gamma(q - k + pos), also lane-packed / block-diagonal
    a = q_t - k_ref[...].astype(jnp.float32) + pos
    g = jnp.maximum(jnp.dot(a, gw1_ref[...], preferred_element_type=jnp.float32)
                    + gb1_ref[...], 0.0)
    g = (jnp.dot(g, gw2_ref[...], preferred_element_type=jnp.float32)
         + gb2_ref[...]) * (1.0 / math.sqrt(d))

    vpos = v_ref[...].astype(jnp.float32) + pos              # (t, k*d)

    # softmax over the neighbor axis (static lane-group slices) + weighted sum
    gs = [g[:, j * d:(j + 1) * d] for j in range(k_nn)]
    vs = [vpos[:, j * d:(j + 1) * d] for j in range(k_nn)]
    mx = gs[0]
    for j in range(1, k_nn):
        mx = jnp.maximum(mx, gs[j])
    e = jnp.exp(gs[0] - mx)
    denom = e
    acc = e * vs[0]
    for j in range(1, k_nn):
        e = jnp.exp(gs[j] - mx)
        denom = denom + e
        acc = acc + e * vs[j]
    res = acc * pl.reciprocal(denom, approx=True)            # EUP slot, VPU stays free

    # fc2 + residual fused into the same kernel
    o_ref[...] = (jnp.dot(res, fc2w_ref[...], preferred_element_type=jnp.float32)
                  + fc2b_ref[...] + feats)


def _head_kernel(x_ref, w1, b1, w2, b2, w3, b3, o_ref):
    m = jnp.mean(x_ref[...], axis=1)                         # global mean over points
    h = jnp.maximum(jnp.dot(m, w1[...], preferred_element_type=jnp.float32) + b1[...], 0.0)
    h = jnp.maximum(jnp.dot(h, w2[...], preferred_element_type=jnp.float32) + b2[...], 0.0)
    o_ref[...] = jnp.dot(h, w3[...], preferred_element_type=jnp.float32) + b3[...]


# ----------------------------- pallas_call wrappers -------------------------

def mlp_first_kv_pallas(x2, w0, b0, w1, b1, kw, kb, vw, vb):
    m, din = x2.shape
    d_mid = w1.shape[1]
    d_model = kw.shape[1]
    tile, grid = _row_tile(m)
    out_shape = (jax.ShapeDtypeStruct((m, d_mid), jnp.float32),
                 jax.ShapeDtypeStruct((m, d_model), jnp.bfloat16),
                 jax.ShapeDtypeStruct((m, d_model), jnp.bfloat16))
    weights = [w0, b0, w1, b1, kw, kb, vw, vb]
    return pl.pallas_call(
        _mlp_first_kv_kernel,
        out_shape=out_shape,
        grid=(grid,),
        in_specs=[pl.BlockSpec((tile, din), lambda i: (i, 0))]
                 + [_const_spec(w.shape) for w in weights],
        out_specs=[pl.BlockSpec((tile, d_mid), lambda i: (i, 0)),
                   pl.BlockSpec((tile, d_model), lambda i: (i, 0)),
                   pl.BlockSpec((tile, d_model), lambda i: (i, 0))],
        compiler_params=_PAR,
    )(x2, *weights)


def td_kv_pallas(xk, w, b, kw, kb, vw, vb, k_nn):
    _, m, c = xk.shape
    d_out = w.shape[1]
    d_model = kw.shape[1]
    tile, grid = _row_tile(m)
    out_shape = (jax.ShapeDtypeStruct((m, d_out), jnp.float32),
                 jax.ShapeDtypeStruct((m, d_model), jnp.bfloat16),
                 jax.ShapeDtypeStruct((m, d_model), jnp.bfloat16))
    weights = [w, b, kw, kb, vw, vb]
    return pl.pallas_call(
        partial(_td_kv_kernel, k_nn=k_nn),
        out_shape=out_shape,
        grid=(grid,),
        in_specs=[pl.BlockSpec((k_nn, tile, c), lambda i: (0, i, 0))]
                 + [_const_spec(wgt.shape) for wgt in weights],
        out_specs=[pl.BlockSpec((tile, d_out), lambda i: (i, 0)),
                   pl.BlockSpec((tile, d_model), lambda i: (i, 0)),
                   pl.BlockSpec((tile, d_model), lambda i: (i, 0))],
        compiler_params=_PAR,
    )(xk, *weights)


def pt_attention_pallas(fold, feats2, kg, vg, rel, k_nn):
    m, d_points = feats2.shape
    d = fold["d"]
    tile, grid = _row_tile(m)
    weights = [fold["qw"], fold["qb"], fold["dw1"], fold["db1"], fold["dw2"], fold["db2"],
               fold["gw1"], fold["gb1"], fold["gw2"], fold["gb2"], fold["fc2w"], fold["fc2b"]]
    in_specs = [pl.BlockSpec((tile, d_points), lambda i: (i, 0)),
                pl.BlockSpec((tile, k_nn * d), lambda i: (i, 0)),
                pl.BlockSpec((tile, k_nn * d), lambda i: (i, 0)),
                pl.BlockSpec((tile, k_nn * 3), lambda i: (i, 0))]
    in_specs += [_const_spec(w.shape) for w in weights]
    return pl.pallas_call(
        partial(_attn_kernel, k_nn=k_nn, d_model=d),
        out_shape=jax.ShapeDtypeStruct((m, d_points), jnp.float32),
        grid=(grid,),
        in_specs=in_specs,
        out_specs=pl.BlockSpec((tile, d_points), lambda i: (i, 0)),
        compiler_params=_PAR,
    )(feats2, kg, vg, rel, *weights)


# ----------------------------- plain-JAX glue -------------------------------

def square_distance(src, dst):
    return (jnp.sum(src ** 2, -1)[:, :, None]
            + jnp.sum(dst ** 2, -1)[:, None, :]
            - 2.0 * jnp.einsum("bnc,bmc->bnm", src, dst))


def index_points(points, idx):
    return jax.vmap(lambda p, i: p[i])(points, idx)


def knn_indices(dists, k):
    # k smallest distances (neighbor permutation is irrelevant downstream)
    _, idx = jax.lax.top_k(-dists, k)
    return idx


def farthest_point_sample(xyz, npoint):
    # TODO(synk): reference torch FPS uses a random start index; start at 0 deterministically.
    B, N, _ = xyz.shape

    def body(i, state):
        centroids, distance, farthest = state
        centroids = centroids.at[:, i].set(farthest)
        centroid = index_points(xyz, farthest[:, None])
        dist = jnp.sum((xyz - centroid) ** 2, -1)
        distance = jnp.minimum(distance, dist)
        farthest = jnp.argmax(distance, -1).astype(jnp.int32)
        return centroids, distance, farthest

    init = (jnp.zeros((B, npoint), jnp.int32),
            jnp.full((B, N), 1e10, jnp.float32),
            jnp.zeros((B,), jnp.int32))
    centroids, _, _ = jax.lax.fori_loop(0, npoint, body, init)
    return centroids


# ----------------------------- model pieces ---------------------------------

def _fold_block_weights(p, k):
    """Fold fc1 into q/k/v, build block-diagonal (lane-packed) delta/gamma weights."""
    d = p["wq"].shape[1]
    eye = jnp.eye(k, dtype=jnp.float32)
    bd = lambda w: jnp.kron(eye, w)          # block-diag: same weights per neighbor group
    tl = lambda b: jnp.tile(b, (1, k))
    return dict(
        d=d,
        qw=p["fc1_w"] @ p["wq"], qb=p["fc1_b"] @ p["wq"],
        kw=p["fc1_w"] @ p["wk"], kb=p["fc1_b"] @ p["wk"],
        vw=p["fc1_w"] @ p["wv"], vb=p["fc1_b"] @ p["wv"],
        dw1=bd(p["delta_w1"]), db1=tl(p["delta_b1"]),
        dw2=bd(p["delta_w2"]), db2=tl(p["delta_b2"]),
        gw1=bd(p["gamma_w1"]), gb1=tl(p["gamma_b1"]),
        gw2=bd(p["gamma_w2"]), gb2=tl(p["gamma_b2"]),
        fc2w=p["fc2_w"], fc2b=p["fc2_b"],
    )


def _pt_block_attention(fold, feats2, kproj, vproj, xyz, k):
    B, N, _ = xyz.shape
    m, _ = feats2.shape
    d = fold["d"]
    knn_idx = knn_indices(square_distance(xyz, xyz), k)            # (B,N,k)
    knn_xyz = index_points(xyz, knn_idx)                           # (B,N,k,3)
    # TODO(synk): the kNN gather stays wrapper-side; an in-kernel DMA gather via
    # scalar-prefetched indices would avoid the k x HBM duplication of K/V.
    rel = (xyz[:, :, None, :] - knn_xyz).reshape(m, k * 3).astype(jnp.bfloat16)
    kg = index_points(kproj.reshape(B, N, d), knn_idx).reshape(m, k * d)
    vg = index_points(vproj.reshape(B, N, d), knn_idx).reshape(m, k * d)
    return pt_attention_pallas(fold, feats2, kg, vg, rel, k)


def transition_down(td_p, fold_next, coords, feats, npoint, k):
    B, N, _ = coords.shape
    fps_idx = farthest_point_sample(coords, npoint)
    new_coords = index_points(coords, fps_idx)                     # (B,np,3)
    knn_idx = knn_indices(square_distance(new_coords, coords), k)  # (B,np,k)
    rel_xyz = index_points(coords, knn_idx) - new_coords[:, :, None, :]
    grouped = index_points(feats, knn_idx)
    x = jnp.concatenate([rel_xyz, grouped], axis=-1)               # (B,np,k,3+d_in)
    m = B * npoint
    c = x.shape[-1]
    xk = jnp.moveaxis(x.reshape(m, k, c), 1, 0).astype(jnp.float32)  # (k,m,c)
    f2, kp, vp = td_kv_pallas(xk, td_p["w"], td_p["b"],
                              fold_next["kw"], fold_next["kb"],
                              fold_next["vw"], fold_next["vb"], k)
    return new_coords, f2, kp, vp


def point_transformer_classif(params, x, cfg):
    coords = x[..., :3]
    B, N, d_feature = x.shape
    k = cfg["k"]

    # transformer1: mlp_first fused with its K/V projection, then attention
    f1 = _fold_block_weights(params["transformer1"], k)
    (w0, b0), (w1, b1) = params["mlp_first"]
    feats2, kp, vp = mlp_first_kv_pallas(
        x.reshape(B * N, d_feature).astype(jnp.float32),
        w0, b0, w1, b1, f1["kw"], f1["kb"], f1["vw"], f1["vb"])
    feats2 = _pt_block_attention(f1, feats2, kp, vp, coords, k)
    feats = feats2.reshape(B, N, -1)

    for i in range(cfg["n_block"]):
        npoint = cfg["n_point"] // 4 ** (i + 1)
        fi = _fold_block_weights(params["pt"][i], k)
        coords, feats2, kp, vp = transition_down(params["td"][i], fi, coords, feats, npoint, k)
        feats2 = _pt_block_attention(fi, feats2, kp, vp, coords, k)
        feats = feats2.reshape(B, npoint, -1)

    (hw1, hb1), (hw2, hb2), (hw3, hb3) = params["mlp_last"]
    n_class = hw3.shape[1]
    args = [feats, hw1, hb1, hw2, hb2, hw3, hb3]
    out = pl.pallas_call(
        _head_kernel,
        out_shape=jax.ShapeDtypeStruct((feats.shape[0], n_class), jnp.float32),
        grid=(1,),
        in_specs=[_const_spec(a.shape) for a in args],
        out_specs=pl.BlockSpec((feats.shape[0], n_class), lambda i: (0, 0)),
        compiler_params=_ARB,
    )(*args)
    return out


# ----------------------------- parameter init -------------------------------

class KeyGen:
    def __init__(self, key):
        self.key = key

    def __call__(self):
        self.key, sub = jax.random.split(self.key)
        return sub


def init_params(key, cfg):
    kg = KeyGen(key)

    def lin(din, dout):
        w = jax.random.normal(kg(), (din, dout), jnp.float32) / math.sqrt(din)
        b = jax.random.normal(kg(), (1, dout), jnp.float32) * 0.02
        return w, b

    def trans_block(d_points, d_model):
        fc1_w, fc1_b = lin(d_points, d_model)
        fc2_w, fc2_b = lin(d_model, d_points)
        wq, _ = lin(d_model, d_model)
        wk, _ = lin(d_model, d_model)
        wv, _ = lin(d_model, d_model)
        dw1, db1 = lin(3, d_model)
        dw2, db2 = lin(d_model, d_model)
        gw1, gb1 = lin(d_model, d_model)
        gw2, gb2 = lin(d_model, d_model)
        return dict(fc1_w=fc1_w, fc1_b=fc1_b, fc2_w=fc2_w, fc2_b=fc2_b,
                    wq=wq, wk=wk, wv=wv,
                    delta_w1=dw1, delta_b1=db1, delta_w2=dw2, delta_b2=db2,
                    gamma_w1=gw1, gamma_b1=gb1, gamma_w2=gw2, gamma_b2=gb2)

    params = {
        "mlp_first": [lin(cfg["d_feature"], 32), lin(32, 32)],
        "transformer1": trans_block(32, cfg["d_trans"]),
        "td": [],
        "pt": [],
    }
    for i in range(cfg["n_block"]):
        d_in = 32 * 2 ** (i + 1) // 2
        d_out = 32 * 2 ** (i + 1)
        w, b = lin(d_in + 3, d_out)
        params["td"].append(dict(w=w, b=b))
        params["pt"].append(trans_block(d_out, cfg["d_trans"]))
    d_last = 32 * 2 ** cfg["n_block"]
    params["mlp_last"] = [lin(d_last, 256), lin(256, 64), lin(64, cfg["n_class"])]
    return params


# --------------------------------- main --------------------------------------

if __name__ == "__main__":
    cfg = dict(n_point=64, k=4, n_class=10, d_feature=6, n_block=2, d_trans=8)
    key = jax.random.PRNGKey(0)
    pkey, xkey = jax.random.split(key)
    params = init_params(pkey, cfg)
    x = jax.random.normal(xkey, (2, cfg["n_point"], cfg["d_feature"]), jnp.float32)

    fwd = jax.jit(partial(point_transformer_classif, cfg=cfg))
    out = jax.block_until_ready(fwd(params, x))
    assert out.shape == (2, cfg["n_class"]), out.shape
    assert bool(jnp.all(jnp.isfinite(out)))
    print("KERNEL_OK")
</pallas_src>

<mosaic_0001>
module attributes {stable_mosaic.version = 11 : i64} {
  func.func @_mlp_first_kv_kernel(%arg0: i32, %arg1: memref<64x6xf32, #tpu.memory_space<vmem>>, %arg2: memref<6x32xf32, #tpu.memory_space<vmem>>, %arg3: memref<1x32xf32, #tpu.memory_space<vmem>>, %arg4: memref<32x32xf32, #tpu.memory_space<vmem>>, %arg5: memref<1x32xf32, #tpu.memory_space<vmem>>, %arg6: memref<32x8xf32, #tpu.memory_space<vmem>>, %arg7: memref<1x8xf32, #tpu.memory_space<vmem>>, %arg8: memref<32x8xf32, #tpu.memory_space<vmem>>, %arg9: memref<1x8xf32, #tpu.memory_space<vmem>>, %arg10: memref<64x32xf32, #tpu.memory_space<vmem>>, %arg11: memref<64x8xbf16, #tpu.memory_space<vmem>>, %arg12: memref<64x8xbf16, #tpu.memory_space<vmem>>) attributes {dimension_semantics = [#tpu.dimension_semantics<parallel>], iteration_bounds = array<i64: 2>, scalar_prefetch = 0 : i64, scratch_operands = 0 : i64, tpu.core_type = #tpu.core_type<tc>, window_params = [{transform_indices = @transform_0, window_bounds = array<i64: 64, 6>}, {pipeline_mode = #tpu.pipeline_mode<synchronous>, transform_indices = @transform_1, window_bounds = array<i64: 6, 32>}, {pipeline_mode = #tpu.pipeline_mode<synchronous>, transform_indices = @transform_2, window_bounds = array<i64: 1, 32>}, {pipeline_mode = #tpu.pipeline_mode<synchronous>, transform_indices = @transform_3, window_bounds = array<i64: 32, 32>}, {pipeline_mode = #tpu.pipeline_mode<synchronous>, transform_indices = @transform_4, window_bounds = array<i64: 1, 32>}, {pipeline_mode = #tpu.pipeline_mode<synchronous>, transform_indices = @transform_5, window_bounds = array<i64: 32, 8>}, {pipeline_mode = #tpu.pipeline_mode<synchronous>, transform_indices = @transform_6, window_bounds = array<i64: 1, 8>}, {pipeline_mode = #tpu.pipeline_mode<synchronous>, transform_indices = @transform_7, window_bounds = array<i64: 32, 8>}, {pipeline_mode = #tpu.pipeline_mode<synchronous>, transform_indices = @transform_8, window_bounds = array<i64: 1, 8>}, {transform_indices = @transform_9, window_bounds = array<i64: 64, 32>}, {transform_indices = @transform_10, window_bounds = array<i64: 64, 8>}, {transform_indices = @transform_11, window_bounds = array<i64: 64, 8>}]} {
    %c0 = arith.constant 0 : index
    %c0_0 = arith.constant 0 : index
    %0 = vector.load %arg1[%c0, %c0_0] : memref<64x6xf32, #tpu.memory_space<vmem>>, vector<64x6xf32>
    %c0_1 = arith.constant 0 : index
    %c0_2 = arith.constant 0 : index
    %1 = vector.load %arg2[%c0_1, %c0_2] : memref<6x32xf32, #tpu.memory_space<vmem>>, vector<6x32xf32>
    %cst = arith.constant dense<0.000000e+00> : vector<64x32xf32>
    %2 = tpu.matmul %0, %1, %cst {dimension_numbers = #tpu.dot_dimension_numbers<[1], [0], [0], [1], [0, 0, 1, 1], [], []>} : vector<64x6xf32>, vector<6x32xf32>, vector<64x32xf32> -> vector<64x32xf32>
    %c0_3 = arith.constant 0 : index
    %c0_4 = arith.constant 0 : index
    %3 = vector.load %arg3[%c0_3, %c0_4] : memref<1x32xf32, #tpu.memory_space<vmem>>, vector<1x32xf32>
    %4 = vector.broadcast %3 : vector<1x32xf32> to vector<64x32xf32>
    %5 = arith.addf %2, %4 : vector<64x32xf32>
    %cst_5 = arith.constant 0.000000e+00 : f32
    %6 = vector.broadcast %cst_5 : f32 to vector<64x32xf32>
    %7 = arith.maximumf %5, %6 : vector<64x32xf32>
    %c0_6 = arith.constant 0 : index
    %c0_7 = arith.constant 0 : index
    %8 = vector.load %arg4[%c0_6, %c0_7] : memref<32x32xf32, #tpu.memory_space<vmem>>, vector<32x32xf32>
    %cst_8 = arith.constant dense<0.000000e+00> : vector<64x32xf32>
    %9 = tpu.matmul %7, %8, %cst_8 {dimension_numbers = #tpu.dot_dimension_numbers<[1], [0], [0], [1], [0, 0, 1, 1], [], []>} : vector<64x32xf32>, vector<32x32xf32>, vector<64x32xf32> -> vector<64x32xf32>
    %c0_9 = arith.constant 0 : index
    %c0_10 = arith.constant 0 : index
    %10 = vector.load %arg5[%c0_9, %c0_10] : memref<1x32xf32, #tpu.memory_space<vmem>>, vector<1x32xf32>
    %11 = vector.broadcast %10 : vector<1x32xf32> to vector<64x32xf32>
    %12 = arith.addf %9, %11 : vector<64x32xf32>
    %c0_11 = arith.constant 0 : index
    %c0_12 = arith.constant 0 : index
    %13 = vector.load %arg10[%c0_11, %c0_12] : memref<64x32xf32, #tpu.memory_space<vmem>>, vector<64x32xf32>
    tpu.vector_store %arg10[%c0_11, %c0_12], %12 {strides = array<i32>} : memref<64x32xf32, #tpu.memory_space<vmem>>, vector<64x32xf32>,
    %c0_13 = arith.constant 0 : index
    %c0_14 = arith.constant 0 : index
    %14 = vector.load %arg6[%c0_13, %c0_14] : memref<32x8xf32, #tpu.memory_space<vmem>>, vector<32x8xf32>
    %cst_15 = arith.constant dense<0.000000e+00> : vector<64x8xf32>
    %15 = tpu.matmul %12, %14, %cst_15 {dimension_numbers = #tpu.dot_dimension_numbers<[1], [0], [0], [1], [0, 0, 1, 1], [], []>} : vector<64x32xf32>, vector<32x8xf32>, vector<64x8xf32> -> vector<64x8xf32>
    %c0_16 = arith.constant 0 : index
    %c0_17 = arith.constant 0 : index
    %16 = vector.load %arg7[%c0_16, %c0_17] : memref<1x8xf32, #tpu.memory_space<vmem>>, vector<1x8xf32>
    %17 = vector.broadcast %16 : vector<1x8xf32> to vector<64x8xf32>
    %18 = arith.addf %15, %17 : vector<64x8xf32>
    %19 = arith.truncf %18 : vector<64x8xf32> to vector<64x8xbf16>
    %c0_18 = arith.constant 0 : index
    %c0_19 = arith.constant 0 : index
    %20 = vector.load %arg11[%c0_18, %c0_19] : memref<64x8xbf16, #tpu.memory_space<vmem>>, vector<64x8xbf16>
    tpu.vector_store %arg11[%c0_18, %c0_19], %19 {strides = array<i32>} : memref<64x8xbf16, #tpu.memory_space<vmem>>, vector<64x8xbf16>,
    %c0_20 = arith.constant 0 : index
    %c0_21 = arith.constant 0 : index
    %21 = vector.load %arg8[%c0_20, %c0_21] : memref<32x8xf32, #tpu.memory_space<vmem>>, vector<32x8xf32>
    %cst_22 = arith.constant dense<0.000000e+00> : vector<64x8xf32>
    %22 = tpu.matmul %12, %21, %cst_22 {dimension_numbers = #tpu.dot_dimension_numbers<[1], [0], [0], [1], [0, 0, 1, 1], [], []>} : vector<64x32xf32>, vector<32x8xf32>, vector<64x8xf32> -> vector<64x8xf32>
    %c0_23 = arith.constant 0 : index
    %c0_24 = arith.constant 0 : index
    %23 = vector.load %arg9[%c0_23, %c0_24] : memref<1x8xf32, #tpu.memory_space<vmem>>, vector<1x8xf32>
    %24 = vector.broadcast %23 : vector<1x8xf32> to vector<64x8xf32>
    %25 = arith.addf %22, %24 : vector<64x8xf32>
    %26 = arith.truncf %25 : vector<64x8xf32> to vector<64x8xbf16>
    %c0_25 = arith.constant 0 : index
    %c0_26 = arith.constant 0 : index
    %27 = vector.load %arg12[%c0_25, %c0_26] : memref<64x8xbf16, #tpu.memory_space<vmem>>, vector<64x8xbf16>
    tpu.vector_store %arg12[%c0_25, %c0_26], %26 {strides = array<i32>} : memref<64x8xbf16, #tpu.memory_space<vmem>>, vector<64x8xbf16>,
    return
  }
  func.func @transform_0(%arg0: i32) -> (i32, i32) {
    %c0_i32 = arith.constant 0 : i32
    %c0_i32_0 = arith.constant 0 : i32
    return %arg0, %c0_i32 : i32, i32
  }
  func.func @transform_1(%arg0: i32) -> (i32, i32) {
    %c0_i32 = arith.constant 0 : i32
    %c0_i32_0 = arith.constant 0 : i32
    %c0_i32_1 = arith.constant 0 : i32
    return %c0_i32, %c0_i32_0 : i32, i32
  }
  func.func @transform_2(%arg0: i32) -> (i32, i32) {
    %c0_i32 = arith.constant 0 : i32
    %c0_i32_0 = arith.constant 0 : i32
    %c0_i32_1 = arith.constant 0 : i32
    return %c0_i32, %c0_i32_0 : i32, i32
  }
  func.func @transform_3(%arg0: i32) -> (i32, i32) {
    %c0_i32 = arith.constant 0 : i32
    %c0_i32_0 = arith.constant 0 : i32
    %c0_i32_1 = arith.constant 0 : i32
    return %c0_i32, %c0_i32_0 : i32, i32
  }
  func.func @transform_4(%arg0: i32) -> (i32, i32) {
    %c0_i32 = arith.constant 0 : i32
    %c0_i32_0 = arith.constant 0 : i32
    %c0_i32_1 = arith.constant 0 : i32
    return %c0_i32, %c0_i32_0 : i32, i32
  }
  func.func @transform_5(%arg0: i32) -> (i32, i32) {
    %c0_i32 = arith.constant 0 : i32
    %c0_i32_0 = arith.constant 0 : i32
    %c0_i32_1 = arith.constant 0 : i32
    return %c0_i32, %c0_i32_0 : i32, i32
  }
  func.func @transform_6(%arg0: i32) -> (i32, i32) {
    %c0_i32 = arith.constant 0 : i32
    %c0_i32_0 = arith.constant 0 : i32
    %c0_i32_1 = arith.constant 0 : i32
    return %c0_i32, %c0_i32_0 : i32, i32
  }
  func.func @transform_7(%arg0: i32) -> (i32, i32) {
    %c0_i32 = arith.constant 0 : i32
    %c0_i32_0 = arith.constant 0 : i32
    %c0_i32_1 = arith.constant 0 : i32
    return %c0_i32, %c0_i32_0 : i32, i32
  }
  func.func @transform_8(%arg0: i32) -> (i32, i32) {
    %c0_i32 = arith.constant 0 : i32
    %c0_i32_0 = arith.constant 0 : i32
    %c0_i32_1 = arith.constant 0 : i32
    return %c0_i32, %c0_i32_0 : i32, i32
  }
  func.func @transform_9(%arg0: i32) -> (i32, i32) {
    %c0_i32 = arith.constant 0 : i32
    %c0_i32_0 = arith.constant 0 : i32
    return %arg0, %c0_i32 : i32, i32
  }
  func.func @transform_10(%arg0: i32) -> (i32, i32) {
    %c0_i32 = arith.constant 0 : i32
    %c0_i32_0 = arith.constant 0 : i32
    return %arg0, %c0_i32 : i32, i32
  }
  func.func @transform_11(%arg0: i32) -> (i32, i32) {
    %c0_i32 = arith.constant 0 : i32
    %c0_i32_0 = arith.constant 0 : i32
    return %arg0, %c0_i32 : i32, i32
  }
}

module attributes {stable_mosaic.version = 11 : i64} {
  func.func @_attn_kernel(%arg0: i32, %arg1: memref<64x32xf32, #tpu.memory_space<vmem>>, %arg2: memref<64x32xbf16, #tpu.memory_space<vmem>>, %arg3: memref<64x32xbf16, #tpu.memory_space<vmem>>, %arg4: memref<64x12xbf16, #tpu.memory_space<vmem>>, %arg5: memref<32x8xf32, #tpu.memory_space<vmem>>, %arg6: memref<1x8xf32, #tpu.memory_space<vmem>>, %arg7: memref<12x32xf32, #tpu.memory_space<vmem>>, %arg8: memref<1x32xf32, #tpu.memory_space<vmem>>, %arg9: memref<32x32xf32, #tpu.memory_space<vmem>>, %arg10: memref<1x32xf32, #tpu.memory_space<vmem>>, %arg11: memref<32x32xf32, #tpu.memory_space<vmem>>, %arg12: memref<1x32xf32, #tpu.memory_space<vmem>>, %arg13: memref<32x32xf32, #tpu.memory_space<vmem>>, %arg14: memref<1x32xf32, #tpu.memory_space<vmem>>, %arg15: memref<8x32xf32, #tpu.memory_space<vmem>>, %arg16: memref<1x32xf32, #tpu.memory_space<vmem>>, %arg17: memref<64x32xf32, #tpu.memory_space<vmem>>) attributes {dimension_semantics = [#tpu.dimension_semantics<parallel>], iteration_bounds = array<i64: 2>, scalar_prefetch = 0 : i64, scratch_operands = 0 : i64, tpu.core_type = #tpu.core_type<tc>, window_params = [{transform_indices = @transform_0, window_bounds = array<i64: 64, 32>}, {transform_indices = @transform_1, window_bounds = array<i64: 64, 32>}, {transform_indices = @transform_2, window_bounds = array<i64: 64, 32>}, {transform_indices = @transform_3, window_bounds = array<i64: 64, 12>}, {pipeline_mode = #tpu.pipeline_mode<synchronous>, transform_indices = @transform_4, window_bounds = array<i64: 32, 8>}, {pipeline_mode = #tpu.pipeline_mode<synchronous>, transform_indices = @transform_5, window_bounds = array<i64: 1, 8>}, {pipeline_mode = #tpu.pipeline_mode<synchronous>, transform_indices = @transform_6, window_bounds = array<i64: 12, 32>}, {pipeline_mode = #tpu.pipeline_mode<synchronous>, transform_indices = @transform_7, window_bounds = array<i64: 1, 32>}, {pipeline_mode = #tpu.pipeline_mode<synchronous>, transform_indices = @transform_8, window_bounds = array<i64: 32, 32>}, {pipeline_mode = #tpu.pipeline_mode<synchronous>, transform_indices = @transform_9, window_bounds = array<i64: 1, 32>}, {pipeline_mode = #tpu.pipeline_mode<synchronous>, transform_indices = @transform_10, window_bounds = array<i64: 32, 32>}, {pipeline_mode = #tpu.pipeline_mode<synchronous>, transform_indices = @transform_11, window_bounds = array<i64: 1, 32>}, {pipeline_mode = #tpu.pipeline_mode<synchronous>, transform_indices = @transform_12, window_bounds = array<i64: 32, 32>}, {pipeline_mode = #tpu.pipeline_mode<synchronous>, transform_indices = @transform_13, window_bounds = array<i64: 1, 32>}, {pipeline_mode = #tpu.pipeline_mode<synchronous>, transform_indices = @transform_14, window_bounds = array<i64: 8, 32>}, {pipeline_mode = #tpu.pipeline_mode<synchronous>, transform_indices = @transform_15, window_bounds = array<i64: 1, 32>}, {transform_indices = @transform_16, window_bounds = array<i64: 64, 32>}]} {
    %c0 = arith.constant 0 : index
    %c0_0 = arith.constant 0 : index
    %0 = vector.load %arg1[%c0, %c0_0] : memref<64x32xf32, #tpu.memory_space<vmem>>, vector<64x32xf32>
    %c0_1 = arith.constant 0 : index
    %c0_2 = arith.constant 0 : index
    %1 = vector.load %arg5[%c0_1, %c0_2] : memref<32x8xf32, #tpu.memory_space<vmem>>, vector<32x8xf32>
    %cst = arith.constant dense<0.000000e+00> : vector<64x8xf32>
    %2 = tpu.matmul %0, %1, %cst {dimension_numbers = #tpu.dot_dimension_numbers<[1], [0], [0], [1], [0, 0, 1, 1], [], []>} : vector<64x32xf32>, vector<32x8xf32>, vector<64x8xf32> -> vector<64x8xf32>
    %c0_3 = arith.constant 0 : index
    %c0_4 = arith.constant 0 : index
    %3 = vector.load %arg6[%c0_3, %c0_4] : memref<1x8xf32, #tpu.memory_space<vmem>>, vector<1x8xf32>
    %4 = vector.broadcast %3 : vector<1x8xf32> to vector<64x8xf32>
    %5 = arith.addf %2, %4 : vector<64x8xf32>
    %6 = tpu.concatenate %5, %5, %5, %5 in 1 : vector<64x8xf32>, vector<64x8xf32>, vector<64x8xf32>, vector<64x8xf32> -> vector<64x32xf32>
    %c0_5 = arith.constant 0 : index
    %c0_6 = arith.constant 0 : index
    %7 = vector.load %arg4[%c0_5, %c0_6] : memref<64x12xbf16, #tpu.memory_space<vmem>>, vector<64x12xbf16>
    %8 = arith.extf %7 : vector<64x12xbf16> to vector<64x12xf32>
    %c0_7 = arith.constant 0 : index
    %c0_8 = arith.constant 0 : index
    %9 = vector.load %arg7[%c0_7, %c0_8] : memref<12x32xf32, #tpu.memory_space<vmem>>, vector<12x32xf32>
    %cst_9 = arith.constant dense<0.000000e+00> : vector<64x32xf32>
    %10 = tpu.matmul %8, %9, %cst_9 {dimension_numbers = #tpu.dot_dimension_numbers<[1], [0], [0], [1], [0, 0, 1, 1], [], []>} : vector<64x12xf32>, vector<12x32xf32>, vector<64x32xf32> -> vector<64x32xf32>
    %c0_10 = arith.constant 0 : index
    %c0_11 = arith.constant 0 : index
    %11 = vector.load %arg8[%c0_10, %c0_11] : memref<1x32xf32, #tpu.memory_space<vmem>>, vector<1x32xf32>
    %12 = vector.broadcast %11 : vector<1x32xf32> to vector<64x32xf32>
    %13 = arith.addf %10, %12 : vector<64x32xf32>
    %cst_12 = arith.constant 0.000000e+00 : f32
    %14 = vector.broadcast %cst_12 : f32 to vector<64x32xf32>
    %15 = arith.maximumf %13, %14 : vector<64x32xf32>
    %c0_13 = arith.constant 0 : index
    %c0_14 = arith.constant 0 : index
    %16 = vector.load %arg9[%c0_13, %c0_14] : memref<32x32xf32, #tpu.memory_space<vmem>>, vector<32x32xf32>
    %cst_15 = arith.constant dense<0.000000e+00> : vector<64x32xf32>
    %17 = tpu.matmul %15, %16, %cst_15 {dimension_numbers = #tpu.dot_dimension_numbers<[1], [0], [0], [1], [0, 0, 1, 1], [], []>} : vector<64x32xf32>, vector<32x32xf32>, vector<64x32xf32> -> vector<64x32xf32>
    %c0_16 = arith.constant 0 : index
    %c0_17 = arith.constant 0 : index
    %18 = vector.load %arg10[%c0_16, %c0_17] : memref<1x32xf32, #tpu.memory_space<vmem>>, vector<1x32xf32>
    %19 = vector.broadcast %18 : vector<1x32xf32> to vector<64x32xf32>
    %20 = arith.addf %17, %19 : vector<64x32xf32>
    %c0_18 = arith.constant 0 : index
    %c0_19 = arith.constant 0 : index
    %21 = vector.load %arg2[%c0_18, %c0_19] : memref<64x32xbf16, #tpu.memory_space<vmem>>, vector<64x32xbf16>
    %22 = arith.extf %21 : vector<64x32xbf16> to vector<64x32xf32>
    %23 = arith.subf %6, %22 : vector<64x32xf32>
    %24 = arith.addf %23, %20 : vector<64x32xf32>
    %c0_20 = arith.constant 0 : index
    %c0_21 = arith.constant 0 : index
    %25 = vector.load %arg11[%c0_20, %c0_21] : memref<32x32xf32, #tpu.memory_space<vmem>>, vector<32x32xf32>
    %cst_22 = arith.constant dense<0.000000e+00> : vector<64x32xf32>
    %26 = tpu.matmul %24, %25, %cst_22 {dimension_numbers = #tpu.dot_dimension_numbers<[1], [0], [0], [1], [0, 0, 1, 1], [], []>} : vector<64x32xf32>, vector<32x32xf32>, vector<64x32xf32> -> vector<64x32xf32>
    %c0_23 = arith.constant 0 : index
    %c0_24 = arith.constant 0 : index
    %27 = vector.load %arg12[%c0_23, %c0_24] : memref<1x32xf32, #tpu.memory_space<vmem>>, vector<1x32xf32>
    %28 = vector.broadcast %27 : vector<1x32xf32> to vector<64x32xf32>
    %29 = arith.addf %26, %28 : vector<64x32xf32>
    %cst_25 = arith.constant 0.000000e+00 : f32
    %30 = vector.broadcast %cst_25 : f32 to vector<64x32xf32>
    %31 = arith.maximumf %29, %30 : vector<64x32xf32>
    %c0_26 = arith.constant 0 : index
    %c0_27 = arith.constant 0 : index
    %32 = vector.load %arg13[%c0_26, %c0_27] : memref<32x32xf32, #tpu.memory_space<vmem>>, vector<32x32xf32>
    %cst_28 = arith.constant dense<0.000000e+00> : vector<64x32xf32>
    %33 = tpu.matmul %31, %32, %cst_28 {dimension_numbers = #tpu.dot_dimension_numbers<[1], [0], [0], [1], [0, 0, 1, 1], [], []>} : vector<64x32xf32>, vector<32x32xf32>, vector<64x32xf32> -> vector<64x32xf32>
    %c0_29 = arith.constant 0 : index
    %c0_30 = arith.constant 0 : index
    %34 = vector.load %arg14[%c0_29, %c0_30] : memref<1x32xf32, #tpu.memory_space<vmem>>, vector<1x32xf32>
    %35 = vector.broadcast %34 : vector<1x32xf32> to vector<64x32xf32>
    %36 = arith.addf %33, %35 : vector<64x32xf32>
    %cst_31 = arith.constant 0.353553385 : f32
    %37 = vector.broadcast %cst_31 : f32 to vector<64x32xf32>
    %38 = arith.mulf %36, %37 : vector<64x32xf32>
    %c0_32 = arith.constant 0 : index
    %c0_33 = arith.constant 0 : index
    %39 = vector.load %arg3[%c0_32, %c0_33] : memref<64x32xbf16, #tpu.memory_space<vmem>>, vector<64x32xbf16>
    %40 = arith.extf %39 : vector<64x32xbf16> to vector<64x32xf32>
    %41 = arith.addf %40, %20 : vector<64x32xf32>
    %42 = vector.extract_strided_slice %38 {offsets = [0, 0], sizes = [64, 8], strides = [1, 1]} : vector<64x32xf32> to vector<64x8xf32>
    %43 = vector.extract_strided_slice %38 {offsets = [0, 8], sizes = [64, 8], strides = [1, 1]} : vector<64x32xf32> to vector<64x8xf32>
    %44 = vector.extract_strided_slice %38 {offsets = [0, 16], sizes = [64, 8], strides = [1, 1]} : vector<64x32xf32> to vector<64x8xf32>
    %45 = vector.extract_strided_slice %38 {offsets = [0, 24], sizes = [64, 8], strides = [1, 1]} : vector<64x32xf32> to vector<64x8xf32>
    %46 = vector.extract_strided_slice %41 {offsets = [0, 0], sizes = [64, 8], strides = [1, 1]} : vector<64x32xf32> to vector<64x8xf32>
    %47 = vector.extract_strided_slice %41 {offsets = [0, 8], sizes = [64, 8], strides = [1, 1]} : vector<64x32xf32> to vector<64x8xf32>
    %48 = vector.extract_strided_slice %41 {offsets = [0, 16], sizes = [64, 8], strides = [1, 1]} : vector<64x32xf32> to vector<64x8xf32>
    %49 = vector.extract_strided_slice %41 {offsets = [0, 24], sizes = [64, 8], strides = [1, 1]} : vector<64x32xf32> to vector<64x8xf32>
    %50 = arith.maximumf %42, %43 : vector<64x8xf32>
    %51 = arith.maximumf %50, %44 : vector<64x8xf32>
    %52 = arith.maximumf %51, %45 : vector<64x8xf32>
    %53 = arith.subf %42, %52 : vector<64x8xf32>
    %54 = math.exp %53 : vector<64x8xf32>
    %55 = arith.mulf %54, %46 : vector<64x8xf32>
    %56 = arith.subf %43, %52 : vector<64x8xf32>
    %57 = math.exp %56 : vector<64x8xf32>
    %58 = arith.addf %54, %57 : vector<64x8xf32>
    %59 = arith.mulf %57, %47 : vector<64x8xf32>
    %60 = arith.addf %55, %59 : vector<64x8xf32>
    %61 = arith.subf %44, %52 : vector<64x8xf32>
    %62 = math.exp %61 : vector<64x8xf32>
    %63 = arith.addf %58, %62 : vector<64x8xf32>
    %64 = arith.mulf %62, %48 : vector<64x8xf32>
    %65 = arith.addf %60, %64 : vector<64x8xf32>
    %66 = arith.subf %45, %52 : vector<64x8xf32>
    %67 = math.exp %66 : vector<64x8xf32>
    %68 = arith.addf %63, %67 : vector<64x8xf32>
    %69 = arith.mulf %67, %49 : vector<64x8xf32>
    %70 = arith.addf %65, %69 : vector<64x8xf32>
    %71 = tpu.reciprocal %68 {approx = true} : vector<64x8xf32> -> vector<64x8xf32>
    %72 = arith.mulf %70, %71 : vector<64x8xf32>
    %c0_34 = arith.constant 0 : index
    %c0_35 = arith.constant 0 : index
    %73 = vector.load %arg15[%c0_34, %c0_35] : memref<8x32xf32, #tpu.memory_space<vmem>>, vector<8x32xf32>
    %cst_36 = arith.constant dense<0.000000e+00> : vector<64x32xf32>
    %74 = tpu.matmul %72, %73, %cst_36 {dimension_numbers = #tpu.dot_dimension_numbers<[1], [0], [0], [1], [0, 0, 1, 1], [], []>} : vector<64x8xf32>, vector<8x32xf32>, vector<64x32xf32> -> vector<64x32xf32>
    %c0_37 = arith.constant 0 : index
    %c0_38 = arith.constant 0 : index
    %75 = vector.load %arg16[%c0_37, %c0_38] : memref<1x32xf32, #tpu.memory_space<vmem>>, vector<1x32xf32>
    %76 = vector.broadcast %75 : vector<1x32xf32> to vector<64x32xf32>
    %77 = arith.addf %74, %76 : vector<64x32xf32>
    %78 = arith.addf %77, %0 : vector<64x32xf32>
    %c0_39 = arith.constant 0 : index
    %c0_40 = arith.constant 0 : index
    %79 = vector.load %arg17[%c0_39, %c0_40] : memref<64x32xf32, #tpu.memory_space<vmem>>, vector<64x32xf32>
    tpu.vector_store %arg17[%c0_39, %c0_40], %78 {strides = array<i32>} : memref<64x32xf32, #tpu.memory_space<vmem>>, vector<64x32xf32>,
    return
  }
  func.func @transform_0(%arg0: i32) -> (i32, i32) {
    %c0_i32 = arith.constant 0 : i32
    %c0_i32_0 = arith.constant 0 : i32
    return %arg0, %c0_i32 : i32, i32
  }
  func.func @transform_1(%arg0: i32) -> (i32, i32) {
    %c0_i32 = arith.constant 0 : i32
    %c0_i32_0 = arith.constant 0 : i32
    return %arg0, %c0_i32 : i32, i32
  }
  func.func @transform_2(%arg0: i32) -> (i32, i32) {
    %c0_i32 = arith.constant 0 : i32
    %c0_i32_0 = arith.constant 0 : i32
    return %arg0, %c0_i32 : i32, i32
  }
  func.func @transform_3(%arg0: i32) -> (i32, i32) {
    %c0_i32 = arith.constant 0 : i32
    %c0_i32_0 = arith.constant 0 : i32
    return %arg0, %c0_i32 : i32, i32
  }
  func.func @transform_4(%arg0: i32) -> (i32, i32) {
    %c0_i32 = arith.constant 0 : i32
    %c0_i32_0 = arith.constant 0 : i32
    %c0_i32_1 = arith.constant 0 : i32
    return %c0_i32, %c0_i32_0 : i32, i32
  }
  func.func @transform_5(%arg0: i32) -> (i32, i32) {
    %c0_i32 = arith.constant 0 : i32
    %c0_i32_0 = arith.constant 0 : i32
    %c0_i32_1 = arith.constant 0 : i32
    return %c0_i32, %c0_i32_0 : i32, i32
  }
  func.func @transform_6(%arg0: i32) -> (i32, i32) {
    %c0_i32 = arith.constant 0 : i32
    %c0_i32_0 = arith.constant 0 : i32
    %c0_i32_1 = arith.constant 0 : i32
    return %c0_i32, %c0_i32_0 : i32, i32
  }
  func.func @transform_7(%arg0: i32) -> (i32, i32) {
    %c0_i32 = arith.constant 0 : i32
    %c0_i32_0 = arith.constant 0 : i32
    %c0_i32_1 = arith.constant 0 : i32
    return %c0_i32, %c0_i32_0 : i32, i32
  }
  func.func @transform_8(%arg0: i32) -> (i32, i32) {
    %c0_i32 = arith.constant 0 : i32
    %c0_i32_0 = arith.constant 0 : i32
    %c0_i32_1 = arith.constant 0 : i32
    return %c0_i32, %c0_i32_0 : i32, i32
  }
  func.func @transform_9(%arg0: i32) -> (i32, i32) {
    %c0_i32 = arith.constant 0 : i32
    %c0_i32_0 = arith.constant 0 : i32
    %c0_i32_1 = arith.constant 0 : i32
    return %c0_i32, %c0_i32_0 : i32, i32
  }
  func.func @transform_10(%arg0: i32) -> (i32, i32) {
    %c0_i32 = arith.constant 0 : i32
    %c0_i32_0 = arith.constant 0 : i32
    %c0_i32_1 = arith.constant 0 : i32
    return %c0_i32, %c0_i32_0 : i32, i32
  }
  func.func @transform_11(%arg0: i32) -> (i32, i32) {
    %c0_i32 = arith.constant 0 : i32
    %c0_i32_0 = arith.constant 0 : i32
    %c0_i32_1 = arith.constant 0 : i32
    return %c0_i32, %c0_i32_0 : i32, i32
  }
  func.func @transform_12(%arg0: i32) -> (i32, i32) {
    %c0_i32 = arith.constant 0 : i32
    %c0_i32_0 = arith.constant 0 : i32
    %c0_i32_1 = arith.constant 0 : i32
    return %c0_i32, %c0_i32_0 : i32, i32
  }
  func.func @transform_13(%arg0: i32) -> (i32, i32) {
    %c0_i32 = arith.constant 0 : i32
    %c0_i32_0 = arith.constant 0 : i32
    %c0_i32_1 = arith.constant 0 : i32
    return %c0_i32, %c0_i32_0 : i32, i32
  }
  func.func @transform_14(%arg0: i32) -> (i32, i32) {
    %c0_i32 = arith.constant 0 : i32
    %c0_i32_0 = arith.constant 0 : i32
    %c0_i32_1 = arith.constant 0 : i32
    return %c0_i32, %c0_i32_0 : i32, i32
  }
  func.func @transform_15(%arg0: i32) -> (i32, i32) {
    %c0_i32 = arith.constant 0 : i32
    %c0_i32_0 = arith.constant 0 : i32
    %c0_i32_1 = arith.constant 0 : i32
    return %c0_i32, %c0_i32_0 : i32, i32
  }
  func.func @transform_16(%arg0: i32) -> (i32, i32) {
    %c0_i32 = arith.constant 0 : i32
    %c0_i32_0 = arith.constant 0 : i32
    return %arg0, %c0_i32 : i32, i32
  }
}

module attributes {stable_mosaic.version = 11 : i64} {
  func.func @_td_kv_kernel(%arg0: i32, %arg1: memref<4x16x35xf32, #tpu.memory_space<vmem>>, %arg2: memref<35x64xf32, #tpu.memory_space<vmem>>, %arg3: memref<1x64xf32, #tpu.memory_space<vmem>>, %arg4: memref<64x8xf32, #tpu.memory_space<vmem>>, %arg5: memref<1x8xf32, #tpu.memory_space<vmem>>, %arg6: memref<64x8xf32, #tpu.memory_space<vmem>>, %arg7: memref<1x8xf32, #tpu.memory_space<vmem>>, %arg8: memref<16x64xf32, #tpu.memory_space<vmem>>, %arg9: memref<16x8xbf16, #tpu.memory_space<vmem>>, %arg10: memref<16x8xbf16, #tpu.memory_space<vmem>>) attributes {dimension_semantics = [#tpu.dimension_semantics<parallel>], iteration_bounds = array<i64: 2>, scalar_prefetch = 0 : i64, scratch_operands = 0 : i64, tpu.core_type = #tpu.core_type<tc>, window_params = [{transform_indices = @transform_0, window_bounds = array<i64: 4, 16, 35>}, {pipeline_mode = #tpu.pipeline_mode<synchronous>, transform_indices = @transform_1, window_bounds = array<i64: 35, 64>}, {pipeline_mode = #tpu.pipeline_mode<synchronous>, transform_indices = @transform_2, window_bounds = array<i64: 1, 64>}, {pipeline_mode = #tpu.pipeline_mode<synchronous>, transform_indices = @transform_3, window_bounds = array<i64: 64, 8>}, {pipeline_mode = #tpu.pipeline_mode<synchronous>, transform_indices = @transform_4, window_bounds = array<i64: 1, 8>}, {pipeline_mode = #tpu.pipeline_mode<synchronous>, transform_indices = @transform_5, window_bounds = array<i64: 64, 8>}, {pipeline_mode = #tpu.pipeline_mode<synchronous>, transform_indices = @transform_6, window_bounds = array<i64: 1, 8>}, {transform_indices = @transform_7, window_bounds = array<i64: 16, 64>}, {transform_indices = @transform_8, window_bounds = array<i64: 16, 8>}, {transform_indices = @transform_9, window_bounds = array<i64: 16, 8>}]} {
    %c0 = arith.constant 0 : index
    %c0_0 = arith.constant 0 : index
    %c0_1 = arith.constant 0 : index
    %0 = vector.load %arg1[%c0, %c0_0, %c0_1] : memref<4x16x35xf32, #tpu.memory_space<vmem>>, vector<4x16x35xf32>
    %1 = vector.shape_cast %0 : vector<4x16x35xf32> to vector<64x35xf32>
    %c0_2 = arith.constant 0 : index
    %c0_3 = arith.constant 0 : index
    %2 = vector.load %arg2[%c0_2, %c0_3] : memref<35x64xf32, #tpu.memory_space<vmem>>, vector<35x64xf32>
    %cst = arith.constant dense<0.000000e+00> : vector<64x64xf32>
    %3 = tpu.matmul %1, %2, %cst {dimension_numbers = #tpu.dot_dimension_numbers<[1], [0], [0], [1], [0, 0, 1, 1], [], []>} : vector<64x35xf32>, vector<35x64xf32>, vector<64x64xf32> -> vector<64x64xf32>
    %c0_4 = arith.constant 0 : index
    %c0_5 = arith.constant 0 : index
    %4 = vector.load %arg3[%c0_4, %c0_5] : memref<1x64xf32, #tpu.memory_space<vmem>>, vector<1x64xf32>
    %5 = vector.broadcast %4 : vector<1x64xf32> to vector<64x64xf32>
    %6 = arith.addf %3, %5 : vector<64x64xf32>
    %cst_6 = arith.constant 0.000000e+00 : f32
    %7 = vector.broadcast %cst_6 : f32 to vector<64x64xf32>
    %8 = arith.maximumf %6, %7 : vector<64x64xf32>
    %9 = vector.shape_cast %8 : vector<64x64xf32> to vector<4x16x64xf32>
    %10 = vector.extract_strided_slice %9 {offsets = [0, 0, 0], sizes = [1, 16, 64], strides = [1, 1, 1]} : vector<4x16x64xf32> to vector<1x16x64xf32>
    %11 = vector.shape_cast %10 : vector<1x16x64xf32> to vector<16x64xf32>
    %12 = vector.extract_strided_slice %9 {offsets = [1, 0, 0], sizes = [1, 16, 64], strides = [1, 1, 1]} : vector<4x16x64xf32> to vector<1x16x64xf32>
    %13 = vector.shape_cast %12 : vector<1x16x64xf32> to vector<16x64xf32>
    %14 = arith.maximumf %11, %13 : vector<16x64xf32>
    %15 = vector.extract_strided_slice %9 {offsets = [2, 0, 0], sizes = [1, 16, 64], strides = [1, 1, 1]} : vector<4x16x64xf32> to vector<1x16x64xf32>
    %16 = vector.shape_cast %15 : vector<1x16x64xf32> to vector<16x64xf32>
    %17 = arith.maximumf %14, %16 : vector<16x64xf32>
    %18 = vector.extract_strided_slice %9 {offsets = [3, 0, 0], sizes = [1, 16, 64], strides = [1, 1, 1]} : vector<4x16x64xf32> to vector<1x16x64xf32>
    %19 = vector.shape_cast %18 : vector<1x16x64xf32> to vector<16x64xf32>
    %20 = arith.maximumf %17, %19 : vector<16x64xf32>
    %c0_7 = arith.constant 0 : index
    %c0_8 = arith.constant 0 : index
    %21 = vector.load %arg8[%c0_7, %c0_8] : memref<16x64xf32, #tpu.memory_space<vmem>>, vector<16x64xf32>
    tpu.vector_store %arg8[%c0_7, %c0_8], %20 {strides = array<i32>} : memref<16x64xf32, #tpu.memory_space<vmem>>, vector<16x64xf32>,
    %c0_9 = arith.constant 0 : index
    %c0_10 = arith.constant 0 : index
    %22 = vector.load %arg4[%c0_9, %c0_10] : memref<64x8xf32, #tpu.memory_space<vmem>>, vector<64x8xf32>
    %cst_11 = arith.constant dense<0.000000e+00> : vector<16x8xf32>
    %23 = tpu.matmul %20, %22, %cst_11 {dimension_numbers = #tpu.dot_dimension_numbers<[1], [0], [0], [1], [0, 0, 1, 1], [], []>} : vector<16x64xf32>, vector<64x8xf32>, vector<16x8xf32> -> vector<16x8xf32>
    %c0_12 = arith.constant 0 : index
    %c0_13 = arith.constant 0 : index
    %24 = vector.load %arg5[%c0_12, %c0_13] : memref<1x8xf32, #tpu.memory_space<vmem>>, vector<1x8xf32>
    %25 = vector.broadcast %24 : vector<1x8xf32> to vector<16x8xf32>
    %26 = arith.addf %23, %25 : vector<16x8xf32>
    %27 = arith.truncf %26 : vector<16x8xf32> to vector<16x8xbf16>
    %c0_14 = arith.constant 0 : index
    %c0_15 = arith.constant 0 : index
    %28 = vector.load %arg9[%c0_14, %c0_15] : memref<16x8xbf16, #tpu.memory_space<vmem>>, vector<16x8xbf16>
    tpu.vector_store %arg9[%c0_14, %c0_15], %27 {strides = array<i32>} : memref<16x8xbf16, #tpu.memory_space<vmem>>, vector<16x8xbf16>,
    %c0_16 = arith.constant 0 : index
    %c0_17 = arith.constant 0 : index
    %29 = vector.load %arg6[%c0_16, %c0_17] : memref<64x8xf32, #tpu.memory_space<vmem>>, vector<64x8xf32>
    %cst_18 = arith.constant dense<0.000000e+00> : vector<16x8xf32>
    %30 = tpu.matmul %20, %29, %cst_18 {dimension_numbers = #tpu.dot_dimension_numbers<[1], [0], [0], [1], [0, 0, 1, 1], [], []>} : vector<16x64xf32>, vector<64x8xf32>, vector<16x8xf32> -> vector<16x8xf32>
    %c0_19 = arith.constant 0 : index
    %c0_20 = arith.constant 0 : index
    %31 = vector.load %arg7[%c0_19, %c0_20] : memref<1x8xf32, #tpu.memory_space<vmem>>, vector<1x8xf32>
    %32 = vector.broadcast %31 : vector<1x8xf32> to vector<16x8xf32>
    %33 = arith.addf %30, %32 : vector<16x8xf32>
    %34 = arith.truncf %33 : vector<16x8xf32> to vector<16x8xbf16>
    %c0_21 = arith.constant 0 : index
    %c0_22 = arith.constant 0 : index
    %35 = vector.load %arg10[%c0_21, %c0_22] : memref<16x8xbf16, #tpu.memory_space<vmem>>, vector<16x8xbf16>
    tpu.vector_store %arg10[%c0_21, %c0_22], %34 {strides = array<i32>} : memref<16x8xbf16, #tpu.memory_space<vmem>>, vector<16x8xbf16>,
    return
  }
  func.func @transform_0(%arg0: i32) -> (i32, i32, i32) {
    %c0_i32 = arith.constant 0 : i32
    %c0_i32_0 = arith.constant 0 : i32
    %c0_i32_1 = arith.constant 0 : i32
    return %c0_i32, %arg0, %c0_i32_0 : i32, i32, i32
  }
  func.func @transform_1(%arg0: i32) -> (i32, i32) {
    %c0_i32 = arith.constant 0 : i32
    %c0_i32_0 = arith.constant 0 : i32
    %c0_i32_1 = arith.constant 0 : i32
    return %c0_i32, %c0_i32_0 : i32, i32
  }
  func.func @transform_2(%arg0: i32) -> (i32, i32) {
    %c0_i32 = arith.constant 0 : i32
    %c0_i32_0 = arith.constant 0 : i32
    %c0_i32_1 = arith.constant 0 : i32
    return %c0_i32, %c0_i32_0 : i32, i32
  }
  func.func @transform_3(%arg0: i32) -> (i32, i32) {
    %c0_i32 = arith.constant 0 : i32
    %c0_i32_0 = arith.constant 0 : i32
    %c0_i32_1 = arith.constant 0 : i32
    return %c0_i32, %c0_i32_0 : i32, i32
  }
  func.func @transform_4(%arg0: i32) -> (i32, i32) {
    %c0_i32 = arith.constant 0 : i32
    %c0_i32_0 = arith.constant 0 : i32
    %c0_i32_1 = arith.constant 0 : i32
    return %c0_i32, %c0_i32_0 : i32, i32
  }
  func.func @transform_5(%arg0: i32) -> (i32, i32) {
    %c0_i32 = arith.constant 0 : i32
    %c0_i32_0 = arith.constant 0 : i32
    %c0_i32_1 = arith.constant 0 : i32
    return %c0_i32, %c0_i32_0 : i32, i32
  }
  func.func @transform_6(%arg0: i32) -> (i32, i32) {
    %c0_i32 = arith.constant 0 : i32
    %c0_i32_0 = arith.constant 0 : i32
    %c0_i32_1 = arith.constant 0 : i32
    return %c0_i32, %c0_i32_0 : i32, i32
  }
  func.func @transform_7(%arg0: i32) -> (i32, i32) {
    %c0_i32 = arith.constant 0 : i32
    %c0_i32_0 = arith.constant 0 : i32
    return %arg0, %c0_i32 : i32, i32
  }
  func.func @transform_8(%arg0: i32) -> (i32, i32) {
    %c0_i32 = arith.constant 0 : i32
    %c0_i32_0 = arith.constant 0 : i32
    return %arg0, %c0_i32 : i32, i32
  }
  func.func @transform_9(%arg0: i32) -> (i32, i32) {
    %c0_i32 = arith.constant 0 : i32
    %c0_i32_0 = arith.constant 0 : i32
    return %arg0, %c0_i32 : i32, i32
  }
}

module attributes {stable_mosaic.version = 11 : i64} {
  func.func @_attn_kernel(%arg0: i32, %arg1: memref<16x64xf32, #tpu.memory_space<vmem>>, %arg2: memref<16x32xbf16, #tpu.memory_space<vmem>>, %arg3: memref<16x32xbf16, #tpu.memory_space<vmem>>, %arg4: memref<16x12xbf16, #tpu.memory_space<vmem>>, %arg5: memref<64x8xf32, #tpu.memory_space<vmem>>, %arg6: memref<1x8xf32, #tpu.memory_space<vmem>>, %arg7: memref<12x32xf32, #tpu.memory_space<vmem>>, %arg8: memref<1x32xf32, #tpu.memory_space<vmem>>, %arg9: memref<32x32xf32, #tpu.memory_space<vmem>>, %arg10: memref<1x32xf32, #tpu.memory_space<vmem>>, %arg11: memref<32x32xf32, #tpu.memory_space<vmem>>, %arg12: memref<1x32xf32, #tpu.memory_space<vmem>>, %arg13: memref<32x32xf32, #tpu.memory_space<vmem>>, %arg14: memref<1x32xf32, #tpu.memory_space<vmem>>, %arg15: memref<8x64xf32, #tpu.memory_space<vmem>>, %arg16: memref<1x64xf32, #tpu.memory_space<vmem>>, %arg17: memref<16x64xf32, #tpu.memory_space<vmem>>) attributes {dimension_semantics = [#tpu.dimension_semantics<parallel>], iteration_bounds = array<i64: 2>, scalar_prefetch = 0 : i64, scratch_operands = 0 : i64, tpu.core_type = #tpu.core_type<tc>, window_params = [{transform_indices = @transform_0, window_bounds = array<i64: 16, 64>}, {transform_indices = @transform_1, window_bounds = array<i64: 16, 32>}, {transform_indices = @transform_2, window_bounds = array<i64: 16, 32>}, {transform_indices = @transform_3, window_bounds = array<i64: 16, 12>}, {pipeline_mode = #tpu.pipeline_mode<synchronous>, transform_indices = @transform_4, window_bounds = array<i64: 64, 8>}, {pipeline_mode = #tpu.pipeline_mode<synchronous>, transform_indices = @transform_5, window_bounds = array<i64: 1, 8>}, {pipeline_mode = #tpu.pipeline_mode<synchronous>, transform_indices = @transform_6, window_bounds = array<i64: 12, 32>}, {pipeline_mode = #tpu.pipeline_mode<synchronous>, transform_indices = @transform_7, window_bounds = array<i64: 1, 32>}, {pipeline_mode = #tpu.pipeline_mode<synchronous>, transform_indices = @transform_8, window_bounds = array<i64: 32, 32>}, {pipeline_mode = #tpu.pipeline_mode<synchronous>, transform_indices = @transform_9, window_bounds = array<i64: 1, 32>}, {pipeline_mode = #tpu.pipeline_mode<synchronous>, transform_indices = @transform_10, window_bounds = array<i64: 32, 32>}, {pipeline_mode = #tpu.pipeline_mode<synchronous>, transform_indices = @transform_11, window_bounds = array<i64: 1, 32>}, {pipeline_mode = #tpu.pipeline_mode<synchronous>, transform_indices = @transform_12, window_bounds = array<i64: 32, 32>}, {pipeline_mode = #tpu.pipeline_mode<synchronous>, transform_indices = @transform_13, window_bounds = array<i64: 1, 32>}, {pipeline_mode = #tpu.pipeline_mode<synchronous>, transform_indices = @transform_14, window_bounds = array<i64: 8, 64>}, {pipeline_mode = #tpu.pipeline_mode<synchronous>, transform_indices = @transform_15, window_bounds = array<i64: 1, 64>}, {transform_indices = @transform_16, window_bounds = array<i64: 16, 64>}]} {
    %c0 = arith.constant 0 : index
    %c0_0 = arith.constant 0 : index
    %0 = vector.load %arg1[%c0, %c0_0] : memref<16x64xf32, #tpu.memory_space<vmem>>, vector<16x64xf32>
    %c0_1 = arith.constant 0 : index
    %c0_2 = arith.constant 0 : index
    %1 = vector.load %arg5[%c0_1, %c0_2] : memref<64x8xf32, #tpu.memory_space<vmem>>, vector<64x8xf32>
    %cst = arith.constant dense<0.000000e+00> : vector<16x8xf32>
    %2 = tpu.matmul %0, %1, %cst {dimension_numbers = #tpu.dot_dimension_numbers<[1], [0], [0], [1], [0, 0, 1, 1], [], []>} : vector<16x64xf32>, vector<64x8xf32>, vector<16x8xf32> -> vector<16x8xf32>
    %c0_3 = arith.constant 0 : index
    %c0_4 = arith.constant 0 : index
    %3 = vector.load %arg6[%c0_3, %c0_4] : memref<1x8xf32, #tpu.memory_space<vmem>>, vector<1x8xf32>
    %4 = vector.broadcast %3 : vector<1x8xf32> to vector<16x8xf32>
    %5 = arith.addf %2, %4 : vector<16x8xf32>
    %6 = tpu.concatenate %5, %5, %5, %5 in 1 : vector<16x8xf32>, vector<16x8xf32>, vector<16x8xf32>, vector<16x8xf32> -> vector<16x32xf32>
    %c0_5 = arith.constant 0 : index
    %c0_6 = arith.constant 0 : index
    %7 = vector.load %arg4[%c0_5, %c0_6] : memref<16x12xbf16, #tpu.memory_space<vmem>>, vector<16x12xbf16>
    %8 = arith.extf %7 : vector<16x12xbf16> to vector<16x12xf32>
    %c0_7 = arith.constant 0 : index
    %c0_8 = arith.constant 0 : index
    %9 = vector.load %arg7[%c0_7, %c0_8] : memref<12x32xf32, #tpu.memory_space<vmem>>, vector<12x32xf32>
    %cst_9 = arith.constant dense<0.000000e+00> : vector<16x32xf32>
    %10 = tpu.matmul %8, %9, %cst_9 {dimension_numbers = #tpu.dot_dimension_numbers<[1], [0], [0], [1], [0, 0, 1, 1], [], []>} : vector<16x12xf32>, vector<12x32xf32>, vector<16x32xf32> -> vector<16x32xf32>
    %c0_10 = arith.constant 0 : index
    %c0_11 = arith.constant 0 : index
    %11 = vector.load %arg8[%c0_10, %c0_11] : memref<1x32xf32, #tpu.memory_space<vmem>>, vector<1x32xf32>
    %12 = vector.broadcast %11 : vector<1x32xf32> to vector<16x32xf32>
    %13 = arith.addf %10, %12 : vector<16x32xf32>
    %cst_12 = arith.constant 0.000000e+00 : f32
    %14 = vector.broadcast %cst_12 : f32 to vector<16x32xf32>
    %15 = arith.maximumf %13, %14 : vector<16x32xf32>
    %c0_13 = arith.constant 0 : index
    %c0_14 = arith.constant 0 : index
    %16 = vector.load %arg9[%c0_13, %c0_14] : memref<32x32xf32, #tpu.memory_space<vmem>>, vector<32x32xf32>
    %cst_15 = arith.constant dense<0.000000e+00> : vector<16x32xf32>
    %17 = tpu.matmul %15, %16, %cst_15 {dimension_numbers = #tpu.dot_dimension_numbers<[1], [0], [0], [1], [0, 0, 1, 1], [], []>} : vector<16x32xf32>, vector<32x32xf32>, vector<16x32xf32> -> vector<16x32xf32>
    %c0_16 = arith.constant 0 : index
    %c0_17 = arith.constant 0 : index
    %18 = vector.load %arg10[%c0_16, %c0_17] : memref<1x32xf32, #tpu.memory_space<vmem>>, vector<1x32xf32>
    %19 = vector.broadcast %18 : vector<1x32xf32> to vector<16x32xf32>
    %20 = arith.addf %17, %19 : vector<16x32xf32>
    %c0_18 = arith.constant 0 : index
    %c0_19 = arith.constant 0 : index
    %21 = vector.load %arg2[%c0_18, %c0_19] : memref<16x32xbf16, #tpu.memory_space<vmem>>, vector<16x32xbf16>
    %22 = arith.extf %21 : vector<16x32xbf16> to vector<16x32xf32>
    %23 = arith.subf %6, %22 : vector<16x32xf32>
    %24 = arith.addf %23, %20 : vector<16x32xf32>
    %c0_20 = arith.constant 0 : index
    %c0_21 = arith.constant 0 : index
    %25 = vector.load %arg11[%c0_20, %c0_21] : memref<32x32xf32, #tpu.memory_space<vmem>>, vector<32x32xf32>
    %cst_22 = arith.constant dense<0.000000e+00> : vector<16x32xf32>
    %26 = tpu.matmul %24, %25, %cst_22 {dimension_numbers = #tpu.dot_dimension_numbers<[1], [0], [0], [1], [0, 0, 1, 1], [], []>} : vector<16x32xf32>, vector<32x32xf32>, vector<16x32xf32> -> vector<16x32xf32>
    %c0_23 = arith.constant 0 : index
    %c0_24 = arith.constant 0 : index
    %27 = vector.load %arg12[%c0_23, %c0_24] : memref<1x32xf32, #tpu.memory_space<vmem>>, vector<1x32xf32>
    %28 = vector.broadcast %27 : vector<1x32xf32> to vector<16x32xf32>
    %29 = arith.addf %26, %28 : vector<16x32xf32>
    %cst_25 = arith.constant 0.000000e+00 : f32
    %30 = vector.broadcast %cst_25 : f32 to vector<16x32xf32>
    %31 = arith.maximumf %29, %30 : vector<16x32xf32>
    %c0_26 = arith.constant 0 : index
    %c0_27 = arith.constant 0 : index
    %32 = vector.load %arg13[%c0_26, %c0_27] : memref<32x32xf32, #tpu.memory_space<vmem>>, vector<32x32xf32>
    %cst_28 = arith.constant dense<0.000000e+00> : vector<16x32xf32>
    %33 = tpu.matmul %31, %32, %cst_28 {dimension_numbers = #tpu.dot_dimension_numbers<[1], [0], [0], [1], [0, 0, 1, 1], [], []>} : vector<16x32xf32>, vector<32x32xf32>, vector<16x32xf32> -> vector<16x32xf32>
    %c0_29 = arith.constant 0 : index
    %c0_30 = arith.constant 0 : index
    %34 = vector.load %arg14[%c0_29, %c0_30] : memref<1x32xf32, #tpu.memory_space<vmem>>, vector<1x32xf32>
    %35 = vector.broadcast %34 : vector<1x32xf32> to vector<16x32xf32>
    %36 = arith.addf %33, %35 : vector<16x32xf32>
    %cst_31 = arith.constant 0.353553385 : f32
    %37 = vector.broadcast %cst_31 : f32 to vector<16x32xf32>
    %38 = arith.mulf %36, %37 : vector<16x32xf32>
    %c0_32 = arith.constant 0 : index
    %c0_33 = arith.constant 0 : index
    %39 = vector.load %arg3[%c0_32, %c0_33] : memref<16x32xbf16, #tpu.memory_space<vmem>>, vector<16x32xbf16>
    %40 = arith.extf %39 : vector<16x32xbf16> to vector<16x32xf32>
    %41 = arith.addf %40, %20 : vector<16x32xf32>
    %42 = vector.extract_strided_slice %38 {offsets = [0, 0], sizes = [16, 8], strides = [1, 1]} : vector<16x32xf32> to vector<16x8xf32>
    %43 = vector.extract_strided_slice %38 {offsets = [0, 8], sizes = [16, 8], strides = [1, 1]} : vector<16x32xf32> to vector<16x8xf32>
    %44 = vector.extract_strided_slice %38 {offsets = [0, 16], sizes = [16, 8], strides = [1, 1]} : vector<16x32xf32> to vector<16x8xf32>
    %45 = vector.extract_strided_slice %38 {offsets = [0, 24], sizes = [16, 8], strides = [1, 1]} : vector<16x32xf32> to vector<16x8xf32>
    %46 = vector.extract_strided_slice %41 {offsets = [0, 0], sizes = [16, 8], strides = [1, 1]} : vector<16x32xf32> to vector<16x8xf32>
    %47 = vector.extract_strided_slice %41 {offsets = [0, 8], sizes = [16, 8], strides = [1, 1]} : vector<16x32xf32> to vector<16x8xf32>
    %48 = vector.extract_strided_slice %41 {offsets = [0, 16], sizes = [16, 8], strides = [1, 1]} : vector<16x32xf32> to vector<16x8xf32>
    %49 = vector.extract_strided_slice %41 {offsets = [0, 24], sizes = [16, 8], strides = [1, 1]} : vector<16x32xf32> to vector<16x8xf32>
    %50 = arith.maximumf %42, %43 : vector<16x8xf32>
    %51 = arith.maximumf %50, %44 : vector<16x8xf32>
    %52 = arith.maximumf %51, %45 : vector<16x8xf32>
    %53 = arith.subf %42, %52 : vector<16x8xf32>
    %54 = math.exp %53 : vector<16x8xf32>
    %55 = arith.mulf %54, %46 : vector<16x8xf32>
    %56 = arith.subf %43, %52 : vector<16x8xf32>
    %57 = math.exp %56 : vector<16x8xf32>
    %58 = arith.addf %54, %57 : vector<16x8xf32>
    %59 = arith.mulf %57, %47 : vector<16x8xf32>
    %60 = arith.addf %55, %59 : vector<16x8xf32>
    %61 = arith.subf %44, %52 : vector<16x8xf32>
    %62 = math.exp %61 : vector<16x8xf32>
    %63 = arith.addf %58, %62 : vector<16x8xf32>
    %64 = arith.mulf %62, %48 : vector<16x8xf32>
    %65 = arith.addf %60, %64 : vector<16x8xf32>
    %66 = arith.subf %45, %52 : vector<16x8xf32>
    %67 = math.exp %66 : vector<16x8xf32>
    %68 = arith.addf %63, %67 : vector<16x8xf32>
    %69 = arith.mulf %67, %49 : vector<16x8xf32>
    %70 = arith.addf %65, %69 : vector<16x8xf32>
    %71 = tpu.reciprocal %68 {approx = true} : vector<16x8xf32> -> vector<16x8xf32>
    %72 = arith.mulf %70, %71 : vector<16x8xf32>
    %c0_34 = arith.constant 0 : index
    %c0_35 = arith.constant 0 : index
    %73 = vector.load %arg15[%c0_34, %c0_35] : memref<8x64xf32, #tpu.memory_space<vmem>>, vector<8x64xf32>
    %cst_36 = arith.constant dense<0.000000e+00> : vector<16x64xf32>
    %74 = tpu.matmul %72, %73, %cst_36 {dimension_numbers = #tpu.dot_dimension_numbers<[1], [0], [0], [1], [0, 0, 1, 1], [], []>} : vector<16x8xf32>, vector<8x64xf32>, vector<16x64xf32> -> vector<16x64xf32>
    %c0_37 = arith.constant 0 : index
    %c0_38 = arith.constant 0 : index
    %75 = vector.load %arg16[%c0_37, %c0_38] : memref<1x64xf32, #tpu.memory_space<vmem>>, vector<1x64xf32>
    %76 = vector.broadcast %75 : vector<1x64xf32> to vector<16x64xf32>
    %77 = arith.addf %74, %76 : vector<16x64xf32>
    %78 = arith.addf %77, %0 : vector<16x64xf32>
    %c0_39 = arith.constant 0 : index
    %c0_40 = arith.constant 0 : index
    %79 = vector.load %arg17[%c0_39, %c0_40] : memref<16x64xf32, #tpu.memory_space<vmem>>, vector<16x64xf32>
    tpu.vector_store %arg17[%c0_39, %c0_40], %78 {strides = array<i32>} : memref<16x64xf32, #tpu.memory_space<vmem>>, vector<16x64xf32>,
    return
  }
  func.func @transform_0(%arg0: i32) -> (i32, i32) {
    %c0_i32 = arith.constant 0 : i32
    %c0_i32_0 = arith.constant 0 : i32
    return %arg0, %c0_i32 : i32, i32
  }
  func.func @transform_1(%arg0: i32) -> (i32, i32) {
    %c0_i32 = arith.constant 0 : i32
    %c0_i32_0 = arith.constant 0 : i32
    return %arg0, %c0_i32 : i32, i32
  }
  func.func @transform_2(%arg0: i32) -> (i32, i32) {
    %c0_i32 = arith.constant 0 : i32
    %c0_i32_0 = arith.constant 0 : i32
    return %arg0, %c0_i32 : i32, i32
  }
  func.func @transform_3(%arg0: i32) -> (i32, i32) {
    %c0_i32 = arith.constant 0 : i32
    %c0_i32_0 = arith.constant 0 : i32
    return %arg0, %c0_i32 : i32, i32
  }
  func.func @transform_4(%arg0: i32) -> (i32, i32) {
    %c0_i32 = arith.constant 0 : i32
    %c0_i32_0 = arith.constant 0 : i32
    %c0_i32_1 = arith.constant 0 : i32
    return %c0_i32, %c0_i32_0 : i32, i32
  }
  func.func @transform_5(%arg0: i32) -> (i32, i32) {
    %c0_i32 = arith.constant 0 : i32
    %c0_i32_0 = arith.constant 0 : i32
    %c0_i32_1 = arith.constant 0 : i32
    return %c0_i32, %c0_i32_0 : i32, i32
  }
  func.func @transform_6(%arg0: i32) -> (i32, i32) {
    %c0_i32 = arith.constant 0 : i32
    %c0_i32_0 = arith.constant 0 : i32
    %c0_i32_1 = arith.constant 0 : i32
    return %c0_i32, %c0_i32_0 : i32, i32
  }
  func.func @transform_7(%arg0: i32) -> (i32, i32) {
    %c0_i32 = arith.constant 0 : i32
    %c0_i32_0 = arith.constant 0 : i32
    %c0_i32_1 = arith.constant 0 : i32
    return %c0_i32, %c0_i32_0 : i32, i32
  }
  func.func @transform_8(%arg0: i32) -> (i32, i32) {
    %c0_i32 = arith.constant 0 : i32
    %c0_i32_0 = arith.constant 0 : i32
    %c0_i32_1 = arith.constant 0 : i32
    return %c0_i32, %c0_i32_0 : i32, i32
  }
  func.func @transform_9(%arg0: i32) -> (i32, i32) {
    %c0_i32 = arith.constant 0 : i32
    %c0_i32_0 = arith.constant 0 : i32
    %c0_i32_1 = arith.constant 0 : i32
    return %c0_i32, %c0_i32_0 : i32, i32
  }
  func.func @transform_10(%arg0: i32) -> (i32, i32) {
    %c0_i32 = arith.constant 0 : i32
    %c0_i32_0 = arith.constant 0 : i32
    %c0_i32_1 = arith.constant 0 : i32
    return %c0_i32, %c0_i32_0 : i32, i32
  }
  func.func @transform_11(%arg0: i32) -> (i32, i32) {
    %c0_i32 = arith.constant 0 : i32
    %c0_i32_0 = arith.constant 0 : i32
    %c0_i32_1 = arith.constant 0 : i32
    return %c0_i32, %c0_i32_0 : i32, i32
  }
  func.func @transform_12(%arg0: i32) -> (i32, i32) {
    %c0_i32 = arith.constant 0 : i32
    %c0_i32_0 = arith.constant 0 : i32
    %c0_i32_1 = arith.constant 0 : i32
    return %c0_i32, %c0_i32_0 : i32, i32
  }
  func.func @transform_13(%arg0: i32) -> (i32, i32) {
    %c0_i32 = arith.constant 0 : i32
    %c0_i32_0 = arith.constant 0 : i32
    %c0_i32_1 = arith.constant 0 : i32
    return %c0_i32, %c0_i32_0 : i32, i32
  }
  func.func @transform_14(%arg0: i32) -> (i32, i32) {
    %c0_i32 = arith.constant 0 : i32
    %c0_i32_0 = arith.constant 0 : i32
    %c0_i32_1 = arith.constant 0 : i32
    return %c0_i32, %c0_i32_0 : i32, i32
  }
  func.func @transform_15(%arg0: i32) -> (i32, i32) {
    %c0_i32 = arith.constant 0 : i32
    %c0_i32_0 = arith.constant 0 : i32
    %c0_i32_1 = arith.constant 0 : i32
    return %c0_i32, %c0_i32_0 : i32, i32
  }
  func.func @transform_16(%arg0: i32) -> (i32, i32) {
    %c0_i32 = arith.constant 0 : i32
    %c0_i32_0 = arith.constant 0 : i32
    return %arg0, %c0_i32 : i32, i32
  }
}

module attributes {stable_mosaic.version = 11 : i64} {
  func.func @_td_kv_kernel(%arg0: i32, %arg1: memref<4x8x67xf32, #tpu.memory_space<vmem>>, %arg2: memref<67x128xf32, #tpu.memory_space<vmem>>, %arg3: memref<1x128xf32, #tpu.memory_space<vmem>>, %arg4: memref<128x8xf32, #tpu.memory_space<vmem>>, %arg5: memref<1x8xf32, #tpu.memory_space<vmem>>, %arg6: memref<128x8xf32, #tpu.memory_space<vmem>>, %arg7: memref<1x8xf32, #tpu.memory_space<vmem>>, %arg8: memref<8x128xf32, #tpu.memory_space<vmem>>, %arg9: memref<8x8xbf16, #tpu.memory_space<vmem>>, %arg10: memref<8x8xbf16, #tpu.memory_space<vmem>>) attributes {dimension_semantics = [#tpu.dimension_semantics<parallel>], iteration_bounds = array<i64: 1>, scalar_prefetch = 0 : i64, scratch_operands = 0 : i64, tpu.core_type = #tpu.core_type<tc>, window_params = [{transform_indices = @transform_0, window_bounds = array<i64: 4, 8, 67>}, {pipeline_mode = #tpu.pipeline_mode<synchronous>, transform_indices = @transform_1, window_bounds = array<i64: 67, 128>}, {pipeline_mode = #tpu.pipeline_mode<synchronous>, transform_indices = @transform_2, window_bounds = array<i64: 1, 128>}, {pipeline_mode = #tpu.pipeline_mode<synchronous>, transform_indices = @transform_3, window_bounds = array<i64: 128, 8>}, {pipeline_mode = #tpu.pipeline_mode<synchronous>, transform_indices = @transform_4, window_bounds = array<i64: 1, 8>}, {pipeline_mode = #tpu.pipeline_mode<synchronous>, transform_indices = @transform_5, window_bounds = array<i64: 128, 8>}, {pipeline_mode = #tpu.pipeline_mode<synchronous>, transform_indices = @transform_6, window_bounds = array<i64: 1, 8>}, {transform_indices = @transform_7, window_bounds = array<i64: 8, 128>}, {transform_indices = @transform_8, window_bounds = array<i64: 8, 8>}, {transform_indices = @transform_9, window_bounds = array<i64: 8, 8>}]} {
    %c0 = arith.constant 0 : index
    %c0_0 = arith.constant 0 : index
    %c0_1 = arith.constant 0 : index
    %0 = vector.load %arg1[%c0, %c0_0, %c0_1] : memref<4x8x67xf32, #tpu.memory_space<vmem>>, vector<4x8x67xf32>
    %1 = vector.shape_cast %0 : vector<4x8x67xf32> to vector<32x67xf32>
    %c0_2 = arith.constant 0 : index
    %c0_3 = arith.constant 0 : index
    %2 = vector.load %arg2[%c0_2, %c0_3] : memref<67x128xf32, #tpu.memory_space<vmem>>, vector<67x128xf32>
    %cst = arith.constant dense<0.000000e+00> : vector<32x128xf32>
    %3 = tpu.matmul %1, %2, %cst {dimension_numbers = #tpu.dot_dimension_numbers<[1], [0], [0], [1], [0, 0, 1, 1], [], []>} : vector<32x67xf32>, vector<67x128xf32>, vector<32x128xf32> -> vector<32x128xf32>
    %c0_4 = arith.constant 0 : index
    %c0_5 = arith.constant 0 : index
    %4 = vector.load %arg3[%c0_4, %c0_5] : memref<1x128xf32, #tpu.memory_space<vmem>>, vector<1x128xf32>
    %5 = vector.broadcast %4 : vector<1x128xf32> to vector<32x128xf32>
    %6 = arith.addf %3, %5 : vector<32x128xf32>
    %cst_6 = arith.constant 0.000000e+00 : f32
    %7 = vector.broadcast %cst_6 : f32 to vector<32x128xf32>
    %8 = arith.maximumf %6, %7 : vector<32x128xf32>
    %9 = vector.shape_cast %8 : vector<32x128xf32> to vector<4x8x128xf32>
    %10 = vector.extract_strided_slice %9 {offsets = [0, 0, 0], sizes = [1, 8, 128], strides = [1, 1, 1]} : vector<4x8x128xf32> to vector<1x8x128xf32>
    %11 = vector.shape_cast %10 : vector<1x8x128xf32> to vector<8x128xf32>
    %12 = vector.extract_strided_slice %9 {offsets = [1, 0, 0], sizes = [1, 8, 128], strides = [1, 1, 1]} : vector<4x8x128xf32> to vector<1x8x128xf32>
    %13 = vector.shape_cast %12 : vector<1x8x128xf32> to vector<8x128xf32>
    %14 = arith.maximumf %11, %13 : vector<8x128xf32>
    %15 = vector.extract_strided_slice %9 {offsets = [2, 0, 0], sizes = [1, 8, 128], strides = [1, 1, 1]} : vector<4x8x128xf32> to vector<1x8x128xf32>
    %16 = vector.shape_cast %15 : vector<1x8x128xf32> to vector<8x128xf32>
    %17 = arith.maximumf %14, %16 : vector<8x128xf32>
    %18 = vector.extract_strided_slice %9 {offsets = [3, 0, 0], sizes = [1, 8, 128], strides = [1, 1, 1]} : vector<4x8x128xf32> to vector<1x8x128xf32>
    %19 = vector.shape_cast %18 : vector<1x8x128xf32> to vector<8x128xf32>
    %20 = arith.maximumf %17, %19 : vector<8x128xf32>
    %c0_7 = arith.constant 0 : index
    %c0_8 = arith.constant 0 : index
    %21 = vector.load %arg8[%c0_7, %c0_8] : memref<8x128xf32, #tpu.memory_space<vmem>>, vector<8x128xf32>
    tpu.vector_store %arg8[%c0_7, %c0_8], %20 {strides = array<i32>} : memref<8x128xf32, #tpu.memory_space<vmem>>, vector<8x128xf32>,
    %c0_9 = arith.constant 0 : index
    %c0_10 = arith.constant 0 : index
    %22 = vector.load %arg4[%c0_9, %c0_10] : memref<128x8xf32, #tpu.memory_space<vmem>>, vector<128x8xf32>
    %cst_11 = arith.constant dense<0.000000e+00> : vector<8x8xf32>
    %23 = tpu.matmul %20, %22, %cst_11 {dimension_numbers = #tpu.dot_dimension_numbers<[1], [0], [0], [1], [0, 0, 1, 1], [], []>} : vector<8x128xf32>, vector<128x8xf32>, vector<8x8xf32> -> vector<8x8xf32>
    %c0_12 = arith.constant 0 : index
    %c0_13 = arith.constant 0 : index
    %24 = vector.load %arg5[%c0_12, %c0_13] : memref<1x8xf32, #tpu.memory_space<vmem>>, vector<1x8xf32>
    %25 = vector.broadcast %24 : vector<1x8xf32> to vector<8x8xf32>
    %26 = arith.addf %23, %25 : vector<8x8xf32>
    %27 = arith.truncf %26 : vector<8x8xf32> to vector<8x8xbf16>
    %c0_14 = arith.constant 0 : index
    %c0_15 = arith.constant 0 : index
    %28 = vector.load %arg9[%c0_14, %c0_15] : memref<8x8xbf16, #tpu.memory_space<vmem>>, vector<8x8xbf16>
    tpu.vector_store %arg9[%c0_14, %c0_15], %27 {strides = array<i32>} : memref<8x8xbf16, #tpu.memory_space<vmem>>, vector<8x8xbf16>,
    %c0_16 = arith.constant 0 : index
    %c0_17 = arith.constant 0 : index
    %29 = vector.load %arg6[%c0_16, %c0_17] : memref<128x8xf32, #tpu.memory_space<vmem>>, vector<128x8xf32>
    %cst_18 = arith.constant dense<0.000000e+00> : vector<8x8xf32>
    %30 = tpu.matmul %20, %29, %cst_18 {dimension_numbers = #tpu.dot_dimension_numbers<[1], [0], [0], [1], [0, 0, 1, 1], [], []>} : vector<8x128xf32>, vector<128x8xf32>, vector<8x8xf32> -> vector<8x8xf32>
    %c0_19 = arith.constant 0 : index
    %c0_20 = arith.constant 0 : index
    %31 = vector.load %arg7[%c0_19, %c0_20] : memref<1x8xf32, #tpu.memory_space<vmem>>, vector<1x8xf32>
    %32 = vector.broadcast %31 : vector<1x8xf32> to vector<8x8xf32>
    %33 = arith.addf %30, %32 : vector<8x8xf32>
    %34 = arith.truncf %33 : vector<8x8xf32> to vector<8x8xbf16>
    %c0_21 = arith.constant 0 : index
    %c0_22 = arith.constant 0 : index
    %35 = vector.load %arg10[%c0_21, %c0_22] : memref<8x8xbf16, #tpu.memory_space<vmem>>, vector<8x8xbf16>
    tpu.vector_store %arg10[%c0_21, %c0_22], %34 {strides = array<i32>} : memref<8x8xbf16, #tpu.memory_space<vmem>>, vector<8x8xbf16>,
    return
  }
  func.func @transform_0(%arg0: i32) -> (i32, i32, i32) {
    %c0_i32 = arith.constant 0 : i32
    %c0_i32_0 = arith.constant 0 : i32
    %c0_i32_1 = arith.constant 0 : i32
    return %c0_i32, %arg0, %c0_i32_0 : i32, i32, i32
  }
  func.func @transform_1(%arg0: i32) -> (i32, i32) {
    %c0_i32 = arith.constant 0 : i32
    %c0_i32_0 = arith.constant 0 : i32
    %c0_i32_1 = arith.constant 0 : i32
    return %c0_i32, %c0_i32_0 : i32, i32
  }
  func.func @transform_2(%arg0: i32) -> (i32, i32) {
    %c0_i32 = arith.constant 0 : i32
    %c0_i32_0 = arith.constant 0 : i32
    %c0_i32_1 = arith.constant 0 : i32
    return %c0_i32, %c0_i32_0 : i32, i32
  }
  func.func @transform_3(%arg0: i32) -> (i32, i32) {
    %c0_i32 = arith.constant 0 : i32
    %c0_i32_0 = arith.constant 0 : i32
    %c0_i32_1 = arith.constant 0 : i32
    return %c0_i32, %c0_i32_0 : i32, i32
  }
  func.func @transform_4(%arg0: i32) -> (i32, i32) {
    %c0_i32 = arith.constant 0 : i32
    %c0_i32_0 = arith.constant 0 : i32
    %c0_i32_1 = arith.constant 0 : i32
    return %c0_i32, %c0_i32_0 : i32, i32
  }
  func.func @transform_5(%arg0: i32) -> (i32, i32) {
    %c0_i32 = arith.constant 0 : i32
    %c0_i32_0 = arith.constant 0 : i32
    %c0_i32_1 = arith.constant 0 : i32
    return %c0_i32, %c0_i32_0 : i32, i32
  }
  func.func @transform_6(%arg0: i32) -> (i32, i32) {
    %c0_i32 = arith.constant 0 : i32
    %c0_i32_0 = arith.constant 0 : i32
    %c0_i32_1 = arith.constant 0 : i32
    return %c0_i32, %c0_i32_0 : i32, i32
  }
  func.func @transform_7(%arg0: i32) -> (i32, i32) {
    %c0_i32 = arith.constant 0 : i32
    %c0_i32_0 = arith.constant 0 : i32
    return %arg0, %c0_i32 : i32, i32
  }
  func.func @transform_8(%arg0: i32) -> (i32, i32) {
    %c0_i32 = arith.constant 0 : i32
    %c0_i32_0 = arith.constant 0 : i32
    return %arg0, %c0_i32 : i32, i32
  }
  func.func @transform_9(%arg0: i32) -> (i32, i32) {
    %c0_i32 = arith.constant 0 : i32
    %c0_i32_0 = arith.constant 0 : i32
    return %arg0, %c0_i32 : i32, i32
  }
}

module attributes {stable_mosaic.version = 11 : i64} {
  func.func @_attn_kernel(%arg0: i32, %arg1: memref<8x128xf32, #tpu.memory_space<vmem>>, %arg2: memref<8x32xbf16, #tpu.memory_space<vmem>>, %arg3: memref<8x32xbf16, #tpu.memory_space<vmem>>, %arg4: memref<8x12xbf16, #tpu.memory_space<vmem>>, %arg5: memref<128x8xf32, #tpu.memory_space<vmem>>, %arg6: memref<1x8xf32, #tpu.memory_space<vmem>>, %arg7: memref<12x32xf32, #tpu.memory_space<vmem>>, %arg8: memref<1x32xf32, #tpu.memory_space<vmem>>, %arg9: memref<32x32xf32, #tpu.memory_space<vmem>>, %arg10: memref<1x32xf32, #tpu.memory_space<vmem>>, %arg11: memref<32x32xf32, #tpu.memory_space<vmem>>, %arg12: memref<1x32xf32, #tpu.memory_space<vmem>>, %arg13: memref<32x32xf32, #tpu.memory_space<vmem>>, %arg14: memref<1x32xf32, #tpu.memory_space<vmem>>, %arg15: memref<8x128xf32, #tpu.memory_space<vmem>>, %arg16: memref<1x128xf32, #tpu.memory_space<vmem>>, %arg17: memref<8x128xf32, #tpu.memory_space<vmem>>) attributes {dimension_semantics = [#tpu.dimension_semantics<parallel>], iteration_bounds = array<i64: 1>, scalar_prefetch = 0 : i64, scratch_operands = 0 : i64, tpu.core_type = #tpu.core_type<tc>, window_params = [{transform_indices = @transform_0, window_bounds = array<i64: 8, 128>}, {transform_indices = @transform_1, window_bounds = array<i64: 8, 32>}, {transform_indices = @transform_2, window_bounds = array<i64: 8, 32>}, {transform_indices = @transform_3, window_bounds = array<i64: 8, 12>}, {pipeline_mode = #tpu.pipeline_mode<synchronous>, transform_indices = @transform_4, window_bounds = array<i64: 128, 8>}, {pipeline_mode = #tpu.pipeline_mode<synchronous>, transform_indices = @transform_5, window_bounds = array<i64: 1, 8>}, {pipeline_mode = #tpu.pipeline_mode<synchronous>, transform_indices = @transform_6, window_bounds = array<i64: 12, 32>}, {pipeline_mode = #tpu.pipeline_mode<synchronous>, transform_indices = @transform_7, window_bounds = array<i64: 1, 32>}, {pipeline_mode = #tpu.pipeline_mode<synchronous>, transform_indices = @transform_8, window_bounds = array<i64: 32, 32>}, {pipeline_mode = #tpu.pipeline_mode<synchronous>, transform_indices = @transform_9, window_bounds = array<i64: 1, 32>}, {pipeline_mode = #tpu.pipeline_mode<synchronous>, transform_indices = @transform_10, window_bounds = array<i64: 32, 32>}, {pipeline_mode = #tpu.pipeline_mode<synchronous>, transform_indices = @transform_11, window_bounds = array<i64: 1, 32>}, {pipeline_mode = #tpu.pipeline_mode<synchronous>, transform_indices = @transform_12, window_bounds = array<i64: 32, 32>}, {pipeline_mode = #tpu.pipeline_mode<synchronous>, transform_indices = @transform_13, window_bounds = array<i64: 1, 32>}, {pipeline_mode = #tpu.pipeline_mode<synchronous>, transform_indices = @transform_14, window_bounds = array<i64: 8, 128>}, {pipeline_mode = #tpu.pipeline_mode<synchronous>, transform_indices = @transform_15, window_bounds = array<i64: 1, 128>}, {transform_indices = @transform_16, window_bounds = array<i64: 8, 128>}]} {
    %c0 = arith.constant 0 : index
    %c0_0 = arith.constant 0 : index
    %0 = vector.load %arg1[%c0, %c0_0] : memref<8x128xf32, #tpu.memory_space<vmem>>, vector<8x128xf32>
    %c0_1 = arith.constant 0 : index
    %c0_2 = arith.constant 0 : index
    %1 = vector.load %arg5[%c0_1, %c0_2] : memref<128x8xf32, #tpu.memory_space<vmem>>, vector<128x8xf32>
    %cst = arith.constant dense<0.000000e+00> : vector<8x8xf32>
    %2 = tpu.matmul %0, %1, %cst {dimension_numbers = #tpu.dot_dimension_numbers<[1], [0], [0], [1], [0, 0, 1, 1], [], []>} : vector<8x128xf32>, vector<128x8xf32>, vector<8x8xf32> -> vector<8x8xf32>
    %c0_3 = arith.constant 0 : index
    %c0_4 = arith.constant 0 : index
    %3 = vector.load %arg6[%c0_3, %c0_4] : memref<1x8xf32, #tpu.memory_space<vmem>>, vector<1x8xf32>
    %4 = vector.broadcast %3 : vector<1x8xf32> to vector<8x8xf32>
    %5 = arith.addf %2, %4 : vector<8x8xf32>
    %6 = tpu.concatenate %5, %5, %5, %5 in 1 : vector<8x8xf32>, vector<8x8xf32>, vector<8x8xf32>, vector<8x8xf32> -> vector<8x32xf32>
    %c0_5 = arith.constant 0 : index
    %c0_6 = arith.constant 0 : index
    %7 = vector.load %arg4[%c0_5, %c0_6] : memref<8x12xbf16, #tpu.memory_space<vmem>>, vector<8x12xbf16>
    %8 = arith.extf %7 : vector<8x12xbf16> to vector<8x12xf32>
    %c0_7 = arith.constant 0 : index
    %c0_8 = arith.constant 0 : index
    %9 = vector.load %arg7[%c0_7, %c0_8] : memref<12x32xf32, #tpu.memory_space<vmem>>, vector<12x32xf32>
    %cst_9 = arith.constant dense<0.000000e+00> : vector<8x32xf32>
    %10 = tpu.matmul %8, %9, %cst_9 {dimension_numbers = #tpu.dot_dimension_numbers<[1], [0], [0], [1], [0, 0, 1, 1], [], []>} : vector<8x12xf32>, vector<12x32xf32>, vector<8x32xf32> -> vector<8x32xf32>
    %c0_10 = arith.constant 0 : index
    %c0_11 = arith.constant 0 : index
    %11 = vector.load %arg8[%c0_10, %c0_11] : memref<1x32xf32, #tpu.memory_space<vmem>>, vector<1x32xf32>
    %12 = vector.broadcast %11 : vector<1x32xf32> to vector<8x32xf32>
    %13 = arith.addf %10, %12 : vector<8x32xf32>
    %cst_12 = arith.constant 0.000000e+00 : f32
    %14 = vector.broadcast %cst_12 : f32 to vector<8x32xf32>
    %15 = arith.maximumf %13, %14 : vector<8x32xf32>
    %c0_13 = arith.constant 0 : index
    %c0_14 = arith.constant 0 : index
    %16 = vector.load %arg9[%c0_13, %c0_14] : memref<32x32xf32, #tpu.memory_space<vmem>>, vector<32x32xf32>
    %cst_15 = arith.constant dense<0.000000e+00> : vector<8x32xf32>
    %17 = tpu.matmul %15, %16, %cst_15 {dimension_numbers = #tpu.dot_dimension_numbers<[1], [0], [0], [1], [0, 0, 1, 1], [], []>} : vector<8x32xf32>, vector<32x32xf32>, vector<8x32xf32> -> vector<8x32xf32>
    %c0_16 = arith.constant 0 : index
    %c0_17 = arith.constant 0 : index
    %18 = vector.load %arg10[%c0_16, %c0_17] : memref<1x32xf32, #tpu.memory_space<vmem>>, vector<1x32xf32>
    %19 = vector.broadcast %18 : vector<1x32xf32> to vector<8x32xf32>
    %20 = arith.addf %17, %19 : vector<8x32xf32>
    %c0_18 = arith.constant 0 : index
    %c0_19 = arith.constant 0 : index
    %21 = vector.load %arg2[%c0_18, %c0_19] : memref<8x32xbf16, #tpu.memory_space<vmem>>, vector<8x32xbf16>
    %22 = arith.extf %21 : vector<8x32xbf16> to vector<8x32xf32>
    %23 = arith.subf %6, %22 : vector<8x32xf32>
    %24 = arith.addf %23, %20 : vector<8x32xf32>
    %c0_20 = arith.constant 0 : index
    %c0_21 = arith.constant 0 : index
    %25 = vector.load %arg11[%c0_20, %c0_21] : memref<32x32xf32, #tpu.memory_space<vmem>>, vector<32x32xf32>
    %cst_22 = arith.constant dense<0.000000e+00> : vector<8x32xf32>
    %26 = tpu.matmul %24, %25, %cst_22 {dimension_numbers = #tpu.dot_dimension_numbers<[1], [0], [0], [1], [0, 0, 1, 1], [], []>} : vector<8x32xf32>, vector<32x32xf32>, vector<8x32xf32> -> vector<8x32xf32>
    %c0_23 = arith.constant 0 : index
    %c0_24 = arith.constant 0 : index
    %27 = vector.load %arg12[%c0_23, %c0_24] : memref<1x32xf32, #tpu.memory_space<vmem>>, vector<1x32xf32>
    %28 = vector.broadcast %27 : vector<1x32xf32> to vector<8x32xf32>
    %29 = arith.addf %26, %28 : vector<8x32xf32>
    %cst_25 = arith.constant 0.000000e+00 : f32
    %30 = vector.broadcast %cst_25 : f32 to vector<8x32xf32>
    %31 = arith.maximumf %29, %30 : vector<8x32xf32>
    %c0_26 = arith.constant 0 : index
    %c0_27 = arith.constant 0 : index
    %32 = vector.load %arg13[%c0_26, %c0_27] : memref<32x32xf32, #tpu.memory_space<vmem>>, vector<32x32xf32>
    %cst_28 = arith.constant dense<0.000000e+00> : vector<8x32xf32>
    %33 = tpu.matmul %31, %32, %cst_28 {dimension_numbers = #tpu.dot_dimension_numbers<[1], [0], [0], [1], [0, 0, 1, 1], [], []>} : vector<8x32xf32>, vector<32x32xf32>, vector<8x32xf32> -> vector<8x32xf32>
    %c0_29 = arith.constant 0 : index
    %c0_30 = arith.constant 0 : index
    %34 = vector.load %arg14[%c0_29, %c0_30] : memref<1x32xf32, #tpu.memory_space<vmem>>, vector<1x32xf32>
    %35 = vector.broadcast %34 : vector<1x32xf32> to vector<8x32xf32>
    %36 = arith.addf %33, %35 : vector<8x32xf32>
    %cst_31 = arith.constant 0.353553385 : f32
    %37 = vector.broadcast %cst_31 : f32 to vector<8x32xf32>
    %38 = arith.mulf %36, %37 : vector<8x32xf32>
    %c0_32 = arith.constant 0 : index
    %c0_33 = arith.constant 0 : index
    %39 = vector.load %arg3[%c0_32, %c0_33] : memref<8x32xbf16, #tpu.memory_space<vmem>>, vector<8x32xbf16>
    %40 = arith.extf %39 : vector<8x32xbf16> to vector<8x32xf32>
    %41 = arith.addf %40, %20 : vector<8x32xf32>
    %42 = vector.extract_strided_slice %38 {offsets = [0, 0], sizes = [8, 8], strides = [1, 1]} : vector<8x32xf32> to vector<8x8xf32>
    %43 = vector.extract_strided_slice %38 {offsets = [0, 8], sizes = [8, 8], strides = [1, 1]} : vector<8x32xf32> to vector<8x8xf32>
    %44 = vector.extract_strided_slice %38 {offsets = [0, 16], sizes = [8, 8], strides = [1, 1]} : vector<8x32xf32> to vector<8x8xf32>
    %45 = vector.extract_strided_slice %38 {offsets = [0, 24], sizes = [8, 8], strides = [1, 1]} : vector<8x32xf32> to vector<8x8xf32>
    %46 = vector.extract_strided_slice %41 {offsets = [0, 0], sizes = [8, 8], strides = [1, 1]} : vector<8x32xf32> to vector<8x8xf32>
    %47 = vector.extract_strided_slice %41 {offsets = [0, 8], sizes = [8, 8], strides = [1, 1]} : vector<8x32xf32> to vector<8x8xf32>
    %48 = vector.extract_strided_slice %41 {offsets = [0, 16], sizes = [8, 8], strides = [1, 1]} : vector<8x32xf32> to vector<8x8xf32>
    %49 = vector.extract_strided_slice %41 {offsets = [0, 24], sizes = [8, 8], strides = [1, 1]} : vector<8x32xf32> to vector<8x8xf32>
    %50 = arith.maximumf %42, %43 : vector<8x8xf32>
    %51 = arith.maximumf %50, %44 : vector<8x8xf32>
    %52 = arith.maximumf %51, %45 : vector<8x8xf32>
    %53 = arith.subf %42, %52 : vector<8x8xf32>
    %54 = math.exp %53 : vector<8x8xf32>
    %55 = arith.mulf %54, %46 : vector<8x8xf32>
    %56 = arith.subf %43, %52 : vector<8x8xf32>
    %57 = math.exp %56 : vector<8x8xf32>
    %58 = arith.addf %54, %57 : vector<8x8xf32>
    %59 = arith.mulf %57, %47 : vector<8x8xf32>
    %60 = arith.addf %55, %59 : vector<8x8xf32>
    %61 = arith.subf %44, %52 : vector<8x8xf32>
    %62 = math.exp %61 : vector<8x8xf32>
    %63 = arith.addf %58, %62 : vector<8x8xf32>
    %64 = arith.mulf %62, %48 : vector<8x8xf32>
    %65 = arith.addf %60, %64 : vector<8x8xf32>
    %66 = arith.subf %45, %52 : vector<8x8xf32>
    %67 = math.exp %66 : vector<8x8xf32>
    %68 = arith.addf %63, %67 : vector<8x8xf32>
    %69 = arith.mulf %67, %49 : vector<8x8xf32>
    %70 = arith.addf %65, %69 : vector<8x8xf32>
    %71 = tpu.reciprocal %68 {approx = true} : vector<8x8xf32> -> vector<8x8xf32>
    %72 = arith.mulf %70, %71 : vector<8x8xf32>
    %c0_34 = arith.constant 0 : index
    %c0_35 = arith.constant 0 : index
    %73 = vector.load %arg15[%c0_34, %c0_35] : memref<8x128xf32, #tpu.memory_space<vmem>>, vector<8x128xf32>
    %cst_36 = arith.constant dense<0.000000e+00> : vector<8x128xf32>
    %74 = tpu.matmul %72, %73, %cst_36 {dimension_numbers = #tpu.dot_dimension_numbers<[1], [0], [0], [1], [0, 0, 1, 1], [], []>} : vector<8x8xf32>, vector<8x128xf32>, vector<8x128xf32> -> vector<8x128xf32>
    %c0_37 = arith.constant 0 : index
    %c0_38 = arith.constant 0 : index
    %75 = vector.load %arg16[%c0_37, %c0_38] : memref<1x128xf32, #tpu.memory_space<vmem>>, vector<1x128xf32>
    %76 = vector.broadcast %75 : vector<1x128xf32> to vector<8x128xf32>
    %77 = arith.addf %74, %76 : vector<8x128xf32>
    %78 = arith.addf %77, %0 : vector<8x128xf32>
    %c0_39 = arith.constant 0 : index
    %c0_40 = arith.constant 0 : index
    %79 = vector.load %arg17[%c0_39, %c0_40] : memref<8x128xf32, #tpu.memory_space<vmem>>, vector<8x128xf32>
    tpu.vector_store %arg17[%c0_39, %c0_40], %78 {strides = array<i32>} : memref<8x128xf32, #tpu.memory_space<vmem>>, vector<8x128xf32>,
    return
  }
  func.func @transform_0(%arg0: i32) -> (i32, i32) {
    %c0_i32 = arith.constant 0 : i32
    %c0_i32_0 = arith.constant 0 : i32
    return %arg0, %c0_i32 : i32, i32
  }
  func.func @transform_1(%arg0: i32) -> (i32, i32) {
    %c0_i32 = arith.constant 0 : i32
    %c0_i32_0 = arith.constant 0 : i32
    return %arg0, %c0_i32 : i32, i32
  }
  func.func @transform_2(%arg0: i32) -> (i32, i32) {
    %c0_i32 = arith.constant 0 : i32
    %c0_i32_0 = arith.constant 0 : i32
    return %arg0, %c0_i32 : i32, i32
  }
  func.func @transform_3(%arg0: i32) -> (i32, i32) {
    %c0_i32 = arith.constant 0 : i32
    %c0_i32_0 = arith.constant 0 : i32
    return %arg0, %c0_i32 : i32, i32
  }
  func.func @transform_4(%arg0: i32) -> (i32, i32) {
    %c0_i32 = arith.constant 0 : i32
    %c0_i32_0 = arith.constant 0 : i32
    %c0_i32_1 = arith.constant 0 : i32
    return %c0_i32, %c0_i32_0 : i32, i32
  }
  func.func @transform_5(%arg0: i32) -> (i32, i32) {
    %c0_i32 = arith.constant 0 : i32
    %c0_i32_0 = arith.constant 0 : i32
    %c0_i32_1 = arith.constant 0 : i32
    return %c0_i32, %c0_i32_0 : i32, i32
  }
  func.func @transform_6(%arg0: i32) -> (i32, i32) {
    %c0_i32 = arith.constant 0 : i32
    %c0_i32_0 = arith.constant 0 : i32
    %c0_i32_1 = arith.constant 0 : i32
    return %c0_i32, %c0_i32_0 : i32, i32
  }
  func.func @transform_7(%arg0: i32) -> (i32, i32) {
    %c0_i32 = arith.constant 0 : i32
    %c0_i32_0 = arith.constant 0 : i32
    %c0_i32_1 = arith.constant 0 : i32
    return %c0_i32, %c0_i32_0 : i32, i32
  }
  func.func @transform_8(%arg0: i32) -> (i32, i32) {
    %c0_i32 = arith.constant 0 : i32
    %c0_i32_0 = arith.constant 0 : i32
    %c0_i32_1 = arith.constant 0 : i32
    return %c0_i32, %c0_i32_0 : i32, i32
  }
  func.func @transform_9(%arg0: i32) -> (i32, i32) {
    %c0_i32 = arith.constant 0 : i32
    %c0_i32_0 = arith.constant 0 : i32
    %c0_i32_1 = arith.constant 0 : i32
    return %c0_i32, %c0_i32_0 : i32, i32
  }
  func.func @transform_10(%arg0: i32) -> (i32, i32) {
    %c0_i32 = arith.constant 0 : i32
    %c0_i32_0 = arith.constant 0 : i32
    %c0_i32_1 = arith.constant 0 : i32
    return %c0_i32, %c0_i32_0 : i32, i32
  }
  func.func @transform_11(%arg0: i32) -> (i32, i32) {
    %c0_i32 = arith.constant 0 : i32
    %c0_i32_0 = arith.constant 0 : i32
    %c0_i32_1 = arith.constant 0 : i32
    return %c0_i32, %c0_i32_0 : i32, i32
  }
  func.func @transform_12(%arg0: i32) -> (i32, i32) {
    %c0_i32 = arith.constant 0 : i32
    %c0_i32_0 = arith.constant 0 : i32
    %c0_i32_1 = arith.constant 0 : i32
    return %c0_i32, %c0_i32_0 : i32, i32
  }
  func.func @transform_13(%arg0: i32) -> (i32, i32) {
    %c0_i32 = arith.constant 0 : i32
    %c0_i32_0 = arith.constant 0 : i32
    %c0_i32_1 = arith.constant 0 : i32
    return %c0_i32, %c0_i32_0 : i32, i32
  }
  func.func @transform_14(%arg0: i32) -> (i32, i32) {
    %c0_i32 = arith.constant 0 : i32
    %c0_i32_0 = arith.constant 0 : i32
    %c0_i32_1 = arith.constant 0 : i32
    return %c0_i32, %c0_i32_0 : i32, i32
  }
  func.func @transform_15(%arg0: i32) -> (i32, i32) {
    %c0_i32 = arith.constant 0 : i32
    %c0_i32_0 = arith.constant 0 : i32
    %c0_i32_1 = arith.constant 0 : i32
    return %c0_i32, %c0_i32_0 : i32, i32
  }
  func.func @transform_16(%arg0: i32) -> (i32, i32) {
    %c0_i32 = arith.constant 0 : i32
    %c0_i32_0 = arith.constant 0 : i32
    return %arg0, %c0_i32 : i32, i32
  }
}

module attributes {stable_mosaic.version = 11 : i64} {
  func.func @_head_kernel(%arg0: i32, %arg1: memref<2x4x128xf32, #tpu.memory_space<vmem>>, %arg2: memref<128x256xf32, #tpu.memory_space<vmem>>, %arg3: memref<1x256xf32, #tpu.memory_space<vmem>>, %arg4: memref<256x64xf32, #tpu.memory_space<vmem>>, %arg5: memref<1x64xf32, #tpu.memory_space<vmem>>, %arg6: memref<64x10xf32, #tpu.memory_space<vmem>>, %arg7: memref<1x10xf32, #tpu.memory_space<vmem>>, %arg8: memref<2x10xf32, #tpu.memory_space<vmem>>) attributes {dimension_semantics = [#tpu.dimension_semantics<arbitrary>], iteration_bounds = array<i64: 1>, scalar_prefetch = 0 : i64, scratch_operands = 0 : i64, tpu.core_type = #tpu.core_type<tc>, window_params = [{pipeline_mode = #tpu.pipeline_mode<synchronous>, transform_indices = @transform_0, window_bounds = array<i64: 2, 4, 128>}, {pipeline_mode = #tpu.pipeline_mode<synchronous>, transform_indices = @transform_1, window_bounds = array<i64: 128, 256>}, {pipeline_mode = #tpu.pipeline_mode<synchronous>, transform_indices = @transform_2, window_bounds = array<i64: 1, 256>}, {pipeline_mode = #tpu.pipeline_mode<synchronous>, transform_indices = @transform_3, window_bounds = array<i64: 256, 64>}, {pipeline_mode = #tpu.pipeline_mode<synchronous>, transform_indices = @transform_4, window_bounds = array<i64: 1, 64>}, {pipeline_mode = #tpu.pipeline_mode<synchronous>, transform_indices = @transform_5, window_bounds = array<i64: 64, 10>}, {pipeline_mode = #tpu.pipeline_mode<synchronous>, transform_indices = @transform_6, window_bounds = array<i64: 1, 10>}, {pipeline_mode = #tpu.pipeline_mode<synchronous>, transform_indices = @transform_7, window_bounds = array<i64: 2, 10>}]} {
    %c0 = arith.constant 0 : index
    %c0_0 = arith.constant 0 : index
    %c0_1 = arith.constant 0 : index
    %0 = vector.load %arg1[%c0, %c0_0, %c0_1] : memref<2x4x128xf32, #tpu.memory_space<vmem>>, vector<2x4x128xf32>
    %cst = arith.constant dense<0.000000e+00> : vector<2x128xf32>
    %1 = vector.multi_reduction <add>, %0, %cst [1] : vector<2x4x128xf32> to vector<2x128xf32>
    %cst_2 = arith.constant 4.000000e+00 : f32
    %2 = vector.broadcast %cst_2 : f32 to vector<2x128xf32>
    %3 = arith.divf %1, %2 : vector<2x128xf32>
    %c0_3 = arith.constant 0 : index
    %c0_4 = arith.constant 0 : index
    %4 = vector.load %arg2[%c0_3, %c0_4] : memref<128x256xf32, #tpu.memory_space<vmem>>, vector<128x256xf32>
    %cst_5 = arith.constant dense<0.000000e+00> : vector<2x256xf32>
    %5 = tpu.matmul %3, %4, %cst_5 {dimension_numbers = #tpu.dot_dimension_numbers<[1], [0], [0], [1], [0, 0, 1, 1], [], []>} : vector<2x128xf32>, vector<128x256xf32>, vector<2x256xf32> -> vector<2x256xf32>
    %c0_6 = arith.constant 0 : index
    %c0_7 = arith.constant 0 : index
    %6 = vector.load %arg3[%c0_6, %c0_7] : memref<1x256xf32, #tpu.memory_space<vmem>>, vector<1x256xf32>
    %7 = vector.broadcast %6 : vector<1x256xf32> to vector<2x256xf32>
    %8 = arith.addf %5, %7 : vector<2x256xf32>
    %cst_8 = arith.constant 0.000000e+00 : f32
    %9 = vector.broadcast %cst_8 : f32 to vector<2x256xf32>
    %10 = arith.maximumf %8, %9 : vector<2x256xf32>
    %c0_9 = arith.constant 0 : index
    %c0_10 = arith.constant 0 : index
    %11 = vector.load %arg4[%c0_9, %c0_10] : memref<256x64xf32, #tpu.memory_space<vmem>>, vector<256x64xf32>
    %cst_11 = arith.constant dense<0.000000e+00> : vector<2x64xf32>
    %12 = tpu.matmul %10, %11, %cst_11 {dimension_numbers = #tpu.dot_dimension_numbers<[1], [0], [0], [1], [0, 0, 1, 1], [], []>} : vector<2x256xf32>, vector<256x64xf32>, vector<2x64xf32> -> vector<2x64xf32>
    %c0_12 = arith.constant 0 : index
    %c0_13 = arith.constant 0 : index
    %13 = vector.load %arg5[%c0_12, %c0_13] : memref<1x64xf32, #tpu.memory_space<vmem>>, vector<1x64xf32>
    %14 = vector.broadcast %13 : vector<1x64xf32> to vector<2x64xf32>
    %15 = arith.addf %12, %14 : vector<2x64xf32>
    %cst_14 = arith.constant 0.000000e+00 : f32
    %16 = vector.broadcast %cst_14 : f32 to vector<2x64xf32>
    %17 = arith.maximumf %15, %16 : vector<2x64xf32>
    %c0_15 = arith.constant 0 : index
    %c0_16 = arith.constant 0 : index
    %18 = vector.load %arg6[%c0_15, %c0_16] : memref<64x10xf32, #tpu.memory_space<vmem>>, vector<64x10xf32>
    %cst_17 = arith.constant dense<0.000000e+00> : vector<2x10xf32>
    %19 = tpu.matmul %17, %18, %cst_17 {dimension_numbers = #tpu.dot_dimension_numbers<[1], [0], [0], [1], [0, 0, 1, 1], [], []>} : vector<2x64xf32>, vector<64x10xf32>, vector<2x10xf32> -> vector<2x10xf32>
    %c0_18 = arith.constant 0 : index
    %c0_19 = arith.constant 0 : index
    %20 = vector.load %arg7[%c0_18, %c0_19] : memref<1x10xf32, #tpu.memory_space<vmem>>, vector<1x10xf32>
    %21 = vector.broadcast %20 : vector<1x10xf32> to vector<2x10xf32>
    %22 = arith.addf %19, %21 : vector<2x10xf32>
    %c0_20 = arith.constant 0 : index
    %c0_21 = arith.constant 0 : index
    %23 = vector.load %arg8[%c0_20, %c0_21] : memref<2x10xf32, #tpu.memory_space<vmem>>, vector<2x10xf32>
    tpu.vector_store %arg8[%c0_20, %c0_21], %22 {strides = array<i32>} : memref<2x10xf32, #tpu.memory_space<vmem>>, vector<2x10xf32>,
    return
  }
  func.func @transform_0(%arg0: i32) -> (i32, i32, i32) {
    %c0_i32 = arith.constant 0 : i32
    %c0_i32_0 = arith.constant 0 : i32
    %c0_i32_1 = arith.constant 0 : i32
    %c0_i32_2 = arith.constant 0 : i32
    return %c0_i32, %c0_i32_0, %c0_i32_1 : i32, i32, i32
  }
  func.func @transform_1(%arg0: i32) -> (i32, i32) {
    %c0_i32 = arith.constant 0 : i32
    %c0_i32_0 = arith.constant 0 : i32
    %c0_i32_1 = arith.constant 0 : i32
    return %c0_i32, %c0_i32_0 : i32, i32
  }
  func.func @transform_2(%arg0: i32) -> (i32, i32) {
    %c0_i32 = arith.constant 0 : i32
    %c0_i32_0 = arith.constant 0 : i32
    %c0_i32_1 = arith.constant 0 : i32
    return %c0_i32, %c0_i32_0 : i32, i32
  }
  func.func @transform_3(%arg0: i32) -> (i32, i32) {
    %c0_i32 = arith.constant 0 : i32
    %c0_i32_0 = arith.constant 0 : i32
    %c0_i32_1 = arith.constant 0 : i32
    return %c0_i32, %c0_i32_0 : i32, i32
  }
  func.func @transform_4(%arg0: i32) -> (i32, i32) {
    %c0_i32 = arith.constant 0 : i32
    %c0_i32_0 = arith.constant 0 : i32
    %c0_i32_1 = arith.constant 0 : i32
    return %c0_i32, %c0_i32_0 : i32, i32
  }
  func.func @transform_5(%arg0: i32) -> (i32, i32) {
    %c0_i32 = arith.constant 0 : i32
    %c0_i32_0 = arith.constant 0 : i32
    %c0_i32_1 = arith.constant 0 : i32
    return %c0_i32, %c0_i32_0 : i32, i32
  }
  func.func @transform_6(%arg0: i32) -> (i32, i32) {
    %c0_i32 = arith.constant 0 : i32
    %c0_i32_0 = arith.constant 0 : i32
    %c0_i32_1 = arith.constant 0 : i32
    return %c0_i32, %c0_i32_0 : i32, i32
  }
  func.func @transform_7(%arg0: i32) -> (i32, i32) {
    %c0_i32 = arith.constant 0 : i32
    %c0_i32_0 = arith.constant 0 : i32
    %c0_i32_1 = arith.constant 0 : i32
    return %c0_i32, %c0_i32_0 : i32, i32
  }
}

</mosaic_0001>

<llo_original>
// kernel: point_transformer_classif.7
$region0: #{point_transformer_classif.7}
  #allocation0 [shape = 'u32[]', space=smem, size = 0x4, offset = 0x4, fixed_abs, tag = 'smem constant byte address 0x4 - core index']
  #allocation1 [shape = 'u32[144,128]{1,0:T(1,128)}', space=vmem, size = 0x12000, scoped, tag = 'internal scratch']
  %s0 = inlined_call_operand.hbm [shape: f32[128,6], index: 0, kind: input, shape index: {}]
  %s1 = inlined_call_operand.hbm [shape: f32[6,32], index: 1, kind: input, shape index: {}]
  %s2 = inlined_call_operand.hbm [shape: f32[1,32], index: 2, kind: input, shape index: {}]
  %s3 = inlined_call_operand.hbm [shape: f32[32,32], index: 3, kind: input, shape index: {}]
  %s4 = inlined_call_operand.hbm [shape: f32[1,32], index: 4, kind: input, shape index: {}]
  %s5 = inlined_call_operand.hbm [shape: f32[32,8], index: 5, kind: input, shape index: {}]
  %s6 = inlined_call_operand.hbm [shape: f32[1,8], index: 6, kind: input, shape index: {}]
  %s7 = inlined_call_operand.hbm [shape: f32[32,8], index: 7, kind: input, shape index: {}]
  %s8 = inlined_call_operand.hbm [shape: f32[1,8], index: 8, kind: input, shape index: {}]
  %s9 = inlined_call_operand.hbm [shape: f32[128,32], index: 9, kind: output, shape index: {0}]
  %s10 = inlined_call_operand.hbm [shape: bf16[128,8], index: 10, kind: output, shape index: {1}]
  %s11 = inlined_call_operand.hbm [shape: bf16[128,8], index: 11, kind: output, shape index: {2}]
  %12 = xla_tuple %s9, %s10, %s11
  %s13 = sld [smem:[#allocation0]]
  $region121: #{point_transformer_classif.7} parent=0
    _
  %s15 = ssub.s32 1, %s13
  %s16 = scalar_select 0, %s15, %s13
  $region1: #{point_transformer_classif.7} parent=0
    #allocation2 [shape = 'u8[65536]{0}', space=vmem, size = 0x10000, scoped, tag = 'input window, operand 0']
    #allocation3 [shape = 's32[2]{0}', space=sflag, size = 0x8, scoped, tag = 'scoped memory for point_transformer_classif.7']
    #allocation4 [shape = 's32[2]{0}', space=sflag, size = 0x8, scoped, tag = 'scoped memory for point_transformer_classif.7']
    #allocation5 [shape = 'u8[4096]{0}', space=vmem, size = 0x1000, scoped, tag = 'input window, operand 1, single buffered']
    #allocation6 [shape = 's32[1]{0}', space=sflag, size = 0x4, scoped, tag = 'scoped memory for point_transformer_classif.7']
    #allocation7 [shape = 'u8[512]{0}', space=vmem, size = 0x400, scoped, tag = 'input window, operand 2, single buffered']
    #allocation8 [shape = 'u8[16384]{0}', space=vmem, size = 0x4000, scoped, tag = 'input window, operand 3, single buffered']
    #allocation9 [shape = 's32[1]{0}', space=sflag, size = 0x4, scoped, tag = 'scoped memory for point_transformer_classif.7']
    #allocation10 [shape = 'u8[512]{0}', space=vmem, size = 0x400, scoped, tag = 'input window, operand 4, single buffered']
    #allocation11 [shape = 'u8[16384]{0}', space=vmem, size = 0x4000, scoped, tag = 'input window, operand 5, single buffered']
    #allocation12 [shape = 's32[1]{0}', space=sflag, size = 0x4, scoped, tag = 'scoped memory for point_transformer_classif.7']
    #allocation13 [shape = 'u8[512]{0}', space=vmem, size = 0x400, scoped, tag = 'input window, operand 6, single buffered']
    #allocation14 [shape = 'u8[16384]{0}', space=vmem, size = 0x4000, scoped, tag = 'input window, operand 7, single buffered']
    #allocation15 [shape = 's32[1]{0}', space=sflag, size = 0x4, scoped, tag = 'scoped memory for point_transformer_classif.7']
    #allocation16 [shape = 'u8[512]{0}', space=vmem, size = 0x400, scoped, tag = 'input window, operand 8, single buffered']
    #allocation17 [shape = 'u8[65536]{0}', space=vmem, size = 0x10000, scoped, tag = 'output window, operand 0']
    #allocation18 [shape = 'u8[32768]{0}', space=vmem, size = 0x8000, scoped, tag = 'output window, operand 1']
    #allocation19 [shape = 's32[2]{0}', space=sflag, size = 0x8, scoped, tag = 'scoped memory for point_transformer_classif.7']
    #allocation20 [shape = 'u8[32768]{0}', space=vmem, size = 0x8000, scoped, tag = 'output window, operand 2']
    %17 = vsyncpa [#allocation3], 0
    %s18 = scalar_lea.sflag [#allocation3], 1
    %19 = vsyncpa %s18, 0
    %20 = vsyncpa [#allocation6], 0
    %21 = vsyncpa [#allocation9], 0
    %22 = vsyncpa [#allocation12], 0
    %23 = vsyncpa [#allocation15], 0
    %24 = vsyncpa [#allocation4], 0
    %s25 = scalar_lea.sflag [#allocation4], 1
    %26 = vsyncpa %s25, 0
    %27 = vsyncpa [#allocation19], 0
    %s28 = scalar_lea.sflag [#allocation19], 1
    %29 = vsyncpa %s28, 0
    loop: start=0, step=1, limit=4
    $region2: #{point_transformer_classif.7} parent=1 // loop_pre_header
      _
    $region3: #{point_transformer_classif.7} parent=1 // loop_header
      %s31 = sphi 0, %s35
      %p32 = scmp.ge.s32.totalorder %s31, 4
      %s41 = sphi 0, %s43
      %s44 = sphi 0, %s41
      %s45 = sphi 0, %s44
      %s61 = sphi 0, %s45
      %s65 = sphi 0, %s65
      %s67 = sphi 0, %s65
      %s68 = sphi 0, %s67
      %s82 = sphi 0, %s68
      %s86 = sphi 0, %s86
      %s88 = sphi 0, %s86
      %s89 = sphi 0, %s88
      %s103 = sphi 0, %s89
      %s107 = sphi 0, %s107
      %s109 = sphi 0, %s107
      %s110 = sphi 0, %s109
      %s124 = sphi 0, %s110
      %s128 = sphi 0, %s128
      %s130 = sphi 0, %s128
      %s131 = sphi 0, %s130
      %s145 = sphi 0, %s131
      %s149 = sphi 0, %s149
      %s151 = sphi 0, %s149
      %s152 = sphi 0, %s151
      %s166 = sphi 0, %s152
      %s170 = sphi 0, %s170
      %s172 = sphi 0, %s170
      %s173 = sphi 0, %s172
      %s187 = sphi 0, %s173
      %s191 = sphi 0, %s191
      %s193 = sphi 0, %s191
      %s194 = sphi 0, %s193
      %s208 = sphi 0, %s194
      %s212 = sphi 0, %s212
      %s214 = sphi 0, %s212
      %s215 = sphi 0, %s214
      %s229 = sphi 0, %s215
      %s235 = sphi 0, %s237
      %s238 = sphi 0, %s235
      %s239 = sphi 0, %s238
      %s255 = sphi 0, %s239
      %s261 = sphi 0, %s263
      %s264 = sphi 0, %s261
      %s265 = sphi 0, %s264
      %s281 = sphi 0, %s265
      %s287 = sphi 0, %s289
      %s290 = sphi 0, %s287
      %s291 = sphi 0, %s290
      %s307 = sphi 0, %s291
    $region4: #{point_transformer_classif.7} parent=1 // loop_header_branch
      %34 = sbr.rel (%p32) target = $region8
    $region5: #{point_transformer_classif.7} parent=1 // loop_body
      %s36 = ssub.s32 %s31, 1
      %s37 = ssub.s32 %s31, 2
      %s38 = sadd.s32 %s31, 1
      %s39 = ssub.s32 %s31, %s38
      %p40 = scmp.eq.s32.totalorder %s39, 0
      %s42 = sadd.s32 %s41, 1
      %s43 = scalar_select %p40, %s41, %s42
      %p46 = pneg %p40
      %p47 = scmp.eq.s32.totalorder %s31, 1
      %p48 = por %p46, %p47
      %p49 = scmp.ne.s32.totalorder %s41, %s44
      %p50 = scmp.eq.s32.totalorder %s31, 0
      %p51 = por %p49, %p50
      %p52 = scmp.ne.s32.totalorder %s41, %s44
      %p53 = scmp.eq.s32.totalorder %s36, 1
      %p54 = por %p52, %p53
      %p55 = scmp.ne.s32.totalorder %s44, %s45
      %p56 = scmp.eq.s32.totalorder %s36, 0
      %p57 = por %p55, %p56
      %p58 = scmp.ne.s32.totalorder %s44, %s45
      %p59 = scmp.eq.s32.totalorder %s37, 1
      %p60 = por %p58, %p59
      %p62 = scmp.ne.s32.totalorder %s45, %s61
      %p63 = scmp.eq.s32.totalorder %s37, 0
      %p64 = por %p62, %p63
      %s66 = sadd.s32 %s65, 1
      %p69 = scmp.eq.s32.totalorder %s31, 1
      %p70 = scmp.ne.s32.totalorder %s65, %s67
      %p71 = scmp.eq.s32.totalorder %s31, 0
      %p72 = por %p70, %p71
      %p73 = scmp.ne.s32.totalorder %s65, %s67
      %p74 = scmp.eq.s32.totalorder %s36, 1
      %p75 = por %p73, %p74
      %p76 = scmp.ne.s32.totalorder %s67, %s68
      %p77 = scmp.eq.s32.totalorder %s36, 0
      %p78 = por %p76, %p77
      %p79 = scmp.ne.s32.totalorder %s67, %s68
      %p80 = scmp.eq.s32.totalorder %s37, 1
      %p81 = por %p79, %p80
      %p83 = scmp.ne.s32.totalorder %s68, %s82
      %p84 = scmp.eq.s32.totalorder %s37, 0
      %p85 = por %p83, %p84
      %s87 = sadd.s32 %s86, 1
      %p90 = scmp.eq.s32.totalorder %s31, 1
      %p91 = scmp.ne.s32.totalorder %s86, %s88
      %p92 = scmp.eq.s32.totalorder %s31, 0
      %p93 = por %p91, %p92
      %p94 = scmp.ne.s32.totalorder %s86, %s88
      %p95 = scmp.eq.s32.totalorder %s36, 1
      %p96 = por %p94, %p95
      %p97 = scmp.ne.s32.totalorder %s88, %s89
      %p98 = scmp.eq.s32.totalorder %s36, 0
      %p99 = por %p97, %p98
      %p100 = scmp.ne.s32.totalorder %s88, %s89
      %p101 = scmp.eq.s32.totalorder %s37, 1
      %p102 = por %p100, %p101
      %p104 = scmp.ne.s32.totalorder %s89, %s103
      %p105 = scmp.eq.s32.totalorder %s37, 0
      %p106 = por %p104, %p105
      %s108 = sadd.s32 %s107, 1
      %p111 = scmp.eq.s32.totalorder %s31, 1
      %p112 = scmp.ne.s32.totalorder %s107, %s109
      %p113 = scmp.eq.s32.totalorder %s31, 0
      %p114 = por %p112, %p113
      %p115 = scmp.ne.s32.totalorder %s107, %s109
      %p116 = scmp.eq.s32.totalorder %s36, 1
      %p117 = por %p115, %p116
      %p118 = scmp.ne.s32.totalorder %s109, %s110
      %p119 = scmp.eq.s32.totalorder %s36, 0
      %p120 = por %p118, %p119
      %p121 = scmp.ne.s32.totalorder %s109, %s110
      %p122 = scmp.eq.s32.totalorder %s37, 1
      %p123 = por %p121, %p122
      %p125 = scmp.ne.s32.totalorder %s110, %s124
      %p126 = scmp.eq.s32.totalorder %s37, 0
      %p127 = por %p125, %p126
      %s129 = sadd.s32 %s128, 1
      %p132 = scmp.eq.s32.totalorder %s31, 1
      %p133 = scmp.ne.s32.totalorder %s128, %s130
      %p134 = scmp.eq.s32.totalorder %s31, 0
      %p135 = por %p133, %p134
      %p136 = scmp.ne.s32.totalorder %s128, %s130
      %p137 = scmp.eq.s32.totalorder %s36, 1
      %p138 = por %p136, %p137
      %p139 = scmp.ne.s32.totalorder %s130, %s131
      %p140 = scmp.eq.s32.totalorder %s36, 0
      %p141 = por %p139, %p140
      %p142 = scmp.ne.s32.totalorder %s130, %s131
      %p143 = scmp.eq.s32.totalorder %s37, 1
      %p144 = por %p142, %p143
      %p146 = scmp.ne.s32.totalorder %s131, %s145
      %p147 = scmp.eq.s32.totalorder %s37, 0
      %p148 = por %p146, %p147
      %s150 = sadd.s32 %s149, 1
      %p153 = scmp.eq.s32.totalorder %s31, 1
      %p154 = scmp.ne.s32.totalorder %s149, %s151
      %p155 = scmp.eq.s32.totalorder %s31, 0
      %p156 = por %p154, %p155
      %p157 = scmp.ne.s32.totalorder %s149, %s151
      %p158 = scmp.eq.s32.totalorder %s36, 1
      %p159 = por %p157, %p158
      %p160 = scmp.ne.s32.totalorder %s151, %s152
      %p161 = scmp.eq.s32.totalorder %s36, 0
      %p162 = por %p160, %p161
      %p163 = scmp.ne.s32.totalorder %s151, %s152
      %p164 = scmp.eq.s32.totalorder %s37, 1
      %p165 = por %p163, %p164
      %p167 = scmp.ne.s32.totalorder %s152, %s166
      %p168 = scmp.eq.s32.totalorder %s37, 0
      %p169 = por %p167, %p168
      %s171 = sadd.s32 %s170, 1
      %p174 = scmp.eq.s32.totalorder %s31, 1
      %p175 = scmp.ne.s32.totalorder %s170, %s172
      %p176 = scmp.eq.s32.totalorder %s31, 0
      %p177 = por %p175, %p176
      %p178 = scmp.ne.s32.totalorder %s170, %s172
      %p179 = scmp.eq.s32.totalorder %s36, 1
      %p180 = por %p178, %p179
      %p181 = scmp.ne.s32.totalorder %s172, %s173
      %p182 = scmp.eq.s32.totalorder %s36, 0
      %p183 = por %p181, %p182
      %p184 = scmp.ne.s32.totalorder %s172, %s173
      %p185 = scmp.eq.s32.totalorder %s37, 1
      %p186 = por %p184, %p185
      %p188 = scmp.ne.s32.totalorder %s173, %s187
      %p189 = scmp.eq.s32.totalorder %s37, 0
      %p190 = por %p188, %p189
      %s192 = sadd.s32 %s191, 1
      %p195 = scmp.eq.s32.totalorder %s31, 1
      %p196 = scmp.ne.s32.totalorder %s191, %s193
      %p197 = scmp.eq.s32.totalorder %s31, 0
      %p198 = por %p196, %p197
      %p199 = scmp.ne.s32.totalorder %s191, %s193
      %p200 = scmp.eq.s32.totalorder %s36, 1
      %p201 = por %p199, %p200
      %p202 = scmp.ne.s32.totalorder %s193, %s194
      %p203 = scmp.eq.s32.totalorder %s36, 0
      %p204 = por %p202, %p203
      %p205 = scmp.ne.s32.totalorder %s193, %s194
      %p206 = scmp.eq.s32.totalorder %s37, 1
      %p207 = por %p205, %p206
      %p209 = scmp.ne.s32.totalorder %s194, %s208
      %p210 = scmp.eq.s32.totalorder %s37, 0
      %p211 = por %p209, %p210
      %s213 = sadd.s32 %s212, 1
      %p216 = scmp.eq.s32.totalorder %s31, 1
      %p217 = scmp.ne.s32.totalorder %s212, %s214
      %p218 = scmp.eq.s32.totalorder %s31, 0
      %p219 = por %p217, %p218
      %p220 = scmp.ne.s32.totalorder %s212, %s214
      %p221 = scmp.eq.s32.totalorder %s36, 1
      %p222 = por %p220, %p221
      %p223 = scmp.ne.s32.totalorder %s214, %s215
      %p224 = scmp.eq.s32.totalorder %s36, 0
      %p225 = por %p223, %p224
      %p226 = scmp.ne.s32.totalorder %s214, %s215
      %p227 = scmp.eq.s32.totalorder %s37, 1
      %p228 = por %p226, %p227
      %p230 = scmp.ne.s32.totalorder %s215, %s229
      %p231 = scmp.eq.s32.totalorder %s37, 0
      %p232 = por %p230, %p231
      %s233 = ssub.s32 %s31, %s38
      %p234 = scmp.eq.s32.totalorder %s233, 0
      %s236 = sadd.s32 %s235, 1
      %s237 = scalar_select %p234, %s235, %s236
      %p240 = pneg %p234
      %p241 = scmp.eq.s32.totalorder %s31, 1
      %p242 = por %p240, %p241
      %p243 = scmp.ne.s32.totalorder %s235, %s238
      %p244 = scmp.eq.s32.totalorder %s31, 0
      %p245 = por %p243, %p244
      %p246 = scmp.ne.s32.totalorder %s235, %s238
      %p247 = scmp.eq.s32.totalorder %s36, 1
      %p248 = por %p246, %p247
      %p249 = scmp.ne.s32.totalorder %s238, %s239
      %p250 = scmp.eq.s32.totalorder %s36, 0
      %p251 = por %p249, %p250
      %p252 = scmp.ne.s32.totalorder %s238, %s239
      %p253 = scmp.eq.s32.totalorder %s37, 1
      %p254 = por %p252, %p253
      %p256 = scmp.ne.s32.totalorder %s239, %s255
      %p257 = scmp.eq.s32.totalorder %s37, 0
      %p258 = por %p256, %p257
      %s259 = ssub.s32 %s31, %s38
      %p260 = scmp.eq.s32.totalorder %s259, 0
      %s262 = sadd.s32 %s261, 1
      %s263 = scalar_select %p260, %s261, %s262
      %p266 = pneg %p260
      %p267 = scmp.eq.s32.totalorder %s31, 1
      %p268 = por %p266, %p267
      %p269 = scmp.ne.s32.totalorder %s261, %s264
      %p270 = scmp.eq.s32.totalorder %s31, 0
      %p271 = por %p269, %p270
      %p272 = scmp.ne.s32.totalorder %s261, %s264
      %p273 = scmp.eq.s32.totalorder %s36, 1
      %p274 = por %p272, %p273
      %p275 = scmp.ne.s32.totalorder %s264, %s265
      %p276 = scmp.eq.s32.totalorder %s36, 0
      %p277 = por %p275, %p276
      %p278 = scmp.ne.s32.totalorder %s264, %s265
      %p279 = scmp.eq.s32.totalorder %s37, 1
      %p280 = por %p278, %p279
      %p282 = scmp.ne.s32.totalorder %s265, %s281
      %p283 = scmp.eq.s32.totalorder %s37, 0
      %p284 = por %p282, %p283
      %s285 = ssub.s32 %s31, %s38
      %p286 = scmp.eq.s32.totalorder %s285, 0
      %s288 = sadd.s32 %s287, 1
      %s289 = scalar_select %p286, %s287, %s288
      %p292 = pneg %p286
      %p293 = scmp.eq.s32.totalorder %s31, 1
      %p294 = por %p292, %p293
      %p295 = scmp.ne.s32.totalorder %s287, %s290
      %p296 = scmp.eq.s32.totalorder %s31, 0
      %p297 = por %p295, %p296
      %p298 = scmp.ne.s32.totalorder %s287, %s290
      %p299 = scmp.eq.s32.totalorder %s36, 1
      %p300 = por %p298, %p299
      %p301 = scmp.ne.s32.totalorder %s290, %s291
      %p302 = scmp.eq.s32.totalorder %s36, 0
      %p303 = por %p301, %p302
      %p304 = scmp.ne.s32.totalorder %s290, %s291
      %p305 = scmp.eq.s32.totalorder %s37, 1
      %p306 = por %p304, %p305
      %p308 = scmp.ne.s32.totalorder %s291, %s307
      %p309 = scmp.eq.s32.totalorder %s37, 0
      %p310 = por %p308, %p309
      %p311 = scmp.le.s32.totalorder 1, %s31
      %p312 = scmp.lt.s32.totalorder %s31, 3
      %p313 = pnand %p311, %p312
      %p314 = pneg %p313
      // Predicated region
      $region9: #{point_transformer_classif.7} parent=5 // pred_check
        _
      $region10: #{point_transformer_classif.7} parent=5 // pred_check_branch
        %316 = sbr.rel (%p313) target = $region12
      $region11: #{point_transformer_classif.7} parent=5 // pred_region
        %s317 = ssub.s32 %s31, 1
        // Predicated region
        $region13: #{point_transformer_classif.7} parent=11 // pred_check
          %p318 = pneg %p78
        $region14: #{point_transformer_classif.7} parent=11 // pred_check_branch
          %320 = sbr.rel (%p318) target = $region16
        $region15: #{point_transformer_classif.7} parent=11 // pred_region
          %s322 = ssub.s32 128, 128
          %323 = vsyncadd [#allocation6], %s322
          %s325 = sshll.u32 [#allocation5], 4
          %s326 = int_to_ptr.vmem [resolvable:$true] %s325
          %328 = dma.hbm_to_vmem [thread:$0]  %s1, 128, %s326, [#allocation6]
        $region16: #{point_transformer_classif.7} parent=11 // pred_fallthru
          _
        // Predicated region
        $region17: #{point_transformer_classif.7} parent=11 // pred_check
          %p329 = pneg %p99
        $region18: #{point_transformer_classif.7} parent=11 // pred_check_branch
          %331 = sbr.rel (%p329) target = $region20
        $region19: #{point_transformer_classif.7} parent=11 // pred_region
          %s333 = ssub.s32 16, 16
          %334 = vsyncadd [#allocation6], %s333
          %s336 = sshll.u32 [#allocation7], 4
          %s337 = int_to_ptr.vmem [resolvable:$true] %s336
          %339 = dma.hbm_to_vmem [thread:$0]  %s2, 16, %s337, [#allocation6]
        $region20: #{point_transformer_classif.7} parent=11 // pred_fallthru
          _
        // Predicated region
        $region21: #{point_transformer_classif.7} parent=11 // pred_check
          %p340 = pneg %p120
        $region22: #{point_transformer_classif.7} parent=11 // pred_check_branch
          %342 = sbr.rel (%p340) target = $region24
        $region23: #{point_transformer_classif.7} parent=11 // pred_region
          %s344 = ssub.s32 512, 512
          %345 = vsyncadd [#allocation9], %s344
          %s346 = sshll.u32 [#allocation8], 4
          %s347 = int_to_ptr.vmem [resolvable:$true] %s346
          %352 = dma.hbm_to_vmem [thread:$0]  %s3, 512, %s347, [#allocation9], 128, 128, 8
        $region24: #{point_transformer_classif.7} parent=11 // pred_fallthru
          _
        // Predicated region
        $region25: #{point_transformer_classif.7} parent=11 // pred_check
          %p353 = pneg %p141
        $region26: #{point_transformer_classif.7} parent=11 // pred_check_branch
          %355 = sbr.rel (%p353) target = $region28
        $region27: #{point_transformer_classif.7} parent=11 // pred_region
          %s357 = ssub.s32 16, 16
          %358 = vsyncadd [#allocation9], %s357
          %s360 = sshll.u32 [#allocation10], 4
          %s361 = int_to_ptr.vmem [resolvable:$true] %s360
          %363 = dma.hbm_to_vmem [thread:$0]  %s4, 16, %s361, [#allocation9]
        $region28: #{point_transformer_classif.7} parent=11 // pred_fallthru
          _
        // Predicated region
        $region29: #{point_transformer_classif.7} parent=11 // pred_check
          %p364 = pneg %p162
        $region30: #{point_transformer_classif.7} parent=11 // pred_check_branch
          %366 = sbr.rel (%p364) target = $region32
        $region31: #{point_transformer_classif.7} parent=11 // pred_region
          %s368 = ssub.s32 512, 512
          %369 = vsyncadd [#allocation12], %s368
          %s370 = sshll.u32 [#allocation11], 4
          %s371 = int_to_ptr.vmem [resolvable:$true] %s370
          %376 = dma.hbm_to_vmem [thread:$0]  %s5, 512, %s371, [#allocation12], 128, 128, 8
        $region32: #{point_transformer_classif.7} parent=11 // pred_fallthru
          _
        // Predicated region
        $region33: #{point_transformer_classif.7} parent=11 // pred_check
          %p377 = pneg %p183
        $region34: #{point_transformer_classif.7} parent=11 // pred_check_branch
          %379 = sbr.rel (%p377) target = $region36
        $region35: #{point_transformer_classif.7} parent=11 // pred_region
          %s381 = ssub.s32 16, 16
          %382 = vsyncadd [#allocation12], %s381
          %s384 = sshll.u32 [#allocation13], 4
          %s385 = int_to_ptr.vmem [resolvable:$true] %s384
          %387 = dma.hbm_to_vmem [thread:$0]  %s6, 16, %s385, [#allocation12]
        $region36: #{point_transformer_classif.7} parent=11 // pred_fallthru
          _
        // Predicated region
        $region37: #{point_transformer_classif.7} parent=11 // pred_check
          %p388 = pneg %p204
        $region38: #{point_transformer_classif.7} parent=11 // pred_check_branch
          %390 = sbr.rel (%p388) target = $region40
        $region39: #{point_transformer_classif.7} parent=11 // pred_region
          %s392 = ssub.s32 512, 512
          %393 = vsyncadd [#allocation15], %s392
          %s394 = sshll.u32 [#allocation14], 4
          %s395 = int_to_ptr.vmem [resolvable:$true] %s394
          %400 = dma.hbm_to_vmem [thread:$0]  %s7, 512, %s395, [#allocation15], 128, 128, 8
        $region40: #{point_transformer_classif.7} parent=11 // pred_fallthru
          _
        // Predicated region
        $region41: #{point_transformer_classif.7} parent=11 // pred_check
          %p401 = pneg %p225
        $region42: #{point_transformer_classif.7} parent=11 // pred_check_branch
          %403 = sbr.rel (%p401) target = $region44
        $region43: #{point_transformer_classif.7} parent=11 // pred_region
          %s405 = ssub.s32 16, 16
          %406 = vsyncadd [#allocation15], %s405
          %s408 = sshll.u32 [#allocation16], 4
          %s409 = int_to_ptr.vmem [resolvable:$true] %s408
          %411 = dma.hbm_to_vmem [thread:$0]  %s8, 16, %s409, [#allocation15]
        $region44: #{point_transformer_classif.7} parent=11 // pred_fallthru
          _
      $region12: #{point_transformer_classif.7} parent=5 // pred_fallthru
        _
      %p412 = scmp.lt.s32.totalorder %s31, 2
      // Predicated region
      $region45: #{point_transformer_classif.7} parent=5 // pred_check
        %p413 = pneg %p412
      $region46: #{point_transformer_classif.7} parent=5 // pred_check_branch
        %415 = sbr.rel (%p413) target = $region48
      $region47: #{point_transformer_classif.7} parent=5 // pred_region
        // Predicated region
        $region49: #{point_transformer_classif.7} parent=47 // pred_check
          %p416 = pneg %p51
        $region50: #{point_transformer_classif.7} parent=47 // pred_check_branch
          %418 = sbr.rel (%p416) target = $region52
        $region51: #{point_transformer_classif.7} parent=47 // pred_region
          %s419 = sand.u32 %s41, 1
          %s420 = scalar_lea.sflag [#allocation3], %s419
          %s421 = sand.u32 %s41, 1
          %s422 = smul.addr %s421, 64
          %s423 = scalar_lea.vmem [#allocation2], %s422
          %s424 = smul.u32 8, %s31
          %s426 = ssub.s32 1024, 1024
          %427 = vsyncadd %s420, %s426
          %s428 = smul.addr %s424, 128
          %s429 = scalar_lea.hbm %s0, %s428
          %s430 = sshll.u32 %s423, 4
          %s431 = int_to_ptr.vmem [resolvable:$true] %s430
          %436 = dma.hbm_to_vmem [thread:$0]  %s429, 1024, %s431, %s420, 128, 128, 8
        $region52: #{point_transformer_classif.7} parent=47 // pred_fallthru
          _
      $region48: #{point_transformer_classif.7} parent=5 // pred_fallthru
        _
      %p437 = scmp.le.s32.totalorder 1, %s31
      %p438 = scmp.lt.s32.totalorder %s31, 3
      %p439 = pnand %p437, %p438
      %p440 = pneg %p439
      // Predicated region
      $region53: #{point_transformer_classif.7} parent=5 // pred_check
        _
      $region54: #{point_transformer_classif.7} parent=5 // pred_check_branch
        %442 = sbr.rel (%p439) target = $region56
      $region55: #{point_transformer_classif.7} parent=5 // pred_region
        %s443 = ssub.s32 %s31, 1
        %s444 = sand.u32 %s44, 1
        %s445 = scalar_lea.sflag [#allocation3], %s444
        %s446 = sand.u32 %s44, 1
        %s447 = smul.addr %s446, 64
        %s448 = scalar_lea.vmem [#allocation2], %s447
        // Predicated region
        $region57: #{point_transformer_classif.7} parent=55 // pred_check
          %p449 = pneg %p57
        $region58: #{point_transformer_classif.7} parent=55 // pred_check_branch
          %451 = sbr.rel (%p449) target = $region60
        $region59: #{point_transformer_classif.7} parent=55 // pred_region
          %452 = dma.done %s445, 1024
        $region60: #{point_transformer_classif.7} parent=55 // pred_fallthru
          _
        // Predicated region
        $region61: #{point_transformer_classif.7} parent=55 // pred_check
          %p453 = pneg %p78
        $region62: #{point_transformer_classif.7} parent=55 // pred_check_branch
          %455 = sbr.rel (%p453) target = $region64
        $region63: #{point_transformer_classif.7} parent=55 // pred_region
          %456 = dma.done [#allocation6], 128
        $region64: #{point_transformer_classif.7} parent=55 // pred_fallthru
          _
        // Predicated region
        $region65: #{point_transformer_classif.7} parent=55 // pred_check
          %p457 = pneg %p99
        $region66: #{point_transformer_classif.7} parent=55 // pred_check_branch
          %459 = sbr.rel (%p457) target = $region68
        $region67: #{point_transformer_classif.7} parent=55 // pred_region
          %460 = dma.done [#allocation6], 16
        $region68: #{point_transformer_classif.7} parent=55 // pred_fallthru
          _
        // Predicated region
        $region69: #{point_transformer_classif.7} parent=55 // pred_check
          %p461 = pneg %p120
        $region70: #{point_transformer_classif.7} parent=55 // pred_check_branch
          %463 = sbr.rel (%p461) target = $region72
        $region71: #{point_transformer_classif.7} parent=55 // pred_region
          %464 = dma.done [#allocation9], 512
        $region72: #{point_transformer_classif.7} parent=55 // pred_fallthru
          _
        // Predicated region
        $region73: #{point_transformer_classif.7} parent=55 // pred_check
          %p465 = pneg %p141
        $region74: #{point_transformer_classif.7} parent=55 // pred_check_branch
          %467 = sbr.rel (%p465) target = $region76
        $region75: #{point_transformer_classif.7} parent=55 // pred_region
          %468 = dma.done [#allocation9], 16
        $region76: #{point_transformer_classif.7} parent=55 // pred_fallthru
          _
        // Predicated region
        $region77: #{point_transformer_classif.7} parent=55 // pred_check
          %p469 = pneg %p162
        $region78: #{point_transformer_classif.7} parent=55 // pred_check_branch
          %471 = sbr.rel (%p469) target = $region80
        $region79: #{point_transformer_classif.7} parent=55 // pred_region
          %472 = dma.done [#allocation12], 512
        $region80: #{point_transformer_classif.7} parent=55 // pred_fallthru
          _
        // Predicated region
        $region81: #{point_transformer_classif.7} parent=55 // pred_check
          %p473 = pneg %p183
        $region82: #{point_transformer_classif.7} parent=55 // pred_check_branch
          %475 = sbr.rel (%p473) target = $region84
        $region83: #{point_transformer_classif.7} parent=55 // pred_region
          %476 = dma.done [#allocation12], 16
        $region84: #{point_transformer_classif.7} parent=55 // pred_fallthru
          _
        // Predicated region
        $region85: #{point_transformer_classif.7} parent=55 // pred_check
          %p477 = pneg %p204
        $region86: #{point_transformer_classif.7} parent=55 // pred_check_branch
          %479 = sbr.rel (%p477) target = $region88
        $region87: #{point_transformer_classif.7} parent=55 // pred_region
          %480 = dma.done [#allocation15], 512
        $region88: #{point_transformer_classif.7} parent=55 // pred_fallthru
          _
        // Predicated region
        $region89: #{point_transformer_classif.7} parent=55 // pred_check
          %p481 = pneg %p225
        $region90: #{point_transformer_classif.7} parent=55 // pred_check_branch
          %483 = sbr.rel (%p481) target = $region92
        $region91: #{point_transformer_classif.7} parent=55 // pred_region
          %484 = dma.done [#allocation15], 16
        $region92: #{point_transformer_classif.7} parent=55 // pred_fallthru
          _
        %s485 = sand.u32 %s44, 1
        %s486 = scalar_lea.sflag [#allocation3], %s485
        %s487 = sand.u32 %s44, 1
        %s488 = smul.addr %s487, 64
        %s489 = scalar_lea.vmem [#allocation2], %s488
        %p490 = pneg %p57
        %p491 = pneg %p54
        %p492 = pneg %p78
        %p493 = pneg %p75
        %p494 = pneg %p99
        %p495 = pneg %p96
        %p496 = pneg %p120
        %p497 = pneg %p117
        %p498 = pneg %p141
        %p499 = pneg %p138
        %p500 = pneg %p162
        %p501 = pneg %p159
        %p502 = pneg %p183
        %p503 = pneg %p180
        %p504 = pneg %p204
        %p505 = pneg %p201
        %p506 = pneg %p225
        %p507 = pneg %p222
        %p508 = pneg %p251
        %p509 = pneg %p248
        %s510 = sand.u32 %s238, 1
        %s511 = scalar_lea.sflag [#allocation4], %s510
        %s512 = sand.u32 %s238, 1
        %s513 = smul.addr %s512, 64
        %s514 = scalar_lea.vmem [#allocation17], %s513
        %p515 = pneg %p277
        %p516 = pneg %p274
        %s517 = sand.u32 %s36, 1
        %s518 = scalar_lea.sflag [#allocation19], %s517
        %s519 = sand.u32 %s264, 1
        %s520 = smul.addr %s519, 32
        %s521 = scalar_lea.vmem [#allocation18], %s520
        %p522 = pneg %p303
        %p523 = pneg %p300
        %s524 = sand.u32 %s36, 1
        %s525 = scalar_lea.sflag [#allocation19], %s524
        %s526 = sand.u32 %s290, 1
        %s527 = smul.addr %s526, 32
        %s528 = scalar_lea.vmem [#allocation20], %s527
        %s529 = smul.u32 8, %s36
        %s530 = smul.u32 8, %s36
        %s531 = smul.u32 8, %s36
        %s532 = smul.u32 8, %s36
        %v533 = vld [vmem:[%s448] sm:$0xff]
        %v534 = vld [vmem:[%s448 + $0x8] sm:$0xff]
        %v535 = vld [vmem:[%s448 + $0x10] sm:$0xff]
        %v536 = vld [vmem:[%s448 + $0x18] sm:$0xff]
        %v537 = vld [vmem:[%s448 + $0x20] sm:$0xff]
        %v538 = vld [vmem:[%s448 + $0x28] sm:$0xff]
        %v539 = vld [vmem:[%s448 + $0x30] sm:$0xff]
        %v540 = vld [vmem:[%s448 + $0x38] sm:$0xff]
        %v541 = vld [vmem:[#allocation5] sm:$0x3f]
        %v542 = vld [vmem:[#allocation7] sm:$0x1]
        %v544 = vlaneseq
        %v545 = vshrl.u32 %v544, 7
        %v546 = vsub.s32 0, %v545
        %v547 = vrot.slane %v542, %v546
        %vm549 = vcmask 48128
        %v551 = vsel %vm549, %v533, 0
        %v554 = vsel %vm549, %v534, 0
        %v557 = vsel %vm549, %v535, 0
        %v560 = vsel %vm549, %v536, 0
        %v563 = vsel %vm549, %v537, 0
        %v566 = vsel %vm549, %v538, 0
        %v569 = vsel %vm549, %v539, 0
        %v572 = vsel %vm549, %v540, 0
        %vm574 = vcmask 1045504
        %v576 = vsel %vm574, %v541, 0
        %578 = vmatprep.subr.mxu0 0.0
        %579 = vmatpush1.msra.mxu0 %v576
        %580 = vmatprep.subr.mxu0 0.0
        %581 = vmatpush1.msra.mxu0 0.0
        %582 = vmatprep.subr.mxu0 0.0
        %583 = vmatpush1.msra.mxu0 0.0
        %584 = vmatprep.subr.mxu0 0.0
        %585 = vmatpush1.msra.mxu0 0.0
        %586 = vmatprep.subr.mxu0 0.0
        %587 = vmatpush1.msra.mxu0 0.0
        %588 = vmatprep.subr.mxu0 0.0
        %589 = vmatpush1.msra.mxu0 0.0
        %590 = vmatprep.subr.mxu0 0.0
        %591 = vmatpush1.msra.mxu0 0.0
        %592 = vmatprep.subr.mxu0 0.0
        %593 = vmatpush1.msra.mxu0 0.0
        %594 = vmatprep.subr.mxu0 0.0
        %595 = vmatpush1.msra.mxu0 0.0
        %596 = vmatprep.subr.mxu0 0.0
        %597 = vmatpush1.msra.mxu0 0.0
        %598 = vmatprep.subr.mxu0 0.0
        %599 = vmatpush1.msra.mxu0 0.0
        %600 = vmatprep.subr.mxu0 0.0
        %601 = vmatpush1.msra.mxu0 0.0
        %602 = vmatprep.subr.mxu0 0.0
        %603 = vmatpush1.msra.mxu0 0.0
        %604 = vmatprep.subr.mxu0 0.0
        %605 = vmatpush1.msra.mxu0 0.0
        %606 = vmatprep.subr.mxu0 0.0
        %607 = vmatpush1.msra.mxu0 0.0
        %608 = vmatprep.subr.mxu0 0.0
        %609 = vmatpush1.msra.mxu0 0.0
        %610 = vmatprep.subr.mxu0 0.0
        %611 = vmatpush1.msra.mxu0 0.0
        %612 = vmatprep.subr.mxu0 0.0
        %613 = vmatpush1.msra.mxu0 0.0
        %614 = vmatprep.subr.mxu0 0.0
        %615 = vmatpush1.msra.mxu0 0.0
        %616 = vmatprep.subr.mxu0 0.0
        %617 = vmatpush1.msra.mxu0 0.0
        %618 = vmatprep.subr.mxu0 0.0
        %619 = vmatpush1.msra.mxu0 0.0
        %620 = vmatprep.subr.mxu0 0.0
        %621 = vmatpush1.msra.mxu0 0.0
        %622 = vmatprep.subr.mxu0 0.0
        %623 = vmatpush1.msra.mxu0 0.0
        %624 = vmatprep.subr.mxu0 0.0
        %625 = vmatpush1.msra.mxu0 0.0
        %626 = vmatprep.subr.mxu0 0.0
        %627 = vmatpush1.msra.mxu0 0.0
        %628 = vmatprep.subr.mxu0 0.0
        %629 = vmatpush1.msra.mxu0 0.0
        %630 = vmatprep.subr.mxu0 0.0
        %631 = vmatpush1.msra.mxu0 0.0
        %632 = vmatprep.subr.mxu0 0.0
        %633 = vmatpush1.msra.mxu0 0.0
        %634 = vmatprep.subr.mxu0 0.0
        %635 = vmatpush1.msra.mxu0 0.0
        %636 = vmatprep.subr.mxu0 0.0
        %637 = vmatpush1.msra.mxu0 0.0
        %638 = vmatprep.subr.mxu0 0.0
        %639 = vmatpush1.msra.mxu0 0.0
        %640 = vmatprep.subr.mxu0 0.0
        %641 = vmatpush1.msra.mxu0 0.0
        %642 = vmatprep.mubr.f32.mxu0 0.0
        %643 = vmatmul.mubr.f32.gmra.mrb[0].mxu0 %v551
        %v644 = vpop.f32.mrb[0].mxu0
        %v645 = vadd.f32 %v547, %v644
        %v646 = vpop.f32.mrb[0].mxu0
        %647 = vmatprep.mubr.f32.mxu0 0.0
        %648 = vmatmul.mubr.f32.gmra.mrb[0].mxu0 %v554
        %v649 = vpop.f32.mrb[0].mxu0
        %v650 = vadd.f32 %v547, %v649
        %v651 = vpop.f32.mrb[0].mxu0
        %652 = vmatprep.mubr.f32.mxu0 0.0
        %653 = vmatmul.mubr.f32.gmra.mrb[0].mxu0 %v557
        %v654 = vpop.f32.mrb[0].mxu0
        %v655 = vadd.f32 %v547, %v654
        %v656 = vpop.f32.mrb[0].mxu0
        %657 = vmatprep.mubr.f32.mxu0 0.0
        %658 = vmatmul.mubr.f32.gmra.mrb[0].mxu0 %v560
        %v659 = vpop.f32.mrb[0].mxu0
        %v660 = vadd.f32 %v547, %v659
        %v661 = vpop.f32.mrb[0].mxu0
        %662 = vmatprep.mubr.f32.mxu0 0.0
        %663 = vmatmul.mubr.f32.gmra.mrb[0].mxu0 %v563
        %v664 = vpop.f32.mrb[0].mxu0
        %v665 = vadd.f32 %v547, %v664
        %v666 = vpop.f32.mrb[0].mxu0
        %667 = vmatprep.mubr.f32.mxu0 0.0
        %668 = vmatmul.mubr.f32.gmra.mrb[0].mxu0 %v566
        %v669 = vpop.f32.mrb[0].mxu0
        %v670 = vadd.f32 %v547, %v669
        %v671 = vpop.f32.mrb[0].mxu0
        %672 = vmatprep.mubr.f32.mxu0 0.0
        %673 = vmatmul.mubr.f32.gmra.mrb[0].mxu0 %v569
        %v674 = vpop.f32.mrb[0].mxu0
        %v675 = vadd.f32 %v547, %v674
        %v676 = vpop.f32.mrb[0].mxu0
        %677 = vmatprep.mubr.f32.mxu0 0.0
        %678 = vmatmul.mubr.f32.gmra.mrb[0].mxu0 %v572
        %v679 = vpop.f32.mrb[0].mxu0
        %v680 = vadd.f32 %v547, %v679
        %v681 = vpop.f32.mrb[0].mxu0
        %682 = vdwg.mxu0
        %v683 = vmax.f32 %v645, 0.0
        %v684 = vmax.f32 %v650, 0.0
        %v685 = vmax.f32 %v655, 0.0
        %v686 = vmax.f32 %v660, 0.0
        %v687 = vmax.f32 %v665, 0.0
        %v688 = vmax.f32 %v670, 0.0
        %v689 = vmax.f32 %v675, 0.0
        %v690 = vmax.f32 %v680, 0.0
        %v691 = vld [vmem:[#allocation8] sm:$0xff]
        %v692 = vld [vmem:[#allocation8 + $0x8] sm:$0xff]
        %v693 = vld [vmem:[#allocation8 + $0x10] sm:$0xff]
        %v694 = vld [vmem:[#allocation8 + $0x18] sm:$0xff]
        %v695 = vld [vmem:[#allocation10] sm:$0x1]
        %v697 = vlaneseq
        %v698 = vshrl.u32 %v697, 7
        %v699 = vsub.s32 0, %v698
        %v700 = vrot.slane %v695, %v699
        %vm702 = vcmask 261120
        %v704 = vsel %vm702, %v683, 0
        %v707 = vsel %vm702, %v684, 0
        %v710 = vsel %vm702, %v685, 0
        %v713 = vsel %vm702, %v686, 0
        %v716 = vsel %vm702, %v687, 0
        %v719 = vsel %vm702, %v688, 0
        %v722 = vsel %vm702, %v689, 0
        %v725 = vsel %vm702, %v690, 0
        %727 = vmatprep.subr.mxu0 0.0
        %728 = vmatpush1.msra.mxu0 %v691
        %729 = vmatprep.subr.mxu0 0.0
        %730 = vmatpush1.msra.mxu0 %v692
        %731 = vmatprep.subr.mxu0 0.0
        %732 = vmatpush1.msra.mxu0 %v693
        %733 = vmatprep.subr.mxu0 0.0
        %734 = vmatpush1.msra.mxu0 %v694
        %735 = vmatprep.subr.mxu0 0.0
        %736 = vmatpush1.msra.mxu0 0.0
        %737 = vmatprep.subr.mxu0 0.0
        %738 = vmatpush1.msra.mxu0 0.0
        %739 = vmatprep.subr.mxu0 0.0
        %740 = vmatpush1.msra.mxu0 0.0
        %741 = vmatprep.subr.mxu0 0.0
        %742 = vmatpush1.msra.mxu0 0.0
        %743 = vmatprep.subr.mxu0 0.0
        %744 = vmatpush1.msra.mxu0 0.0
        %745 = vmatprep.subr.mxu0 0.0
        %746 = vmatpush1.msra.mxu0 0.0
        %747 = vmatprep.subr.mxu0 0.0
        %748 = vmatpush1.msra.mxu0 0.0
        %749 = vmatprep.subr.mxu0 0.0
        %750 = vmatpush1.msra.mxu0 0.0
        %751 = vmatprep.subr.mxu0 0.0
        %752 = vmatpush1.msra.mxu0 0.0
        %753 = vmatprep.subr.mxu0 0.0
        %754 = vmatpush1.msra.mxu0 0.0
        %755 = vmatprep.subr.mxu0 0.0
        %756 = vmatpush1.msra.mxu0 0.0
        %757 = vmatprep.subr.mxu0 0.0
        %758 = vmatpush1.msra.mxu0 0.0
        %759 = vmatprep.subr.mxu0 0.0
        %760 = vmatpush1.msra.mxu0 0.0
        %761 = vmatprep.subr.mxu0 0.0
        %762 = vmatpush1.msra.mxu0 0.0
        %763 = vmatprep.subr.mxu0 0.0
        %764 = vmatpush1.msra.mxu0 0.0
        %765 = vmatprep.subr.mxu0 0.0
        %766 = vmatpush1.msra.mxu0 0.0
        %767 = vmatprep.subr.mxu0 0.0
        %768 = vmatpush1.msra.mxu0 0.0
        %769 = vmatprep.subr.mxu0 0.0
        %770 = vmatpush1.msra.mxu0 0.0
        %771 = vmatprep.subr.mxu0 0.0
        %772 = vmatpush1.msra.mxu0 0.0
        %773 = vmatprep.subr.mxu0 0.0
        %774 = vmatpush1.msra.mxu0 0.0
        %775 = vmatprep.subr.mxu0 0.0
        %776 = vmatpush1.msra.mxu0 0.0
        %777 = vmatprep.subr.mxu0 0.0
        %778 = vmatpush1.msra.mxu0 0.0
        %779 = vmatprep.subr.mxu0 0.0
        %780 = vmatpush1.msra.mxu0 0.0
        %781 = vmatprep.subr.mxu0 0.0
        %782 = vmatpush1.msra.mxu0 0.0
        %783 = vmatprep.subr.mxu0 0.0
        %784 = vmatpush1.msra.mxu0 0.0
        %785 = vmatprep.subr.mxu0 0.0
        %786 = vmatpush1.msra.mxu0 0.0
        %787 = vmatprep.subr.mxu0 0.0
        %788 = vmatpush1.msra.mxu0 0.0
        %789 = vmatprep.subr.mxu0 0.0
        %790 = vmatpush1.msra.mxu0 0.0
        %791 = vmatprep.mubr.f32.mxu0 0.0
        %792 = vmatmul.mubr.f32.gmra.mrb[0].mxu0 %v704
        %v793 = vpop.f32.mrb[0].mxu0
        %v794 = vadd.f32 %v700, %v793
        %v795 = vpop.f32.mrb[0].mxu0
        %796 = vmatprep.mubr.f32.mxu0 0.0
        %797 = vmatmul.mubr.f32.gmra.mrb[0].mxu0 %v707
        %v798 = vpop.f32.mrb[0].mxu0
        %v799 = vadd.f32 %v700, %v798
        %v800 = vpop.f32.mrb[0].mxu0
        %801 = vmatprep.mubr.f32.mxu0 0.0
        %802 = vmatmul.mubr.f32.gmra.mrb[0].mxu0 %v710
        %v803 = vpop.f32.mrb[0].mxu0
        %v804 = vadd.f32 %v700, %v803
        %v805 = vpop.f32.mrb[0].mxu0
        %806 = vmatprep.mubr.f32.mxu0 0.0
        %807 = vmatmul.mubr.f32.gmra.mrb[0].mxu0 %v713
        %v808 = vpop.f32.mrb[0].mxu0
        %v809 = vadd.f32 %v700, %v808
        %v810 = vpop.f32.mrb[0].mxu0
        %811 = vmatprep.mubr.f32.mxu0 0.0
        %812 = vmatmul.mubr.f32.gmra.mrb[0].mxu0 %v716
        %v813 = vpop.f32.mrb[0].mxu0
        %v814 = vadd.f32 %v700, %v813
        %v815 = vpop.f32.mrb[0].mxu0
        %816 = vmatprep.mubr.f32.mxu0 0.0
        %817 = vmatmul.mubr.f32.gmra.mrb[0].mxu0 %v719
        %v818 = vpop.f32.mrb[0].mxu0
        %v819 = vadd.f32 %v700, %v818
        %v820 = vpop.f32.mrb[0].mxu0
        %821 = vmatprep.mubr.f32.mxu0 0.0
        %822 = vmatmul.mubr.f32.gmra.mrb[0].mxu0 %v722
        %v823 = vpop.f32.mrb[0].mxu0
        %v824 = vadd.f32 %v700, %v823
        %v825 = vpop.f32.mrb[0].mxu0
        %826 = vmatprep.mubr.f32.mxu0 0.0
        %827 = vmatmul.mubr.f32.gmra.mrb[0].mxu0 %v725
        %v828 = vpop.f32.mrb[0].mxu0
        %v829 = vadd.f32 %v700, %v828
        %v830 = vpop.f32.mrb[0].mxu0
        %831 = vdwg.mxu0
        %832 = vst.msk [vmem:[%s514] sm:$0xff] %vm702, %v794
        %833 = vst.msk [vmem:[%s514 + $0x8] sm:$0xff] %vm702, %v799
        %834 = vst.msk [vmem:[%s514 + $0x10] sm:$0xff] %vm702, %v804
        %835 = vst.msk [vmem:[%s514 + $0x18] sm:$0xff] %vm702, %v809
        %836 = vst.msk [vmem:[%s514 + $0x20] sm:$0xff] %vm702, %v814
        %837 = vst.msk [vmem:[%s514 + $0x28] sm:$0xff] %vm702, %v819
        %838 = vst.msk [vmem:[%s514 + $0x30] sm:$0xff] %vm702, %v824
        %839 = vst.msk [vmem:[%s514 + $0x38] sm:$0xff] %vm702, %v829
        %v840 = vld [vmem:[#allocation11] sm:$0xff]
        %v841 = vld [vmem:[#allocation11 + $0x8] sm:$0xff]
        %v842 = vld [vmem:[#allocation11 + $0x10] sm:$0xff]
        %v843 = vld [vmem:[#allocation11 + $0x18] sm:$0xff]
        %v844 = vld [vmem:[#allocation13] sm:$0x1]
        %v846 = vlaneseq
        %v847 = vshrl.u32 %v846, 7
        %v848 = vsub.s32 0, %v847
        %v849 = vrot.slane %v844, %v848
        %v852 = vsel %vm702, %v794, 0
        %v855 = vsel %vm702, %v799, 0
        %v858 = vsel %vm702, %v804, 0
        %v861 = vsel %vm702, %v809, 0
        %v864 = vsel %vm702, %v814, 0
        %v867 = vsel %vm702, %v819, 0
        %v870 = vsel %vm702, %v824, 0
        %v873 = vsel %vm702, %v829, 0
        %875 = vmatprep.subr.mxu0 0.0
        %876 = vmatpush1.msra.mxu0 %v840
        %877 = vmatprep.subr.mxu0 0.0
        %878 = vmatpush1.msra.mxu0 %v841
        %879 = vmatprep.subr.mxu0 0.0
        %880 = vmatpush1.msra.mxu0 %v842
        %881 = vmatprep.subr.mxu0 0.0
        %882 = vmatpush1.msra.mxu0 %v843
        %883 = vmatprep.subr.mxu0 0.0
        %884 = vmatpush1.msra.mxu0 0.0
        %885 = vmatprep.subr.mxu0 0.0
        %886 = vmatpush1.msra.mxu0 0.0
        %887 = vmatprep.subr.mxu0 0.0
        %888 = vmatpush1.msra.mxu0 0.0
        %889 = vmatprep.subr.mxu0 0.0
        %890 = vmatpush1.msra.mxu0 0.0
        %891 = vmatprep.subr.mxu0 0.0
        %892 = vmatpush1.msra.mxu0 0.0
        %893 = vmatprep.subr.mxu0 0.0
        %894 = vmatpush1.msra.mxu0 0.0
        %895 = vmatprep.subr.mxu0 0.0
        %896 = vmatpush1.msra.mxu0 0.0
        %897 = vmatprep.subr.mxu0 0.0
        %898 = vmatpush1.msra.mxu0 0.0
        %899 = vmatprep.subr.mxu0 0.0
        %900 = vmatpush1.msra.mxu0 0.0
        %901 = vmatprep.subr.mxu0 0.0
        %902 = vmatpush1.msra.mxu0 0.0
        %903 = vmatprep.subr.mxu0 0.0
        %904 = vmatpush1.msra.mxu0 0.0
        %905 = vmatprep.subr.mxu0 0.0
        %906 = vmatpush1.msra.mxu0 0.0
        %907 = vmatprep.subr.mxu0 0.0
        %908 = vmatpush1.msra.mxu0 0.0
        %909 = vmatprep.subr.mxu0 0.0
        %910 = vmatpush1.msra.mxu0 0.0
        %911 = vmatprep.subr.mxu0 0.0
        %912 = vmatpush1.msra.mxu0 0.0
        %913 = vmatprep.subr.mxu0 0.0
        %914 = vmatpush1.msra.mxu0 0.0
        %915 = vmatprep.subr.mxu0 0.0
        %916 = vmatpush1.msra.mxu0 0.0
        %917 = vmatprep.subr.mxu0 0.0
        %918 = vmatpush1.msra.mxu0 0.0
        %919 = vmatprep.subr.mxu0 0.0
        %920 = vmatpush1.msra.mxu0 0.0
        %921 = vmatprep.subr.mxu0 0.0
        %922 = vmatpush1.msra.mxu0 0.0
        %923 = vmatprep.subr.mxu0 0.0
        %924 = vmatpush1.msra.mxu0 0.0
        %925 = vmatprep.subr.mxu0 0.0
        %926 = vmatpush1.msra.mxu0 0.0
        %927 = vmatprep.subr.mxu0 0.0
        %928 = vmatpush1.msra.mxu0 0.0
        %929 = vmatprep.subr.mxu0 0.0
        %930 = vmatpush1.msra.mxu0 0.0
        %931 = vmatprep.subr.mxu0 0.0
        %932 = vmatpush1.msra.mxu0 0.0
        %933 = vmatprep.subr.mxu0 0.0
        %934 = vmatpush1.msra.mxu0 0.0
        %935 = vmatprep.subr.mxu0 0.0
        %936 = vmatpush1.msra.mxu0 0.0
        %937 = vmatprep.subr.mxu0 0.0
        %938 = vmatpush1.msra.mxu0 0.0
        %939 = vmatprep.mubr.f32.mxu0 0.0
        %940 = vmatmul.mubr.f32.gmra.mrb[0].mxu0 %v852
        %v941 = vpop.f32.mrb[0].mxu0
        %v942 = vadd.f32 %v849, %v941
        %v943 = vpop.f32.mrb[0].mxu0
        %944 = vmatprep.mubr.f32.mxu0 0.0
        %945 = vmatmul.mubr.f32.gmra.mrb[0].mxu0 %v855
        %v946 = vpop.f32.mrb[0].mxu0
        %v947 = vadd.f32 %v849, %v946
        %v948 = vpop.f32.mrb[0].mxu0
        %949 = vmatprep.mubr.f32.mxu0 0.0
        %950 = vmatmul.mubr.f32.gmra.mrb[0].mxu0 %v858
        %v951 = vpop.f32.mrb[0].mxu0
        %v952 = vadd.f32 %v849, %v951
        %v953 = vpop.f32.mrb[0].mxu0
        %954 = vmatprep.mubr.f32.mxu0 0.0
        %955 = vmatmul.mubr.f32.gmra.mrb[0].mxu0 %v861
        %v956 = vpop.f32.mrb[0].mxu0
        %v957 = vadd.f32 %v849, %v956
        %v958 = vpop.f32.mrb[0].mxu0
        %959 = vmatprep.mubr.f32.mxu0 0.0
        %960 = vmatmul.mubr.f32.gmra.mrb[0].mxu0 %v864
        %v961 = vpop.f32.mrb[0].mxu0
        %v962 = vadd.f32 %v849, %v961
        %v963 = vpop.f32.mrb[0].mxu0
        %964 = vmatprep.mubr.f32.mxu0 0.0
        %965 = vmatmul.mubr.f32.gmra.mrb[0].mxu0 %v867
        %v966 = vpop.f32.mrb[0].mxu0
        %v967 = vadd.f32 %v849, %v966
        %v968 = vpop.f32.mrb[0].mxu0
        %969 = vmatprep.mubr.f32.mxu0 0.0
        %970 = vmatmul.mubr.f32.gmra.mrb[0].mxu0 %v870
        %v971 = vpop.f32.mrb[0].mxu0
        %v972 = vadd.f32 %v849, %v971
        %v973 = vpop.f32.mrb[0].mxu0
        %974 = vmatprep.mubr.f32.mxu0 0.0
        %975 = vmatmul.mubr.f32.gmra.mrb[0].mxu0 %v873
        %v976 = vpop.f32.mrb[0].mxu0
        %v977 = vadd.f32 %v849, %v976
        %v978 = vpop.f32.mrb[0].mxu0
        %979 = vdwg.mxu0
        %v980 = vpack.c.bf16 %v947, %v942
        %v981 = vpack.c.bf16 %v957, %v952
        %v982 = vpack.c.bf16 %v967, %v962
        %v983 = vpack.c.bf16 %v977, %v972
        %v988 = vunpack.c.l.b16 %v980
        %v989 = vunpack.c.h.b16 %v980
        %v990 = vunpack.c.l.b16 %v981
        %v991 = vunpack.c.h.b16 %v981
        %v992 = vunpack.c.l.b16 %v982
        %v993 = vunpack.c.h.b16 %v982
        %v994 = vunpack.c.l.b16 %v983
        %v995 = vunpack.c.h.b16 %v983
        %v996 = vpack.c.b16 %v988, %v988
        %v997 = vpack.c.b16 %v989, %v989
        %v998 = vpack.c.b16 %v990, %v990
        %v999 = vpack.c.b16 %v991, %v991
        %v1000 = vpack.c.b16 %v992, %v992
        %v1001 = vpack.c.b16 %v993, %v993
        %v1002 = vpack.c.b16 %v994, %v994
        %v1003 = vpack.c.b16 %v995, %v995
        %vm1012 = vcmask 60416
        %1013 = vst.msk [vmem:[%s521] sm:$0xf] %vm1012, %v996
        %1014 = vst.msk [vmem:[%s521 + $0x4] sm:$0xf] %vm1012, %v997
        %1015 = vst.msk [vmem:[%s521 + $0x8] sm:$0xf] %vm1012, %v998
        %1016 = vst.msk [vmem:[%s521 + $0xc] sm:$0xf] %vm1012, %v999
        %1017 = vst.msk [vmem:[%s521 + $0x10] sm:$0xf] %vm1012, %v1000
        %1018 = vst.msk [vmem:[%s521 + $0x14] sm:$0xf] %vm1012, %v1001
        %1019 = vst.msk [vmem:[%s521 + $0x18] sm:$0xf] %vm1012, %v1002
        %1020 = vst.msk [vmem:[%s521 + $0x1c] sm:$0xf] %vm1012, %v1003
        %v1021 = vld [vmem:[#allocation14] sm:$0xff]
        %v1022 = vld [vmem:[#allocation14 + $0x8] sm:$0xff]
        %v1023 = vld [vmem:[#allocation14 + $0x10] sm:$0xff]
        %v1024 = vld [vmem:[#allocation14 + $0x18] sm:$0xff]
        %v1025 = vld [vmem:[#allocation16] sm:$0x1]
        %v1027 = vlaneseq
        %v1028 = vshrl.u32 %v1027, 7
        %v1029 = vsub.s32 0, %v1028
        %v1030 = vrot.slane %v1025, %v1029
        %1032 = vmatprep.subr.mxu0 0.0
        %1033 = vmatpush1.msra.mxu0 %v1021
        %1034 = vmatprep.subr.mxu0 0.0
        %1035 = vmatpush1.msra.mxu0 %v1022
        %1036 = vmatprep.subr.mxu0 0.0
        %1037 = vmatpush1.msra.mxu0 %v1023
        %1038 = vmatprep.subr.mxu0 0.0
        %1039 = vmatpush1.msra.mxu0 %v1024
        %1040 = vmatprep.subr.mxu0 0.0
        %1041 = vmatpush1.msra.mxu0 0.0
        %1042 = vmatprep.subr.mxu0 0.0
        %1043 = vmatpush1.msra.mxu0 0.0
        %1044 = vmatprep.subr.mxu0 0.0
        %1045 = vmatpush1.msra.mxu0 0.0
        %1046 = vmatprep.subr.mxu0 0.0
        %1047 = vmatpush1.msra.mxu0 0.0
        %1048 = vmatprep.subr.mxu0 0.0
        %1049 = vmatpush1.msra.mxu0 0.0
        %1050 = vmatprep.subr.mxu0 0.0
        %1051 = vmatpush1.msra.mxu0 0.0
        %1052 = vmatprep.subr.mxu0 0.0
        %1053 = vmatpush1.msra.mxu0 0.0
        %1054 = vmatprep.subr.mxu0 0.0
        %1055 = vmatpush1.msra.mxu0 0.0
        %1056 = vmatprep.subr.mxu0 0.0
        %1057 = vmatpush1.msra.mxu0 0.0
        %1058 = vmatprep.subr.mxu0 0.0
        %1059 = vmatpush1.msra.mxu0 0.0
        %1060 = vmatprep.subr.mxu0 0.0
        %1061 = vmatpush1.msra.mxu0 0.0
        %1062 = vmatprep.subr.mxu0 0.0
        %1063 = vmatpush1.msra.mxu0 0.0
        %1064 = vmatprep.subr.mxu0 0.0
        %1065 = vmatpush1.msra.mxu0 0.0
        %1066 = vmatprep.subr.mxu0 0.0
        %1067 = vmatpush1.msra.mxu0 0.0
        %1068 = vmatprep.subr.mxu0 0.0
        %1069 = vmatpush1.msra.mxu0 0.0
        %1070 = vmatprep.subr.mxu0 0.0
        %1071 = vmatpush1.msra.mxu0 0.0
        %1072 = vmatprep.subr.mxu0 0.0
        %1073 = vmatpush1.msra.mxu0 0.0
        %1074 = vmatprep.subr.mxu0 0.0
        %1075 = vmatpush1.msra.mxu0 0.0
        %1076 = vmatprep.subr.mxu0 0.0
        %1077 = vmatpush1.msra.mxu0 0.0
        %1078 = vmatprep.subr.mxu0 0.0
        %1079 = vmatpush1.msra.mxu0 0.0
        %1080 = vmatprep.subr.mxu0 0.0
        %1081 = vmatpush1.msra.mxu0 0.0
        %1082 = vmatprep.subr.mxu0 0.0
        %1083 = vmatpush1.msra.mxu0 0.0
        %1084 = vmatprep.subr.mxu0 0.0
        %1085 = vmatpush1.msra.mxu0 0.0
        %1086 = vmatprep.subr.mxu0 0.0
        %1087 = vmatpush1.msra.mxu0 0.0
        %1088 = vmatprep.subr.mxu0 0.0
        %1089 = vmatpush1.msra.mxu0 0.0
        %1090 = vmatprep.subr.mxu0 0.0
        %1091 = vmatpush1.msra.mxu0 0.0
        %1092 = vmatprep.subr.mxu0 0.0
        %1093 = vmatpush1.msra.mxu0 0.0
        %1094 = vmatprep.subr.mxu0 0.0
        %1095 = vmatpush1.msra.mxu0 0.0
        %1096 = vmatprep.mubr.f32.mxu0 0.0
        %1097 = vmatmul.mubr.f32.gmra.mrb[0].mxu0 %v852
        %v1098 = vpop.f32.mrb[0].mxu0
        %v1099 = vadd.f32 %v1030, %v1098
        %v1100 = vpop.f32.mrb[0].mxu0
        %1101 = vmatprep.mubr.f32.mxu0 0.0
        %1102 = vmatmul.mubr.f32.gmra.mrb[0].mxu0 %v855
        %v1103 = vpop.f32.mrb[0].mxu0
        %v1104 = vadd.f32 %v1030, %v1103
        %v1105 = vpop.f32.mrb[0].mxu0
        %1106 = vmatprep.mubr.f32.mxu0 0.0
        %1107 = vmatmul.mubr.f32.gmra.mrb[0].mxu0 %v858
        %v1108 = vpop.f32.mrb[0].mxu0
        %v1109 = vadd.f32 %v1030, %v1108
        %v1110 = vpop.f32.mrb[0].mxu0
        %1111 = vmatprep.mubr.f32.mxu0 0.0
        %1112 = vmatmul.mubr.f32.gmra.mrb[0].mxu0 %v861
        %v1113 = vpop.f32.mrb[0].mxu0
        %v1114 = vadd.f32 %v1030, %v1113
        %v1115 = vpop.f32.mrb[0].mxu0
        %1116 = vmatprep.mubr.f32.mxu0 0.0
        %1117 = vmatmul.mubr.f32.gmra.mrb[0].mxu0 %v864
        %v1118 = vpop.f32.mrb[0].mxu0
        %v1119 = vadd.f32 %v1030, %v1118
        %v1120 = vpop.f32.mrb[0].mxu0
        %1121 = vmatprep.mubr.f32.mxu0 0.0
        %1122 = vmatmul.mubr.f32.gmra.mrb[0].mxu0 %v867
        %v1123 = vpop.f32.mrb[0].mxu0
        %v1124 = vadd.f32 %v1030, %v1123
        %v1125 = vpop.f32.mrb[0].mxu0
        %1126 = vmatprep.mubr.f32.mxu0 0.0
        %1127 = vmatmul.mubr.f32.gmra.mrb[0].mxu0 %v870
        %v1128 = vpop.f32.mrb[0].mxu0
        %v1129 = vadd.f32 %v1030, %v1128
        %v1130 = vpop.f32.mrb[0].mxu0
        %1131 = vmatprep.mubr.f32.mxu0 0.0
        %1132 = vmatmul.mubr.f32.gmra.mrb[0].mxu0 %v873
        %v1133 = vpop.f32.mrb[0].mxu0
        %v1134 = vadd.f32 %v1030, %v1133
        %v1135 = vpop.f32.mrb[0].mxu0
        %1136 = vdwg.mxu0
        %v1137 = vpack.c.bf16 %v1104, %v1099
        %v1138 = vpack.c.bf16 %v1114, %v1109
        %v1139 = vpack.c.bf16 %v1124, %v1119
        %v1140 = vpack.c.bf16 %v1134, %v1129
        %v1145 = vunpack.c.l.b16 %v1137
        %v1146 = vunpack.c.h.b16 %v1137
        %v1147 = vunpack.c.l.b16 %v1138
        %v1148 = vunpack.c.h.b16 %v1138
        %v1149 = vunpack.c.l.b16 %v1139
        %v1150 = vunpack.c.h.b16 %v1139
        %v1151 = vunpack.c.l.b16 %v1140
        %v1152 = vunpack.c.h.b16 %v1140
        %v1153 = vpack.c.b16 %v1145, %v1145
        %v1154 = vpack.c.b16 %v1146, %v1146
        %v1155 = vpack.c.b16 %v1147, %v1147
        %v1156 = vpack.c.b16 %v1148, %v1148
        %v1157 = vpack.c.b16 %v1149, %v1149
        %v1158 = vpack.c.b16 %v1150, %v1150
        %v1159 = vpack.c.b16 %v1151, %v1151
        %v1160 = vpack.c.b16 %v1152, %v1152
        %1169 = vst.msk [vmem:[%s528] sm:$0xf] %vm1012, %v1153
        %1170 = vst.msk [vmem:[%s528 + $0x4] sm:$0xf] %vm1012, %v1154
        %1171 = vst.msk [vmem:[%s528 + $0x8] sm:$0xf] %vm1012, %v1155
        %1172 = vst.msk [vmem:[%s528 + $0xc] sm:$0xf] %vm1012, %v1156
        %1173 = vst.msk [vmem:[%s528 + $0x10] sm:$0xf] %vm1012, %v1157
        %1174 = vst.msk [vmem:[%s528 + $0x14] sm:$0xf] %vm1012, %v1158
        %1175 = vst.msk [vmem:[%s528 + $0x18] sm:$0xf] %vm1012, %v1159
        %1176 = vst.msk [vmem:[%s528 + $0x1c] sm:$0xf] %vm1012, %v1160
        %s1177 = sand.u32 %s238, 1
        %s1178 = scalar_lea.sflag [#allocation4], %s1177
        %s1179 = sand.u32 %s238, 1
        %s1180 = smul.addr %s1179, 64
        %s1181 = scalar_lea.vmem [#allocation17], %s1180
        %s1182 = sand.u32 %s36, 1
        %s1183 = scalar_lea.sflag [#allocation19], %s1182
        %s1184 = sand.u32 %s264, 1
        %s1185 = smul.addr %s1184, 32
        %s1186 = scalar_lea.vmem [#allocation18], %s1185
        %s1187 = sand.u32 %s36, 1
        %s1188 = scalar_lea.sflag [#allocation19], %s1187
        %s1189 = sand.u32 %s290, 1
        %s1190 = smul.addr %s1189, 32
        %s1191 = scalar_lea.vmem [#allocation20], %s1190
        // Predicated region
        $region93: #{point_transformer_classif.7} parent=55 // pred_check
          %p1192 = pneg %p248
        $region94: #{point_transformer_classif.7} parent=55 // pred_check_branch
          %1194 = sbr.rel (%p1192) target = $region96
        $region95: #{point_transformer_classif.7} parent=55 // pred_region
          %s1195 = smul.u32 8, %s36
          %s1197 = ssub.s32 1024, 1024
          %1198 = vsyncadd %s1178, %s1197
          %s1199 = smul.addr %s1195, 128
          %s1200 = scalar_lea.hbm %s9, %s1199
          %s1201 = sshll.u32 %s1181, 4
          %s1202 = int_to_ptr.vmem [resolvable:$true] %s1201
          %1207 = dma.vmem_to_hbm [thread:$0]  %s1202, 1024, %s1200, %s1178, 128, 128, 8
        $region96: #{point_transformer_classif.7} parent=55 // pred_fallthru
          _
        // Predicated region
        $region97: #{point_transformer_classif.7} parent=55 // pred_check
          %p1208 = pneg %p274
        $region98: #{point_transformer_classif.7} parent=55 // pred_check_branch
          %1210 = sbr.rel (%p1208) target = $region100
        $region99: #{point_transformer_classif.7} parent=55 // pred_region
          %s1211 = smul.u32 8, %s36
          %s1213 = ssub.s32 512, 512
          %1214 = vsyncadd %s1183, %s1213
          %s1215 = smul.addr %s1211, 64
          %s1216 = scalar_lea.hbm %s10, %s1215
          %s1217 = sshll.u32 %s1186, 4
          %s1218 = int_to_ptr.vmem [resolvable:$true] %s1217
          %1223 = dma.vmem_to_hbm [thread:$0]  %s1218, 512, %s1216, %s1183, 64, 64, 4
        $region100: #{point_transformer_classif.7} parent=55 // pred_fallthru
          _
        // Predicated region
        $region101: #{point_transformer_classif.7} parent=55 // pred_check
          %p1224 = pneg %p300
        $region102: #{point_transformer_classif.7} parent=55 // pred_check_branch
          %1226 = sbr.rel (%p1224) target = $region104
        $region103: #{point_transformer_classif.7} parent=55 // pred_region
          %s1227 = smul.u32 8, %s36
          %s1229 = ssub.s32 512, 512
          %1230 = vsyncadd %s1188, %s1229
          %s1231 = smul.addr %s1227, 64
          %s1232 = scalar_lea.hbm %s11, %s1231
          %s1233 = sshll.u32 %s1191, 4
          %s1234 = int_to_ptr.vmem [resolvable:$true] %s1233
          %1239 = dma.vmem_to_hbm [thread:$0]  %s1234, 512, %s1232, %s1188, 64, 64, 4
        $region104: #{point_transformer_classif.7} parent=55 // pred_fallthru
          _
      $region56: #{point_transformer_classif.7} parent=5 // pred_fallthru
        _
      %p1240 = scmp.le.s32.totalorder 2, %s31
      // Predicated region
      $region105: #{point_transformer_classif.7} parent=5 // pred_check
        %p1241 = pneg %p1240
      $region106: #{point_transformer_classif.7} parent=5 // pred_check_branch
        %1243 = sbr.rel (%p1241) target = $region108
      $region107: #{point_transformer_classif.7} parent=5 // pred_region
        %s1244 = ssub.s32 %s31, 2
        // Predicated region
        $region109: #{point_transformer_classif.7} parent=107 // pred_check
          %p1245 = pneg %p254
        $region110: #{point_transformer_classif.7} parent=107 // pred_check_branch
          %1247 = sbr.rel (%p1245) target = $region112
        $region111: #{point_transformer_classif.7} parent=107 // pred_region
          %s1248 = sand.u32 %s239, 1
          %s1249 = scalar_lea.sflag [#allocation4], %s1248
          %s1250 = sand.u32 %s239, 1
          %s1251 = smul.addr %s1250, 64
          %s1252 = scalar_lea.vmem [#allocation17], %s1251
          %1253 = dma.done %s1249, 1024
        $region112: #{point_transformer_classif.7} parent=107 // pred_fallthru
          _
        // Predicated region
        $region113: #{point_transformer_classif.7} parent=107 // pred_check
          %p1254 = pneg %p280
        $region114: #{point_transformer_classif.7} parent=107 // pred_check_branch
          %1256 = sbr.rel (%p1254) target = $region116
        $region115: #{point_transformer_classif.7} parent=107 // pred_region
          %s1257 = sand.u32 %s37, 1
          %s1258 = scalar_lea.sflag [#allocation19], %s1257
          %s1259 = sand.u32 %s265, 1
          %s1260 = smul.addr %s1259, 32
          %s1261 = scalar_lea.vmem [#allocation18], %s1260
          %1262 = dma.done %s1258, 512
        $region116: #{point_transformer_classif.7} parent=107 // pred_fallthru
          _
        // Predicated region
        $region117: #{point_transformer_classif.7} parent=107 // pred_check
          %p1263 = pneg %p306
        $region118: #{point_transformer_classif.7} parent=107 // pred_check_branch
          %1265 = sbr.rel (%p1263) target = $region120
        $region119: #{point_transformer_classif.7} parent=107 // pred_region
          %s1266 = sand.u32 %s37, 1
          %s1267 = scalar_lea.sflag [#allocation19], %s1266
          %s1268 = sand.u32 %s291, 1
          %s1269 = smul.addr %s1268, 32
          %s1270 = scalar_lea.vmem [#allocation20], %s1269
          %1271 = dma.done %s1267, 512
        $region120: #{point_transformer_classif.7} parent=107 // pred_fallthru
          _
      $region108: #{point_transformer_classif.7} parent=5 // pred_fallthru
        _
    $region6: #{point_transformer_classif.7} parent=1 // loop_footer
      %s35 = sadd.s32 1, %s31
    $region7: #{point_transformer_classif.7} parent=1 // loop_footer_branch
      %30 = sbr.rel target = $region3
    $region8: #{point_transformer_classif.7} parent=1 // loop_exit
      _
    %1272 = vsyncpa [#allocation3], 1
    %s1273 = scalar_lea.sflag [#allocation3], 1
    %1274 = vsyncpa %s1273, 1
    %1275 = vsyncpa [#allocation6], 1
    %1276 = vsyncpa [#allocation9], 1
    %1277 = vsyncpa [#allocation12], 1
    %1278 = vsyncpa [#allocation15], 1
    %1279 = vsyncpa [#allocation4], 1
    %s1280 = scalar_lea.sflag [#allocation4], 1
    %1281 = vsyncpa %s1280, 1
    %1282 = vsyncpa [#allocation19], 1
    %s1283 = scalar_lea.sflag [#allocation19], 1
    %1284 = vsyncpa %s1283, 1

// kernel: custom-call.34
$region0: #{custom-call.34}
  %s0 = inlined_call_operand.vmem [shape: f32[2,64], index: 0, kind: output, shape index: {}]

// kernel: point_transformer_classif.8
$region0: #{point_transformer_classif.8}
  #allocation0 [shape = 'u32[]', space=smem, size = 0x4, offset = 0x4, fixed_abs, tag = 'smem constant byte address 0x4 - core index']
  #allocation1 [shape = 'u32[144,128]{1,0:T(1,128)}', space=vmem, size = 0x12000, scoped, tag = 'internal scratch']
  %s0 = inlined_call_operand.hbm [shape: f32[128,32], index: 0, kind: input, shape index: {}]
  %s1 = inlined_call_operand.hbm [shape: bf16[128,32], index: 1, kind: input, shape index: {}]
  %s2 = inlined_call_operand.hbm [shape: bf16[128,32], index: 2, kind: input, shape index: {}]
  %s3 = inlined_call_operand.hbm [shape: bf16[128,12], index: 3, kind: input, shape index: {}]
  %s4 = inlined_call_operand.hbm [shape: f32[32,8], index: 4, kind: input, shape index: {}]
  %s5 = inlined_call_operand.hbm [shape: f32[1,8], index: 5, kind: input, shape index: {}]
  %s6 = inlined_call_operand.hbm [shape: f32[12,32], index: 6, kind: input, shape index: {}]
  %s7 = inlined_call_operand.hbm [shape: f32[1,32], index: 7, kind: input, shape index: {}]
  %s8 = inlined_call_operand.hbm [shape: f32[32,32], index: 8, kind: input, shape index: {}]
  %s9 = inlined_call_operand.hbm [shape: f32[1,32], index: 9, kind: input, shape index: {}]
  %s10 = inlined_call_operand.hbm [shape: f32[32,32], index: 10, kind: input, shape index: {}]
  %s11 = inlined_call_operand.hbm [shape: f32[1,32], index: 11, kind: input, shape index: {}]
  %s12 = inlined_call_operand.hbm [shape: f32[32,32], index: 12, kind: input, shape index: {}]
  %s13 = inlined_call_operand.hbm [shape: f32[1,32], index: 13, kind: input, shape index: {}]
  %s14 = inlined_call_operand.hbm [shape: f32[8,32], index: 14, kind: input, shape index: {}]
  %s15 = inlined_call_operand.hbm [shape: f32[1,32], index: 15, kind: input, shape index: {}]
  %s16 = inlined_call_operand.hbm [shape: f32[128,32], index: 16, kind: output, shape index: {}]
  %s17 = sld [smem:[#allocation0]]
  $region161: #{point_transformer_classif.8} parent=0
    _
  %s19 = ssub.s32 1, %s17
  %s20 = scalar_select 0, %s19, %s17
  $region1: #{point_transformer_classif.8} parent=0
    #allocation2 [shape = 'u8[65536]{0}', space=vmem, size = 0x10000, scoped, tag = 'input window, operand 0']
    #allocation3 [shape = 's32[2]{0}', space=sflag, size = 0x8, scoped, tag = 'scoped memory for point_transformer_classif.8']
    #allocation4 [shape = 's32[2]{0}', space=sflag, size = 0x8, scoped, tag = 'scoped memory for point_transformer_classif.8']
    #allocation5 [shape = 'u8[32768]{0}', space=vmem, size = 0x8000, scoped, tag = 'input window, operand 1']
    #allocation6 [shape = 's32[2]{0}', space=sflag, size = 0x8, scoped, tag = 'scoped memory for point_transformer_classif.8']
    #allocation7 [shape = 'u8[32768]{0}', space=vmem, size = 0x8000, scoped, tag = 'input window, operand 2']
    #allocation8 [shape = 'u8[32768]{0}', space=vmem, size = 0x8000, scoped, tag = 'input window, operand 3']
    #allocation9 [shape = 's32[2]{0}', space=sflag, size = 0x8, scoped, tag = 'scoped memory for point_transformer_classif.8']
    #allocation10 [shape = 'u8[16384]{0}', space=vmem, size = 0x4000, scoped, tag = 'input window, operand 4, single buffered']
    #allocation11 [shape = 'u8[512]{0}', space=vmem, size = 0x400, scoped, tag = 'input window, operand 5, single buffered']
    #allocation12 [shape = 's32[1]{0}', space=sflag, size = 0x4, scoped, tag = 'scoped memory for point_transformer_classif.8']
    #allocation13 [shape = 'u8[8192]{0}', space=vmem, size = 0x2000, scoped, tag = 'input window, operand 6, single buffered']
    #allocation14 [shape = 'u8[512]{0}', space=vmem, size = 0x400, scoped, tag = 'input window, operand 7, single buffered']
    #allocation15 [shape = 's32[1]{0}', space=sflag, size = 0x4, scoped, tag = 'scoped memory for point_transformer_classif.8']
    #allocation16 [shape = 'u8[16384]{0}', space=vmem, size = 0x4000, scoped, tag = 'input window, operand 8, single buffered']
    #allocation17 [shape = 'u8[512]{0}', space=vmem, size = 0x400, scoped, tag = 'input window, operand 9, single buffered']
    #allocation18 [shape = 's32[1]{0}', space=sflag, size = 0x4, scoped, tag = 'scoped memory for point_transformer_classif.8']
    #allocation19 [shape = 'u8[16384]{0}', space=vmem, size = 0x4000, scoped, tag = 'input window, operand 10, single buffered']
    #allocation20 [shape = 'u8[512]{0}', space=vmem, size = 0x400, scoped, tag = 'input window, operand 11, single buffered']
    #allocation21 [shape = 's32[1]{0}', space=sflag, size = 0x4, scoped, tag = 'scoped memory for point_transformer_classif.8']
    #allocation22 [shape = 'u8[16384]{0}', space=vmem, size = 0x4000, scoped, tag = 'input window, operand 12, single buffered']
    #allocation23 [shape = 'u8[512]{0}', space=vmem, size = 0x400, scoped, tag = 'input window, operand 13, single buffered']
    #allocation24 [shape = 's32[1]{0}', space=sflag, size = 0x4, scoped, tag = 'scoped memory for point_transformer_classif.8']
    #allocation25 [shape = 'u8[4096]{0}', space=vmem, size = 0x1000, scoped, tag = 'input window, operand 14, single buffered']
    #allocation26 [shape = 'u8[512]{0}', space=vmem, size = 0x400, scoped, tag = 'input window, operand 15, single buffered']
    #allocation27 [shape = 's32[1]{0}', space=sflag, size = 0x4, scoped, tag = 'scoped memory for point_transformer_classif.8']
    #allocation28 [shape = 'u8[65536]{0}', space=vmem, size = 0x10000, scoped, tag = 'output window, operand 0']
    %21 = vsyncpa [#allocation3], 0
    %s22 = scalar_lea.sflag [#allocation3], 1
    %23 = vsyncpa %s22, 0
    %24 = vsyncpa [#allocation6], 0
    %s25 = scalar_lea.sflag [#allocation6], 1
    %26 = vsyncpa %s25, 0
    %27 = vsyncpa [#allocation9], 0
    %s28 = scalar_lea.sflag [#allocation9], 1
    %29 = vsyncpa %s28, 0
    %30 = vsyncpa [#allocation12], 0
    %31 = vsyncpa [#allocation15], 0
    %32 = vsyncpa [#allocation18], 0
    %33 = vsyncpa [#allocation21], 0
    %34 = vsyncpa [#allocation24], 0
    %35 = vsyncpa [#allocation27], 0
    %36 = vsyncpa [#allocation4], 0
    %s37 = scalar_lea.sflag [#allocation4], 1
    %38 = vsyncpa %s37, 0
    loop: start=0, step=1, limit=4
    $region2: #{point_transformer_classif.8} parent=1 // loop_pre_header
      _
    $region3: #{point_transformer_classif.8} parent=1 // loop_header
      %s40 = sphi 0, %s44
      %p41 = scmp.ge.s32.totalorder %s40, 4
      %s50 = sphi 0, %s52
      %s53 = sphi 0, %s50
      %s54 = sphi 0, %s53
      %s70 = sphi 0, %s54
      %s76 = sphi 0, %s78
      %s79 = sphi 0, %s76
      %s80 = sphi 0, %s79
      %s96 = sphi 0, %s80
      %s102 = sphi 0, %s104
      %s105 = sphi 0, %s102
      %s106 = sphi 0, %s105
      %s122 = sphi 0, %s106
      %s128 = sphi 0, %s130
      %s131 = sphi 0, %s128
      %s132 = sphi 0, %s131
      %s148 = sphi 0, %s132
      %s152 = sphi 0, %s152
      %s154 = sphi 0, %s152
      %s155 = sphi 0, %s154
      %s169 = sphi 0, %s155
      %s173 = sphi 0, %s173
      %s175 = sphi 0, %s173
      %s176 = sphi 0, %s175
      %s190 = sphi 0, %s176
      %s194 = sphi 0, %s194
      %s196 = sphi 0, %s194
      %s197 = sphi 0, %s196
      %s211 = sphi 0, %s197
      %s215 = sphi 0, %s215
      %s217 = sphi 0, %s215
      %s218 = sphi 0, %s217
      %s232 = sphi 0, %s218
      %s236 = sphi 0, %s236
      %s238 = sphi 0, %s236
      %s239 = sphi 0, %s238
      %s253 = sphi 0, %s239
      %s257 = sphi 0, %s257
      %s259 = sphi 0, %s257
      %s260 = sphi 0, %s259
      %s274 = sphi 0, %s260
      %s278 = sphi 0, %s278
      %s280 = sphi 0, %s278
      %s281 = sphi 0, %s280
      %s295 = sphi 0, %s281
      %s299 = sphi 0, %s299
      %s301 = sphi 0, %s299
      %s302 = sphi 0, %s301
      %s316 = sphi 0, %s302
      %s320 = sphi 0, %s320
      %s322 = sphi 0, %s320
      %s323 = sphi 0, %s322
      %s337 = sphi 0, %s323
      %s341 = sphi 0, %s341
      %s343 = sphi 0, %s341
      %s344 = sphi 0, %s343
      %s358 = sphi 0, %s344
      %s362 = sphi 0, %s362
      %s364 = sphi 0, %s362
      %s365 = sphi 0, %s364
      %s379 = sphi 0, %s365
      %s383 = sphi 0, %s383
      %s385 = sphi 0, %s383
      %s386 = sphi 0, %s385
      %s400 = sphi 0, %s386
      %s406 = sphi 0, %s408
      %s409 = sphi 0, %s406
      %s410 = sphi 0, %s409
      %s426 = sphi 0, %s410
    $region4: #{point_transformer_classif.8} parent=1 // loop_header_branch
      %43 = sbr.rel (%p41) target = $region8
    $region5: #{point_transformer_classif.8} parent=1 // loop_body
      %s45 = ssub.s32 %s40, 1
      %s46 = ssub.s32 %s40, 2
      %s47 = sadd.s32 %s40, 1
      %s48 = ssub.s32 %s40, %s47
      %p49 = scmp.eq.s32.totalorder %s48, 0
      %s51 = sadd.s32 %s50, 1
      %s52 = scalar_select %p49, %s50, %s51
      %p55 = pneg %p49
      %p56 = scmp.eq.s32.totalorder %s40, 1
      %p57 = por %p55, %p56
      %p58 = scmp.ne.s32.totalorder %s50, %s53
      %p59 = scmp.eq.s32.totalorder %s40, 0
      %p60 = por %p58, %p59
      %p61 = scmp.ne.s32.totalorder %s50, %s53
      %p62 = scmp.eq.s32.totalorder %s45, 1
      %p63 = por %p61, %p62
      %p64 = scmp.ne.s32.totalorder %s53, %s54
      %p65 = scmp.eq.s32.totalorder %s45, 0
      %p66 = por %p64, %p65
      %p67 = scmp.ne.s32.totalorder %s53, %s54
      %p68 = scmp.eq.s32.totalorder %s46, 1
      %p69 = por %p67, %p68
      %p71 = scmp.ne.s32.totalorder %s54, %s70
      %p72 = scmp.eq.s32.totalorder %s46, 0
      %p73 = por %p71, %p72
      %s74 = ssub.s32 %s40, %s47
      %p75 = scmp.eq.s32.totalorder %s74, 0
      %s77 = sadd.s32 %s76, 1
      %s78 = scalar_select %p75, %s76, %s77
      %p81 = pneg %p75
      %p82 = scmp.eq.s32.totalorder %s40, 1
      %p83 = por %p81, %p82
      %p84 = scmp.ne.s32.totalorder %s76, %s79
      %p85 = scmp.eq.s32.totalorder %s40, 0
      %p86 = por %p84, %p85
      %p87 = scmp.ne.s32.totalorder %s76, %s79
      %p88 = scmp.eq.s32.totalorder %s45, 1
      %p89 = por %p87, %p88
      %p90 = scmp.ne.s32.totalorder %s79, %s80
      %p91 = scmp.eq.s32.totalorder %s45, 0
      %p92 = por %p90, %p91
      %p93 = scmp.ne.s32.totalorder %s79, %s80
      %p94 = scmp.eq.s32.totalorder %s46, 1
      %p95 = por %p93, %p94
      %p97 = scmp.ne.s32.totalorder %s80, %s96
      %p98 = scmp.eq.s32.totalorder %s46, 0
      %p99 = por %p97, %p98
      %s100 = ssub.s32 %s40, %s47
      %p101 = scmp.eq.s32.totalorder %s100, 0
      %s103 = sadd.s32 %s102, 1
      %s104 = scalar_select %p101, %s102, %s103
      %p107 = pneg %p101
      %p108 = scmp.eq.s32.totalorder %s40, 1
      %p109 = por %p107, %p108
      %p110 = scmp.ne.s32.totalorder %s102, %s105
      %p111 = scmp.eq.s32.totalorder %s40, 0
      %p112 = por %p110, %p111
      %p113 = scmp.ne.s32.totalorder %s102, %s105
      %p114 = scmp.eq.s32.totalorder %s45, 1
      %p115 = por %p113, %p114
      %p116 = scmp.ne.s32.totalorder %s105, %s106
      %p117 = scmp.eq.s32.totalorder %s45, 0
      %p118 = por %p116, %p117
      %p119 = scmp.ne.s32.totalorder %s105, %s106
      %p120 = scmp.eq.s32.totalorder %s46, 1
      %p121 = por %p119, %p120
      %p123 = scmp.ne.s32.totalorder %s106, %s122
      %p124 = scmp.eq.s32.totalorder %s46, 0
      %p125 = por %p123, %p124
      %s126 = ssub.s32 %s40, %s47
      %p127 = scmp.eq.s32.totalorder %s126, 0
      %s129 = sadd.s32 %s128, 1
      %s130 = scalar_select %p127, %s128, %s129
      %p133 = pneg %p127
      %p134 = scmp.eq.s32.totalorder %s40, 1
      %p135 = por %p133, %p134
      %p136 = scmp.ne.s32.totalorder %s128, %s131
      %p137 = scmp.eq.s32.totalorder %s40, 0
      %p138 = por %p136, %p137
      %p139 = scmp.ne.s32.totalorder %s128, %s131
      %p140 = scmp.eq.s32.totalorder %s45, 1
      %p141 = por %p139, %p140
      %p142 = scmp.ne.s32.totalorder %s131, %s132
      %p143 = scmp.eq.s32.totalorder %s45, 0
      %p144 = por %p142, %p143
      %p145 = scmp.ne.s32.totalorder %s131, %s132
      %p146 = scmp.eq.s32.totalorder %s46, 1
      %p147 = por %p145, %p146
      %p149 = scmp.ne.s32.totalorder %s132, %s148
      %p150 = scmp.eq.s32.totalorder %s46, 0
      %p151 = por %p149, %p150
      %s153 = sadd.s32 %s152, 1
      %p156 = scmp.eq.s32.totalorder %s40, 1
      %p157 = scmp.ne.s32.totalorder %s152, %s154
      %p158 = scmp.eq.s32.totalorder %s40, 0
      %p159 = por %p157, %p158
      %p160 = scmp.ne.s32.totalorder %s152, %s154
      %p161 = scmp.eq.s32.totalorder %s45, 1
      %p162 = por %p160, %p161
      %p163 = scmp.ne.s32.totalorder %s154, %s155
      %p164 = scmp.eq.s32.totalorder %s45, 0
      %p165 = por %p163, %p164
      %p166 = scmp.ne.s32.totalorder %s154, %s155
      %p167 = scmp.eq.s32.totalorder %s46, 1
      %p168 = por %p166, %p167
      %p170 = scmp.ne.s32.totalorder %s155, %s169
      %p171 = scmp.eq.s32.totalorder %s46, 0
      %p172 = por %p170, %p171
      %s174 = sadd.s32 %s173, 1
      %p177 = scmp.eq.s32.totalorder %s40, 1
      %p178 = scmp.ne.s32.totalorder %s173, %s175
      %p179 = scmp.eq.s32.totalorder %s40, 0
      %p180 = por %p178, %p179
      %p181 = scmp.ne.s32.totalorder %s173, %s175
      %p182 = scmp.eq.s32.totalorder %s45, 1
      %p183 = por %p181, %p182
      %p184 = scmp.ne.s32.totalorder %s175, %s176
      %p185 = scmp.eq.s32.totalorder %s45, 0
      %p186 = por %p184, %p185
      %p187 = scmp.ne.s32.totalorder %s175, %s176
      %p188 = scmp.eq.s32.totalorder %s46, 1
      %p189 = por %p187, %p188
      %p191 = scmp.ne.s32.totalorder %s176, %s190
      %p192 = scmp.eq.s32.totalorder %s46, 0
      %p193 = por %p191, %p192
      %s195 = sadd.s32 %s194, 1
      %p198 = scmp.eq.s32.totalorder %s40, 1
      %p199 = scmp.ne.s32.totalorder %s194, %s196
      %p200 = scmp.eq.s32.totalorder %s40, 0
      %p201 = por %p199, %p200
      %p202 = scmp.ne.s32.totalorder %s194, %s196
      %p203 = scmp.eq.s32.totalorder %s45, 1
      %p204 = por %p202, %p203
      %p205 = scmp.ne.s32.totalorder %s196, %s197
      %p206 = scmp.eq.s32.totalorder %s45, 0
      %p207 = por %p205, %p206
      %p208 = scmp.ne.s32.totalorder %s196, %s197
      %p209 = scmp.eq.s32.totalorder %s46, 1
      %p210 = por %p208, %p209
      %p212 = scmp.ne.s32.totalorder %s197, %s211
      %p213 = scmp.eq.s32.totalorder %s46, 0
      %p214 = por %p212, %p213
      %s216 = sadd.s32 %s215, 1
      %p219 = scmp.eq.s32.totalorder %s40, 1
      %p220 = scmp.ne.s32.totalorder %s215, %s217
      %p221 = scmp.eq.s32.totalorder %s40, 0
      %p222 = por %p220, %p221
      %p223 = scmp.ne.s32.totalorder %s215, %s217
      %p224 = scmp.eq.s32.totalorder %s45, 1
      %p225 = por %p223, %p224
      %p226 = scmp.ne.s32.totalorder %s217, %s218
      %p227 = scmp.eq.s32.totalorder %s45, 0
      %p228 = por %p226, %p227
      %p229 = scmp.ne.s32.totalorder %s217, %s218
      %p230 = scmp.eq.s32.totalorder %s46, 1
      %p231 = por %p229, %p230
      %p233 = scmp.ne.s32.totalorder %s218, %s232
      %p234 = scmp.eq.s32.totalorder %s46, 0
      %p235 = por %p233, %p234
      %s237 = sadd.s32 %s236, 1
      %p240 = scmp.eq.s32.totalorder %s40, 1
      %p241 = scmp.ne.s32.totalorder %s236, %s238
      %p242 = scmp.eq.s32.totalorder %s40, 0
      %p243 = por %p241, %p242
      %p244 = scmp.ne.s32.totalorder %s236, %s238
      %p245 = scmp.eq.s32.totalorder %s45, 1
      %p246 = por %p244, %p245
      %p247 = scmp.ne.s32.totalorder %s238, %s239
      %p248 = scmp.eq.s32.totalorder %s45, 0
      %p249 = por %p247, %p248
      %p250 = scmp.ne.s32.totalorder %s238, %s239
      %p251 = scmp.eq.s32.totalorder %s46, 1
      %p252 = por %p250, %p251
      %p254 = scmp.ne.s32.totalorder %s239, %s253
      %p255 = scmp.eq.s32.totalorder %s46, 0
      %p256 = por %p254, %p255
      %s258 = sadd.s32 %s257, 1
      %p261 = scmp.eq.s32.totalorder %s40, 1
      %p262 = scmp.ne.s32.totalorder %s257, %s259
      %p263 = scmp.eq.s32.totalorder %s40, 0
      %p264 = por %p262, %p263
      %p265 = scmp.ne.s32.totalorder %s257, %s259
      %p266 = scmp.eq.s32.totalorder %s45, 1
      %p267 = por %p265, %p266
      %p268 = scmp.ne.s32.totalorder %s259, %s260
      %p269 = scmp.eq.s32.totalorder %s45, 0
      %p270 = por %p268, %p269
      %p271 = scmp.ne.s32.totalorder %s259, %s260
      %p272 = scmp.eq.s32.totalorder %s46, 1
      %p273 = por %p271, %p272
      %p275 = scmp.ne.s32.totalorder %s260, %s274
      %p276 = scmp.eq.s32.totalorder %s46, 0
      %p277 = por %p275, %p276
      %s279 = sadd.s32 %s278, 1
      %p282 = scmp.eq.s32.totalorder %s40, 1
      %p283 = scmp.ne.s32.totalorder %s278, %s280
      %p284 = scmp.eq.s32.totalorder %s40, 0
      %p285 = por %p283, %p284
      %p286 = scmp.ne.s32.totalorder %s278, %s280
      %p287 = scmp.eq.s32.totalorder %s45, 1
      %p288 = por %p286, %p287
      %p289 = scmp.ne.s32.totalorder %s280, %s281
      %p290 = scmp.eq.s32.totalorder %s45, 0
      %p291 = por %p289, %p290
      %p292 = scmp.ne.s32.totalorder %s280, %s281
      %p293 = scmp.eq.s32.totalorder %s46, 1
      %p294 = por %p292, %p293
      %p296 = scmp.ne.s32.totalorder %s281, %s295
      %p297 = scmp.eq.s32.totalorder %s46, 0
      %p298 = por %p296, %p297
      %s300 = sadd.s32 %s299, 1
      %p303 = scmp.eq.s32.totalorder %s40, 1
      %p304 = scmp.ne.s32.totalorder %s299, %s301
      %p305 = scmp.eq.s32.totalorder %s40, 0
      %p306 = por %p304, %p305
      %p307 = scmp.ne.s32.totalorder %s299, %s301
      %p308 = scmp.eq.s32.totalorder %s45, 1
      %p309 = por %p307, %p308
      %p310 = scmp.ne.s32.totalorder %s301, %s302
      %p311 = scmp.eq.s32.totalorder %s45, 0
      %p312 = por %p310, %p311
      %p313 = scmp.ne.s32.totalorder %s301, %s302
      %p314 = scmp.eq.s32.totalorder %s46, 1
      %p315 = por %p313, %p314
      %p317 = scmp.ne.s32.totalorder %s302, %s316
      %p318 = scmp.eq.s32.totalorder %s46, 0
      %p319 = por %p317, %p318
      %s321 = sadd.s32 %s320, 1
      %p324 = scmp.eq.s32.totalorder %s40, 1
      %p325 = scmp.ne.s32.totalorder %s320, %s322
      %p326 = scmp.eq.s32.totalorder %s40, 0
      %p327 = por %p325, %p326
      %p328 = scmp.ne.s32.totalorder %s320, %s322
      %p329 = scmp.eq.s32.totalorder %s45, 1
      %p330 = por %p328, %p329
      %p331 = scmp.ne.s32.totalorder %s322, %s323
      %p332 = scmp.eq.s32.totalorder %s45, 0
      %p333 = por %p331, %p332
      %p334 = scmp.ne.s32.totalorder %s322, %s323
      %p335 = scmp.eq.s32.totalorder %s46, 1
      %p336 = por %p334, %p335
      %p338 = scmp.ne.s32.totalorder %s323, %s337
      %p339 = scmp.eq.s32.totalorder %s46, 0
      %p340 = por %p338, %p339
      %s342 = sadd.s32 %s341, 1
      %p345 = scmp.eq.s32.totalorder %s40, 1
      %p346 = scmp.ne.s32.totalorder %s341, %s343
      %p347 = scmp.eq.s32.totalorder %s40, 0
      %p348 = por %p346, %p347
      %p349 = scmp.ne.s32.totalorder %s341, %s343
      %p350 = scmp.eq.s32.totalorder %s45, 1
      %p351 = por %p349, %p350
      %p352 = scmp.ne.s32.totalorder %s343, %s344
      %p353 = scmp.eq.s32.totalorder %s45, 0
      %p354 = por %p352, %p353
      %p355 = scmp.ne.s32.totalorder %s343, %s344
      %p356 = scmp.eq.s32.totalorder %s46, 1
      %p357 = por %p355, %p356
      %p359 = scmp.ne.s32.totalorder %s344, %s358
      %p360 = scmp.eq.s32.totalorder %s46, 0
      %p361 = por %p359, %p360
      %s363 = sadd.s32 %s362, 1
      %p366 = scmp.eq.s32.totalorder %s40, 1
      %p367 = scmp.ne.s32.totalorder %s362, %s364
      %p368 = scmp.eq.s32.totalorder %s40, 0
      %p369 = por %p367, %p368
      %p370 = scmp.ne.s32.totalorder %s362, %s364
      %p371 = scmp.eq.s32.totalorder %s45, 1
      %p372 = por %p370, %p371
      %p373 = scmp.ne.s32.totalorder %s364, %s365
      %p374 = scmp.eq.s32.totalorder %s45, 0
      %p375 = por %p373, %p374
      %p376 = scmp.ne.s32.totalorder %s364, %s365
      %p377 = scmp.eq.s32.totalorder %s46, 1
      %p378 = por %p376, %p377
      %p380 = scmp.ne.s32.totalorder %s365, %s379
      %p381 = scmp.eq.s32.totalorder %s46, 0
      %p382 = por %p380, %p381
      %s384 = sadd.s32 %s383, 1
      %p387 = scmp.eq.s32.totalorder %s40, 1
      %p388 = scmp.ne.s32.totalorder %s383, %s385
      %p389 = scmp.eq.s32.totalorder %s40, 0
      %p390 = por %p388, %p389
      %p391 = scmp.ne.s32.totalorder %s383, %s385
      %p392 = scmp.eq.s32.totalorder %s45, 1
      %p393 = por %p391, %p392
      %p394 = scmp.ne.s32.totalorder %s385, %s386
      %p395 = scmp.eq.s32.totalorder %s45, 0
      %p396 = por %p394, %p395
      %p397 = scmp.ne.s32.totalorder %s385, %s386
      %p398 = scmp.eq.s32.totalorder %s46, 1
      %p399 = por %p397, %p398
      %p401 = scmp.ne.s32.totalorder %s386, %s400
      %p402 = scmp.eq.s32.totalorder %s46, 0
      %p403 = por %p401, %p402
      %s404 = ssub.s32 %s40, %s47
      %p405 = scmp.eq.s32.totalorder %s404, 0
      %s407 = sadd.s32 %s406, 1
      %s408 = scalar_select %p405, %s406, %s407
      %p411 = pneg %p405
      %p412 = scmp.eq.s32.totalorder %s40, 1
      %p413 = por %p411, %p412
      %p414 = scmp.ne.s32.totalorder %s406, %s409
      %p415 = scmp.eq.s32.totalorder %s40, 0
      %p416 = por %p414, %p415
      %p417 = scmp.ne.s32.totalorder %s406, %s409
      %p418 = scmp.eq.s32.totalorder %s45, 1
      %p419 = por %p417, %p418
      %p420 = scmp.ne.s32.totalorder %s409, %s410
      %p421 = scmp.eq.s32.totalorder %s45, 0
      %p422 = por %p420, %p421
      %p423 = scmp.ne.s32.totalorder %s409, %s410
      %p424 = scmp.eq.s32.totalorder %s46, 1
      %p425 = por %p423, %p424
      %p427 = scmp.ne.s32.totalorder %s410, %s426
      %p428 = scmp.eq.s32.totalorder %s46, 0
      %p429 = por %p427, %p428
      %p430 = scmp.le.s32.totalorder 1, %s40
      %p431 = scmp.lt.s32.totalorder %s40, 3
      %p432 = pnand %p430, %p431
      %p433 = pneg %p432
      // Predicated region
      $region9: #{point_transformer_classif.8} parent=5 // pred_check
        _
      $region10: #{point_transformer_classif.8} parent=5 // pred_check_branch
        %435 = sbr.rel (%p432) target = $region12
      $region11: #{point_transformer_classif.8} parent=5 // pred_region
        %s436 = ssub.s32 %s40, 1
        // Predicated region
        $region13: #{point_transformer_classif.8} parent=11 // pred_check
          %p437 = pneg %p165
        $region14: #{point_transformer_classif.8} parent=11 // pred_check_branch
          %439 = sbr.rel (%p437) target = $region16
        $region15: #{point_transformer_classif.8} parent=11 // pred_region
          %s441 = ssub.s32 512, 512
          %442 = vsyncadd [#allocation9], %s441
          %s443 = sshll.u32 [#allocation10], 4
          %s444 = int_to_ptr.vmem [resolvable:$true] %s443
          %449 = dma.hbm_to_vmem [thread:$0]  %s4, 512, %s444, [#allocation9], 128, 128, 8
        $region16: #{point_transformer_classif.8} parent=11 // pred_fallthru
          _
        // Predicated region
        $region17: #{point_transformer_classif.8} parent=11 // pred_check
          %p450 = pneg %p186
        $region18: #{point_transformer_classif.8} parent=11 // pred_check_branch
          %452 = sbr.rel (%p450) target = $region20
        $region19: #{point_transformer_classif.8} parent=11 // pred_region
          %s454 = ssub.s32 16, 16
          %455 = vsyncadd [#allocation12], %s454
          %s457 = sshll.u32 [#allocation11], 4
          %s458 = int_to_ptr.vmem [resolvable:$true] %s457
          %460 = dma.hbm_to_vmem [thread:$0]  %s5, 16, %s458, [#allocation12]
        $region20: #{point_transformer_classif.8} parent=11 // pred_fallthru
          _
        // Predicated region
        $region21: #{point_transformer_classif.8} parent=11 // pred_check
          %p461 = pneg %p207
        $region22: #{point_transformer_classif.8} parent=11 // pred_check_branch
          %463 = sbr.rel (%p461) target = $region24
        $region23: #{point_transformer_classif.8} parent=11 // pred_region
          %s465 = ssub.s32 256, 256
          %466 = vsyncadd [#allocation12], %s465
          %s467 = sshll.u32 [#allocation13], 4
          %s468 = int_to_ptr.vmem [resolvable:$true] %s467
          %473 = dma.hbm_to_vmem [thread:$0]  %s6, 256, %s468, [#allocation12], 128, 128, 8
        $region24: #{point_transformer_classif.8} parent=11 // pred_fallthru
          _
        // Predicated region
        $region25: #{point_transformer_classif.8} parent=11 // pred_check
          %p474 = pneg %p228
        $region26: #{point_transformer_classif.8} parent=11 // pred_check_branch
          %476 = sbr.rel (%p474) target = $region28
        $region27: #{point_transformer_classif.8} parent=11 // pred_region
          %s478 = ssub.s32 16, 16
          %479 = vsyncadd [#allocation15], %s478
          %s481 = sshll.u32 [#allocation14], 4
          %s482 = int_to_ptr.vmem [resolvable:$true] %s481
          %484 = dma.hbm_to_vmem [thread:$0]  %s7, 16, %s482, [#allocation15]
        $region28: #{point_transformer_classif.8} parent=11 // pred_fallthru
          _
        // Predicated region
        $region29: #{point_transformer_classif.8} parent=11 // pred_check
          %p485 = pneg %p249
        $region30: #{point_transformer_classif.8} parent=11 // pred_check_branch
          %487 = sbr.rel (%p485) target = $region32
        $region31: #{point_transformer_classif.8} parent=11 // pred_region
          %s489 = ssub.s32 512, 512
          %490 = vsyncadd [#allocation15], %s489
          %s491 = sshll.u32 [#allocation16], 4
          %s492 = int_to_ptr.vmem [resolvable:$true] %s491
          %497 = dma.hbm_to_vmem [thread:$0]  %s8, 512, %s492, [#allocation15], 128, 128, 8
        $region32: #{point_transformer_classif.8} parent=11 // pred_fallthru
          _
        // Predicated region
        $region33: #{point_transformer_classif.8} parent=11 // pred_check
          %p498 = pneg %p270
        $region34: #{point_transformer_classif.8} parent=11 // pred_check_branch
          %500 = sbr.rel (%p498) target = $region36
        $region35: #{point_transformer_classif.8} parent=11 // pred_region
          %s502 = ssub.s32 16, 16
          %503 = vsyncadd [#allocation18], %s502
          %s505 = sshll.u32 [#allocation17], 4
          %s506 = int_to_ptr.vmem [resolvable:$true] %s505
          %508 = dma.hbm_to_vmem [thread:$0]  %s9, 16, %s506, [#allocation18]
        $region36: #{point_transformer_classif.8} parent=11 // pred_fallthru
          _
        // Predicated region
        $region37: #{point_transformer_classif.8} parent=11 // pred_check
          %p509 = pneg %p291
        $region38: #{point_transformer_classif.8} parent=11 // pred_check_branch
          %511 = sbr.rel (%p509) target = $region40
        $region39: #{point_transformer_classif.8} parent=11 // pred_region
          %s513 = ssub.s32 512, 512
          %514 = vsyncadd [#allocation18], %s513
          %s515 = sshll.u32 [#allocation19], 4
          %s516 = int_to_ptr.vmem [resolvable:$true] %s515
          %521 = dma.hbm_to_vmem [thread:$0]  %s10, 512, %s516, [#allocation18], 128, 128, 8
        $region40: #{point_transformer_classif.8} parent=11 // pred_fallthru
          _
        // Predicated region
        $region41: #{point_transformer_classif.8} parent=11 // pred_check
          %p522 = pneg %p312
        $region42: #{point_transformer_classif.8} parent=11 // pred_check_branch
          %524 = sbr.rel (%p522) target = $region44
        $region43: #{point_transformer_classif.8} parent=11 // pred_region
          %s526 = ssub.s32 16, 16
          %527 = vsyncadd [#allocation21], %s526
          %s529 = sshll.u32 [#allocation20], 4
          %s530 = int_to_ptr.vmem [resolvable:$true] %s529
          %532 = dma.hbm_to_vmem [thread:$0]  %s11, 16, %s530, [#allocation21]
        $region44: #{point_transformer_classif.8} parent=11 // pred_fallthru
          _
        // Predicated region
        $region45: #{point_transformer_classif.8} parent=11 // pred_check
          %p533 = pneg %p333
        $region46: #{point_transformer_classif.8} parent=11 // pred_check_branch
          %535 = sbr.rel (%p533) target = $region48
        $region47: #{point_transformer_classif.8} parent=11 // pred_region
          %s537 = ssub.s32 512, 512
          %538 = vsyncadd [#allocation21], %s537
          %s539 = sshll.u32 [#allocation22], 4
          %s540 = int_to_ptr.vmem [resolvable:$true] %s539
          %545 = dma.hbm_to_vmem [thread:$0]  %s12, 512, %s540, [#allocation21], 128, 128, 8
        $region48: #{point_transformer_classif.8} parent=11 // pred_fallthru
          _
        // Predicated region
        $region49: #{point_transformer_classif.8} parent=11 // pred_check
          %p546 = pneg %p354
        $region50: #{point_transformer_classif.8} parent=11 // pred_check_branch
          %548 = sbr.rel (%p546) target = $region52
        $region51: #{point_transformer_classif.8} parent=11 // pred_region
          %s550 = ssub.s32 16, 16
          %551 = vsyncadd [#allocation24], %s550
          %s553 = sshll.u32 [#allocation23], 4
          %s554 = int_to_ptr.vmem [resolvable:$true] %s553
          %556 = dma.hbm_to_vmem [thread:$0]  %s13, 16, %s554, [#allocation24]
        $region52: #{point_transformer_classif.8} parent=11 // pred_fallthru
          _
        // Predicated region
        $region53: #{point_transformer_classif.8} parent=11 // pred_check
          %p557 = pneg %p375
        $region54: #{point_transformer_classif.8} parent=11 // pred_check_branch
          %559 = sbr.rel (%p557) target = $region56
        $region55: #{point_transformer_classif.8} parent=11 // pred_region
          %s561 = ssub.s32 128, 128
          %562 = vsyncadd [#allocation24], %s561
          %s564 = sshll.u32 [#allocation25], 4
          %s565 = int_to_ptr.vmem [resolvable:$true] %s564
          %567 = dma.hbm_to_vmem [thread:$0]  %s14, 128, %s565, [#allocation24]
        $region56: #{point_transformer_classif.8} parent=11 // pred_fallthru
          _
        // Predicated region
        $region57: #{point_transformer_classif.8} parent=11 // pred_check
          %p568 = pneg %p396
        $region58: #{point_transformer_classif.8} parent=11 // pred_check_branch
          %570 = sbr.rel (%p568) target = $region60
        $region59: #{point_transformer_classif.8} parent=11 // pred_region
          %s572 = ssub.s32 16, 16
          %573 = vsyncadd [#allocation27], %s572
          %s575 = sshll.u32 [#allocation26], 4
          %s576 = int_to_ptr.vmem [resolvable:$true] %s575
          %578 = dma.hbm_to_vmem [thread:$0]  %s15, 16, %s576, [#allocation27]
        $region60: #{point_transformer_classif.8} parent=11 // pred_fallthru
          _
      $region12: #{point_transformer_classif.8} parent=5 // pred_fallthru
        _
      %p579 = scmp.lt.s32.totalorder %s40, 2
      // Predicated region
      $region61: #{point_transformer_classif.8} parent=5 // pred_check
        %p580 = pneg %p579
      $region62: #{point_transformer_classif.8} parent=5 // pred_check_branch
        %582 = sbr.rel (%p580) target = $region64
      $region63: #{point_transformer_classif.8} parent=5 // pred_region
        // Predicated region
        $region65: #{point_transformer_classif.8} parent=63 // pred_check
          %p583 = pneg %p60
        $region66: #{point_transformer_classif.8} parent=63 // pred_check_branch
          %585 = sbr.rel (%p583) target = $region68
        $region67: #{point_transformer_classif.8} parent=63 // pred_region
          %s586 = sand.u32 %s50, 1
          %s587 = scalar_lea.sflag [#allocation3], %s586
          %s588 = sand.u32 %s50, 1
          %s589 = smul.addr %s588, 64
          %s590 = scalar_lea.vmem [#allocation2], %s589
          %s591 = smul.u32 8, %s40
          %s593 = ssub.s32 1024, 1024
          %594 = vsyncadd %s587, %s593
          %s595 = smul.addr %s591, 128
          %s596 = scalar_lea.hbm %s0, %s595
          %s597 = sshll.u32 %s590, 4
          %s598 = int_to_ptr.vmem [resolvable:$true] %s597
          %603 = dma.hbm_to_vmem [thread:$0]  %s596, 1024, %s598, %s587, 128, 128, 8
        $region68: #{point_transformer_classif.8} parent=63 // pred_fallthru
          _
        // Predicated region
        $region69: #{point_transformer_classif.8} parent=63 // pred_check
          %p604 = pneg %p86
        $region70: #{point_transformer_classif.8} parent=63 // pred_check_branch
          %606 = sbr.rel (%p604) target = $region72
        $region71: #{point_transformer_classif.8} parent=63 // pred_region
          %s607 = sand.u32 %s40, 1
          %s608 = scalar_lea.sflag [#allocation6], %s607
          %s609 = sand.u32 %s76, 1
          %s610 = smul.addr %s609, 32
          %s611 = scalar_lea.vmem [#allocation5], %s610
          %s612 = smul.u32 8, %s40
          %s614 = ssub.s32 512, 512
          %615 = vsyncadd %s608, %s614
          %s616 = smul.addr %s612, 64
          %s617 = scalar_lea.hbm %s1, %s616
          %s618 = sshll.u32 %s611, 4
          %s619 = int_to_ptr.vmem [resolvable:$true] %s618
          %624 = dma.hbm_to_vmem [thread:$0]  %s617, 512, %s619, %s608, 64, 64, 4
        $region72: #{point_transformer_classif.8} parent=63 // pred_fallthru
          _
        // Predicated region
        $region73: #{point_transformer_classif.8} parent=63 // pred_check
          %p625 = pneg %p112
        $region74: #{point_transformer_classif.8} parent=63 // pred_check_branch
          %627 = sbr.rel (%p625) target = $region76
        $region75: #{point_transformer_classif.8} parent=63 // pred_region
          %s628 = sand.u32 %s40, 1
          %s629 = scalar_lea.sflag [#allocation6], %s628
          %s630 = sand.u32 %s102, 1
          %s631 = smul.addr %s630, 32
          %s632 = scalar_lea.vmem [#allocation7], %s631
          %s633 = smul.u32 8, %s40
          %s635 = ssub.s32 512, 512
          %636 = vsyncadd %s629, %s635
          %s637 = smul.addr %s633, 64
          %s638 = scalar_lea.hbm %s2, %s637
          %s639 = sshll.u32 %s632, 4
          %s640 = int_to_ptr.vmem [resolvable:$true] %s639
          %645 = dma.hbm_to_vmem [thread:$0]  %s638, 512, %s640, %s629, 64, 64, 4
        $region76: #{point_transformer_classif.8} parent=63 // pred_fallthru
          _
        // Predicated region
        $region77: #{point_transformer_classif.8} parent=63 // pred_check
          %p646 = pneg %p138
        $region78: #{point_transformer_classif.8} parent=63 // pred_check_branch
          %648 = sbr.rel (%p646) target = $region80
        $region79: #{point_transformer_classif.8} parent=63 // pred_region
          %s649 = sand.u32 %s40, 1
          %s650 = scalar_lea.sflag [#allocation9], %s649
          %s651 = sand.u32 %s128, 1
          %s652 = smul.addr %s651, 32
          %s653 = scalar_lea.vmem [#allocation8], %s652
          %s654 = smul.u32 8, %s40
          %s656 = ssub.s32 512, 512
          %657 = vsyncadd %s650, %s656
          %s658 = smul.addr %s654, 64
          %s659 = scalar_lea.hbm %s3, %s658
          %s660 = sshll.u32 %s653, 4
          %s661 = int_to_ptr.vmem [resolvable:$true] %s660
          %666 = dma.hbm_to_vmem [thread:$0]  %s659, 512, %s661, %s650, 64, 64, 4
        $region80: #{point_transformer_classif.8} parent=63 // pred_fallthru
          _
      $region64: #{point_transformer_classif.8} parent=5 // pred_fallthru
        _
      %p667 = scmp.le.s32.totalorder 1, %s40
      %p668 = scmp.lt.s32.totalorder %s40, 3
      %p669 = pnand %p667, %p668
      %p670 = pneg %p669
      // Predicated region
      $region81: #{point_transformer_classif.8} parent=5 // pred_check
        _
      $region82: #{point_transformer_classif.8} parent=5 // pred_check_branch
        %672 = sbr.rel (%p669) target = $region84
      $region83: #{point_transformer_classif.8} parent=5 // pred_region
        %s673 = ssub.s32 %s40, 1
        %s674 = sand.u32 %s53, 1
        %s675 = scalar_lea.sflag [#allocation3], %s674
        %s676 = sand.u32 %s53, 1
        %s677 = smul.addr %s676, 64
        %s678 = scalar_lea.vmem [#allocation2], %s677
        // Predicated region
        $region85: #{point_transformer_classif.8} parent=83 // pred_check
          %p679 = pneg %p66
        $region86: #{point_transformer_classif.8} parent=83 // pred_check_branch
          %681 = sbr.rel (%p679) target = $region88
        $region87: #{point_transformer_classif.8} parent=83 // pred_region
          %682 = dma.done %s675, 1024
        $region88: #{point_transformer_classif.8} parent=83 // pred_fallthru
          _
        %s683 = sand.u32 %s45, 1
        %s684 = scalar_lea.sflag [#allocation6], %s683
        %s685 = sand.u32 %s79, 1
        %s686 = smul.addr %s685, 32
        %s687 = scalar_lea.vmem [#allocation5], %s686
        // Predicated region
        $region89: #{point_transformer_classif.8} parent=83 // pred_check
          %p688 = pneg %p92
        $region90: #{point_transformer_classif.8} parent=83 // pred_check_branch
          %690 = sbr.rel (%p688) target = $region92
        $region91: #{point_transformer_classif.8} parent=83 // pred_region
          %691 = dma.done %s684, 512
        $region92: #{point_transformer_classif.8} parent=83 // pred_fallthru
          _
        %s692 = sand.u32 %s45, 1
        %s693 = scalar_lea.sflag [#allocation6], %s692
        %s694 = sand.u32 %s105, 1
        %s695 = smul.addr %s694, 32
        %s696 = scalar_lea.vmem [#allocation7], %s695
        // Predicated region
        $region93: #{point_transformer_classif.8} parent=83 // pred_check
          %p697 = pneg %p118
        $region94: #{point_transformer_classif.8} parent=83 // pred_check_branch
          %699 = sbr.rel (%p697) target = $region96
        $region95: #{point_transformer_classif.8} parent=83 // pred_region
          %700 = dma.done %s693, 512
        $region96: #{point_transformer_classif.8} parent=83 // pred_fallthru
          _
        %s701 = sand.u32 %s45, 1
        %s702 = scalar_lea.sflag [#allocation9], %s701
        %s703 = sand.u32 %s131, 1
        %s704 = smul.addr %s703, 32
        %s705 = scalar_lea.vmem [#allocation8], %s704
        // Predicated region
        $region97: #{point_transformer_classif.8} parent=83 // pred_check
          %p706 = pneg %p144
        $region98: #{point_transformer_classif.8} parent=83 // pred_check_branch
          %708 = sbr.rel (%p706) target = $region100
        $region99: #{point_transformer_classif.8} parent=83 // pred_region
          %709 = dma.done %s702, 512
        $region100: #{point_transformer_classif.8} parent=83 // pred_fallthru
          _
        // Predicated region
        $region101: #{point_transformer_classif.8} parent=83 // pred_check
          %p710 = pneg %p165
        $region102: #{point_transformer_classif.8} parent=83 // pred_check_branch
          %712 = sbr.rel (%p710) target = $region104
        $region103: #{point_transformer_classif.8} parent=83 // pred_region
          %713 = dma.done [#allocation9], 512
        $region104: #{point_transformer_classif.8} parent=83 // pred_fallthru
          _
        // Predicated region
        $region105: #{point_transformer_classif.8} parent=83 // pred_check
          %p714 = pneg %p186
        $region106: #{point_transformer_classif.8} parent=83 // pred_check_branch
          %716 = sbr.rel (%p714) target = $region108
        $region107: #{point_transformer_classif.8} parent=83 // pred_region
          %717 = dma.done [#allocation12], 16
        $region108: #{point_transformer_classif.8} parent=83 // pred_fallthru
          _
        // Predicated region
        $region109: #{point_transformer_classif.8} parent=83 // pred_check
          %p718 = pneg %p207
        $region110: #{point_transformer_classif.8} parent=83 // pred_check_branch
          %720 = sbr.rel (%p718) target = $region112
        $region111: #{point_transformer_classif.8} parent=83 // pred_region
          %721 = dma.done [#allocation12], 256
        $region112: #{point_transformer_classif.8} parent=83 // pred_fallthru
          _
        // Predicated region
        $region113: #{point_transformer_classif.8} parent=83 // pred_check
          %p722 = pneg %p228
        $region114: #{point_transformer_classif.8} parent=83 // pred_check_branch
          %724 = sbr.rel (%p722) target = $region116
        $region115: #{point_transformer_classif.8} parent=83 // pred_region
          %725 = dma.done [#allocation15], 16
        $region116: #{point_transformer_classif.8} parent=83 // pred_fallthru
          _
        // Predicated region
        $region117: #{point_transformer_classif.8} parent=83 // pred_check
          %p726 = pneg %p249
        $region118: #{point_transformer_classif.8} parent=83 // pred_check_branch
          %728 = sbr.rel (%p726) target = $region120
        $region119: #{point_transformer_classif.8} parent=83 // pred_region
          %729 = dma.done [#allocation15], 512
        $region120: #{point_transformer_classif.8} parent=83 // pred_fallthru
          _
        // Predicated region
        $region121: #{point_transformer_classif.8} parent=83 // pred_check
          %p730 = pneg %p270
        $region122: #{point_transformer_classif.8} parent=83 // pred_check_branch
          %732 = sbr.rel (%p730) target = $region124
        $region123: #{point_transformer_classif.8} parent=83 // pred_region
          %733 = dma.done [#allocation18], 16
        $region124: #{point_transformer_classif.8} parent=83 // pred_fallthru
          _
        // Predicated region
        $region125: #{point_transformer_classif.8} parent=83 // pred_check
          %p734 = pneg %p291
        $region126: #{point_transformer_classif.8} parent=83 // pred_check_branch
          %736 = sbr.rel (%p734) target = $region128
        $region127: #{point_transformer_classif.8} parent=83 // pred_region
          %737 = dma.done [#allocation18], 512
        $region128: #{point_transformer_classif.8} parent=83 // pred_fallthru
          _
        // Predicated region
        $region129: #{point_transformer_classif.8} parent=83 // pred_check
          %p738 = pneg %p312
        $region130: #{point_transformer_classif.8} parent=83 // pred_check_branch
          %740 = sbr.rel (%p738) target = $region132
        $region131: #{point_transformer_classif.8} parent=83 // pred_region
          %741 = dma.done [#allocation21], 16
        $region132: #{point_transformer_classif.8} parent=83 // pred_fallthru
          _
        // Predicated region
        $region133: #{point_transformer_classif.8} parent=83 // pred_check
          %p742 = pneg %p333
        $region134: #{point_transformer_classif.8} parent=83 // pred_check_branch
          %744 = sbr.rel (%p742) target = $region136
        $region135: #{point_transformer_classif.8} parent=83 // pred_region
          %745 = dma.done [#allocation21], 512
        $region136: #{point_transformer_classif.8} parent=83 // pred_fallthru
          _
        // Predicated region
        $region137: #{point_transformer_classif.8} parent=83 // pred_check
          %p746 = pneg %p354
        $region138: #{point_transformer_classif.8} parent=83 // pred_check_branch
          %748 = sbr.rel (%p746) target = $region140
        $region139: #{point_transformer_classif.8} parent=83 // pred_region
          %749 = dma.done [#allocation24], 16
        $region140: #{point_transformer_classif.8} parent=83 // pred_fallthru
          _
        // Predicated region
        $region141: #{point_transformer_classif.8} parent=83 // pred_check
          %p750 = pneg %p375
        $region142: #{point_transformer_classif.8} parent=83 // pred_check_branch
          %752 = sbr.rel (%p750) target = $region144
        $region143: #{point_transformer_classif.8} parent=83 // pred_region
          %753 = dma.done [#allocation24], 128
        $region144: #{point_transformer_classif.8} parent=83 // pred_fallthru
          _
        // Predicated region
        $region145: #{point_transformer_classif.8} parent=83 // pred_check
          %p754 = pneg %p396
        $region146: #{point_transformer_classif.8} parent=83 // pred_check_branch
          %756 = sbr.rel (%p754) target = $region148
        $region147: #{point_transformer_classif.8} parent=83 // pred_region
          %757 = dma.done [#allocation27], 16
        $region148: #{point_transformer_classif.8} parent=83 // pred_fallthru
          _
        %s758 = sand.u32 %s53, 1
        %s759 = scalar_lea.sflag [#allocation3], %s758
        %s760 = sand.u32 %s53, 1
        %s761 = smul.addr %s760, 64
        %s762 = scalar_lea.vmem [#allocation2], %s761
        %p763 = pneg %p66
        %p764 = pneg %p63
        %s765 = sand.u32 %s45, 1
        %s766 = scalar_lea.sflag [#allocation6], %s765
        %s767 = sand.u32 %s79, 1
        %s768 = smul.addr %s767, 32
        %s769 = scalar_lea.vmem [#allocation5], %s768
        %p770 = pneg %p92
        %p771 = pneg %p89
        %s772 = sand.u32 %s45, 1
        %s773 = scalar_lea.sflag [#allocation6], %s772
        %s774 = sand.u32 %s105, 1
        %s775 = smul.addr %s774, 32
        %s776 = scalar_lea.vmem [#allocation7], %s775
        %p777 = pneg %p118
        %p778 = pneg %p115
        %s779 = sand.u32 %s45, 1
        %s780 = scalar_lea.sflag [#allocation9], %s779
        %s781 = sand.u32 %s131, 1
        %s782 = smul.addr %s781, 32
        %s783 = scalar_lea.vmem [#allocation8], %s782
        %p784 = pneg %p144
        %p785 = pneg %p141
        %p786 = pneg %p165
        %p787 = pneg %p162
        %p788 = pneg %p186
        %p789 = pneg %p183
        %p790 = pneg %p207
        %p791 = pneg %p204
        %p792 = pneg %p228
        %p793 = pneg %p225
        %p794 = pneg %p249
        %p795 = pneg %p246
        %p796 = pneg %p270
        %p797 = pneg %p267
        %p798 = pneg %p291
        %p799 = pneg %p288
        %p800 = pneg %p312
        %p801 = pneg %p309
        %p802 = pneg %p333
        %p803 = pneg %p330
        %p804 = pneg %p354
        %p805 = pneg %p351
        %p806 = pneg %p375
        %p807 = pneg %p372
        %p808 = pneg %p396
        %p809 = pneg %p393
        %p810 = pneg %p422
        %p811 = pneg %p419
        %s812 = sand.u32 %s409, 1
        %s813 = scalar_lea.sflag [#allocation4], %s812
        %s814 = sand.u32 %s409, 1
        %s815 = smul.addr %s814, 64
        %s816 = scalar_lea.vmem [#allocation28], %s815
        %s817 = smul.u32 8, %s45
        %s818 = smul.u32 8, %s45
        %s819 = smul.u32 8, %s45
        %s820 = smul.u32 8, %s45
        %s821 = smul.u32 8, %s45
        %v822 = vld [vmem:[%s678] sm:$0xff]
        %v823 = vld [vmem:[%s678 + $0x8] sm:$0xff]
        %v824 = vld [vmem:[%s678 + $0x10] sm:$0xff]
        %v825 = vld [vmem:[%s678 + $0x18] sm:$0xff]
        %v826 = vld [vmem:[%s678 + $0x20] sm:$0xff]
        %v827 = vld [vmem:[%s678 + $0x28] sm:$0xff]
        %v828 = vld [vmem:[%s678 + $0x30] sm:$0xff]
        %v829 = vld [vmem:[%s678 + $0x38] sm:$0xff]
        %v830 = vld [vmem:[#allocation10] sm:$0xff]
        %v831 = vld [vmem:[#allocation10 + $0x8] sm:$0xff]
        %v832 = vld [vmem:[#allocation10 + $0x10] sm:$0xff]
        %v833 = vld [vmem:[#allocation10 + $0x18] sm:$0xff]
        %v834 = vld [vmem:[#allocation11] sm:$0x1]
        %v836 = vlaneseq
        %v837 = vshrl.u32 %v836, 7
        %v838 = vsub.s32 0, %v837
        %v839 = vrot.slane %v834, %v838
        %vm841 = vcmask 261120
        %v843 = vsel %vm841, %v822, 0
        %v846 = vsel %vm841, %v823, 0
        %v849 = vsel %vm841, %v824, 0
        %v852 = vsel %vm841, %v825, 0
        %v855 = vsel %vm841, %v826, 0
        %v858 = vsel %vm841, %v827, 0
        %v861 = vsel %vm841, %v828, 0
        %v864 = vsel %vm841, %v829, 0
        %866 = vmatprep.subr.mxu0 0.0
        %867 = vmatpush1.msra.mxu0 %v830
        %868 = vmatprep.subr.mxu0 0.0
        %869 = vmatpush1.msra.mxu0 %v831
        %870 = vmatprep.subr.mxu0 0.0
        %871 = vmatpush1.msra.mxu0 %v832
        %872 = vmatprep.subr.mxu0 0.0
        %873 = vmatpush1.msra.mxu0 %v833
        %874 = vmatprep.subr.mxu0 0.0
        %875 = vmatpush1.msra.mxu0 0.0
        %876 = vmatprep.subr.mxu0 0.0
        %877 = vmatpush1.msra.mxu0 0.0
        %878 = vmatprep.subr.mxu0 0.0
        %879 = vmatpush1.msra.mxu0 0.0
        %880 = vmatprep.subr.mxu0 0.0
        %881 = vmatpush1.msra.mxu0 0.0
        %882 = vmatprep.subr.mxu0 0.0
        %883 = vmatpush1.msra.mxu0 0.0
        %884 = vmatprep.subr.mxu0 0.0
        %885 = vmatpush1.msra.mxu0 0.0
        %886 = vmatprep.subr.mxu0 0.0
        %887 = vmatpush1.msra.mxu0 0.0
        %888 = vmatprep.subr.mxu0 0.0
        %889 = vmatpush1.msra.mxu0 0.0
        %890 = vmatprep.subr.mxu0 0.0
        %891 = vmatpush1.msra.mxu0 0.0
        %892 = vmatprep.subr.mxu0 0.0
        %893 = vmatpush1.msra.mxu0 0.0
        %894 = vmatprep.subr.mxu0 0.0
        %895 = vmatpush1.msra.mxu0 0.0
        %896 = vmatprep.subr.mxu0 0.0
        %897 = vmatpush1.msra.mxu0 0.0
        %898 = vmatprep.subr.mxu0 0.0
        %899 = vmatpush1.msra.mxu0 0.0
        %900 = vmatprep.subr.mxu0 0.0
        %901 = vmatpush1.msra.mxu0 0.0
        %902 = vmatprep.subr.mxu0 0.0
        %903 = vmatpush1.msra.mxu0 0.0
        %904 = vmatprep.subr.mxu0 0.0
        %905 = vmatpush1.msra.mxu0 0.0
        %906 = vmatprep.subr.mxu0 0.0
        %907 = vmatpush1.msra.mxu0 0.0
        %908 = vmatprep.subr.mxu0 0.0
        %909 = vmatpush1.msra.mxu0 0.0
        %910 = vmatprep.subr.mxu0 0.0
        %911 = vmatpush1.msra.mxu0 0.0
        %912 = vmatprep.subr.mxu0 0.0
        %913 = vmatpush1.msra.mxu0 0.0
        %914 = vmatprep.subr.mxu0 0.0
        %915 = vmatpush1.msra.mxu0 0.0
        %916 = vmatprep.subr.mxu0 0.0
        %917 = vmatpush1.msra.mxu0 0.0
        %918 = vmatprep.subr.mxu0 0.0
        %919 = vmatpush1.msra.mxu0 0.0
        %920 = vmatprep.subr.mxu0 0.0
        %921 = vmatpush1.msra.mxu0 0.0
        %922 = vmatprep.subr.mxu0 0.0
        %923 = vmatpush1.msra.mxu0 0.0
        %924 = vmatprep.subr.mxu0 0.0
        %925 = vmatpush1.msra.mxu0 0.0
        %926 = vmatprep.subr.mxu0 0.0
        %927 = vmatpush1.msra.mxu0 0.0
        %928 = vmatprep.subr.mxu0 0.0
        %929 = vmatpush1.msra.mxu0 0.0
        %930 = vmatprep.mubr.f32.mxu0 0.0
        %931 = vmatmul.mubr.f32.gmra.mrb[0].mxu0 %v843
        %v932 = vpop.f32.mrb[0].mxu0
        %v933 = vadd.f32 %v839, %v932
        %v934 = vpop.f32.mrb[0].mxu0
        %935 = vmatprep.mubr.f32.mxu0 0.0
        %936 = vmatmul.mubr.f32.gmra.mrb[0].mxu0 %v846
        %v937 = vpop.f32.mrb[0].mxu0
        %v938 = vadd.f32 %v839, %v937
        %v939 = vpop.f32.mrb[0].mxu0
        %940 = vmatprep.mubr.f32.mxu0 0.0
        %941 = vmatmul.mubr.f32.gmra.mrb[0].mxu0 %v849
        %v942 = vpop.f32.mrb[0].mxu0
        %v943 = vadd.f32 %v839, %v942
        %v944 = vpop.f32.mrb[0].mxu0
        %945 = vmatprep.mubr.f32.mxu0 0.0
        %946 = vmatmul.mubr.f32.gmra.mrb[0].mxu0 %v852
        %v947 = vpop.f32.mrb[0].mxu0
        %v948 = vadd.f32 %v839, %v947
        %v949 = vpop.f32.mrb[0].mxu0
        %950 = vmatprep.mubr.f32.mxu0 0.0
        %951 = vmatmul.mubr.f32.gmra.mrb[0].mxu0 %v855
        %v952 = vpop.f32.mrb[0].mxu0
        %v953 = vadd.f32 %v839, %v952
        %v954 = vpop.f32.mrb[0].mxu0
        %955 = vmatprep.mubr.f32.mxu0 0.0
        %956 = vmatmul.mubr.f32.gmra.mrb[0].mxu0 %v858
        %v957 = vpop.f32.mrb[0].mxu0
        %v958 = vadd.f32 %v839, %v957
        %v959 = vpop.f32.mrb[0].mxu0
        %960 = vmatprep.mubr.f32.mxu0 0.0
        %961 = vmatmul.mubr.f32.gmra.mrb[0].mxu0 %v861
        %v962 = vpop.f32.mrb[0].mxu0
        %v963 = vadd.f32 %v839, %v962
        %v964 = vpop.f32.mrb[0].mxu0
        %965 = vmatprep.mubr.f32.mxu0 0.0
        %966 = vmatmul.mubr.f32.gmra.mrb[0].mxu0 %v864
        %v967 = vpop.f32.mrb[0].mxu0
        %v968 = vadd.f32 %v839, %v967
        %v969 = vpop.f32.mrb[0].mxu0
        %970 = vdwg.mxu0
        %979 = vrot.lane.b32.xlu0 %v933, 8
        %v980 = vpop.permute.xlu0 %979
        %981 = vrot.lane.b32.xlu0 %v938, 8
        %v982 = vpop.permute.xlu0 %981
        %983 = vrot.lane.b32.xlu0 %v943, 8
        %v984 = vpop.permute.xlu0 %983
        %985 = vrot.lane.b32.xlu0 %v948, 8
        %v986 = vpop.permute.xlu0 %985
        %987 = vrot.lane.b32.xlu0 %v953, 8
        %v988 = vpop.permute.xlu0 %987
        %989 = vrot.lane.b32.xlu0 %v958, 8
        %v990 = vpop.permute.xlu0 %989
        %991 = vrot.lane.b32.xlu0 %v963, 8
        %v992 = vpop.permute.xlu0 %991
        %993 = vrot.lane.b32.xlu0 %v968, 8
        %v994 = vpop.permute.xlu0 %993
        %1003 = vrot.lane.b32.xlu0 %v933, 16
        %v1004 = vpop.permute.xlu0 %1003
        %1005 = vrot.lane.b32.xlu0 %v938, 16
        %v1006 = vpop.permute.xlu0 %1005
        %1007 = vrot.lane.b32.xlu0 %v943, 16
        %v1008 = vpop.permute.xlu0 %1007
        %1009 = vrot.lane.b32.xlu0 %v948, 16
        %v1010 = vpop.permute.xlu0 %1009
        %1011 = vrot.lane.b32.xlu0 %v953, 16
        %v1012 = vpop.permute.xlu0 %1011
        %1013 = vrot.lane.b32.xlu0 %v958, 16
        %v1014 = vpop.permute.xlu0 %1013
        %1015 = vrot.lane.b32.xlu0 %v963, 16
        %v1016 = vpop.permute.xlu0 %1015
        %1017 = vrot.lane.b32.xlu0 %v968, 16
        %v1018 = vpop.permute.xlu0 %1017
        %1027 = vrot.lane.b32.xlu0 %v933, 24
        %v1028 = vpop.permute.xlu0 %1027
        %1029 = vrot.lane.b32.xlu0 %v938, 24
        %v1030 = vpop.permute.xlu0 %1029
        %1031 = vrot.lane.b32.xlu0 %v943, 24
        %v1032 = vpop.permute.xlu0 %1031
        %1033 = vrot.lane.b32.xlu0 %v948, 24
        %v1034 = vpop.permute.xlu0 %1033
        %1035 = vrot.lane.b32.xlu0 %v953, 24
        %v1036 = vpop.permute.xlu0 %1035
        %1037 = vrot.lane.b32.xlu0 %v958, 24
        %v1038 = vpop.permute.xlu0 %1037
        %1039 = vrot.lane.b32.xlu0 %v963, 24
        %v1040 = vpop.permute.xlu0 %1039
        %1041 = vrot.lane.b32.xlu0 %v968, 24
        %v1042 = vpop.permute.xlu0 %1041
        %vm1051 = vcmask 64512
        %v1052 = vsel %vm1051, %v933, %v980
        %v1053 = vsel %vm1051, %v938, %v982
        %v1054 = vsel %vm1051, %v943, %v984
        %v1055 = vsel %vm1051, %v948, %v986
        %v1056 = vsel %vm1051, %v953, %v988
        %v1057 = vsel %vm1051, %v958, %v990
        %v1058 = vsel %vm1051, %v963, %v992
        %v1059 = vsel %vm1051, %v968, %v994
        %vm1060 = vcmask 130048
        %v1061 = vsel %vm1060, %v1052, %v1004
        %v1062 = vsel %vm1060, %v1053, %v1006
        %v1063 = vsel %vm1060, %v1054, %v1008
        %v1064 = vsel %vm1060, %v1055, %v1010
        %v1065 = vsel %vm1060, %v1056, %v1012
        %v1066 = vsel %vm1060, %v1057, %v1014
        %v1067 = vsel %vm1060, %v1058, %v1016
        %v1068 = vsel %vm1060, %v1059, %v1018
        %vm1069 = vcmask 195584
        %v1070 = vsel %vm1069, %v1061, %v1028
        %v1071 = vsel %vm1069, %v1062, %v1030
        %v1072 = vsel %vm1069, %v1063, %v1032
        %v1073 = vsel %vm1069, %v1064, %v1034
        %v1074 = vsel %vm1069, %v1065, %v1036
        %v1075 = vsel %vm1069, %v1066, %v1038
        %v1076 = vsel %vm1069, %v1067, %v1040
        %v1077 = vsel %vm1069, %v1068, %v1042
        %v1078 = vld [vmem:[%s705] sm:$0xf]
        %v1079 = vld [vmem:[%s705 + $0x4] sm:$0xf]
        %v1080 = vld [vmem:[%s705 + $0x8] sm:$0xf]
        %v1081 = vld [vmem:[%s705 + $0xc] sm:$0xf]
        %v1082 = vld [vmem:[%s705 + $0x10] sm:$0xf]
        %v1083 = vld [vmem:[%s705 + $0x14] sm:$0xf]
        %v1084 = vld [vmem:[%s705 + $0x18] sm:$0xf]
        %v1085 = vld [vmem:[%s705 + $0x1c] sm:$0xf]
        %v1086 = vunpack.c.l.bf16 %v1078
        %v1087 = vunpack.c.l.bf16 %v1079
        %v1088 = vunpack.c.l.bf16 %v1080
        %v1089 = vunpack.c.l.bf16 %v1081
        %v1090 = vunpack.c.l.bf16 %v1082
        %v1091 = vunpack.c.l.bf16 %v1083
        %v1092 = vunpack.c.l.bf16 %v1084
        %v1093 = vunpack.c.l.bf16 %v1085
        %v1094 = vld [vmem:[#allocation13] sm:$0xff]
        %v1095 = vld [vmem:[#allocation13 + $0x8] sm:$0xf]
        %v1096 = vld [vmem:[#allocation14] sm:$0x1]
        %v1098 = vlaneseq
        %v1099 = vshrl.u32 %v1098, 7
        %v1100 = vsub.s32 0, %v1099
        %v1101 = vrot.slane %v1096, %v1100
        %vm1103 = vcmask 97280
        %v1105 = vsel %vm1103, %v1086, 0
        %v1108 = vsel %vm1103, %v1087, 0
        %v1111 = vsel %vm1103, %v1088, 0
        %v1114 = vsel %vm1103, %v1089, 0
        %v1117 = vsel %vm1103, %v1090, 0
        %v1120 = vsel %vm1103, %v1091, 0
        %v1123 = vsel %vm1103, %v1092, 0
        %v1126 = vsel %vm1103, %v1093, 0
        %vm1128 = vcmask 1043456
        %v1130 = vsel %vm1128, %v1095, 0
        %1132 = vmatprep.subr.mxu0 0.0
        %1133 = vmatpush1.msra.mxu0 %v1094
        %1134 = vmatprep.subr.mxu0 0.0
        %1135 = vmatpush1.msra.mxu0 %v1130
        %1136 = vmatprep.subr.mxu0 0.0
        %1137 = vmatpush1.msra.mxu0 0.0
        %1138 = vmatprep.subr.mxu0 0.0
        %1139 = vmatpush1.msra.mxu0 0.0
        %1140 = vmatprep.subr.mxu0 0.0
        %1141 = vmatpush1.msra.mxu0 0.0
        %1142 = vmatprep.subr.mxu0 0.0
        %1143 = vmatpush1.msra.mxu0 0.0
        %1144 = vmatprep.subr.mxu0 0.0
        %1145 = vmatpush1.msra.mxu0 0.0
        %1146 = vmatprep.subr.mxu0 0.0
        %1147 = vmatpush1.msra.mxu0 0.0
        %1148 = vmatprep.subr.mxu0 0.0
        %1149 = vmatpush1.msra.mxu0 0.0
        %1150 = vmatprep.subr.mxu0 0.0
        %1151 = vmatpush1.msra.mxu0 0.0
        %1152 = vmatprep.subr.mxu0 0.0
        %1153 = vmatpush1.msra.mxu0 0.0
        %1154 = vmatprep.subr.mxu0 0.0
        %1155 = vmatpush1.msra.mxu0 0.0
        %1156 = vmatprep.subr.mxu0 0.0
        %1157 = vmatpush1.msra.mxu0 0.0
        %1158 = vmatprep.subr.mxu0 0.0
        %1159 = vmatpush1.msra.mxu0 0.0
        %1160 = vmatprep.subr.mxu0 0.0
        %1161 = vmatpush1.msra.mxu0 0.0
        %1162 = vmatprep.subr.mxu0 0.0
        %1163 = vmatpush1.msra.mxu0 0.0
        %1164 = vmatprep.subr.mxu0 0.0
        %1165 = vmatpush1.msra.mxu0 0.0
        %1166 = vmatprep.subr.mxu0 0.0
        %1167 = vmatpush1.msra.mxu0 0.0
        %1168 = vmatprep.subr.mxu0 0.0
        %1169 = vmatpush1.msra.mxu0 0.0
        %1170 = vmatprep.subr.mxu0 0.0
        %1171 = vmatpush1.msra.mxu0 0.0
        %1172 = vmatprep.subr.mxu0 0.0
        %1173 = vmatpush1.msra.mxu0 0.0
        %1174 = vmatprep.subr.mxu0 0.0
        %1175 = vmatpush1.msra.mxu0 0.0
        %1176 = vmatprep.subr.mxu0 0.0
        %1177 = vmatpush1.msra.mxu0 0.0
        %1178 = vmatprep.subr.mxu0 0.0
        %1179 = vmatpush1.msra.mxu0 0.0
        %1180 = vmatprep.subr.mxu0 0.0
        %1181 = vmatpush1.msra.mxu0 0.0
        %1182 = vmatprep.subr.mxu0 0.0
        %1183 = vmatpush1.msra.mxu0 0.0
        %1184 = vmatprep.subr.mxu0 0.0
        %1185 = vmatpush1.msra.mxu0 0.0
        %1186 = vmatprep.subr.mxu0 0.0
        %1187 = vmatpush1.msra.mxu0 0.0
        %1188 = vmatprep.subr.mxu0 0.0
        %1189 = vmatpush1.msra.mxu0 0.0
        %1190 = vmatprep.subr.mxu0 0.0
        %1191 = vmatpush1.msra.mxu0 0.0
        %1192 = vmatprep.subr.mxu0 0.0
        %1193 = vmatpush1.msra.mxu0 0.0
        %1194 = vmatprep.subr.mxu0 0.0
        %1195 = vmatpush1.msra.mxu0 0.0
        %1196 = vmatprep.mubr.f32.mxu0 0.0
        %1197 = vmatmul.mubr.f32.gmra.mrb[0].mxu0 %v1105
        %v1198 = vpop.f32.mrb[0].mxu0
        %v1199 = vadd.f32 %v1101, %v1198
        %v1200 = vpop.f32.mrb[0].mxu0
        %1201 = vmatprep.mubr.f32.mxu0 0.0
        %1202 = vmatmul.mubr.f32.gmra.mrb[0].mxu0 %v1108
        %v1203 = vpop.f32.mrb[0].mxu0
        %v1204 = vadd.f32 %v1101, %v1203
        %v1205 = vpop.f32.mrb[0].mxu0
        %1206 = vmatprep.mubr.f32.mxu0 0.0
        %1207 = vmatmul.mubr.f32.gmra.mrb[0].mxu0 %v1111
        %v1208 = vpop.f32.mrb[0].mxu0
        %v1209 = vadd.f32 %v1101, %v1208
        %v1210 = vpop.f32.mrb[0].mxu0
        %1211 = vmatprep.mubr.f32.mxu0 0.0
        %1212 = vmatmul.mubr.f32.gmra.mrb[0].mxu0 %v1114
        %v1213 = vpop.f32.mrb[0].mxu0
        %v1214 = vadd.f32 %v1101, %v1213
        %v1215 = vpop.f32.mrb[0].mxu0
        %1216 = vmatprep.mubr.f32.mxu0 0.0
        %1217 = vmatmul.mubr.f32.gmra.mrb[0].mxu0 %v1117
        %v1218 = vpop.f32.mrb[0].mxu0
        %v1219 = vadd.f32 %v1101, %v1218
        %v1220 = vpop.f32.mrb[0].mxu0
        %1221 = vmatprep.mubr.f32.mxu0 0.0
        %1222 = vmatmul.mubr.f32.gmra.mrb[0].mxu0 %v1120
        %v1223 = vpop.f32.mrb[0].mxu0
        %v1224 = vadd.f32 %v1101, %v1223
        %v1225 = vpop.f32.mrb[0].mxu0
        %1226 = vmatprep.mubr.f32.mxu0 0.0
        %1227 = vmatmul.mubr.f32.gmra.mrb[0].mxu0 %v1123
        %v1228 = vpop.f32.mrb[0].mxu0
        %v1229 = vadd.f32 %v1101, %v1228
        %v1230 = vpop.f32.mrb[0].mxu0
        %1231 = vmatprep.mubr.f32.mxu0 0.0
        %1232 = vmatmul.mubr.f32.gmra.mrb[0].mxu0 %v1126
        %v1233 = vpop.f32.mrb[0].mxu0
        %v1234 = vadd.f32 %v1101, %v1233
        %v1235 = vpop.f32.mrb[0].mxu0
        %1236 = vdwg.mxu0
        %v1237 = vmax.f32 %v1199, 0.0
        %v1238 = vmax.f32 %v1204, 0.0
        %v1239 = vmax.f32 %v1209, 0.0
        %v1240 = vmax.f32 %v1214, 0.0
        %v1241 = vmax.f32 %v1219, 0.0
        %v1242 = vmax.f32 %v1224, 0.0
        %v1243 = vmax.f32 %v1229, 0.0
        %v1244 = vmax.f32 %v1234, 0.0
        %v1245 = vld [vmem:[#allocation16] sm:$0xff]
        %v1246 = vld [vmem:[#allocation16 + $0x8] sm:$0xff]
        %v1247 = vld [vmem:[#allocation16 + $0x10] sm:$0xff]
        %v1248 = vld [vmem:[#allocation16 + $0x18] sm:$0xff]
        %v1249 = vld [vmem:[#allocation17] sm:$0x1]
        %v1251 = vlaneseq
        %v1252 = vshrl.u32 %v1251, 7
        %v1253 = vsub.s32 0, %v1252
        %v1254 = vrot.slane %v1249, %v1253
        %v1257 = vsel %vm841, %v1237, 0
        %v1260 = vsel %vm841, %v1238, 0
        %v1263 = vsel %vm841, %v1239, 0
        %v1266 = vsel %vm841, %v1240, 0
        %v1269 = vsel %vm841, %v1241, 0
        %v1272 = vsel %vm841, %v1242, 0
        %v1275 = vsel %vm841, %v1243, 0
        %v1278 = vsel %vm841, %v1244, 0
        %1280 = vmatprep.subr.mxu0 0.0
        %1281 = vmatpush1.msra.mxu0 %v1245
        %1282 = vmatprep.subr.mxu0 0.0
        %1283 = vmatpush1.msra.mxu0 %v1246
        %1284 = vmatprep.subr.mxu0 0.0
        %1285 = vmatpush1.msra.mxu0 %v1247
        %1286 = vmatprep.subr.mxu0 0.0
        %1287 = vmatpush1.msra.mxu0 %v1248
        %1288 = vmatprep.subr.mxu0 0.0
        %1289 = vmatpush1.msra.mxu0 0.0
        %1290 = vmatprep.subr.mxu0 0.0
        %1291 = vmatpush1.msra.mxu0 0.0
        %1292 = vmatprep.subr.mxu0 0.0
        %1293 = vmatpush1.msra.mxu0 0.0
        %1294 = vmatprep.subr.mxu0 0.0
        %1295 = vmatpush1.msra.mxu0 0.0
        %1296 = vmatprep.subr.mxu0 0.0
        %1297 = vmatpush1.msra.mxu0 0.0
        %1298 = vmatprep.subr.mxu0 0.0
        %1299 = vmatpush1.msra.mxu0 0.0
        %1300 = vmatprep.subr.mxu0 0.0
        %1301 = vmatpush1.msra.mxu0 0.0
        %1302 = vmatprep.subr.mxu0 0.0
        %1303 = vmatpush1.msra.mxu0 0.0
        %1304 = vmatprep.subr.mxu0 0.0
        %1305 = vmatpush1.msra.mxu0 0.0
        %1306 = vmatprep.subr.mxu0 0.0
        %1307 = vmatpush1.msra.mxu0 0.0
        %1308 = vmatprep.subr.mxu0 0.0
        %1309 = vmatpush1.msra.mxu0 0.0
        %1310 = vmatprep.subr.mxu0 0.0
        %1311 = vmatpush1.msra.mxu0 0.0
        %1312 = vmatprep.subr.mxu0 0.0
        %1313 = vmatpush1.msra.mxu0 0.0
        %1314 = vmatprep.subr.mxu0 0.0
        %1315 = vmatpush1.msra.mxu0 0.0
        %1316 = vmatprep.subr.mxu0 0.0
        %1317 = vmatpush1.msra.mxu0 0.0
        %1318 = vmatprep.subr.mxu0 0.0
        %1319 = vmatpush1.msra.mxu0 0.0
        %1320 = vmatprep.subr.mxu0 0.0
        %1321 = vmatpush1.msra.mxu0 0.0
        %1322 = vmatprep.subr.mxu0 0.0
        %1323 = vmatpush1.msra.mxu0 0.0
        %1324 = vmatprep.subr.mxu0 0.0
        %1325 = vmatpush1.msra.mxu0 0.0
        %1326 = vmatprep.subr.mxu0 0.0
        %1327 = vmatpush1.msra.mxu0 0.0
        %1328 = vmatprep.subr.mxu0 0.0
        %1329 = vmatpush1.msra.mxu0 0.0
        %1330 = vmatprep.subr.mxu0 0.0
        %1331 = vmatpush1.msra.mxu0 0.0
        %1332 = vmatprep.subr.mxu0 0.0
        %1333 = vmatpush1.msra.mxu0 0.0
        %1334 = vmatprep.subr.mxu0 0.0
        %1335 = vmatpush1.msra.mxu0 0.0
        %1336 = vmatprep.subr.mxu0 0.0
        %1337 = vmatpush1.msra.mxu0 0.0
        %1338 = vmatprep.subr.mxu0 0.0
        %1339 = vmatpush1.msra.mxu0 0.0
        %1340 = vmatprep.subr.mxu0 0.0
        %1341 = vmatpush1.msra.mxu0 0.0
        %1342 = vmatprep.subr.mxu0 0.0
        %1343 = vmatpush1.msra.mxu0 0.0
        %1344 = vmatprep.mubr.f32.mxu0 0.0
        %1345 = vmatmul.mubr.f32.gmra.mrb[0].mxu0 %v1257
        %v1346 = vpop.f32.mrb[0].mxu0
        %v1347 = vadd.f32 %v1254, %v1346
        %v1348 = vpop.f32.mrb[0].mxu0
        %1349 = vmatprep.mubr.f32.mxu0 0.0
        %1350 = vmatmul.mubr.f32.gmra.mrb[0].mxu0 %v1260
        %v1351 = vpop.f32.mrb[0].mxu0
        %v1352 = vadd.f32 %v1254, %v1351
        %v1353 = vpop.f32.mrb[0].mxu0
        %1354 = vmatprep.mubr.f32.mxu0 0.0
        %1355 = vmatmul.mubr.f32.gmra.mrb[0].mxu0 %v1263
        %v1356 = vpop.f32.mrb[0].mxu0
        %v1357 = vadd.f32 %v1254, %v1356
        %v1358 = vpop.f32.mrb[0].mxu0
        %1359 = vmatprep.mubr.f32.mxu0 0.0
        %1360 = vmatmul.mubr.f32.gmra.mrb[0].mxu0 %v1266
        %v1361 = vpop.f32.mrb[0].mxu0
        %v1362 = vadd.f32 %v1254, %v1361
        %v1363 = vpop.f32.mrb[0].mxu0
        %1364 = vmatprep.mubr.f32.mxu0 0.0
        %1365 = vmatmul.mubr.f32.gmra.mrb[0].mxu0 %v1269
        %v1366 = vpop.f32.mrb[0].mxu0
        %v1367 = vadd.f32 %v1254, %v1366
        %v1368 = vpop.f32.mrb[0].mxu0
        %1369 = vmatprep.mubr.f32.mxu0 0.0
        %1370 = vmatmul.mubr.f32.gmra.mrb[0].mxu0 %v1272
        %v1371 = vpop.f32.mrb[0].mxu0
        %v1372 = vadd.f32 %v1254, %v1371
        %v1373 = vpop.f32.mrb[0].mxu0
        %1374 = vmatprep.mubr.f32.mxu0 0.0
        %1375 = vmatmul.mubr.f32.gmra.mrb[0].mxu0 %v1275
        %v1376 = vpop.f32.mrb[0].mxu0
        %v1377 = vadd.f32 %v1254, %v1376
        %v1378 = vpop.f32.mrb[0].mxu0
        %1379 = vmatprep.mubr.f32.mxu0 0.0
        %1380 = vmatmul.mubr.f32.gmra.mrb[0].mxu0 %v1278
        %v1381 = vpop.f32.mrb[0].mxu0
        %v1382 = vadd.f32 %v1254, %v1381
        %v1383 = vpop.f32.mrb[0].mxu0
        %1384 = vdwg.mxu0
        %v1385 = vld [vmem:[%s687] sm:$0xf]
        %v1386 = vld [vmem:[%s687 + $0x4] sm:$0xf]
        %v1387 = vld [vmem:[%s687 + $0x8] sm:$0xf]
        %v1388 = vld [vmem:[%s687 + $0xc] sm:$0xf]
        %v1389 = vld [vmem:[%s687 + $0x10] sm:$0xf]
        %v1390 = vld [vmem:[%s687 + $0x14] sm:$0xf]
        %v1391 = vld [vmem:[%s687 + $0x18] sm:$0xf]
        %v1392 = vld [vmem:[%s687 + $0x1c] sm:$0xf]
        %v1393 = vunpack.c.l.bf16 %v1385
        %v1394 = vunpack.c.l.bf16 %v1386
        %v1395 = vunpack.c.l.bf16 %v1387
        %v1396 = vunpack.c.l.bf16 %v1388
        %v1397 = vunpack.c.l.bf16 %v1389
        %v1398 = vunpack.c.l.bf16 %v1390
        %v1399 = vunpack.c.l.bf16 %v1391
        %v1400 = vunpack.c.l.bf16 %v1392
        %v1401 = vsub.f32 %v1070, %v1393
        %v1402 = vsub.f32 %v1071, %v1394
        %v1403 = vsub.f32 %v1072, %v1395
        %v1404 = vsub.f32 %v1073, %v1396
        %v1405 = vsub.f32 %v1074, %v1397
        %v1406 = vsub.f32 %v1075, %v1398
        %v1407 = vsub.f32 %v1076, %v1399
        %v1408 = vsub.f32 %v1077, %v1400
        %v1409 = vadd.f32 %v1401, %v1347
        %v1410 = vadd.f32 %v1402, %v1352
        %v1411 = vadd.f32 %v1403, %v1357
        %v1412 = vadd.f32 %v1404, %v1362
        %v1413 = vadd.f32 %v1405, %v1367
        %v1414 = vadd.f32 %v1406, %v1372
        %v1415 = vadd.f32 %v1407, %v1377
        %v1416 = vadd.f32 %v1408, %v1382
        %v1417 = vld [vmem:[#allocation19] sm:$0xff]
        %v1418 = vld [vmem:[#allocation19 + $0x8] sm:$0xff]
        %v1419 = vld [vmem:[#allocation19 + $0x10] sm:$0xff]
        %v1420 = vld [vmem:[#allocation19 + $0x18] sm:$0xff]
        %v1421 = vld [vmem:[#allocation20] sm:$0x1]
        %v1423 = vlaneseq
        %v1424 = vshrl.u32 %v1423, 7
        %v1425 = vsub.s32 0, %v1424
        %v1426 = vrot.slane %v1421, %v1425
        %v1429 = vsel %vm841, %v1409, 0
        %v1432 = vsel %vm841, %v1410, 0
        %v1435 = vsel %vm841, %v1411, 0
        %v1438 = vsel %vm841, %v1412, 0
        %v1441 = vsel %vm841, %v1413, 0
        %v1444 = vsel %vm841, %v1414, 0
        %v1447 = vsel %vm841, %v1415, 0
        %v1450 = vsel %vm841, %v1416, 0
        %1452 = vmatprep.subr.mxu0 0.0
        %1453 = vmatpush1.msra.mxu0 %v1417
        %1454 = vmatprep.subr.mxu0 0.0
        %1455 = vmatpush1.msra.mxu0 %v1418
        %1456 = vmatprep.subr.mxu0 0.0
        %1457 = vmatpush1.msra.mxu0 %v1419
        %1458 = vmatprep.subr.mxu0 0.0
        %1459 = vmatpush1.msra.mxu0 %v1420
        %1460 = vmatprep.subr.mxu0 0.0
        %1461 = vmatpush1.msra.mxu0 0.0
        %1462 = vmatprep.subr.mxu0 0.0
        %1463 = vmatpush1.msra.mxu0 0.0
        %1464 = vmatprep.subr.mxu0 0.0
        %1465 = vmatpush1.msra.mxu0 0.0
        %1466 = vmatprep.subr.mxu0 0.0
        %1467 = vmatpush1.msra.mxu0 0.0
        %1468 = vmatprep.subr.mxu0 0.0
        %1469 = vmatpush1.msra.mxu0 0.0
        %1470 = vmatprep.subr.mxu0 0.0
        %1471 = vmatpush1.msra.mxu0 0.0
        %1472 = vmatprep.subr.mxu0 0.0
        %1473 = vmatpush1.msra.mxu0 0.0
        %1474 = vmatprep.subr.mxu0 0.0
        %1475 = vmatpush1.msra.mxu0 0.0
        %1476 = vmatprep.subr.mxu0 0.0
        %1477 = vmatpush1.msra.mxu0 0.0
        %1478 = vmatprep.subr.mxu0 0.0
        %1479 = vmatpush1.msra.mxu0 0.0
        %1480 = vmatprep.subr.mxu0 0.0
        %1481 = vmatpush1.msra.mxu0 0.0
        %1482 = vmatprep.subr.mxu0 0.0
        %1483 = vmatpush1.msra.mxu0 0.0
        %1484 = vmatprep.subr.mxu0 0.0
        %1485 = vmatpush1.msra.mxu0 0.0
        %1486 = vmatprep.subr.mxu0 0.0
        %1487 = vmatpush1.msra.mxu0 0.0
        %1488 = vmatprep.subr.mxu0 0.0
        %1489 = vmatpush1.msra.mxu0 0.0
        %1490 = vmatprep.subr.mxu0 0.0
        %1491 = vmatpush1.msra.mxu0 0.0
        %1492 = vmatprep.subr.mxu0 0.0
        %1493 = vmatpush1.msra.mxu0 0.0
        %1494 = vmatprep.subr.mxu0 0.0
        %1495 = vmatpush1.msra.mxu0 0.0
        %1496 = vmatprep.subr.mxu0 0.0
        %1497 = vmatpush1.msra.mxu0 0.0
        %1498 = vmatprep.subr.mxu0 0.0
        %1499 = vmatpush1.msra.mxu0 0.0
        %1500 = vmatprep.subr.mxu0 0.0
        %1501 = vmatpush1.msra.mxu0 0.0
        %1502 = vmatprep.subr.mxu0 0.0
        %1503 = vmatpush1.msra.mxu0 0.0
        %1504 = vmatprep.subr.mxu0 0.0
        %1505 = vmatpush1.msra.mxu0 0.0
        %1506 = vmatprep.subr.mxu0 0.0
        %1507 = vmatpush1.msra.mxu0 0.0
        %1508 = vmatprep.subr.mxu0 0.0
        %1509 = vmatpush1.msra.mxu0 0.0
        %1510 = vmatprep.subr.mxu0 0.0
        %1511 = vmatpush1.msra.mxu0 0.0
        %1512 = vmatprep.subr.mxu0 0.0
        %1513 = vmatpush1.msra.mxu0 0.0
        %1514 = vmatprep.subr.mxu0 0.0
        %1515 = vmatpush1.msra.mxu0 0.0
        %1516 = vmatprep.mubr.f32.mxu0 0.0
        %1517 = vmatmul.mubr.f32.gmra.mrb[0].mxu0 %v1429
        %v1518 = vpop.f32.mrb[0].mxu0
        %v1519 = vadd.f32 %v1426, %v1518
        %v1520 = vpop.f32.mrb[0].mxu0
        %1521 = vmatprep.mubr.f32.mxu0 0.0
        %1522 = vmatmul.mubr.f32.gmra.mrb[0].mxu0 %v1432
        %v1523 = vpop.f32.mrb[0].mxu0
        %v1524 = vadd.f32 %v1426, %v1523
        %v1525 = vpop.f32.mrb[0].mxu0
        %1526 = vmatprep.mubr.f32.mxu0 0.0
        %1527 = vmatmul.mubr.f32.gmra.mrb[0].mxu0 %v1435
        %v1528 = vpop.f32.mrb[0].mxu0
        %v1529 = vadd.f32 %v1426, %v1528
        %v1530 = vpop.f32.mrb[0].mxu0
        %1531 = vmatprep.mubr.f32.mxu0 0.0
        %1532 = vmatmul.mubr.f32.gmra.mrb[0].mxu0 %v1438
        %v1533 = vpop.f32.mrb[0].mxu0
        %v1534 = vadd.f32 %v1426, %v1533
        %v1535 = vpop.f32.mrb[0].mxu0
        %1536 = vmatprep.mubr.f32.mxu0 0.0
        %1537 = vmatmul.mubr.f32.gmra.mrb[0].mxu0 %v1441
        %v1538 = vpop.f32.mrb[0].mxu0
        %v1539 = vadd.f32 %v1426, %v1538
        %v1540 = vpop.f32.mrb[0].mxu0
        %1541 = vmatprep.mubr.f32.mxu0 0.0
        %1542 = vmatmul.mubr.f32.gmra.mrb[0].mxu0 %v1444
        %v1543 = vpop.f32.mrb[0].mxu0
        %v1544 = vadd.f32 %v1426, %v1543
        %v1545 = vpop.f32.mrb[0].mxu0
        %1546 = vmatprep.mubr.f32.mxu0 0.0
        %1547 = vmatmul.mubr.f32.gmra.mrb[0].mxu0 %v1447
        %v1548 = vpop.f32.mrb[0].mxu0
        %v1549 = vadd.f32 %v1426, %v1548
        %v1550 = vpop.f32.mrb[0].mxu0
        %1551 = vmatprep.mubr.f32.mxu0 0.0
        %1552 = vmatmul.mubr.f32.gmra.mrb[0].mxu0 %v1450
        %v1553 = vpop.f32.mrb[0].mxu0
        %v1554 = vadd.f32 %v1426, %v1553
        %v1555 = vpop.f32.mrb[0].mxu0
        %1556 = vdwg.mxu0
        %v1557 = vmax.f32 %v1519, 0.0
        %v1558 = vmax.f32 %v1524, 0.0
        %v1559 = vmax.f32 %v1529, 0.0
        %v1560 = vmax.f32 %v1534, 0.0
        %v1561 = vmax.f32 %v1539, 0.0
        %v1562 = vmax.f32 %v1544, 0.0
        %v1563 = vmax.f32 %v1549, 0.0
        %v1564 = vmax.f32 %v1554, 0.0
        %v1565 = vld [vmem:[#allocation22] sm:$0xff]
        %v1566 = vld [vmem:[#allocation22 + $0x8] sm:$0xff]
        %v1567 = vld [vmem:[#allocation22 + $0x10] sm:$0xff]
        %v1568 = vld [vmem:[#allocation22 + $0x18] sm:$0xff]
        %v1569 = vld [vmem:[#allocation23] sm:$0x1]
        %v1571 = vlaneseq
        %v1572 = vshrl.u32 %v1571, 7
        %v1573 = vsub.s32 0, %v1572
        %v1574 = vrot.slane %v1569, %v1573
        %v1577 = vsel %vm841, %v1557, 0
        %v1580 = vsel %vm841, %v1558, 0
        %v1583 = vsel %vm841, %v1559, 0
        %v1586 = vsel %vm841, %v1560, 0
        %v1589 = vsel %vm841, %v1561, 0
        %v1592 = vsel %vm841, %v1562, 0
        %v1595 = vsel %vm841, %v1563, 0
        %v1598 = vsel %vm841, %v1564, 0
        %1600 = vmatprep.subr.mxu0 0.0
        %1601 = vmatpush1.msra.mxu0 %v1565
        %1602 = vmatprep.subr.mxu0 0.0
        %1603 = vmatpush1.msra.mxu0 %v1566
        %1604 = vmatprep.subr.mxu0 0.0
        %1605 = vmatpush1.msra.mxu0 %v1567
        %1606 = vmatprep.subr.mxu0 0.0
        %1607 = vmatpush1.msra.mxu0 %v1568
        %1608 = vmatprep.subr.mxu0 0.0
        %1609 = vmatpush1.msra.mxu0 0.0
        %1610 = vmatprep.subr.mxu0 0.0
        %1611 = vmatpush1.msra.mxu0 0.0
        %1612 = vmatprep.subr.mxu0 0.0
        %1613 = vmatpush1.msra.mxu0 0.0
        %1614 = vmatprep.subr.mxu0 0.0
        %1615 = vmatpush1.msra.mxu0 0.0
        %1616 = vmatprep.subr.mxu0 0.0
        %1617 = vmatpush1.msra.mxu0 0.0
        %1618 = vmatprep.subr.mxu0 0.0
        %1619 = vmatpush1.msra.mxu0 0.0
        %1620 = vmatprep.subr.mxu0 0.0
        %1621 = vmatpush1.msra.mxu0 0.0
        %1622 = vmatprep.subr.mxu0 0.0
        %1623 = vmatpush1.msra.mxu0 0.0
        %1624 = vmatprep.subr.mxu0 0.0
        %1625 = vmatpush1.msra.mxu0 0.0
        %1626 = vmatprep.subr.mxu0 0.0
        %1627 = vmatpush1.msra.mxu0 0.0
        %1628 = vmatprep.subr.mxu0 0.0
        %1629 = vmatpush1.msra.mxu0 0.0
        %1630 = vmatprep.subr.mxu0 0.0
        %1631 = vmatpush1.msra.mxu0 0.0
        %1632 = vmatprep.subr.mxu0 0.0
        %1633 = vmatpush1.msra.mxu0 0.0
        %1634 = vmatprep.subr.mxu0 0.0
        %1635 = vmatpush1.msra.mxu0 0.0
        %1636 = vmatprep.subr.mxu0 0.0
        %1637 = vmatpush1.msra.mxu0 0.0
        %1638 = vmatprep.subr.mxu0 0.0
        %1639 = vmatpush1.msra.mxu0 0.0
        %1640 = vmatprep.subr.mxu0 0.0
        %1641 = vmatpush1.msra.mxu0 0.0
        %1642 = vmatprep.subr.mxu0 0.0
        %1643 = vmatpush1.msra.mxu0 0.0
        %1644 = vmatprep.subr.mxu0 0.0
        %1645 = vmatpush1.msra.mxu0 0.0
        %1646 = vmatprep.subr.mxu0 0.0
        %1647 = vmatpush1.msra.mxu0 0.0
        %1648 = vmatprep.subr.mxu0 0.0
        %1649 = vmatpush1.msra.mxu0 0.0
        %1650 = vmatprep.subr.mxu0 0.0
        %1651 = vmatpush1.msra.mxu0 0.0
        %1652 = vmatprep.subr.mxu0 0.0
        %1653 = vmatpush1.msra.mxu0 0.0
        %1654 = vmatprep.subr.mxu0 0.0
        %1655 = vmatpush1.msra.mxu0 0.0
        %1656 = vmatprep.subr.mxu0 0.0
        %1657 = vmatpush1.msra.mxu0 0.0
        %1658 = vmatprep.subr.mxu0 0.0
        %1659 = vmatpush1.msra.mxu0 0.0
        %1660 = vmatprep.subr.mxu0 0.0
        %1661 = vmatpush1.msra.mxu0 0.0
        %1662 = vmatprep.subr.mxu0 0.0
        %1663 = vmatpush1.msra.mxu0 0.0
        %1664 = vmatprep.mubr.f32.mxu0 0.0
        %1665 = vmatmul.mubr.f32.gmra.mrb[0].mxu0 %v1577
        %v1666 = vpop.f32.mrb[0].mxu0
        %v1667 = vadd.f32 %v1574, %v1666
        %v1668 = vpop.f32.mrb[0].mxu0
        %1669 = vmatprep.mubr.f32.mxu0 0.0
        %1670 = vmatmul.mubr.f32.gmra.mrb[0].mxu0 %v1580
        %v1671 = vpop.f32.mrb[0].mxu0
        %v1672 = vadd.f32 %v1574, %v1671
        %v1673 = vpop.f32.mrb[0].mxu0
        %1674 = vmatprep.mubr.f32.mxu0 0.0
        %1675 = vmatmul.mubr.f32.gmra.mrb[0].mxu0 %v1583
        %v1676 = vpop.f32.mrb[0].mxu0
        %v1677 = vadd.f32 %v1574, %v1676
        %v1678 = vpop.f32.mrb[0].mxu0
        %1679 = vmatprep.mubr.f32.mxu0 0.0
        %1680 = vmatmul.mubr.f32.gmra.mrb[0].mxu0 %v1586
        %v1681 = vpop.f32.mrb[0].mxu0
        %v1682 = vadd.f32 %v1574, %v1681
        %v1683 = vpop.f32.mrb[0].mxu0
        %1684 = vmatprep.mubr.f32.mxu0 0.0
        %1685 = vmatmul.mubr.f32.gmra.mrb[0].mxu0 %v1589
        %v1686 = vpop.f32.mrb[0].mxu0
        %v1687 = vadd.f32 %v1574, %v1686
        %v1688 = vpop.f32.mrb[0].mxu0
        %1689 = vmatprep.mubr.f32.mxu0 0.0
        %1690 = vmatmul.mubr.f32.gmra.mrb[0].mxu0 %v1592
        %v1691 = vpop.f32.mrb[0].mxu0
        %v1692 = vadd.f32 %v1574, %v1691
        %v1693 = vpop.f32.mrb[0].mxu0
        %1694 = vmatprep.mubr.f32.mxu0 0.0
        %1695 = vmatmul.mubr.f32.gmra.mrb[0].mxu0 %v1595
        %v1696 = vpop.f32.mrb[0].mxu0
        %v1697 = vadd.f32 %v1574, %v1696
        %v1698 = vpop.f32.mrb[0].mxu0
        %1699 = vmatprep.mubr.f32.mxu0 0.0
        %1700 = vmatmul.mubr.f32.gmra.mrb[0].mxu0 %v1598
        %v1701 = vpop.f32.mrb[0].mxu0
        %v1702 = vadd.f32 %v1574, %v1701
        %v1703 = vpop.f32.mrb[0].mxu0
        %1704 = vdwg.mxu0
        %v1705 = vmul.f32 %v1667, 0.35355338
        %v1706 = vmul.f32 %v1672, 0.35355338
        %v1707 = vmul.f32 %v1677, 0.35355338
        %v1708 = vmul.f32 %v1682, 0.35355338
        %v1709 = vmul.f32 %v1687, 0.35355338
        %v1710 = vmul.f32 %v1692, 0.35355338
        %v1711 = vmul.f32 %v1697, 0.35355338
        %v1712 = vmul.f32 %v1702, 0.35355338
        %v1713 = vld [vmem:[%s696] sm:$0xf]
        %v1714 = vld [vmem:[%s696 + $0x4] sm:$0xf]
        %v1715 = vld [vmem:[%s696 + $0x8] sm:$0xf]
        %v1716 = vld [vmem:[%s696 + $0xc] sm:$0xf]
        %v1717 = vld [vmem:[%s696 + $0x10] sm:$0xf]
        %v1718 = vld [vmem:[%s696 + $0x14] sm:$0xf]
        %v1719 = vld [vmem:[%s696 + $0x18] sm:$0xf]
        %v1720 = vld [vmem:[%s696 + $0x1c] sm:$0xf]
        %v1721 = vunpack.c.l.bf16 %v1713
        %v1722 = vunpack.c.l.bf16 %v1714
        %v1723 = vunpack.c.l.bf16 %v1715
        %v1724 = vunpack.c.l.bf16 %v1716
        %v1725 = vunpack.c.l.bf16 %v1717
        %v1726 = vunpack.c.l.bf16 %v1718
        %v1727 = vunpack.c.l.bf16 %v1719
        %v1728 = vunpack.c.l.bf16 %v1720
        %v1729 = vadd.f32 %v1721, %v1347
        %v1730 = vadd.f32 %v1722, %v1352
        %v1731 = vadd.f32 %v1723, %v1357
        %v1732 = vadd.f32 %v1724, %v1362
        %v1733 = vadd.f32 %v1725, %v1367
        %v1734 = vadd.f32 %v1726, %v1372
        %v1735 = vadd.f32 %v1727, %v1377
        %v1736 = vadd.f32 %v1728, %v1382
        %1745 = vrot.lane.b32.xlu0 %v1705, 120
        %v1746 = vpop.permute.xlu0 %1745
        %1747 = vrot.lane.b32.xlu0 %v1706, 120
        %v1748 = vpop.permute.xlu0 %1747
        %1749 = vrot.lane.b32.xlu0 %v1707, 120
        %v1750 = vpop.permute.xlu0 %1749
        %1751 = vrot.lane.b32.xlu0 %v1708, 120
        %v1752 = vpop.permute.xlu0 %1751
        %1753 = vrot.lane.b32.xlu0 %v1709, 120
        %v1754 = vpop.permute.xlu0 %1753
        %1755 = vrot.lane.b32.xlu0 %v1710, 120
        %v1756 = vpop.permute.xlu0 %1755
        %1757 = vrot.lane.b32.xlu0 %v1711, 120
        %v1758 = vpop.permute.xlu0 %1757
        %1759 = vrot.lane.b32.xlu0 %v1712, 120
        %v1760 = vpop.permute.xlu0 %1759
        %v1769 = vmax.f32 %v1705, %v1746
        %v1770 = vmax.f32 %v1706, %v1748
        %v1771 = vmax.f32 %v1707, %v1750
        %v1772 = vmax.f32 %v1708, %v1752
        %v1773 = vmax.f32 %v1709, %v1754
        %v1774 = vmax.f32 %v1710, %v1756
        %v1775 = vmax.f32 %v1711, %v1758
        %v1776 = vmax.f32 %v1712, %v1760
        %1777 = vrot.lane.b32.xlu0 %v1705, 112
        %v1778 = vpop.permute.xlu0 %1777
        %1779 = vrot.lane.b32.xlu0 %v1706, 112
        %v1780 = vpop.permute.xlu0 %1779
        %1781 = vrot.lane.b32.xlu0 %v1707, 112
        %v1782 = vpop.permute.xlu0 %1781
        %1783 = vrot.lane.b32.xlu0 %v1708, 112
        %v1784 = vpop.permute.xlu0 %1783
        %1785 = vrot.lane.b32.xlu0 %v1709, 112
        %v1786 = vpop.permute.xlu0 %1785
        %1787 = vrot.lane.b32.xlu0 %v1710, 112
        %v1788 = vpop.permute.xlu0 %1787
        %1789 = vrot.lane.b32.xlu0 %v1711, 112
        %v1790 = vpop.permute.xlu0 %1789
        %1791 = vrot.lane.b32.xlu0 %v1712, 112
        %v1792 = vpop.permute.xlu0 %1791
        %v1801 = vmax.f32 %v1769, %v1778
        %v1802 = vmax.f32 %v1770, %v1780
        %v1803 = vmax.f32 %v1771, %v1782
        %v1804 = vmax.f32 %v1772, %v1784
        %v1805 = vmax.f32 %v1773, %v1786
        %v1806 = vmax.f32 %v1774, %v1788
        %v1807 = vmax.f32 %v1775, %v1790
        %v1808 = vmax.f32 %v1776, %v1792
        %1809 = vrot.lane.b32.xlu0 %v1705, 104
        %v1810 = vpop.permute.xlu0 %1809
        %1811 = vrot.lane.b32.xlu0 %v1706, 104
        %v1812 = vpop.permute.xlu0 %1811
        %1813 = vrot.lane.b32.xlu0 %v1707, 104
        %v1814 = vpop.permute.xlu0 %1813
        %1815 = vrot.lane.b32.xlu0 %v1708, 104
        %v1816 = vpop.permute.xlu0 %1815
        %1817 = vrot.lane.b32.xlu0 %v1709, 104
        %v1818 = vpop.permute.xlu0 %1817
        %1819 = vrot.lane.b32.xlu0 %v1710, 104
        %v1820 = vpop.permute.xlu0 %1819
        %1821 = vrot.lane.b32.xlu0 %v1711, 104
        %v1822 = vpop.permute.xlu0 %1821
        %1823 = vrot.lane.b32.xlu0 %v1712, 104
        %v1824 = vpop.permute.xlu0 %1823
        %v1833 = vmax.f32 %v1801, %v1810
        %v1834 = vmax.f32 %v1802, %v1812
        %v1835 = vmax.f32 %v1803, %v1814
        %v1836 = vmax.f32 %v1804, %v1816
        %v1837 = vmax.f32 %v1805, %v1818
        %v1838 = vmax.f32 %v1806, %v1820
        %v1839 = vmax.f32 %v1807, %v1822
        %v1840 = vmax.f32 %v1808, %v1824
        %v1841 = vsub.f32 %v1705, %v1833
        %v1842 = vsub.f32 %v1706, %v1834
        %v1843 = vsub.f32 %v1707, %v1835
        %v1844 = vsub.f32 %v1708, %v1836
        %v1845 = vsub.f32 %v1709, %v1837
        %v1846 = vsub.f32 %v1710, %v1838
        %v1847 = vsub.f32 %v1711, %v1839
        %v1848 = vsub.f32 %v1712, %v1840
        %v1849 = vmul.f32 %v1841, 1.442695
        %v1850 = vpow.pop %v1849
        %v1851 = vmul.f32 %v1842, 1.442695
        %v1852 = vpow.pop %v1851
        %v1853 = vmul.f32 %v1843, 1.442695
        %v1854 = vpow.pop %v1853
        %v1855 = vmul.f32 %v1844, 1.442695
        %v1856 = vpow.pop %v1855
        %v1857 = vmul.f32 %v1845, 1.442695
        %v1858 = vpow.pop %v1857
        %v1859 = vmul.f32 %v1846, 1.442695
        %v1860 = vpow.pop %v1859
        %v1861 = vmul.f32 %v1847, 1.442695
        %v1862 = vpow.pop %v1861
        %v1863 = vmul.f32 %v1848, 1.442695
        %v1864 = vpow.pop %v1863
        %v1865 = vmul.f32 %v1850, %v1729
        %v1866 = vmul.f32 %v1852, %v1730
        %v1867 = vmul.f32 %v1854, %v1731
        %v1868 = vmul.f32 %v1856, %v1732
        %v1869 = vmul.f32 %v1858, %v1733
        %v1870 = vmul.f32 %v1860, %v1734
        %v1871 = vmul.f32 %v1862, %v1735
        %v1872 = vmul.f32 %v1864, %v1736
        %1881 = vrot.lane.b32.xlu0 %v1833, 8
        %v1882 = vpop.permute.xlu0 %1881
        %1883 = vrot.lane.b32.xlu0 %v1834, 8
        %v1884 = vpop.permute.xlu0 %1883
        %1885 = vrot.lane.b32.xlu0 %v1835, 8
        %v1886 = vpop.permute.xlu0 %1885
        %1887 = vrot.lane.b32.xlu0 %v1836, 8
        %v1888 = vpop.permute.xlu0 %1887
        %1889 = vrot.lane.b32.xlu0 %v1837, 8
        %v1890 = vpop.permute.xlu0 %1889
        %1891 = vrot.lane.b32.xlu0 %v1838, 8
        %v1892 = vpop.permute.xlu0 %1891
        %1893 = vrot.lane.b32.xlu0 %v1839, 8
        %v1894 = vpop.permute.xlu0 %1893
        %1895 = vrot.lane.b32.xlu0 %v1840, 8
        %v1896 = vpop.permute.xlu0 %1895
        %v1905 = vsub.f32 %v1705, %v1882
        %v1906 = vsub.f32 %v1706, %v1884
        %v1907 = vsub.f32 %v1707, %v1886
        %v1908 = vsub.f32 %v1708, %v1888
        %v1909 = vsub.f32 %v1709, %v1890
        %v1910 = vsub.f32 %v1710, %v1892
        %v1911 = vsub.f32 %v1711, %v1894
        %v1912 = vsub.f32 %v1712, %v1896
        %v1913 = vmul.f32 %v1905, 1.442695
        %v1914 = vpow.pop %v1913
        %v1915 = vmul.f32 %v1906, 1.442695
        %v1916 = vpow.pop %v1915
        %v1917 = vmul.f32 %v1907, 1.442695
        %v1918 = vpow.pop %v1917
        %v1919 = vmul.f32 %v1908, 1.442695
        %v1920 = vpow.pop %v1919
        %v1921 = vmul.f32 %v1909, 1.442695
        %v1922 = vpow.pop %v1921
        %v1923 = vmul.f32 %v1910, 1.442695
        %v1924 = vpow.pop %v1923
        %v1925 = vmul.f32 %v1911, 1.442695
        %v1926 = vpow.pop %v1925
        %v1927 = vmul.f32 %v1912, 1.442695
        %v1928 = vpow.pop %v1927
        %1937 = vrot.lane.b32.xlu0 %v1914, 120
        %v1938 = vpop.permute.xlu0 %1937
        %1939 = vrot.lane.b32.xlu0 %v1916, 120
        %v1940 = vpop.permute.xlu0 %1939
        %1941 = vrot.lane.b32.xlu0 %v1918, 120
        %v1942 = vpop.permute.xlu0 %1941
        %1943 = vrot.lane.b32.xlu0 %v1920, 120
        %v1944 = vpop.permute.xlu0 %1943
        %1945 = vrot.lane.b32.xlu0 %v1922, 120
        %v1946 = vpop.permute.xlu0 %1945
        %1947 = vrot.lane.b32.xlu0 %v1924, 120
        %v1948 = vpop.permute.xlu0 %1947
        %1949 = vrot.lane.b32.xlu0 %v1926, 120
        %v1950 = vpop.permute.xlu0 %1949
        %1951 = vrot.lane.b32.xlu0 %v1928, 120
        %v1952 = vpop.permute.xlu0 %1951
        %v1961 = vadd.f32 %v1850, %v1938
        %v1962 = vadd.f32 %v1852, %v1940
        %v1963 = vadd.f32 %v1854, %v1942
        %v1964 = vadd.f32 %v1856, %v1944
        %v1965 = vadd.f32 %v1858, %v1946
        %v1966 = vadd.f32 %v1860, %v1948
        %v1967 = vadd.f32 %v1862, %v1950
        %v1968 = vadd.f32 %v1864, %v1952
        %v1969 = vmul.f32 %v1914, %v1729
        %v1970 = vmul.f32 %v1916, %v1730
        %v1971 = vmul.f32 %v1918, %v1731
        %v1972 = vmul.f32 %v1920, %v1732
        %v1973 = vmul.f32 %v1922, %v1733
        %v1974 = vmul.f32 %v1924, %v1734
        %v1975 = vmul.f32 %v1926, %v1735
        %v1976 = vmul.f32 %v1928, %v1736
        %1985 = vrot.lane.b32.xlu0 %v1969, 120
        %v1986 = vpop.permute.xlu0 %1985
        %1987 = vrot.lane.b32.xlu0 %v1970, 120
        %v1988 = vpop.permute.xlu0 %1987
        %1989 = vrot.lane.b32.xlu0 %v1971, 120
        %v1990 = vpop.permute.xlu0 %1989
        %1991 = vrot.lane.b32.xlu0 %v1972, 120
        %v1992 = vpop.permute.xlu0 %1991
        %1993 = vrot.lane.b32.xlu0 %v1973, 120
        %v1994 = vpop.permute.xlu0 %1993
        %1995 = vrot.lane.b32.xlu0 %v1974, 120
        %v1996 = vpop.permute.xlu0 %1995
        %1997 = vrot.lane.b32.xlu0 %v1975, 120
        %v1998 = vpop.permute.xlu0 %1997
        %1999 = vrot.lane.b32.xlu0 %v1976, 120
        %v2000 = vpop.permute.xlu0 %1999
        %v2009 = vadd.f32 %v1865, %v1986
        %v2010 = vadd.f32 %v1866, %v1988
        %v2011 = vadd.f32 %v1867, %v1990
        %v2012 = vadd.f32 %v1868, %v1992
        %v2013 = vadd.f32 %v1869, %v1994
        %v2014 = vadd.f32 %v1870, %v1996
        %v2015 = vadd.f32 %v1871, %v1998
        %v2016 = vadd.f32 %v1872, %v2000
        %2017 = vrot.lane.b32.xlu0 %v1833, 16
        %v2018 = vpop.permute.xlu0 %2017
        %2019 = vrot.lane.b32.xlu0 %v1834, 16
        %v2020 = vpop.permute.xlu0 %2019
        %2021 = vrot.lane.b32.xlu0 %v1835, 16
        %v2022 = vpop.permute.xlu0 %2021
        %2023 = vrot.lane.b32.xlu0 %v1836, 16
        %v2024 = vpop.permute.xlu0 %2023
        %2025 = vrot.lane.b32.xlu0 %v1837, 16
        %v2026 = vpop.permute.xlu0 %2025
        %2027 = vrot.lane.b32.xlu0 %v1838, 16
        %v2028 = vpop.permute.xlu0 %2027
        %2029 = vrot.lane.b32.xlu0 %v1839, 16
        %v2030 = vpop.permute.xlu0 %2029
        %2031 = vrot.lane.b32.xlu0 %v1840, 16
        %v2032 = vpop.permute.xlu0 %2031
        %v2041 = vsub.f32 %v1705, %v2018
        %v2042 = vsub.f32 %v1706, %v2020
        %v2043 = vsub.f32 %v1707, %v2022
        %v2044 = vsub.f32 %v1708, %v2024
        %v2045 = vsub.f32 %v1709, %v2026
        %v2046 = vsub.f32 %v1710, %v2028
        %v2047 = vsub.f32 %v1711, %v2030
        %v2048 = vsub.f32 %v1712, %v2032
        %v2049 = vmul.f32 %v2041, 1.442695
        %v2050 = vpow.pop %v2049
        %v2051 = vmul.f32 %v2042, 1.442695
        %v2052 = vpow.pop %v2051
        %v2053 = vmul.f32 %v2043, 1.442695
        %v2054 = vpow.pop %v2053
        %v2055 = vmul.f32 %v2044, 1.442695
        %v2056 = vpow.pop %v2055
        %v2057 = vmul.f32 %v2045, 1.442695
        %v2058 = vpow.pop %v2057
        %v2059 = vmul.f32 %v2046, 1.442695
        %v2060 = vpow.pop %v2059
        %v2061 = vmul.f32 %v2047, 1.442695
        %v2062 = vpow.pop %v2061
        %v2063 = vmul.f32 %v2048, 1.442695
        %v2064 = vpow.pop %v2063
        %2073 = vrot.lane.b32.xlu0 %v2050, 112
        %v2074 = vpop.permute.xlu0 %2073
        %2075 = vrot.lane.b32.xlu0 %v2052, 112
        %v2076 = vpop.permute.xlu0 %2075
        %2077 = vrot.lane.b32.xlu0 %v2054, 112
        %v2078 = vpop.permute.xlu0 %2077
        %2079 = vrot.lane.b32.xlu0 %v2056, 112
        %v2080 = vpop.permute.xlu0 %2079
        %2081 = vrot.lane.b32.xlu0 %v2058, 112
        %v2082 = vpop.permute.xlu0 %2081
        %2083 = vrot.lane.b32.xlu0 %v2060, 112
        %v2084 = vpop.permute.xlu0 %2083
        %2085 = vrot.lane.b32.xlu0 %v2062, 112
        %v2086 = vpop.permute.xlu0 %2085
        %2087 = vrot.lane.b32.xlu0 %v2064, 112
        %v2088 = vpop.permute.xlu0 %2087
        %v2097 = vadd.f32 %v1961, %v2074
        %v2098 = vadd.f32 %v1962, %v2076
        %v2099 = vadd.f32 %v1963, %v2078
        %v2100 = vadd.f32 %v1964, %v2080
        %v2101 = vadd.f32 %v1965, %v2082
        %v2102 = vadd.f32 %v1966, %v2084
        %v2103 = vadd.f32 %v1967, %v2086
        %v2104 = vadd.f32 %v1968, %v2088
        %v2105 = vmul.f32 %v2050, %v1729
        %v2106 = vmul.f32 %v2052, %v1730
        %v2107 = vmul.f32 %v2054, %v1731
        %v2108 = vmul.f32 %v2056, %v1732
        %v2109 = vmul.f32 %v2058, %v1733
        %v2110 = vmul.f32 %v2060, %v1734
        %v2111 = vmul.f32 %v2062, %v1735
        %v2112 = vmul.f32 %v2064, %v1736
        %2121 = vrot.lane.b32.xlu0 %v2105, 112
        %v2122 = vpop.permute.xlu0 %2121
        %2123 = vrot.lane.b32.xlu0 %v2106, 112
        %v2124 = vpop.permute.xlu0 %2123
        %2125 = vrot.lane.b32.xlu0 %v2107, 112
        %v2126 = vpop.permute.xlu0 %2125
        %2127 = vrot.lane.b32.xlu0 %v2108, 112
        %v2128 = vpop.permute.xlu0 %2127
        %2129 = vrot.lane.b32.xlu0 %v2109, 112
        %v2130 = vpop.permute.xlu0 %2129
        %2131 = vrot.lane.b32.xlu0 %v2110, 112
        %v2132 = vpop.permute.xlu0 %2131
        %2133 = vrot.lane.b32.xlu0 %v2111, 112
        %v2134 = vpop.permute.xlu0 %2133
        %2135 = vrot.lane.b32.xlu0 %v2112, 112
        %v2136 = vpop.permute.xlu0 %2135
        %v2145 = vadd.f32 %v2009, %v2122
        %v2146 = vadd.f32 %v2010, %v2124
        %v2147 = vadd.f32 %v2011, %v2126
        %v2148 = vadd.f32 %v2012, %v2128
        %v2149 = vadd.f32 %v2013, %v2130
        %v2150 = vadd.f32 %v2014, %v2132
        %v2151 = vadd.f32 %v2015, %v2134
        %v2152 = vadd.f32 %v2016, %v2136
        %2153 = vrot.lane.b32.xlu0 %v1833, 24
        %v2154 = vpop.permute.xlu0 %2153
        %2155 = vrot.lane.b32.xlu0 %v1834, 24
        %v2156 = vpop.permute.xlu0 %2155
        %2157 = vrot.lane.b32.xlu0 %v1835, 24
        %v2158 = vpop.permute.xlu0 %2157
        %2159 = vrot.lane.b32.xlu0 %v1836, 24
        %v2160 = vpop.permute.xlu0 %2159
        %2161 = vrot.lane.b32.xlu0 %v1837, 24
        %v2162 = vpop.permute.xlu0 %2161
        %2163 = vrot.lane.b32.xlu0 %v1838, 24
        %v2164 = vpop.permute.xlu0 %2163
        %2165 = vrot.lane.b32.xlu0 %v1839, 24
        %v2166 = vpop.permute.xlu0 %2165
        %2167 = vrot.lane.b32.xlu0 %v1840, 24
        %v2168 = vpop.permute.xlu0 %2167
        %v2177 = vsub.f32 %v1705, %v2154
        %v2178 = vsub.f32 %v1706, %v2156
        %v2179 = vsub.f32 %v1707, %v2158
        %v2180 = vsub.f32 %v1708, %v2160
        %v2181 = vsub.f32 %v1709, %v2162
        %v2182 = vsub.f32 %v1710, %v2164
        %v2183 = vsub.f32 %v1711, %v2166
        %v2184 = vsub.f32 %v1712, %v2168
        %v2185 = vmul.f32 %v2177, 1.442695
        %v2186 = vpow.pop %v2185
        %v2187 = vmul.f32 %v2178, 1.442695
        %v2188 = vpow.pop %v2187
        %v2189 = vmul.f32 %v2179, 1.442695
        %v2190 = vpow.pop %v2189
        %v2191 = vmul.f32 %v2180, 1.442695
        %v2192 = vpow.pop %v2191
        %v2193 = vmul.f32 %v2181, 1.442695
        %v2194 = vpow.pop %v2193
        %v2195 = vmul.f32 %v2182, 1.442695
        %v2196 = vpow.pop %v2195
        %v2197 = vmul.f32 %v2183, 1.442695
        %v2198 = vpow.pop %v2197
        %v2199 = vmul.f32 %v2184, 1.442695
        %v2200 = vpow.pop %v2199
        %2209 = vrot.lane.b32.xlu0 %v2186, 104
        %v2210 = vpop.permute.xlu0 %2209
        %2211 = vrot.lane.b32.xlu0 %v2188, 104
        %v2212 = vpop.permute.xlu0 %2211
        %2213 = vrot.lane.b32.xlu0 %v2190, 104
        %v2214 = vpop.permute.xlu0 %2213
        %2215 = vrot.lane.b32.xlu0 %v2192, 104
        %v2216 = vpop.permute.xlu0 %2215
        %2217 = vrot.lane.b32.xlu0 %v2194, 104
        %v2218 = vpop.permute.xlu0 %2217
        %2219 = vrot.lane.b32.xlu0 %v2196, 104
        %v2220 = vpop.permute.xlu0 %2219
        %2221 = vrot.lane.b32.xlu0 %v2198, 104
        %v2222 = vpop.permute.xlu0 %2221
        %2223 = vrot.lane.b32.xlu0 %v2200, 104
        %v2224 = vpop.permute.xlu0 %2223
        %v2233 = vadd.f32 %v2097, %v2210
        %v2234 = vadd.f32 %v2098, %v2212
        %v2235 = vadd.f32 %v2099, %v2214
        %v2236 = vadd.f32 %v2100, %v2216
        %v2237 = vadd.f32 %v2101, %v2218
        %v2238 = vadd.f32 %v2102, %v2220
        %v2239 = vadd.f32 %v2103, %v2222
        %v2240 = vadd.f32 %v2104, %v2224
        %v2241 = vmul.f32 %v2186, %v1729
        %v2242 = vmul.f32 %v2188, %v1730
        %v2243 = vmul.f32 %v2190, %v1731
        %v2244 = vmul.f32 %v2192, %v1732
        %v2245 = vmul.f32 %v2194, %v1733
        %v2246 = vmul.f32 %v2196, %v1734
        %v2247 = vmul.f32 %v2198, %v1735
        %v2248 = vmul.f32 %v2200, %v1736
        %2257 = vrot.lane.b32.xlu0 %v2241, 104
        %v2258 = vpop.permute.xlu0 %2257
        %2259 = vrot.lane.b32.xlu0 %v2242, 104
        %v2260 = vpop.permute.xlu0 %2259
        %2261 = vrot.lane.b32.xlu0 %v2243, 104
        %v2262 = vpop.permute.xlu0 %2261
        %2263 = vrot.lane.b32.xlu0 %v2244, 104
        %v2264 = vpop.permute.xlu0 %2263
        %2265 = vrot.lane.b32.xlu0 %v2245, 104
        %v2266 = vpop.permute.xlu0 %2265
        %2267 = vrot.lane.b32.xlu0 %v2246, 104
        %v2268 = vpop.permute.xlu0 %2267
        %2269 = vrot.lane.b32.xlu0 %v2247, 104
        %v2270 = vpop.permute.xlu0 %2269
        %2271 = vrot.lane.b32.xlu0 %v2248, 104
        %v2272 = vpop.permute.xlu0 %2271
        %v2281 = vadd.f32 %v2145, %v2258
        %v2282 = vadd.f32 %v2146, %v2260
        %v2283 = vadd.f32 %v2147, %v2262
        %v2284 = vadd.f32 %v2148, %v2264
        %v2285 = vadd.f32 %v2149, %v2266
        %v2286 = vadd.f32 %v2150, %v2268
        %v2287 = vadd.f32 %v2151, %v2270
        %v2288 = vadd.f32 %v2152, %v2272
        %v2289 = vrcp.pop %v2233
        %v2290 = vrcp.pop %v2234
        %v2291 = vrcp.pop %v2235
        %v2292 = vrcp.pop %v2236
        %v2293 = vrcp.pop %v2237
        %v2294 = vrcp.pop %v2238
        %v2295 = vrcp.pop %v2239
        %v2296 = vrcp.pop %v2240
        %v2297 = vmul.f32 %v2281, %v2289
        %v2298 = vmul.f32 %v2282, %v2290
        %v2299 = vmul.f32 %v2283, %v2291
        %v2300 = vmul.f32 %v2284, %v2292
        %v2301 = vmul.f32 %v2285, %v2293
        %v2302 = vmul.f32 %v2286, %v2294
        %v2303 = vmul.f32 %v2287, %v2295
        %v2304 = vmul.f32 %v2288, %v2296
        %v2305 = vld [vmem:[#allocation25] sm:$0xff]
        %v2306 = vld [vmem:[#allocation26] sm:$0x1]
        %v2308 = vlaneseq
        %v2309 = vshrl.u32 %v2308, 7
        %v2310 = vsub.s32 0, %v2309
        %v2311 = vrot.slane %v2306, %v2310
        %v2314 = vsel %vm1051, %v2297, 0
        %v2317 = vsel %vm1051, %v2298, 0
        %v2320 = vsel %vm1051, %v2299, 0
        %v2323 = vsel %vm1051, %v2300, 0
        %v2326 = vsel %vm1051, %v2301, 0
        %v2329 = vsel %vm1051, %v2302, 0
        %v2332 = vsel %vm1051, %v2303, 0
        %v2335 = vsel %vm1051, %v2304, 0
        %2337 = vmatprep.subr.mxu0 0.0
        %2338 = vmatpush1.msra.mxu0 %v2305
        %2339 = vmatprep.subr.mxu0 0.0
        %2340 = vmatpush1.msra.mxu0 0.0
        %2341 = vmatprep.subr.mxu0 0.0
        %2342 = vmatpush1.msra.mxu0 0.0
        %2343 = vmatprep.subr.mxu0 0.0
        %2344 = vmatpush1.msra.mxu0 0.0
        %2345 = vmatprep.subr.mxu0 0.0
        %2346 = vmatpush1.msra.mxu0 0.0
        %2347 = vmatprep.subr.mxu0 0.0
        %2348 = vmatpush1.msra.mxu0 0.0
        %2349 = vmatprep.subr.mxu0 0.0
        %2350 = vmatpush1.msra.mxu0 0.0
        %2351 = vmatprep.subr.mxu0 0.0
        %2352 = vmatpush1.msra.mxu0 0.0
        %2353 = vmatprep.subr.mxu0 0.0
        %2354 = vmatpush1.msra.mxu0 0.0
        %2355 = vmatprep.subr.mxu0 0.0
        %2356 = vmatpush1.msra.mxu0 0.0
        %2357 = vmatprep.subr.mxu0 0.0
        %2358 = vmatpush1.msra.mxu0 0.0
        %2359 = vmatprep.subr.mxu0 0.0
        %2360 = vmatpush1.msra.mxu0 0.0
        %2361 = vmatprep.subr.mxu0 0.0
        %2362 = vmatpush1.msra.mxu0 0.0
        %2363 = vmatprep.subr.mxu0 0.0
        %2364 = vmatpush1.msra.mxu0 0.0
        %2365 = vmatprep.subr.mxu0 0.0
        %2366 = vmatpush1.msra.mxu0 0.0
        %2367 = vmatprep.subr.mxu0 0.0
        %2368 = vmatpush1.msra.mxu0 0.0
        %2369 = vmatprep.subr.mxu0 0.0
        %2370 = vmatpush1.msra.mxu0 0.0
        %2371 = vmatprep.subr.mxu0 0.0
        %2372 = vmatpush1.msra.mxu0 0.0
        %2373 = vmatprep.subr.mxu0 0.0
        %2374 = vmatpush1.msra.mxu0 0.0
        %2375 = vmatprep.subr.mxu0 0.0
        %2376 = vmatpush1.msra.mxu0 0.0
        %2377 = vmatprep.subr.mxu0 0.0
        %2378 = vmatpush1.msra.mxu0 0.0
        %2379 = vmatprep.subr.mxu0 0.0
        %2380 = vmatpush1.msra.mxu0 0.0
        %2381 = vmatprep.subr.mxu0 0.0
        %2382 = vmatpush1.msra.mxu0 0.0
        %2383 = vmatprep.subr.mxu0 0.0
        %2384 = vmatpush1.msra.mxu0 0.0
        %2385 = vmatprep.subr.mxu0 0.0
        %2386 = vmatpush1.msra.mxu0 0.0
        %2387 = vmatprep.subr.mxu0 0.0
        %2388 = vmatpush1.msra.mxu0 0.0
        %2389 = vmatprep.subr.mxu0 0.0
        %2390 = vmatpush1.msra.mxu0 0.0
        %2391 = vmatprep.subr.mxu0 0.0
        %2392 = vmatpush1.msra.mxu0 0.0
        %2393 = vmatprep.subr.mxu0 0.0
        %2394 = vmatpush1.msra.mxu0 0.0
        %2395 = vmatprep.subr.mxu0 0.0
        %2396 = vmatpush1.msra.mxu0 0.0
        %2397 = vmatprep.subr.mxu0 0.0
        %2398 = vmatpush1.msra.mxu0 0.0
        %2399 = vmatprep.subr.mxu0 0.0
        %2400 = vmatpush1.msra.mxu0 0.0
        %2401 = vmatprep.mubr.f32.mxu0 0.0
        %2402 = vmatmul.mubr.f32.gmra.mrb[0].mxu0 %v2314
        %v2403 = vpop.f32.mrb[0].mxu0
        %v2404 = vadd.f32 %v2311, %v2403
        %v2405 = vpop.f32.mrb[0].mxu0
        %2406 = vmatprep.mubr.f32.mxu0 0.0
        %2407 = vmatmul.mubr.f32.gmra.mrb[0].mxu0 %v2317
        %v2408 = vpop.f32.mrb[0].mxu0
        %v2409 = vadd.f32 %v2311, %v2408
        %v2410 = vpop.f32.mrb[0].mxu0
        %2411 = vmatprep.mubr.f32.mxu0 0.0
        %2412 = vmatmul.mubr.f32.gmra.mrb[0].mxu0 %v2320
        %v2413 = vpop.f32.mrb[0].mxu0
        %v2414 = vadd.f32 %v2311, %v2413
        %v2415 = vpop.f32.mrb[0].mxu0
        %2416 = vmatprep.mubr.f32.mxu0 0.0
        %2417 = vmatmul.mubr.f32.gmra.mrb[0].mxu0 %v2323
        %v2418 = vpop.f32.mrb[0].mxu0
        %v2419 = vadd.f32 %v2311, %v2418
        %v2420 = vpop.f32.mrb[0].mxu0
        %2421 = vmatprep.mubr.f32.mxu0 0.0
        %2422 = vmatmul.mubr.f32.gmra.mrb[0].mxu0 %v2326
        %v2423 = vpop.f32.mrb[0].mxu0
        %v2424 = vadd.f32 %v2311, %v2423
        %v2425 = vpop.f32.mrb[0].mxu0
        %2426 = vmatprep.mubr.f32.mxu0 0.0
        %2427 = vmatmul.mubr.f32.gmra.mrb[0].mxu0 %v2329
        %v2428 = vpop.f32.mrb[0].mxu0
        %v2429 = vadd.f32 %v2311, %v2428
        %v2430 = vpop.f32.mrb[0].mxu0
        %2431 = vmatprep.mubr.f32.mxu0 0.0
        %2432 = vmatmul.mubr.f32.gmra.mrb[0].mxu0 %v2332
        %v2433 = vpop.f32.mrb[0].mxu0
        %v2434 = vadd.f32 %v2311, %v2433
        %v2435 = vpop.f32.mrb[0].mxu0
        %2436 = vmatprep.mubr.f32.mxu0 0.0
        %2437 = vmatmul.mubr.f32.gmra.mrb[0].mxu0 %v2335
        %v2438 = vpop.f32.mrb[0].mxu0
        %v2439 = vadd.f32 %v2311, %v2438
        %v2440 = vpop.f32.mrb[0].mxu0
        %2441 = vdwg.mxu0
        %v2442 = vadd.f32 %v2404, %v822
        %v2443 = vadd.f32 %v2409, %v823
        %v2444 = vadd.f32 %v2414, %v824
        %v2445 = vadd.f32 %v2419, %v825
        %v2446 = vadd.f32 %v2424, %v826
        %v2447 = vadd.f32 %v2429, %v827
        %v2448 = vadd.f32 %v2434, %v828
        %v2449 = vadd.f32 %v2439, %v829
        %2450 = vst.msk [vmem:[%s816] sm:$0xff] %vm841, %v2442
        %2451 = vst.msk [vmem:[%s816 + $0x8] sm:$0xff] %vm841, %v2443
        %2452 = vst.msk [vmem:[%s816 + $0x10] sm:$0xff] %vm841, %v2444
        %2453 = vst.msk [vmem:[%s816 + $0x18] sm:$0xff] %vm841, %v2445
        %2454 = vst.msk [vmem:[%s816 + $0x20] sm:$0xff] %vm841, %v2446
        %2455 = vst.msk [vmem:[%s816 + $0x28] sm:$0xff] %vm841, %v2447
        %2456 = vst.msk [vmem:[%s816 + $0x30] sm:$0xff] %vm841, %v2448
        %2457 = vst.msk [vmem:[%s816 + $0x38] sm:$0xff] %vm841, %v2449
        %s2458 = sand.u32 %s409, 1
        %s2459 = scalar_lea.sflag [#allocation4], %s2458
        %s2460 = sand.u32 %s409, 1
        %s2461 = smul.addr %s2460, 64
        %s2462 = scalar_lea.vmem [#allocation28], %s2461
        // Predicated region
        $region149: #{point_transformer_classif.8} parent=83 // pred_check
          %p2463 = pneg %p419
        $region150: #{point_transformer_classif.8} parent=83 // pred_check_branch
          %2465 = sbr.rel (%p2463) target = $region152
        $region151: #{point_transformer_classif.8} parent=83 // pred_region
          %s2466 = smul.u32 8, %s45
          %s2468 = ssub.s32 1024, 1024
          %2469 = vsyncadd %s2459, %s2468
          %s2470 = smul.addr %s2466, 128
          %s2471 = scalar_lea.hbm %s16, %s2470
          %s2472 = sshll.u32 %s2462, 4
          %s2473 = int_to_ptr.vmem [resolvable:$true] %s2472
          %2478 = dma.vmem_to_hbm [thread:$0]  %s2473, 1024, %s2471, %s2459, 128, 128, 8
        $region152: #{point_transformer_classif.8} parent=83 // pred_fallthru
          _
      $region84: #{point_transformer_classif.8} parent=5 // pred_fallthru
        _
      %p2479 = scmp.le.s32.totalorder 2, %s40
      // Predicated region
      $region153: #{point_transformer_classif.8} parent=5 // pred_check
        %p2480 = pneg %p2479
      $region154: #{point_transformer_classif.8} parent=5 // pred_check_branch
        %2482 = sbr.rel (%p2480) target = $region156
      $region155: #{point_transformer_classif.8} parent=5 // pred_region
        %s2483 = ssub.s32 %s40, 2
        // Predicated region
        $region157: #{point_transformer_classif.8} parent=155 // pred_check
          %p2484 = pneg %p425
        $region158: #{point_transformer_classif.8} parent=155 // pred_check_branch
          %2486 = sbr.rel (%p2484) target = $region160
        $region159: #{point_transformer_classif.8} parent=155 // pred_region
          %s2487 = sand.u32 %s410, 1
          %s2488 = scalar_lea.sflag [#allocation4], %s2487
          %s2489 = sand.u32 %s410, 1
          %s2490 = smul.addr %s2489, 64
          %s2491 = scalar_lea.vmem [#allocation28], %s2490
          %2492 = dma.done %s2488, 1024
        $region160: #{point_transformer_classif.8} parent=155 // pred_fallthru
          _
      $region156: #{point_transformer_classif.8} parent=5 // pred_fallthru
        _
    $region6: #{point_transformer_classif.8} parent=1 // loop_footer
      %s44 = sadd.s32 1, %s40
    $region7: #{point_transformer_classif.8} parent=1 // loop_footer_branch
      %39 = sbr.rel target = $region3
    $region8: #{point_transformer_classif.8} parent=1 // loop_exit
      _
    %2493 = vsyncpa [#allocation3], 1
    %s2494 = scalar_lea.sflag [#allocation3], 1
    %2495 = vsyncpa %s2494, 1
    %2496 = vsyncpa [#allocation6], 1
    %s2497 = scalar_lea.sflag [#allocation6], 1
    %2498 = vsyncpa %s2497, 1
    %2499 = vsyncpa [#allocation9], 1
    %s2500 = scalar_lea.sflag [#allocation9], 1
    %2501 = vsyncpa %s2500, 1
    %2502 = vsyncpa [#allocation12], 1
    %2503 = vsyncpa [#allocation15], 1
    %2504 = vsyncpa [#allocation18], 1
    %2505 = vsyncpa [#allocation21], 1
    %2506 = vsyncpa [#allocation24], 1
    %2507 = vsyncpa [#allocation27], 1
    %2508 = vsyncpa [#allocation4], 1
    %s2509 = scalar_lea.sflag [#allocation4], 1
    %2510 = vsyncpa %s2509, 1

// kernel: point_transformer_classif.9
$region0: #{point_transformer_classif.9}
  #allocation0 [shape = 'u32[]', space=smem, size = 0x4, offset = 0x4, fixed_abs, tag = 'smem constant byte address 0x4 - core index']
  #allocation1 [shape = 'u32[144,128]{1,0:T(1,128)}', space=vmem, size = 0x12000, scoped, tag = 'internal scratch']
  #allocation18 [shape = 's32[]', space=sflag, size = 0x4, offset = 0, fixed_abs, tag = 'sflag constant byte address 0x0 - dummy sync flag']
  %s0 = inlined_call_operand.hbm [shape: f32[4,32,35], index: 0, kind: input, shape index: {}]
  %s1 = inlined_call_operand.hbm [shape: f32[35,64], index: 1, kind: input, shape index: {}]
  %s2 = inlined_call_operand.hbm [shape: f32[1,64], index: 2, kind: input, shape index: {}]
  %s3 = inlined_call_operand.hbm [shape: f32[64,8], index: 3, kind: input, shape index: {}]
  %s4 = inlined_call_operand.hbm [shape: f32[1,8], index: 4, kind: input, shape index: {}]
  %s5 = inlined_call_operand.hbm [shape: f32[64,8], index: 5, kind: input, shape index: {}]
  %s6 = inlined_call_operand.hbm [shape: f32[1,8], index: 6, kind: input, shape index: {}]
  %s7 = inlined_call_operand.hbm [shape: f32[32,64], index: 7, kind: output, shape index: {0}]
  %s8 = inlined_call_operand.hbm [shape: bf16[32,8], index: 8, kind: output, shape index: {1}]
  %s9 = inlined_call_operand.hbm [shape: bf16[32,8], index: 9, kind: output, shape index: {2}]
  %10 = xla_tuple %s7, %s8, %s9
  %s11 = sld [smem:[#allocation0]]
  $region105: #{point_transformer_classif.9} parent=0
    _
  %s13 = ssub.s32 1, %s11
  %s14 = scalar_select 0, %s13, %s11
  $region1: #{point_transformer_classif.9} parent=0
    #allocation2 [shape = 'u8[65536]{0}', space=vmem, size = 0x10000, scoped, tag = 'input window, operand 0']
    #allocation3 [shape = 's32[2]{0}', space=sflag, size = 0x8, scoped, tag = 'scoped memory for point_transformer_classif.9']
    #allocation4 [shape = 's32[2]{0}', space=sflag, size = 0x8, scoped, tag = 'scoped memory for point_transformer_classif.9']
    #allocation5 [shape = 'u8[20480]{0}', space=vmem, size = 0x5000, scoped, tag = 'input window, operand 1, single buffered']
    #allocation6 [shape = 's32[1]{0}', space=sflag, size = 0x4, scoped, tag = 'scoped memory for point_transformer_classif.9']
    #allocation7 [shape = 'u8[512]{0}', space=vmem, size = 0x400, scoped, tag = 'input window, operand 2, single buffered']
    #allocation8 [shape = 'u8[32768]{0}', space=vmem, size = 0x8000, scoped, tag = 'input window, operand 3, single buffered']
    #allocation9 [shape = 's32[1]{0}', space=sflag, size = 0x4, scoped, tag = 'scoped memory for point_transformer_classif.9']
    #allocation10 [shape = 'u8[512]{0}', space=vmem, size = 0x400, scoped, tag = 'input window, operand 4, single buffered']
    #allocation11 [shape = 'u8[32768]{0}', space=vmem, size = 0x8000, scoped, tag = 'input window, operand 5, single buffered']
    #allocation12 [shape = 's32[1]{0}', space=sflag, size = 0x4, scoped, tag = 'scoped memory for point_transformer_classif.9']
    #allocation13 [shape = 'u8[512]{0}', space=vmem, size = 0x400, scoped, tag = 'input window, operand 6, single buffered']
    #allocation14 [shape = 'u8[16384]{0}', space=vmem, size = 0x4000, scoped, tag = 'output window, operand 0']
    #allocation15 [shape = 'u8[8192]{0}', space=vmem, size = 0x2000, scoped, tag = 'output window, operand 1']
    #allocation16 [shape = 's32[2]{0}', space=sflag, size = 0x8, scoped, tag = 'scoped memory for point_transformer_classif.9']
    #allocation17 [shape = 'u8[8192]{0}', space=vmem, size = 0x2000, scoped, tag = 'output window, operand 2']
    %15 = vsyncpa [#allocation3], 0
    %s16 = scalar_lea.sflag [#allocation3], 1
    %17 = vsyncpa %s16, 0
    %18 = vsyncpa [#allocation6], 0
    %19 = vsyncpa [#allocation9], 0
    %20 = vsyncpa [#allocation12], 0
    %21 = vsyncpa [#allocation4], 0
    %s22 = scalar_lea.sflag [#allocation4], 1
    %23 = vsyncpa %s22, 0
    %24 = vsyncpa [#allocation16], 0
    %s25 = scalar_lea.sflag [#allocation16], 1
    %26 = vsyncpa %s25, 0
    loop: start=0, step=1, limit=4
    $region2: #{point_transformer_classif.9} parent=1 // loop_pre_header
      _
    $region3: #{point_transformer_classif.9} parent=1 // loop_header
      %s28 = sphi 0, %s32
      %p29 = scmp.ge.s32.totalorder %s28, 4
      %s38 = sphi 0, %s40
      %s41 = sphi 0, %s38
      %s42 = sphi 0, %s41
      %s58 = sphi 0, %s42
      %s62 = sphi 0, %s62
      %s64 = sphi 0, %s62
      %s65 = sphi 0, %s64
      %s79 = sphi 0, %s65
      %s83 = sphi 0, %s83
      %s85 = sphi 0, %s83
      %s86 = sphi 0, %s85
      %s100 = sphi 0, %s86
      %s104 = sphi 0, %s104
      %s106 = sphi 0, %s104
      %s107 = sphi 0, %s106
      %s121 = sphi 0, %s107
      %s125 = sphi 0, %s125
      %s127 = sphi 0, %s125
      %s128 = sphi 0, %s127
      %s142 = sphi 0, %s128
      %s146 = sphi 0, %s146
      %s148 = sphi 0, %s146
      %s149 = sphi 0, %s148
      %s163 = sphi 0, %s149
      %s167 = sphi 0, %s167
      %s169 = sphi 0, %s167
      %s170 = sphi 0, %s169
      %s184 = sphi 0, %s170
      %s190 = sphi 0, %s192
      %s193 = sphi 0, %s190
      %s194 = sphi 0, %s193
      %s210 = sphi 0, %s194
      %s216 = sphi 0, %s218
      %s219 = sphi 0, %s216
      %s220 = sphi 0, %s219
      %s236 = sphi 0, %s220
      %s242 = sphi 0, %s244
      %s245 = sphi 0, %s242
      %s246 = sphi 0, %s245
      %s262 = sphi 0, %s246
    $region4: #{point_transformer_classif.9} parent=1 // loop_header_branch
      %31 = sbr.rel (%p29) target = $region8
    $region5: #{point_transformer_classif.9} parent=1 // loop_body
      %s33 = ssub.s32 %s28, 1
      %s34 = ssub.s32 %s28, 2
      %s35 = sadd.s32 %s28, 1
      %s36 = ssub.s32 %s28, %s35
      %p37 = scmp.eq.s32.totalorder %s36, 0
      %s39 = sadd.s32 %s38, 1
      %s40 = scalar_select %p37, %s38, %s39
      %p43 = pneg %p37
      %p44 = scmp.eq.s32.totalorder %s28, 1
      %p45 = por %p43, %p44
      %p46 = scmp.ne.s32.totalorder %s38, %s41
      %p47 = scmp.eq.s32.totalorder %s28, 0
      %p48 = por %p46, %p47
      %p49 = scmp.ne.s32.totalorder %s38, %s41
      %p50 = scmp.eq.s32.totalorder %s33, 1
      %p51 = por %p49, %p50
      %p52 = scmp.ne.s32.totalorder %s41, %s42
      %p53 = scmp.eq.s32.totalorder %s33, 0
      %p54 = por %p52, %p53
      %p55 = scmp.ne.s32.totalorder %s41, %s42
      %p56 = scmp.eq.s32.totalorder %s34, 1
      %p57 = por %p55, %p56
      %p59 = scmp.ne.s32.totalorder %s42, %s58
      %p60 = scmp.eq.s32.totalorder %s34, 0
      %p61 = por %p59, %p60
      %s63 = sadd.s32 %s62, 1
      %p66 = scmp.eq.s32.totalorder %s28, 1
      %p67 = scmp.ne.s32.totalorder %s62, %s64
      %p68 = scmp.eq.s32.totalorder %s28, 0
      %p69 = por %p67, %p68
      %p70 = scmp.ne.s32.totalorder %s62, %s64
      %p71 = scmp.eq.s32.totalorder %s33, 1
      %p72 = por %p70, %p71
      %p73 = scmp.ne.s32.totalorder %s64, %s65
      %p74 = scmp.eq.s32.totalorder %s33, 0
      %p75 = por %p73, %p74
      %p76 = scmp.ne.s32.totalorder %s64, %s65
      %p77 = scmp.eq.s32.totalorder %s34, 1
      %p78 = por %p76, %p77
      %p80 = scmp.ne.s32.totalorder %s65, %s79
      %p81 = scmp.eq.s32.totalorder %s34, 0
      %p82 = por %p80, %p81
      %s84 = sadd.s32 %s83, 1
      %p87 = scmp.eq.s32.totalorder %s28, 1
      %p88 = scmp.ne.s32.totalorder %s83, %s85
      %p89 = scmp.eq.s32.totalorder %s28, 0
      %p90 = por %p88, %p89
      %p91 = scmp.ne.s32.totalorder %s83, %s85
      %p92 = scmp.eq.s32.totalorder %s33, 1
      %p93 = por %p91, %p92
      %p94 = scmp.ne.s32.totalorder %s85, %s86
      %p95 = scmp.eq.s32.totalorder %s33, 0
      %p96 = por %p94, %p95
      %p97 = scmp.ne.s32.totalorder %s85, %s86
      %p98 = scmp.eq.s32.totalorder %s34, 1
      %p99 = por %p97, %p98
      %p101 = scmp.ne.s32.totalorder %s86, %s100
      %p102 = scmp.eq.s32.totalorder %s34, 0
      %p103 = por %p101, %p102
      %s105 = sadd.s32 %s104, 1
      %p108 = scmp.eq.s32.totalorder %s28, 1
      %p109 = scmp.ne.s32.totalorder %s104, %s106
      %p110 = scmp.eq.s32.totalorder %s28, 0
      %p111 = por %p109, %p110
      %p112 = scmp.ne.s32.totalorder %s104, %s106
      %p113 = scmp.eq.s32.totalorder %s33, 1
      %p114 = por %p112, %p113
      %p115 = scmp.ne.s32.totalorder %s106, %s107
      %p116 = scmp.eq.s32.totalorder %s33, 0
      %p117 = por %p115, %p116
      %p118 = scmp.ne.s32.totalorder %s106, %s107
      %p119 = scmp.eq.s32.totalorder %s34, 1
      %p120 = por %p118, %p119
      %p122 = scmp.ne.s32.totalorder %s107, %s121
      %p123 = scmp.eq.s32.totalorder %s34, 0
      %p124 = por %p122, %p123
      %s126 = sadd.s32 %s125, 1
      %p129 = scmp.eq.s32.totalorder %s28, 1
      %p130 = scmp.ne.s32.totalorder %s125, %s127
      %p131 = scmp.eq.s32.totalorder %s28, 0
      %p132 = por %p130, %p131
      %p133 = scmp.ne.s32.totalorder %s125, %s127
      %p134 = scmp.eq.s32.totalorder %s33, 1
      %p135 = por %p133, %p134
      %p136 = scmp.ne.s32.totalorder %s127, %s128
      %p137 = scmp.eq.s32.totalorder %s33, 0
      %p138 = por %p136, %p137
      %p139 = scmp.ne.s32.totalorder %s127, %s128
      %p140 = scmp.eq.s32.totalorder %s34, 1
      %p141 = por %p139, %p140
      %p143 = scmp.ne.s32.totalorder %s128, %s142
      %p144 = scmp.eq.s32.totalorder %s34, 0
      %p145 = por %p143, %p144
      %s147 = sadd.s32 %s146, 1
      %p150 = scmp.eq.s32.totalorder %s28, 1
      %p151 = scmp.ne.s32.totalorder %s146, %s148
      %p152 = scmp.eq.s32.totalorder %s28, 0
      %p153 = por %p151, %p152
      %p154 = scmp.ne.s32.totalorder %s146, %s148
      %p155 = scmp.eq.s32.totalorder %s33, 1
      %p156 = por %p154, %p155
      %p157 = scmp.ne.s32.totalorder %s148, %s149
      %p158 = scmp.eq.s32.totalorder %s33, 0
      %p159 = por %p157, %p158
      %p160 = scmp.ne.s32.totalorder %s148, %s149
      %p161 = scmp.eq.s32.totalorder %s34, 1
      %p162 = por %p160, %p161
      %p164 = scmp.ne.s32.totalorder %s149, %s163
      %p165 = scmp.eq.s32.totalorder %s34, 0
      %p166 = por %p164, %p165
      %s168 = sadd.s32 %s167, 1
      %p171 = scmp.eq.s32.totalorder %s28, 1
      %p172 = scmp.ne.s32.totalorder %s167, %s169
      %p173 = scmp.eq.s32.totalorder %s28, 0
      %p174 = por %p172, %p173
      %p175 = scmp.ne.s32.totalorder %s167, %s169
      %p176 = scmp.eq.s32.totalorder %s33, 1
      %p177 = por %p175, %p176
      %p178 = scmp.ne.s32.totalorder %s169, %s170
      %p179 = scmp.eq.s32.totalorder %s33, 0
      %p180 = por %p178, %p179
      %p181 = scmp.ne.s32.totalorder %s169, %s170
      %p182 = scmp.eq.s32.totalorder %s34, 1
      %p183 = por %p181, %p182
      %p185 = scmp.ne.s32.totalorder %s170, %s184
      %p186 = scmp.eq.s32.totalorder %s34, 0
      %p187 = por %p185, %p186
      %s188 = ssub.s32 %s28, %s35
      %p189 = scmp.eq.s32.totalorder %s188, 0
      %s191 = sadd.s32 %s190, 1
      %s192 = scalar_select %p189, %s190, %s191
      %p195 = pneg %p189
      %p196 = scmp.eq.s32.totalorder %s28, 1
      %p197 = por %p195, %p196
      %p198 = scmp.ne.s32.totalorder %s190, %s193
      %p199 = scmp.eq.s32.totalorder %s28, 0
      %p200 = por %p198, %p199
      %p201 = scmp.ne.s32.totalorder %s190, %s193
      %p202 = scmp.eq.s32.totalorder %s33, 1
      %p203 = por %p201, %p202
      %p204 = scmp.ne.s32.totalorder %s193, %s194
      %p205 = scmp.eq.s32.totalorder %s33, 0
      %p206 = por %p204, %p205
      %p207 = scmp.ne.s32.totalorder %s193, %s194
      %p208 = scmp.eq.s32.totalorder %s34, 1
      %p209 = por %p207, %p208
      %p211 = scmp.ne.s32.totalorder %s194, %s210
      %p212 = scmp.eq.s32.totalorder %s34, 0
      %p213 = por %p211, %p212
      %s214 = ssub.s32 %s28, %s35
      %p215 = scmp.eq.s32.totalorder %s214, 0
      %s217 = sadd.s32 %s216, 1
      %s218 = scalar_select %p215, %s216, %s217
      %p221 = pneg %p215
      %p222 = scmp.eq.s32.totalorder %s28, 1
      %p223 = por %p221, %p222
      %p224 = scmp.ne.s32.totalorder %s216, %s219
      %p225 = scmp.eq.s32.totalorder %s28, 0
      %p226 = por %p224, %p225
      %p227 = scmp.ne.s32.totalorder %s216, %s219
      %p228 = scmp.eq.s32.totalorder %s33, 1
      %p229 = por %p227, %p228
      %p230 = scmp.ne.s32.totalorder %s219, %s220
      %p231 = scmp.eq.s32.totalorder %s33, 0
      %p232 = por %p230, %p231
      %p233 = scmp.ne.s32.totalorder %s219, %s220
      %p234 = scmp.eq.s32.totalorder %s34, 1
      %p235 = por %p233, %p234
      %p237 = scmp.ne.s32.totalorder %s220, %s236
      %p238 = scmp.eq.s32.totalorder %s34, 0
      %p239 = por %p237, %p238
      %s240 = ssub.s32 %s28, %s35
      %p241 = scmp.eq.s32.totalorder %s240, 0
      %s243 = sadd.s32 %s242, 1
      %s244 = scalar_select %p241, %s242, %s243
      %p247 = pneg %p241
      %p248 = scmp.eq.s32.totalorder %s28, 1
      %p249 = por %p247, %p248
      %p250 = scmp.ne.s32.totalorder %s242, %s245
      %p251 = scmp.eq.s32.totalorder %s28, 0
      %p252 = por %p250, %p251
      %p253 = scmp.ne.s32.totalorder %s242, %s245
      %p254 = scmp.eq.s32.totalorder %s33, 1
      %p255 = por %p253, %p254
      %p256 = scmp.ne.s32.totalorder %s245, %s246
      %p257 = scmp.eq.s32.totalorder %s33, 0
      %p258 = por %p256, %p257
      %p259 = scmp.ne.s32.totalorder %s245, %s246
      %p260 = scmp.eq.s32.totalorder %s34, 1
      %p261 = por %p259, %p260
      %p263 = scmp.ne.s32.totalorder %s246, %s262
      %p264 = scmp.eq.s32.totalorder %s34, 0
      %p265 = por %p263, %p264
      %p266 = scmp.le.s32.totalorder 1, %s28
      %p267 = scmp.lt.s32.totalorder %s28, 3
      %p268 = pnand %p266, %p267
      %p269 = pneg %p268
      // Predicated region
      $region9: #{point_transformer_classif.9} parent=5 // pred_check
        _
      $region10: #{point_transformer_classif.9} parent=5 // pred_check_branch
        %271 = sbr.rel (%p268) target = $region12
      $region11: #{point_transformer_classif.9} parent=5 // pred_region
        %s272 = ssub.s32 %s28, 1
        // Predicated region
        $region13: #{point_transformer_classif.9} parent=11 // pred_check
          %p273 = pneg %p75
        $region14: #{point_transformer_classif.9} parent=11 // pred_check_branch
          %275 = sbr.rel (%p273) target = $region16
        $region15: #{point_transformer_classif.9} parent=11 // pred_region
          %s277 = ssub.s32 640, 640
          %278 = vsyncadd [#allocation6], %s277
          %s279 = sshll.u32 [#allocation5], 4
          %s280 = int_to_ptr.vmem [resolvable:$true] %s279
          %285 = dma.hbm_to_vmem [thread:$0]  %s1, 640, %s280, [#allocation6], 128, 128, 8
        $region16: #{point_transformer_classif.9} parent=11 // pred_fallthru
          _
        // Predicated region
        $region17: #{point_transformer_classif.9} parent=11 // pred_check
          %p286 = pneg %p96
        $region18: #{point_transformer_classif.9} parent=11 // pred_check_branch
          %288 = sbr.rel (%p286) target = $region20
        $region19: #{point_transformer_classif.9} parent=11 // pred_region
          %s290 = ssub.s32 16, 16
          %291 = vsyncadd [#allocation6], %s290
          %s293 = sshll.u32 [#allocation7], 4
          %s294 = int_to_ptr.vmem [resolvable:$true] %s293
          %296 = dma.hbm_to_vmem [thread:$0]  %s2, 16, %s294, [#allocation6]
        $region20: #{point_transformer_classif.9} parent=11 // pred_fallthru
          _
        // Predicated region
        $region21: #{point_transformer_classif.9} parent=11 // pred_check
          %p297 = pneg %p117
        $region22: #{point_transformer_classif.9} parent=11 // pred_check_branch
          %299 = sbr.rel (%p297) target = $region24
        $region23: #{point_transformer_classif.9} parent=11 // pred_region
          %s301 = ssub.s32 1024, 1024
          %302 = vsyncadd [#allocation9], %s301
          %s303 = sshll.u32 [#allocation8], 4
          %s304 = int_to_ptr.vmem [resolvable:$true] %s303
          %309 = dma.hbm_to_vmem [thread:$0]  %s3, 1024, %s304, [#allocation9], 128, 128, 8
        $region24: #{point_transformer_classif.9} parent=11 // pred_fallthru
          _
        // Predicated region
        $region25: #{point_transformer_classif.9} parent=11 // pred_check
          %p310 = pneg %p138
        $region26: #{point_transformer_classif.9} parent=11 // pred_check_branch
          %312 = sbr.rel (%p310) target = $region28
        $region27: #{point_transformer_classif.9} parent=11 // pred_region
          %s314 = ssub.s32 16, 16
          %315 = vsyncadd [#allocation9], %s314
          %s317 = sshll.u32 [#allocation10], 4
          %s318 = int_to_ptr.vmem [resolvable:$true] %s317
          %320 = dma.hbm_to_vmem [thread:$0]  %s4, 16, %s318, [#allocation9]
        $region28: #{point_transformer_classif.9} parent=11 // pred_fallthru
          _
        // Predicated region
        $region29: #{point_transformer_classif.9} parent=11 // pred_check
          %p321 = pneg %p159
        $region30: #{point_transformer_classif.9} parent=11 // pred_check_branch
          %323 = sbr.rel (%p321) target = $region32
        $region31: #{point_transformer_classif.9} parent=11 // pred_region
          %s325 = ssub.s32 1024, 1024
          %326 = vsyncadd [#allocation12], %s325
          %s327 = sshll.u32 [#allocation11], 4
          %s328 = int_to_ptr.vmem [resolvable:$true] %s327
          %333 = dma.hbm_to_vmem [thread:$0]  %s5, 1024, %s328, [#allocation12], 128, 128, 8
        $region32: #{point_transformer_classif.9} parent=11 // pred_fallthru
          _
        // Predicated region
        $region33: #{point_transformer_classif.9} parent=11 // pred_check
          %p334 = pneg %p180
        $region34: #{point_transformer_classif.9} parent=11 // pred_check_branch
          %336 = sbr.rel (%p334) target = $region36
        $region35: #{point_transformer_classif.9} parent=11 // pred_region
          %s338 = ssub.s32 16, 16
          %339 = vsyncadd [#allocation12], %s338
          %s341 = sshll.u32 [#allocation13], 4
          %s342 = int_to_ptr.vmem [resolvable:$true] %s341
          %344 = dma.hbm_to_vmem [thread:$0]  %s6, 16, %s342, [#allocation12]
        $region36: #{point_transformer_classif.9} parent=11 // pred_fallthru
          _
      $region12: #{point_transformer_classif.9} parent=5 // pred_fallthru
        _
      %p345 = scmp.lt.s32.totalorder %s28, 2
      // Predicated region
      $region37: #{point_transformer_classif.9} parent=5 // pred_check
        %p346 = pneg %p345
      $region38: #{point_transformer_classif.9} parent=5 // pred_check_branch
        %348 = sbr.rel (%p346) target = $region40
      $region39: #{point_transformer_classif.9} parent=5 // pred_region
        // Predicated region
        $region41: #{point_transformer_classif.9} parent=39 // pred_check
          %p349 = pneg %p48
        $region42: #{point_transformer_classif.9} parent=39 // pred_check_branch
          %351 = sbr.rel (%p349) target = $region44
        $region43: #{point_transformer_classif.9} parent=39 // pred_region
          #allocation19 [shape = 'u32[6]{0}', space=smem, size = 0x18, scoped, tag = 'DMA stride descriptor']
          %s352 = sand.u32 %s38, 1
          %s353 = scalar_lea.sflag [#allocation3], %s352
          %s354 = sand.u32 %s38, 1
          %s355 = smul.addr %s354, 64
          %s356 = scalar_lea.vmem [#allocation2], %s355
          %s357 = smul.u32 2, %s28
          %s359 = ssub.s32 1024, 1024
          %360 = vsyncadd %s353, %s359
          %s361 = smul.addr %s357, 128
          %s362 = scalar_lea.hbm %s0, %s361
          %s364 = sshll.u32 1, 14
          %s365 = sxor.u32 4294967295, %s364
          %s367 = sld [smem:[#allocation0]]
          %s368 = sadd.s32 2, %s367
          %s370 = sshll.u32 7, 26
          %s371 = sxor.u32 4294967295, %s370
          %s372 = sand.u32 0, %s371
          %s373 = sshll.u32 %s368, 26
          %s374 = sor.u32 %s372, %s373
          %s375 = sshll.u32 %s356, 4
          %s376 = int_to_ptr.vmem [resolvable:$true] %s375
          %382 = sst [smem:[#allocation19]] 512
          %s383 = scalar_lea.smem [#allocation19], 1
          %384 = sst [smem:[%s383]] 256
          %s385 = scalar_lea.smem [#allocation19], 2
          %386 = sst [smem:[%s385]] 2
          %s387 = scalar_lea.smem [#allocation19], 3
          %388 = sst [smem:[%s387]] 128
          %s389 = scalar_lea.smem [#allocation19], 4
          %390 = sst [smem:[%s389]] 128
          %s391 = scalar_lea.smem [#allocation19], 5
          %392 = sst [smem:[%s391]] 8
          %394 = dma.general %s362, 1024, %s376, %s353, [#allocation18], [#allocation19], %s374, 0
        $region44: #{point_transformer_classif.9} parent=39 // pred_fallthru
          _
      $region40: #{point_transformer_classif.9} parent=5 // pred_fallthru
        _
      %p395 = scmp.le.s32.totalorder 1, %s28
      %p396 = scmp.lt.s32.totalorder %s28, 3
      %p397 = pnand %p395, %p396
      %p398 = pneg %p397
      // Predicated region
      $region45: #{point_transformer_classif.9} parent=5 // pred_check
        _
      $region46: #{point_transformer_classif.9} parent=5 // pred_check_branch
        %400 = sbr.rel (%p397) target = $region48
      $region47: #{point_transformer_classif.9} parent=5 // pred_region
        %s401 = ssub.s32 %s28, 1
        %s402 = sand.u32 %s41, 1
        %s403 = scalar_lea.sflag [#allocation3], %s402
        %s404 = sand.u32 %s41, 1
        %s405 = smul.addr %s404, 64
        %s406 = scalar_lea.vmem [#allocation2], %s405
        // Predicated region
        $region49: #{point_transformer_classif.9} parent=47 // pred_check
          %p407 = pneg %p54
        $region50: #{point_transformer_classif.9} parent=47 // pred_check_branch
          %409 = sbr.rel (%p407) target = $region52
        $region51: #{point_transformer_classif.9} parent=47 // pred_region
          %410 = dma.done %s403, 1024
        $region52: #{point_transformer_classif.9} parent=47 // pred_fallthru
          _
        // Predicated region
        $region53: #{point_transformer_classif.9} parent=47 // pred_check
          %p411 = pneg %p75
        $region54: #{point_transformer_classif.9} parent=47 // pred_check_branch
          %413 = sbr.rel (%p411) target = $region56
        $region55: #{point_transformer_classif.9} parent=47 // pred_region
          %414 = dma.done [#allocation6], 640
        $region56: #{point_transformer_classif.9} parent=47 // pred_fallthru
          _
        // Predicated region
        $region57: #{point_transformer_classif.9} parent=47 // pred_check
          %p415 = pneg %p96
        $region58: #{point_transformer_classif.9} parent=47 // pred_check_branch
          %417 = sbr.rel (%p415) target = $region60
        $region59: #{point_transformer_classif.9} parent=47 // pred_region
          %418 = dma.done [#allocation6], 16
        $region60: #{point_transformer_classif.9} parent=47 // pred_fallthru
          _
        // Predicated region
        $region61: #{point_transformer_classif.9} parent=47 // pred_check
          %p419 = pneg %p117
        $region62: #{point_transformer_classif.9} parent=47 // pred_check_branch
          %421 = sbr.rel (%p419) target = $region64
        $region63: #{point_transformer_classif.9} parent=47 // pred_region
          %422 = dma.done [#allocation9], 1024
        $region64: #{point_transformer_classif.9} parent=47 // pred_fallthru
          _
        // Predicated region
        $region65: #{point_transformer_classif.9} parent=47 // pred_check
          %p423 = pneg %p138
        $region66: #{point_transformer_classif.9} parent=47 // pred_check_branch
          %425 = sbr.rel (%p423) target = $region68
        $region67: #{point_transformer_classif.9} parent=47 // pred_region
          %426 = dma.done [#allocation9], 16
        $region68: #{point_transformer_classif.9} parent=47 // pred_fallthru
          _
        // Predicated region
        $region69: #{point_transformer_classif.9} parent=47 // pred_check
          %p427 = pneg %p159
        $region70: #{point_transformer_classif.9} parent=47 // pred_check_branch
          %429 = sbr.rel (%p427) target = $region72
        $region71: #{point_transformer_classif.9} parent=47 // pred_region
          %430 = dma.done [#allocation12], 1024
        $region72: #{point_transformer_classif.9} parent=47 // pred_fallthru
          _
        // Predicated region
        $region73: #{point_transformer_classif.9} parent=47 // pred_check
          %p431 = pneg %p180
        $region74: #{point_transformer_classif.9} parent=47 // pred_check_branch
          %433 = sbr.rel (%p431) target = $region76
        $region75: #{point_transformer_classif.9} parent=47 // pred_region
          %434 = dma.done [#allocation12], 16
        $region76: #{point_transformer_classif.9} parent=47 // pred_fallthru
          _
        %s435 = sand.u32 %s41, 1
        %s436 = scalar_lea.sflag [#allocation3], %s435
        %s437 = sand.u32 %s41, 1
        %s438 = smul.addr %s437, 64
        %s439 = scalar_lea.vmem [#allocation2], %s438
        %p440 = pneg %p54
        %p441 = pneg %p51
        %p442 = pneg %p75
        %p443 = pneg %p72
        %p444 = pneg %p96
        %p445 = pneg %p93
        %p446 = pneg %p117
        %p447 = pneg %p114
        %p448 = pneg %p138
        %p449 = pneg %p135
        %p450 = pneg %p159
        %p451 = pneg %p156
        %p452 = pneg %p180
        %p453 = pneg %p177
        %p454 = pneg %p206
        %p455 = pneg %p203
        %s456 = sand.u32 %s193, 1
        %s457 = scalar_lea.sflag [#allocation4], %s456
        %s458 = sand.u32 %s193, 1
        %s459 = smul.addr %s458, 16
        %s460 = scalar_lea.vmem [#allocation14], %s459
        %p461 = pneg %p232
        %p462 = pneg %p229
        %s463 = sand.u32 %s33, 1
        %s464 = scalar_lea.sflag [#allocation16], %s463
        %s465 = sand.u32 %s219, 1
        %s466 = smul.addr %s465, 8
        %s467 = scalar_lea.vmem [#allocation15], %s466
        %p468 = pneg %p258
        %p469 = pneg %p255
        %s470 = sand.u32 %s33, 1
        %s471 = scalar_lea.sflag [#allocation16], %s470
        %s472 = sand.u32 %s245, 1
        %s473 = smul.addr %s472, 8
        %s474 = scalar_lea.vmem [#allocation17], %s473
        %s475 = smul.u32 2, %s33
        %s476 = smul.u32 2, %s33
        %s477 = smul.u32 2, %s33
        %s478 = smul.u32 2, %s33
        %v479 = vld [vmem:[%s406] sm:$0xff]
        %v480 = vld [vmem:[%s406 + $0x8] sm:$0xff]
        %v481 = vld [vmem:[%s406 + $0x10] sm:$0xff]
        %v482 = vld [vmem:[%s406 + $0x18] sm:$0xff]
        %v483 = vld [vmem:[%s406 + $0x20] sm:$0xff]
        %v484 = vld [vmem:[%s406 + $0x28] sm:$0xff]
        %v485 = vld [vmem:[%s406 + $0x30] sm:$0xff]
        %v486 = vld [vmem:[%s406 + $0x38] sm:$0xff]
        %v487 = vld [vmem:[#allocation5] sm:$0xff]
        %v488 = vld [vmem:[#allocation5 + $0x8] sm:$0xff]
        %v489 = vld [vmem:[#allocation5 + $0x10] sm:$0xff]
        %v490 = vld [vmem:[#allocation5 + $0x18] sm:$0xff]
        %v491 = vld [vmem:[#allocation5 + $0x20] sm:$0x7]
        %v492 = vld [vmem:[#allocation7] sm:$0x1]
        %v494 = vlaneseq
        %v495 = vshrl.u32 %v494, 7
        %v496 = vsub.s32 0, %v495
        %v497 = vrot.slane %v492, %v496
        %vm499 = vcmask 285696
        %v501 = vsel %vm499, %v479, 0
        %v504 = vsel %vm499, %v480, 0
        %v507 = vsel %vm499, %v481, 0
        %v510 = vsel %vm499, %v482, 0
        %v513 = vsel %vm499, %v483, 0
        %v516 = vsel %vm499, %v484, 0
        %v519 = vsel %vm499, %v485, 0
        %v522 = vsel %vm499, %v486, 0
        %vm524 = vcmask 1042432
        %v526 = vsel %vm524, %v491, 0
        %528 = vmatprep.subr.mxu0 0.0
        %529 = vmatpush1.msra.mxu0 %v487
        %530 = vmatprep.subr.mxu0 0.0
        %531 = vmatpush1.msra.mxu0 %v488
        %532 = vmatprep.subr.mxu0 0.0
        %533 = vmatpush1.msra.mxu0 %v489
        %534 = vmatprep.subr.mxu0 0.0
        %535 = vmatpush1.msra.mxu0 %v490
        %536 = vmatprep.subr.mxu0 0.0
        %537 = vmatpush1.msra.mxu0 %v526
        %538 = vmatprep.subr.mxu0 0.0
        %539 = vmatpush1.msra.mxu0 0.0
        %540 = vmatprep.subr.mxu0 0.0
        %541 = vmatpush1.msra.mxu0 0.0
        %542 = vmatprep.subr.mxu0 0.0
        %543 = vmatpush1.msra.mxu0 0.0
        %544 = vmatprep.subr.mxu0 0.0
        %545 = vmatpush1.msra.mxu0 0.0
        %546 = vmatprep.subr.mxu0 0.0
        %547 = vmatpush1.msra.mxu0 0.0
        %548 = vmatprep.subr.mxu0 0.0
        %549 = vmatpush1.msra.mxu0 0.0
        %550 = vmatprep.subr.mxu0 0.0
        %551 = vmatpush1.msra.mxu0 0.0
        %552 = vmatprep.subr.mxu0 0.0
        %553 = vmatpush1.msra.mxu0 0.0
        %554 = vmatprep.subr.mxu0 0.0
        %555 = vmatpush1.msra.mxu0 0.0
        %556 = vmatprep.subr.mxu0 0.0
        %557 = vmatpush1.msra.mxu0 0.0
        %558 = vmatprep.subr.mxu0 0.0
        %559 = vmatpush1.msra.mxu0 0.0
        %560 = vmatprep.subr.mxu0 0.0
        %561 = vmatpush1.msra.mxu0 0.0
        %562 = vmatprep.subr.mxu0 0.0
        %563 = vmatpush1.msra.mxu0 0.0
        %564 = vmatprep.subr.mxu0 0.0
        %565 = vmatpush1.msra.mxu0 0.0
        %566 = vmatprep.subr.mxu0 0.0
        %567 = vmatpush1.msra.mxu0 0.0
        %568 = vmatprep.subr.mxu0 0.0
        %569 = vmatpush1.msra.mxu0 0.0
        %570 = vmatprep.subr.mxu0 0.0
        %571 = vmatpush1.msra.mxu0 0.0
        %572 = vmatprep.subr.mxu0 0.0
        %573 = vmatpush1.msra.mxu0 0.0
        %574 = vmatprep.subr.mxu0 0.0
        %575 = vmatpush1.msra.mxu0 0.0
        %576 = vmatprep.subr.mxu0 0.0
        %577 = vmatpush1.msra.mxu0 0.0
        %578 = vmatprep.subr.mxu0 0.0
        %579 = vmatpush1.msra.mxu0 0.0
        %580 = vmatprep.subr.mxu0 0.0
        %581 = vmatpush1.msra.mxu0 0.0
        %582 = vmatprep.subr.mxu0 0.0
        %583 = vmatpush1.msra.mxu0 0.0
        %584 = vmatprep.subr.mxu0 0.0
        %585 = vmatpush1.msra.mxu0 0.0
        %586 = vmatprep.subr.mxu0 0.0
        %587 = vmatpush1.msra.mxu0 0.0
        %588 = vmatprep.subr.mxu0 0.0
        %589 = vmatpush1.msra.mxu0 0.0
        %590 = vmatprep.subr.mxu0 0.0
        %591 = vmatpush1.msra.mxu0 0.0
        %592 = vmatprep.mubr.f32.mxu0 0.0
        %593 = vmatmul.mubr.f32.gmra.mrb[0].mxu0 %v501
        %v594 = vpop.f32.mrb[0].mxu0
        %v595 = vadd.f32 %v497, %v594
        %v596 = vpop.f32.mrb[0].mxu0
        %597 = vmatprep.mubr.f32.mxu0 0.0
        %598 = vmatmul.mubr.f32.gmra.mrb[0].mxu0 %v504
        %v599 = vpop.f32.mrb[0].mxu0
        %v600 = vadd.f32 %v497, %v599
        %v601 = vpop.f32.mrb[0].mxu0
        %602 = vmatprep.mubr.f32.mxu0 0.0
        %603 = vmatmul.mubr.f32.gmra.mrb[0].mxu0 %v507
        %v604 = vpop.f32.mrb[0].mxu0
        %v605 = vadd.f32 %v497, %v604
        %v606 = vpop.f32.mrb[0].mxu0
        %607 = vmatprep.mubr.f32.mxu0 0.0
        %608 = vmatmul.mubr.f32.gmra.mrb[0].mxu0 %v510
        %v609 = vpop.f32.mrb[0].mxu0
        %v610 = vadd.f32 %v497, %v609
        %v611 = vpop.f32.mrb[0].mxu0
        %612 = vmatprep.mubr.f32.mxu0 0.0
        %613 = vmatmul.mubr.f32.gmra.mrb[0].mxu0 %v513
        %v614 = vpop.f32.mrb[0].mxu0
        %v615 = vadd.f32 %v497, %v614
        %v616 = vpop.f32.mrb[0].mxu0
        %617 = vmatprep.mubr.f32.mxu0 0.0
        %618 = vmatmul.mubr.f32.gmra.mrb[0].mxu0 %v516
        %v619 = vpop.f32.mrb[0].mxu0
        %v620 = vadd.f32 %v497, %v619
        %v621 = vpop.f32.mrb[0].mxu0
        %622 = vmatprep.mubr.f32.mxu0 0.0
        %623 = vmatmul.mubr.f32.gmra.mrb[0].mxu0 %v519
        %v624 = vpop.f32.mrb[0].mxu0
        %v625 = vadd.f32 %v497, %v624
        %v626 = vpop.f32.mrb[0].mxu0
        %627 = vmatprep.mubr.f32.mxu0 0.0
        %628 = vmatmul.mubr.f32.gmra.mrb[0].mxu0 %v522
        %v629 = vpop.f32.mrb[0].mxu0
        %v630 = vadd.f32 %v497, %v629
        %v631 = vpop.f32.mrb[0].mxu0
        %632 = vdwg.mxu0
        %v633 = vmax.f32 %v595, 0.0
        %v634 = vmax.f32 %v600, 0.0
        %v635 = vmax.f32 %v605, 0.0
        %v636 = vmax.f32 %v610, 0.0
        %v637 = vmax.f32 %v615, 0.0
        %v638 = vmax.f32 %v620, 0.0
        %v639 = vmax.f32 %v625, 0.0
        %v640 = vmax.f32 %v630, 0.0
        %v641 = vmax.f32 %v633, %v635
        %v642 = vmax.f32 %v634, %v636
        %v643 = vmax.f32 %v641, %v637
        %v644 = vmax.f32 %v642, %v638
        %v645 = vmax.f32 %v643, %v639
        %v646 = vmax.f32 %v644, %v640
        %vm647 = vcmask 523264
        %648 = vst.msk [vmem:[%s460] sm:$0xff] %vm647, %v645
        %649 = vst.msk [vmem:[%s460 + $0x8] sm:$0xff] %vm647, %v646
        %v650 = vld [vmem:[#allocation8] sm:$0xff]
        %v651 = vld [vmem:[#allocation8 + $0x8] sm:$0xff]
        %v652 = vld [vmem:[#allocation8 + $0x10] sm:$0xff]
        %v653 = vld [vmem:[#allocation8 + $0x18] sm:$0xff]
        %v654 = vld [vmem:[#allocation8 + $0x20] sm:$0xff]
        %v655 = vld [vmem:[#allocation8 + $0x28] sm:$0xff]
        %v656 = vld [vmem:[#allocation8 + $0x30] sm:$0xff]
        %v657 = vld [vmem:[#allocation8 + $0x38] sm:$0xff]
        %v658 = vld [vmem:[#allocation10] sm:$0x1]
        %v660 = vlaneseq
        %v661 = vshrl.u32 %v660, 7
        %v662 = vsub.s32 0, %v661
        %v663 = vrot.slane %v658, %v662
        %v666 = vsel %vm647, %v645, 0
        %v669 = vsel %vm647, %v646, 0
        %671 = vmatprep.subr.mxu0 0.0
        %672 = vmatpush1.msra.mxu0 %v650
        %673 = vmatprep.subr.mxu0 0.0
        %674 = vmatpush1.msra.mxu0 %v651
        %675 = vmatprep.subr.mxu0 0.0
        %676 = vmatpush1.msra.mxu0 %v652
        %677 = vmatprep.subr.mxu0 0.0
        %678 = vmatpush1.msra.mxu0 %v653
        %679 = vmatprep.subr.mxu0 0.0
        %680 = vmatpush1.msra.mxu0 %v654
        %681 = vmatprep.subr.mxu0 0.0
        %682 = vmatpush1.msra.mxu0 %v655
        %683 = vmatprep.subr.mxu0 0.0
        %684 = vmatpush1.msra.mxu0 %v656
        %685 = vmatprep.subr.mxu0 0.0
        %686 = vmatpush1.msra.mxu0 %v657
        %687 = vmatprep.subr.mxu0 0.0
        %688 = vmatpush1.msra.mxu0 0.0
        %689 = vmatprep.subr.mxu0 0.0
        %690 = vmatpush1.msra.mxu0 0.0
        %691 = vmatprep.subr.mxu0 0.0
        %692 = vmatpush1.msra.mxu0 0.0
        %693 = vmatprep.subr.mxu0 0.0
        %694 = vmatpush1.msra.mxu0 0.0
        %695 = vmatprep.subr.mxu0 0.0
        %696 = vmatpush1.msra.mxu0 0.0
        %697 = vmatprep.subr.mxu0 0.0
        %698 = vmatpush1.msra.mxu0 0.0
        %699 = vmatprep.subr.mxu0 0.0
        %700 = vmatpush1.msra.mxu0 0.0
        %701 = vmatprep.subr.mxu0 0.0
        %702 = vmatpush1.msra.mxu0 0.0
        %703 = vmatprep.subr.mxu0 0.0
        %704 = vmatpush1.msra.mxu0 0.0
        %705 = vmatprep.subr.mxu0 0.0
        %706 = vmatpush1.msra.mxu0 0.0
        %707 = vmatprep.subr.mxu0 0.0
        %708 = vmatpush1.msra.mxu0 0.0
        %709 = vmatprep.subr.mxu0 0.0
        %710 = vmatpush1.msra.mxu0 0.0
        %711 = vmatprep.subr.mxu0 0.0
        %712 = vmatpush1.msra.mxu0 0.0
        %713 = vmatprep.subr.mxu0 0.0
        %714 = vmatpush1.msra.mxu0 0.0
        %715 = vmatprep.subr.mxu0 0.0
        %716 = vmatpush1.msra.mxu0 0.0
        %717 = vmatprep.subr.mxu0 0.0
        %718 = vmatpush1.msra.mxu0 0.0
        %719 = vmatprep.subr.mxu0 0.0
        %720 = vmatpush1.msra.mxu0 0.0
        %721 = vmatprep.subr.mxu0 0.0
        %722 = vmatpush1.msra.mxu0 0.0
        %723 = vmatprep.subr.mxu0 0.0
        %724 = vmatpush1.msra.mxu0 0.0
        %725 = vmatprep.subr.mxu0 0.0
        %726 = vmatpush1.msra.mxu0 0.0
        %727 = vmatprep.subr.mxu0 0.0
        %728 = vmatpush1.msra.mxu0 0.0
        %729 = vmatprep.subr.mxu0 0.0
        %730 = vmatpush1.msra.mxu0 0.0
        %731 = vmatprep.subr.mxu0 0.0
        %732 = vmatpush1.msra.mxu0 0.0
        %733 = vmatprep.subr.mxu0 0.0
        %734 = vmatpush1.msra.mxu0 0.0
        %735 = vmatprep.mubr.f32.mxu0 0.0
        %736 = vmatmul.mubr.f32.gmra.mrb[0].mxu0 %v666
        %v737 = vpop.f32.mrb[0].mxu0
        %v738 = vadd.f32 %v663, %v737
        %v739 = vpop.f32.mrb[0].mxu0
        %740 = vmatprep.mubr.f32.mxu0 0.0
        %741 = vmatmul.mubr.f32.gmra.mrb[0].mxu0 %v669
        %v742 = vpop.f32.mrb[0].mxu0
        %v743 = vadd.f32 %v663, %v742
        %v744 = vpop.f32.mrb[0].mxu0
        %745 = vdwg.mxu0
        %v746 = vpack.c.bf16 %v743, %v738
        %v748 = vunpack.c.l.b16 %v746
        %v749 = vunpack.c.h.b16 %v746
        %v750 = vpack.c.b16 %v748, %v748
        %v751 = vpack.c.b16 %v749, %v749
        %vm754 = vcmask 60416
        %755 = vst.msk [vmem:[%s467] sm:$0xf] %vm754, %v750
        %756 = vst.msk [vmem:[%s467 + $0x4] sm:$0xf] %vm754, %v751
        %v757 = vld [vmem:[#allocation11] sm:$0xff]
        %v758 = vld [vmem:[#allocation11 + $0x8] sm:$0xff]
        %v759 = vld [vmem:[#allocation11 + $0x10] sm:$0xff]
        %v760 = vld [vmem:[#allocation11 + $0x18] sm:$0xff]
        %v761 = vld [vmem:[#allocation11 + $0x20] sm:$0xff]
        %v762 = vld [vmem:[#allocation11 + $0x28] sm:$0xff]
        %v763 = vld [vmem:[#allocation11 + $0x30] sm:$0xff]
        %v764 = vld [vmem:[#allocation11 + $0x38] sm:$0xff]
        %v765 = vld [vmem:[#allocation13] sm:$0x1]
        %v767 = vlaneseq
        %v768 = vshrl.u32 %v767, 7
        %v769 = vsub.s32 0, %v768
        %v770 = vrot.slane %v765, %v769
        %772 = vmatprep.subr.mxu0 0.0
        %773 = vmatpush1.msra.mxu0 %v757
        %774 = vmatprep.subr.mxu0 0.0
        %775 = vmatpush1.msra.mxu0 %v758
        %776 = vmatprep.subr.mxu0 0.0
        %777 = vmatpush1.msra.mxu0 %v759
        %778 = vmatprep.subr.mxu0 0.0
        %779 = vmatpush1.msra.mxu0 %v760
        %780 = vmatprep.subr.mxu0 0.0
        %781 = vmatpush1.msra.mxu0 %v761
        %782 = vmatprep.subr.mxu0 0.0
        %783 = vmatpush1.msra.mxu0 %v762
        %784 = vmatprep.subr.mxu0 0.0
        %785 = vmatpush1.msra.mxu0 %v763
        %786 = vmatprep.subr.mxu0 0.0
        %787 = vmatpush1.msra.mxu0 %v764
        %788 = vmatprep.subr.mxu0 0.0
        %789 = vmatpush1.msra.mxu0 0.0
        %790 = vmatprep.subr.mxu0 0.0
        %791 = vmatpush1.msra.mxu0 0.0
        %792 = vmatprep.subr.mxu0 0.0
        %793 = vmatpush1.msra.mxu0 0.0
        %794 = vmatprep.subr.mxu0 0.0
        %795 = vmatpush1.msra.mxu0 0.0
        %796 = vmatprep.subr.mxu0 0.0
        %797 = vmatpush1.msra.mxu0 0.0
        %798 = vmatprep.subr.mxu0 0.0
        %799 = vmatpush1.msra.mxu0 0.0
        %800 = vmatprep.subr.mxu0 0.0
        %801 = vmatpush1.msra.mxu0 0.0
        %802 = vmatprep.subr.mxu0 0.0
        %803 = vmatpush1.msra.mxu0 0.0
        %804 = vmatprep.subr.mxu0 0.0
        %805 = vmatpush1.msra.mxu0 0.0
        %806 = vmatprep.subr.mxu0 0.0
        %807 = vmatpush1.msra.mxu0 0.0
        %808 = vmatprep.subr.mxu0 0.0
        %809 = vmatpush1.msra.mxu0 0.0
        %810 = vmatprep.subr.mxu0 0.0
        %811 = vmatpush1.msra.mxu0 0.0
        %812 = vmatprep.subr.mxu0 0.0
        %813 = vmatpush1.msra.mxu0 0.0
        %814 = vmatprep.subr.mxu0 0.0
        %815 = vmatpush1.msra.mxu0 0.0
        %816 = vmatprep.subr.mxu0 0.0
        %817 = vmatpush1.msra.mxu0 0.0
        %818 = vmatprep.subr.mxu0 0.0
        %819 = vmatpush1.msra.mxu0 0.0
        %820 = vmatprep.subr.mxu0 0.0
        %821 = vmatpush1.msra.mxu0 0.0
        %822 = vmatprep.subr.mxu0 0.0
        %823 = vmatpush1.msra.mxu0 0.0
        %824 = vmatprep.subr.mxu0 0.0
        %825 = vmatpush1.msra.mxu0 0.0
        %826 = vmatprep.subr.mxu0 0.0
        %827 = vmatpush1.msra.mxu0 0.0
        %828 = vmatprep.subr.mxu0 0.0
        %829 = vmatpush1.msra.mxu0 0.0
        %830 = vmatprep.subr.mxu0 0.0
        %831 = vmatpush1.msra.mxu0 0.0
        %832 = vmatprep.subr.mxu0 0.0
        %833 = vmatpush1.msra.mxu0 0.0
        %834 = vmatprep.subr.mxu0 0.0
        %835 = vmatpush1.msra.mxu0 0.0
        %836 = vmatprep.mubr.f32.mxu0 0.0
        %837 = vmatmul.mubr.f32.gmra.mrb[0].mxu0 %v666
        %v838 = vpop.f32.mrb[0].mxu0
        %v839 = vadd.f32 %v770, %v838
        %v840 = vpop.f32.mrb[0].mxu0
        %841 = vmatprep.mubr.f32.mxu0 0.0
        %842 = vmatmul.mubr.f32.gmra.mrb[0].mxu0 %v669
        %v843 = vpop.f32.mrb[0].mxu0
        %v844 = vadd.f32 %v770, %v843
        %v845 = vpop.f32.mrb[0].mxu0
        %846 = vdwg.mxu0
        %v847 = vpack.c.bf16 %v844, %v839
        %v849 = vunpack.c.l.b16 %v847
        %v850 = vunpack.c.h.b16 %v847
        %v851 = vpack.c.b16 %v849, %v849
        %v852 = vpack.c.b16 %v850, %v850
        %855 = vst.msk [vmem:[%s474] sm:$0xf] %vm754, %v851
        %856 = vst.msk [vmem:[%s474 + $0x4] sm:$0xf] %vm754, %v852
        %s857 = sand.u32 %s193, 1
        %s858 = scalar_lea.sflag [#allocation4], %s857
        %s859 = sand.u32 %s193, 1
        %s860 = smul.addr %s859, 16
        %s861 = scalar_lea.vmem [#allocation14], %s860
        %s862 = sand.u32 %s33, 1
        %s863 = scalar_lea.sflag [#allocation16], %s862
        %s864 = sand.u32 %s219, 1
        %s865 = smul.addr %s864, 8
        %s866 = scalar_lea.vmem [#allocation15], %s865
        %s867 = sand.u32 %s33, 1
        %s868 = scalar_lea.sflag [#allocation16], %s867
        %s869 = sand.u32 %s245, 1
        %s870 = smul.addr %s869, 8
        %s871 = scalar_lea.vmem [#allocation17], %s870
        // Predicated region
        $region77: #{point_transformer_classif.9} parent=47 // pred_check
          %p872 = pneg %p203
        $region78: #{point_transformer_classif.9} parent=47 // pred_check_branch
          %874 = sbr.rel (%p872) target = $region80
        $region79: #{point_transformer_classif.9} parent=47 // pred_region
          %s875 = smul.u32 2, %s33
          %s877 = ssub.s32 256, 256
          %878 = vsyncadd %s858, %s877
          %s879 = smul.addr %s875, 128
          %s880 = scalar_lea.hbm %s7, %s879
          %s881 = sshll.u32 %s861, 4
          %s882 = int_to_ptr.vmem [resolvable:$true] %s881
          %887 = dma.vmem_to_hbm [thread:$0]  %s882, 256, %s880, %s858, 128, 128, 8
        $region80: #{point_transformer_classif.9} parent=47 // pred_fallthru
          _
        // Predicated region
        $region81: #{point_transformer_classif.9} parent=47 // pred_check
          %p888 = pneg %p229
        $region82: #{point_transformer_classif.9} parent=47 // pred_check_branch
          %890 = sbr.rel (%p888) target = $region84
        $region83: #{point_transformer_classif.9} parent=47 // pred_region
          %s891 = smul.u32 2, %s33
          %s893 = ssub.s32 128, 128
          %894 = vsyncadd %s863, %s893
          %s895 = smul.addr %s891, 64
          %s896 = scalar_lea.hbm %s8, %s895
          %s897 = sshll.u32 %s866, 4
          %s898 = int_to_ptr.vmem [resolvable:$true] %s897
          %903 = dma.vmem_to_hbm [thread:$0]  %s898, 128, %s896, %s863, 64, 64, 4
        $region84: #{point_transformer_classif.9} parent=47 // pred_fallthru
          _
        // Predicated region
        $region85: #{point_transformer_classif.9} parent=47 // pred_check
          %p904 = pneg %p255
        $region86: #{point_transformer_classif.9} parent=47 // pred_check_branch
          %906 = sbr.rel (%p904) target = $region88
        $region87: #{point_transformer_classif.9} parent=47 // pred_region
          %s907 = smul.u32 2, %s33
          %s909 = ssub.s32 128, 128
          %910 = vsyncadd %s868, %s909
          %s911 = smul.addr %s907, 64
          %s912 = scalar_lea.hbm %s9, %s911
          %s913 = sshll.u32 %s871, 4
          %s914 = int_to_ptr.vmem [resolvable:$true] %s913
          %919 = dma.vmem_to_hbm [thread:$0]  %s914, 128, %s912, %s868, 64, 64, 4
        $region88: #{point_transformer_classif.9} parent=47 // pred_fallthru
          _
      $region48: #{point_transformer_classif.9} parent=5 // pred_fallthru
        _
      %p920 = scmp.le.s32.totalorder 2, %s28
      // Predicated region
      $region89: #{point_transformer_classif.9} parent=5 // pred_check
        %p921 = pneg %p920
      $region90: #{point_transformer_classif.9} parent=5 // pred_check_branch
        %923 = sbr.rel (%p921) target = $region92
      $region91: #{point_transformer_classif.9} parent=5 // pred_region
        %s924 = ssub.s32 %s28, 2
        // Predicated region
        $region93: #{point_transformer_classif.9} parent=91 // pred_check
          %p925 = pneg %p209
        $region94: #{point_transformer_classif.9} parent=91 // pred_check_branch
          %927 = sbr.rel (%p925) target = $region96
        $region95: #{point_transformer_classif.9} parent=91 // pred_region
          %s928 = sand.u32 %s194, 1
          %s929 = scalar_lea.sflag [#allocation4], %s928
          %s930 = sand.u32 %s194, 1
          %s931 = smul.addr %s930, 16
          %s932 = scalar_lea.vmem [#allocation14], %s931
          %933 = dma.done %s929, 256
        $region96: #{point_transformer_classif.9} parent=91 // pred_fallthru
          _
        // Predicated region
        $region97: #{point_transformer_classif.9} parent=91 // pred_check
          %p934 = pneg %p235
        $region98: #{point_transformer_classif.9} parent=91 // pred_check_branch
          %936 = sbr.rel (%p934) target = $region100
        $region99: #{point_transformer_classif.9} parent=91 // pred_region
          %s937 = sand.u32 %s34, 1
          %s938 = scalar_lea.sflag [#allocation16], %s937
          %s939 = sand.u32 %s220, 1
          %s940 = smul.addr %s939, 8
          %s941 = scalar_lea.vmem [#allocation15], %s940
          %942 = dma.done %s938, 128
        $region100: #{point_transformer_classif.9} parent=91 // pred_fallthru
          _
        // Predicated region
        $region101: #{point_transformer_classif.9} parent=91 // pred_check
          %p943 = pneg %p261
        $region102: #{point_transformer_classif.9} parent=91 // pred_check_branch
          %945 = sbr.rel (%p943) target = $region104
        $region103: #{point_transformer_classif.9} parent=91 // pred_region
          %s946 = sand.u32 %s34, 1
          %s947 = scalar_lea.sflag [#allocation16], %s946
          %s948 = sand.u32 %s246, 1
          %s949 = smul.addr %s948, 8
          %s950 = scalar_lea.vmem [#allocation17], %s949
          %951 = dma.done %s947, 128
        $region104: #{point_transformer_classif.9} parent=91 // pred_fallthru
          _
      $region92: #{point_transformer_classif.9} parent=5 // pred_fallthru
        _
    $region6: #{point_transformer_classif.9} parent=1 // loop_footer
      %s32 = sadd.s32 1, %s28
    $region7: #{point_transformer_classif.9} parent=1 // loop_footer_branch
      %27 = sbr.rel target = $region3
    $region8: #{point_transformer_classif.9} parent=1 // loop_exit
      _
    %952 = vsyncpa [#allocation3], 1
    %s953 = scalar_lea.sflag [#allocation3], 1
    %954 = vsyncpa %s953, 1
    %955 = vsyncpa [#allocation6], 1
    %956 = vsyncpa [#allocation9], 1
    %957 = vsyncpa [#allocation12], 1
    %958 = vsyncpa [#allocation4], 1
    %s959 = scalar_lea.sflag [#allocation4], 1
    %960 = vsyncpa %s959, 1
    %961 = vsyncpa [#allocation16], 1
    %s962 = scalar_lea.sflag [#allocation16], 1
    %963 = vsyncpa %s962, 1

// kernel: custom-call.35
$region0: #{custom-call.35}
  %s0 = inlined_call_operand.vmem [shape: f32[2,16], index: 0, kind: output, shape index: {}]

// kernel: point_transformer_classif.10
$region0: #{point_transformer_classif.10}
  #allocation0 [shape = 'u32[]', space=smem, size = 0x4, offset = 0x4, fixed_abs, tag = 'smem constant byte address 0x4 - core index']
  #allocation1 [shape = 'u32[144,128]{1,0:T(1,128)}', space=vmem, size = 0x12000, scoped, tag = 'internal scratch']
  %s0 = inlined_call_operand.hbm [shape: f32[32,64], index: 0, kind: input, shape index: {}]
  %s1 = inlined_call_operand.hbm [shape: bf16[32,32], index: 1, kind: input, shape index: {}]
  %s2 = inlined_call_operand.hbm [shape: bf16[32,32], index: 2, kind: input, shape index: {}]
  %s3 = inlined_call_operand.hbm [shape: bf16[32,12], index: 3, kind: input, shape index: {}]
  %s4 = inlined_call_operand.hbm [shape: f32[64,8], index: 4, kind: input, shape index: {}]
  %s5 = inlined_call_operand.hbm [shape: f32[1,8], index: 5, kind: input, shape index: {}]
  %s6 = inlined_call_operand.hbm [shape: f32[12,32], index: 6, kind: input, shape index: {}]
  %s7 = inlined_call_operand.hbm [shape: f32[1,32], index: 7, kind: input, shape index: {}]
  %s8 = inlined_call_operand.hbm [shape: f32[32,32], index: 8, kind: input, shape index: {}]
  %s9 = inlined_call_operand.hbm [shape: f32[1,32], index: 9, kind: input, shape index: {}]
  %s10 = inlined_call_operand.hbm [shape: f32[32,32], index: 10, kind: input, shape index: {}]
  %s11 = inlined_call_operand.hbm [shape: f32[1,32], index: 11, kind: input, shape index: {}]
  %s12 = inlined_call_operand.hbm [shape: f32[32,32], index: 12, kind: input, shape index: {}]
  %s13 = inlined_call_operand.hbm [shape: f32[1,32], index: 13, kind: input, shape index: {}]
  %s14 = inlined_call_operand.hbm [shape: f32[8,64], index: 14, kind: input, shape index: {}]
  %s15 = inlined_call_operand.hbm [shape: f32[1,64], index: 15, kind: input, shape index: {}]
  %s16 = inlined_call_operand.hbm [shape: f32[32,64], index: 16, kind: output, shape index: {}]
  %s17 = sld [smem:[#allocation0]]
  $region161: #{point_transformer_classif.10} parent=0
    _
  %s19 = ssub.s32 1, %s17
  %s20 = scalar_select 0, %s19, %s17
  $region1: #{point_transformer_classif.10} parent=0
    #allocation2 [shape = 'u8[16384]{0}', space=vmem, size = 0x4000, scoped, tag = 'input window, operand 0']
    #allocation3 [shape = 's32[2]{0}', space=sflag, size = 0x8, scoped, tag = 'scoped memory for point_transformer_classif.10']
    #allocation4 [shape = 's32[2]{0}', space=sflag, size = 0x8, scoped, tag = 'scoped memory for point_transformer_classif.10']
    #allocation5 [shape = 'u8[8192]{0}', space=vmem, size = 0x2000, scoped, tag = 'input window, operand 1']
    #allocation6 [shape = 's32[2]{0}', space=sflag, size = 0x8, scoped, tag = 'scoped memory for point_transformer_classif.10']
    #allocation7 [shape = 'u8[8192]{0}', space=vmem, size = 0x2000, scoped, tag = 'input window, operand 2']
    #allocation8 [shape = 'u8[8192]{0}', space=vmem, size = 0x2000, scoped, tag = 'input window, operand 3']
    #allocation9 [shape = 's32[2]{0}', space=sflag, size = 0x8, scoped, tag = 'scoped memory for point_transformer_classif.10']
    #allocation10 [shape = 'u8[32768]{0}', space=vmem, size = 0x8000, scoped, tag = 'input window, operand 4, single buffered']
    #allocation11 [shape = 'u8[512]{0}', space=vmem, size = 0x400, scoped, tag = 'input window, operand 5, single buffered']
    #allocation12 [shape = 's32[1]{0}', space=sflag, size = 0x4, scoped, tag = 'scoped memory for point_transformer_classif.10']
    #allocation13 [shape = 'u8[8192]{0}', space=vmem, size = 0x2000, scoped, tag = 'input window, operand 6, single buffered']
    #allocation14 [shape = 'u8[512]{0}', space=vmem, size = 0x400, scoped, tag = 'input window, operand 7, single buffered']
    #allocation15 [shape = 's32[1]{0}', space=sflag, size = 0x4, scoped, tag = 'scoped memory for point_transformer_classif.10']
    #allocation16 [shape = 'u8[16384]{0}', space=vmem, size = 0x4000, scoped, tag = 'input window, operand 8, single buffered']
    #allocation17 [shape = 'u8[512]{0}', space=vmem, size = 0x400, scoped, tag = 'input window, operand 9, single buffered']
    #allocation18 [shape = 's32[1]{0}', space=sflag, size = 0x4, scoped, tag = 'scoped memory for point_transformer_classif.10']
    #allocation19 [shape = 'u8[16384]{0}', space=vmem, size = 0x4000, scoped, tag = 'input window, operand 10, single buffered']
    #allocation20 [shape = 'u8[512]{0}', space=vmem, size = 0x400, scoped, tag = 'input window, operand 11, single buffered']
    #allocation21 [shape = 's32[1]{0}', space=sflag, size = 0x4, scoped, tag = 'scoped memory for point_transformer_classif.10']
    #allocation22 [shape = 'u8[16384]{0}', space=vmem, size = 0x4000, scoped, tag = 'input window, operand 12, single buffered']
    #allocation23 [shape = 'u8[512]{0}', space=vmem, size = 0x400, scoped, tag = 'input window, operand 13, single buffered']
    #allocation24 [shape = 's32[1]{0}', space=sflag, size = 0x4, scoped, tag = 'scoped memory for point_transformer_classif.10']
    #allocation25 [shape = 'u8[4096]{0}', space=vmem, size = 0x1000, scoped, tag = 'input window, operand 14, single buffered']
    #allocation26 [shape = 'u8[512]{0}', space=vmem, size = 0x400, scoped, tag = 'input window, operand 15, single buffered']
    #allocation27 [shape = 's32[1]{0}', space=sflag, size = 0x4, scoped, tag = 'scoped memory for point_transformer_classif.10']
    #allocation28 [shape = 'u8[16384]{0}', space=vmem, size = 0x4000, scoped, tag = 'output window, operand 0']
    %21 = vsyncpa [#allocation3], 0
    %s22 = scalar_lea.sflag [#allocation3], 1
    %23 = vsyncpa %s22, 0
    %24 = vsyncpa [#allocation6], 0
    %s25 = scalar_lea.sflag [#allocation6], 1
    %26 = vsyncpa %s25, 0
    %27 = vsyncpa [#allocation9], 0
    %s28 = scalar_lea.sflag [#allocation9], 1
    %29 = vsyncpa %s28, 0
    %30 = vsyncpa [#allocation12], 0
    %31 = vsyncpa [#allocation15], 0
    %32 = vsyncpa [#allocation18], 0
    %33 = vsyncpa [#allocation21], 0
    %34 = vsyncpa [#allocation24], 0
    %35 = vsyncpa [#allocation27], 0
    %36 = vsyncpa [#allocation4], 0
    %s37 = scalar_lea.sflag [#allocation4], 1
    %38 = vsyncpa %s37, 0
    loop: start=0, step=1, limit=4
    $region2: #{point_transformer_classif.10} parent=1 // loop_pre_header
      _
    $region3: #{point_transformer_classif.10} parent=1 // loop_header
      %s40 = sphi 0, %s44
      %p41 = scmp.ge.s32.totalorder %s40, 4
      %s50 = sphi 0, %s52
      %s53 = sphi 0, %s50
      %s54 = sphi 0, %s53
      %s70 = sphi 0, %s54
      %s76 = sphi 0, %s78
      %s79 = sphi 0, %s76
      %s80 = sphi 0, %s79
      %s96 = sphi 0, %s80
      %s102 = sphi 0, %s104
      %s105 = sphi 0, %s102
      %s106 = sphi 0, %s105
      %s122 = sphi 0, %s106
      %s128 = sphi 0, %s130
      %s131 = sphi 0, %s128
      %s132 = sphi 0, %s131
      %s148 = sphi 0, %s132
      %s152 = sphi 0, %s152
      %s154 = sphi 0, %s152
      %s155 = sphi 0, %s154
      %s169 = sphi 0, %s155
      %s173 = sphi 0, %s173
      %s175 = sphi 0, %s173
      %s176 = sphi 0, %s175
      %s190 = sphi 0, %s176
      %s194 = sphi 0, %s194
      %s196 = sphi 0, %s194
      %s197 = sphi 0, %s196
      %s211 = sphi 0, %s197
      %s215 = sphi 0, %s215
      %s217 = sphi 0, %s215
      %s218 = sphi 0, %s217
      %s232 = sphi 0, %s218
      %s236 = sphi 0, %s236
      %s238 = sphi 0, %s236
      %s239 = sphi 0, %s238
      %s253 = sphi 0, %s239
      %s257 = sphi 0, %s257
      %s259 = sphi 0, %s257
      %s260 = sphi 0, %s259
      %s274 = sphi 0, %s260
      %s278 = sphi 0, %s278
      %s280 = sphi 0, %s278
      %s281 = sphi 0, %s280
      %s295 = sphi 0, %s281
      %s299 = sphi 0, %s299
      %s301 = sphi 0, %s299
      %s302 = sphi 0, %s301
      %s316 = sphi 0, %s302
      %s320 = sphi 0, %s320
      %s322 = sphi 0, %s320
      %s323 = sphi 0, %s322
      %s337 = sphi 0, %s323
      %s341 = sphi 0, %s341
      %s343 = sphi 0, %s341
      %s344 = sphi 0, %s343
      %s358 = sphi 0, %s344
      %s362 = sphi 0, %s362
      %s364 = sphi 0, %s362
      %s365 = sphi 0, %s364
      %s379 = sphi 0, %s365
      %s383 = sphi 0, %s383
      %s385 = sphi 0, %s383
      %s386 = sphi 0, %s385
      %s400 = sphi 0, %s386
      %s406 = sphi 0, %s408
      %s409 = sphi 0, %s406
      %s410 = sphi 0, %s409
      %s426 = sphi 0, %s410
    $region4: #{point_transformer_classif.10} parent=1 // loop_header_branch
      %43 = sbr.rel (%p41) target = $region8
    $region5: #{point_transformer_classif.10} parent=1 // loop_body
      %s45 = ssub.s32 %s40, 1
      %s46 = ssub.s32 %s40, 2
      %s47 = sadd.s32 %s40, 1
      %s48 = ssub.s32 %s40, %s47
      %p49 = scmp.eq.s32.totalorder %s48, 0
      %s51 = sadd.s32 %s50, 1
      %s52 = scalar_select %p49, %s50, %s51
      %p55 = pneg %p49
      %p56 = scmp.eq.s32.totalorder %s40, 1
      %p57 = por %p55, %p56
      %p58 = scmp.ne.s32.totalorder %s50, %s53
      %p59 = scmp.eq.s32.totalorder %s40, 0
      %p60 = por %p58, %p59
      %p61 = scmp.ne.s32.totalorder %s50, %s53
      %p62 = scmp.eq.s32.totalorder %s45, 1
      %p63 = por %p61, %p62
      %p64 = scmp.ne.s32.totalorder %s53, %s54
      %p65 = scmp.eq.s32.totalorder %s45, 0
      %p66 = por %p64, %p65
      %p67 = scmp.ne.s32.totalorder %s53, %s54
      %p68 = scmp.eq.s32.totalorder %s46, 1
      %p69 = por %p67, %p68
      %p71 = scmp.ne.s32.totalorder %s54, %s70
      %p72 = scmp.eq.s32.totalorder %s46, 0
      %p73 = por %p71, %p72
      %s74 = ssub.s32 %s40, %s47
      %p75 = scmp.eq.s32.totalorder %s74, 0
      %s77 = sadd.s32 %s76, 1
      %s78 = scalar_select %p75, %s76, %s77
      %p81 = pneg %p75
      %p82 = scmp.eq.s32.totalorder %s40, 1
      %p83 = por %p81, %p82
      %p84 = scmp.ne.s32.totalorder %s76, %s79
      %p85 = scmp.eq.s32.totalorder %s40, 0
      %p86 = por %p84, %p85
      %p87 = scmp.ne.s32.totalorder %s76, %s79
      %p88 = scmp.eq.s32.totalorder %s45, 1
      %p89 = por %p87, %p88
      %p90 = scmp.ne.s32.totalorder %s79, %s80
      %p91 = scmp.eq.s32.totalorder %s45, 0
      %p92 = por %p90, %p91
      %p93 = scmp.ne.s32.totalorder %s79, %s80
      %p94 = scmp.eq.s32.totalorder %s46, 1
      %p95 = por %p93, %p94
      %p97 = scmp.ne.s32.totalorder %s80, %s96
      %p98 = scmp.eq.s32.totalorder %s46, 0
      %p99 = por %p97, %p98
      %s100 = ssub.s32 %s40, %s47
      %p101 = scmp.eq.s32.totalorder %s100, 0
      %s103 = sadd.s32 %s102, 1
      %s104 = scalar_select %p101, %s102, %s103
      %p107 = pneg %p101
      %p108 = scmp.eq.s32.totalorder %s40, 1
      %p109 = por %p107, %p108
      %p110 = scmp.ne.s32.totalorder %s102, %s105
      %p111 = scmp.eq.s32.totalorder %s40, 0
      %p112 = por %p110, %p111
      %p113 = scmp.ne.s32.totalorder %s102, %s105
      %p114 = scmp.eq.s32.totalorder %s45, 1
      %p115 = por %p113, %p114
      %p116 = scmp.ne.s32.totalorder %s105, %s106
      %p117 = scmp.eq.s32.totalorder %s45, 0
      %p118 = por %p116, %p117
      %p119 = scmp.ne.s32.totalorder %s105, %s106
      %p120 = scmp.eq.s32.totalorder %s46, 1
      %p121 = por %p119, %p120
      %p123 = scmp.ne.s32.totalorder %s106, %s122
      %p124 = scmp.eq.s32.totalorder %s46, 0
      %p125 = por %p123, %p124
      %s126 = ssub.s32 %s40, %s47
      %p127 = scmp.eq.s32.totalorder %s126, 0
      %s129 = sadd.s32 %s128, 1
      %s130 = scalar_select %p127, %s128, %s129
      %p133 = pneg %p127
      %p134 = scmp.eq.s32.totalorder %s40, 1
      %p135 = por %p133, %p134
      %p136 = scmp.ne.s32.totalorder %s128, %s131
      %p137 = scmp.eq.s32.totalorder %s40, 0
      %p138 = por %p136, %p137
      %p139 = scmp.ne.s32.totalorder %s128, %s131
      %p140 = scmp.eq.s32.totalorder %s45, 1
      %p141 = por %p139, %p140
      %p142 = scmp.ne.s32.totalorder %s131, %s132
      %p143 = scmp.eq.s32.totalorder %s45, 0
      %p144 = por %p142, %p143
      %p145 = scmp.ne.s32.totalorder %s131, %s132
      %p146 = scmp.eq.s32.totalorder %s46, 1
      %p147 = por %p145, %p146
      %p149 = scmp.ne.s32.totalorder %s132, %s148
      %p150 = scmp.eq.s32.totalorder %s46, 0
      %p151 = por %p149, %p150
      %s153 = sadd.s32 %s152, 1
      %p156 = scmp.eq.s32.totalorder %s40, 1
      %p157 = scmp.ne.s32.totalorder %s152, %s154
      %p158 = scmp.eq.s32.totalorder %s40, 0
      %p159 = por %p157, %p158
      %p160 = scmp.ne.s32.totalorder %s152, %s154
      %p161 = scmp.eq.s32.totalorder %s45, 1
      %p162 = por %p160, %p161
      %p163 = scmp.ne.s32.totalorder %s154, %s155
      %p164 = scmp.eq.s32.totalorder %s45, 0
      %p165 = por %p163, %p164
      %p166 = scmp.ne.s32.totalorder %s154, %s155
      %p167 = scmp.eq.s32.totalorder %s46, 1
      %p168 = por %p166, %p167
      %p170 = scmp.ne.s32.totalorder %s155, %s169
      %p171 = scmp.eq.s32.totalorder %s46, 0
      %p172 = por %p170, %p171
      %s174 = sadd.s32 %s173, 1
      %p177 = scmp.eq.s32.totalorder %s40, 1
      %p178 = scmp.ne.s32.totalorder %s173, %s175
      %p179 = scmp.eq.s32.totalorder %s40, 0
      %p180 = por %p178, %p179
      %p181 = scmp.ne.s32.totalorder %s173, %s175
      %p182 = scmp.eq.s32.totalorder %s45, 1
      %p183 = por %p181, %p182
      %p184 = scmp.ne.s32.totalorder %s175, %s176
      %p185 = scmp.eq.s32.totalorder %s45, 0
      %p186 = por %p184, %p185
      %p187 = scmp.ne.s32.totalorder %s175, %s176
      %p188 = scmp.eq.s32.totalorder %s46, 1
      %p189 = por %p187, %p188
      %p191 = scmp.ne.s32.totalorder %s176, %s190
      %p192 = scmp.eq.s32.totalorder %s46, 0
      %p193 = por %p191, %p192
      %s195 = sadd.s32 %s194, 1
      %p198 = scmp.eq.s32.totalorder %s40, 1
      %p199 = scmp.ne.s32.totalorder %s194, %s196
      %p200 = scmp.eq.s32.totalorder %s40, 0
      %p201 = por %p199, %p200
      %p202 = scmp.ne.s32.totalorder %s194, %s196
      %p203 = scmp.eq.s32.totalorder %s45, 1
      %p204 = por %p202, %p203
      %p205 = scmp.ne.s32.totalorder %s196, %s197
      %p206 = scmp.eq.s32.totalorder %s45, 0
      %p207 = por %p205, %p206
      %p208 = scmp.ne.s32.totalorder %s196, %s197
      %p209 = scmp.eq.s32.totalorder %s46, 1
      %p210 = por %p208, %p209
      %p212 = scmp.ne.s32.totalorder %s197, %s211
      %p213 = scmp.eq.s32.totalorder %s46, 0
      %p214 = por %p212, %p213
      %s216 = sadd.s32 %s215, 1
      %p219 = scmp.eq.s32.totalorder %s40, 1
      %p220 = scmp.ne.s32.totalorder %s215, %s217
      %p221 = scmp.eq.s32.totalorder %s40, 0
      %p222 = por %p220, %p221
      %p223 = scmp.ne.s32.totalorder %s215, %s217
      %p224 = scmp.eq.s32.totalorder %s45, 1
      %p225 = por %p223, %p224
      %p226 = scmp.ne.s32.totalorder %s217, %s218
      %p227 = scmp.eq.s32.totalorder %s45, 0
      %p228 = por %p226, %p227
      %p229 = scmp.ne.s32.totalorder %s217, %s218
      %p230 = scmp.eq.s32.totalorder %s46, 1
      %p231 = por %p229, %p230
      %p233 = scmp.ne.s32.totalorder %s218, %s232
      %p234 = scmp.eq.s32.totalorder %s46, 0
      %p235 = por %p233, %p234
      %s237 = sadd.s32 %s236, 1
      %p240 = scmp.eq.s32.totalorder %s40, 1
      %p241 = scmp.ne.s32.totalorder %s236, %s238
      %p242 = scmp.eq.s32.totalorder %s40, 0
      %p243 = por %p241, %p242
      %p244 = scmp.ne.s32.totalorder %s236, %s238
      %p245 = scmp.eq.s32.totalorder %s45, 1
      %p246 = por %p244, %p245
      %p247 = scmp.ne.s32.totalorder %s238, %s239
      %p248 = scmp.eq.s32.totalorder %s45, 0
      %p249 = por %p247, %p248
      %p250 = scmp.ne.s32.totalorder %s238, %s239
      %p251 = scmp.eq.s32.totalorder %s46, 1
      %p252 = por %p250, %p251
      %p254 = scmp.ne.s32.totalorder %s239, %s253
      %p255 = scmp.eq.s32.totalorder %s46, 0
      %p256 = por %p254, %p255
      %s258 = sadd.s32 %s257, 1
      %p261 = scmp.eq.s32.totalorder %s40, 1
      %p262 = scmp.ne.s32.totalorder %s257, %s259
      %p263 = scmp.eq.s32.totalorder %s40, 0
      %p264 = por %p262, %p263
      %p265 = scmp.ne.s32.totalorder %s257, %s259
      %p266 = scmp.eq.s32.totalorder %s45, 1
      %p267 = por %p265, %p266
      %p268 = scmp.ne.s32.totalorder %s259, %s260
      %p269 = scmp.eq.s32.totalorder %s45, 0
      %p270 = por %p268, %p269
      %p271 = scmp.ne.s32.totalorder %s259, %s260
      %p272 = scmp.eq.s32.totalorder %s46, 1
      %p273 = por %p271, %p272
      %p275 = scmp.ne.s32.totalorder %s260, %s274
      %p276 = scmp.eq.s32.totalorder %s46, 0
      %p277 = por %p275, %p276
      %s279 = sadd.s32 %s278, 1
      %p282 = scmp.eq.s32.totalorder %s40, 1
      %p283 = scmp.ne.s32.totalorder %s278, %s280
      %p284 = scmp.eq.s32.totalorder %s40, 0
      %p285 = por %p283, %p284
      %p286 = scmp.ne.s32.totalorder %s278, %s280
      %p287 = scmp.eq.s32.totalorder %s45, 1
      %p288 = por %p286, %p287
      %p289 = scmp.ne.s32.totalorder %s280, %s281
      %p290 = scmp.eq.s32.totalorder %s45, 0
      %p291 = por %p289, %p290
      %p292 = scmp.ne.s32.totalorder %s280, %s281
      %p293 = scmp.eq.s32.totalorder %s46, 1
      %p294 = por %p292, %p293
      %p296 = scmp.ne.s32.totalorder %s281, %s295
      %p297 = scmp.eq.s32.totalorder %s46, 0
      %p298 = por %p296, %p297
      %s300 = sadd.s32 %s299, 1
      %p303 = scmp.eq.s32.totalorder %s40, 1
      %p304 = scmp.ne.s32.totalorder %s299, %s301
      %p305 = scmp.eq.s32.totalorder %s40, 0
      %p306 = por %p304, %p305
      %p307 = scmp.ne.s32.totalorder %s299, %s301
      %p308 = scmp.eq.s32.totalorder %s45, 1
      %p309 = por %p307, %p308
      %p310 = scmp.ne.s32.totalorder %s301, %s302
      %p311 = scmp.eq.s32.totalorder %s45, 0
      %p312 = por %p310, %p311
      %p313 = scmp.ne.s32.totalorder %s301, %s302
      %p314 = scmp.eq.s32.totalorder %s46, 1
      %p315 = por %p313, %p314
      %p317 = scmp.ne.s32.totalorder %s302, %s316
      %p318 = scmp.eq.s32.totalorder %s46, 0
      %p319 = por %p317, %p318
      %s321 = sadd.s32 %s320, 1
      %p324 = scmp.eq.s32.totalorder %s40, 1
      %p325 = scmp.ne.s32.totalorder %s320, %s322
      %p326 = scmp.eq.s32.totalorder %s40, 0
      %p327 = por %p325, %p326
      %p328 = scmp.ne.s32.totalorder %s320, %s322
      %p329 = scmp.eq.s32.totalorder %s45, 1
      %p330 = por %p328, %p329
      %p331 = scmp.ne.s32.totalorder %s322, %s323
      %p332 = scmp.eq.s32.totalorder %s45, 0
      %p333 = por %p331, %p332
      %p334 = scmp.ne.s32.totalorder %s322, %s323
      %p335 = scmp.eq.s32.totalorder %s46, 1
      %p336 = por %p334, %p335
      %p338 = scmp.ne.s32.totalorder %s323, %s337
      %p339 = scmp.eq.s32.totalorder %s46, 0
      %p340 = por %p338, %p339
      %s342 = sadd.s32 %s341, 1
      %p345 = scmp.eq.s32.totalorder %s40, 1
      %p346 = scmp.ne.s32.totalorder %s341, %s343
      %p347 = scmp.eq.s32.totalorder %s40, 0
      %p348 = por %p346, %p347
      %p349 = scmp.ne.s32.totalorder %s341, %s343
      %p350 = scmp.eq.s32.totalorder %s45, 1
      %p351 = por %p349, %p350
      %p352 = scmp.ne.s32.totalorder %s343, %s344
      %p353 = scmp.eq.s32.totalorder %s45, 0
      %p354 = por %p352, %p353
      %p355 = scmp.ne.s32.totalorder %s343, %s344
      %p356 = scmp.eq.s32.totalorder %s46, 1
      %p357 = por %p355, %p356
      %p359 = scmp.ne.s32.totalorder %s344, %s358
      %p360 = scmp.eq.s32.totalorder %s46, 0
      %p361 = por %p359, %p360
      %s363 = sadd.s32 %s362, 1
      %p366 = scmp.eq.s32.totalorder %s40, 1
      %p367 = scmp.ne.s32.totalorder %s362, %s364
      %p368 = scmp.eq.s32.totalorder %s40, 0
      %p369 = por %p367, %p368
      %p370 = scmp.ne.s32.totalorder %s362, %s364
      %p371 = scmp.eq.s32.totalorder %s45, 1
      %p372 = por %p370, %p371
      %p373 = scmp.ne.s32.totalorder %s364, %s365
      %p374 = scmp.eq.s32.totalorder %s45, 0
      %p375 = por %p373, %p374
      %p376 = scmp.ne.s32.totalorder %s364, %s365
      %p377 = scmp.eq.s32.totalorder %s46, 1
      %p378 = por %p376, %p377
      %p380 = scmp.ne.s32.totalorder %s365, %s379
      %p381 = scmp.eq.s32.totalorder %s46, 0
      %p382 = por %p380, %p381
      %s384 = sadd.s32 %s383, 1
      %p387 = scmp.eq.s32.totalorder %s40, 1
      %p388 = scmp.ne.s32.totalorder %s383, %s385
      %p389 = scmp.eq.s32.totalorder %s40, 0
      %p390 = por %p388, %p389
      %p391 = scmp.ne.s32.totalorder %s383, %s385
      %p392 = scmp.eq.s32.totalorder %s45, 1
      %p393 = por %p391, %p392
      %p394 = scmp.ne.s32.totalorder %s385, %s386
      %p395 = scmp.eq.s32.totalorder %s45, 0
      %p396 = por %p394, %p395
      %p397 = scmp.ne.s32.totalorder %s385, %s386
      %p398 = scmp.eq.s32.totalorder %s46, 1
      %p399 = por %p397, %p398
      %p401 = scmp.ne.s32.totalorder %s386, %s400
      %p402 = scmp.eq.s32.totalorder %s46, 0
      %p403 = por %p401, %p402
      %s404 = ssub.s32 %s40, %s47
      %p405 = scmp.eq.s32.totalorder %s404, 0
      %s407 = sadd.s32 %s406, 1
      %s408 = scalar_select %p405, %s406, %s407
      %p411 = pneg %p405
      %p412 = scmp.eq.s32.totalorder %s40, 1
      %p413 = por %p411, %p412
      %p414 = scmp.ne.s32.totalorder %s406, %s409
      %p415 = scmp.eq.s32.totalorder %s40, 0
      %p416 = por %p414, %p415
      %p417 = scmp.ne.s32.totalorder %s406, %s409
      %p418 = scmp.eq.s32.totalorder %s45, 1
      %p419 = por %p417, %p418
      %p420 = scmp.ne.s32.totalorder %s409, %s410
      %p421 = scmp.eq.s32.totalorder %s45, 0
      %p422 = por %p420, %p421
      %p423 = scmp.ne.s32.totalorder %s409, %s410
      %p424 = scmp.eq.s32.totalorder %s46, 1
      %p425 = por %p423, %p424
      %p427 = scmp.ne.s32.totalorder %s410, %s426
      %p428 = scmp.eq.s32.totalorder %s46, 0
      %p429 = por %p427, %p428
      %p430 = scmp.le.s32.totalorder 1, %s40
      %p431 = scmp.lt.s32.totalorder %s40, 3
      %p432 = pnand %p430, %p431
      %p433 = pneg %p432
      // Predicated region
      $region9: #{point_transformer_classif.10} parent=5 // pred_check
        _
      $region10: #{point_transformer_classif.10} parent=5 // pred_check_branch
        %435 = sbr.rel (%p432) target = $region12
      $region11: #{point_transformer_classif.10} parent=5 // pred_region
        %s436 = ssub.s32 %s40, 1
        // Predicated region
        $region13: #{point_transformer_classif.10} parent=11 // pred_check
          %p437 = pneg %p165
        $region14: #{point_transformer_classif.10} parent=11 // pred_check_branch
          %439 = sbr.rel (%p437) target = $region16
        $region15: #{point_transformer_classif.10} parent=11 // pred_region
          %s441 = ssub.s32 1024, 1024
          %442 = vsyncadd [#allocation9], %s441
          %s443 = sshll.u32 [#allocation10], 4
          %s444 = int_to_ptr.vmem [resolvable:$true] %s443
          %449 = dma.hbm_to_vmem [thread:$0]  %s4, 1024, %s444, [#allocation9], 128, 128, 8
        $region16: #{point_transformer_classif.10} parent=11 // pred_fallthru
          _
        // Predicated region
        $region17: #{point_transformer_classif.10} parent=11 // pred_check
          %p450 = pneg %p186
        $region18: #{point_transformer_classif.10} parent=11 // pred_check_branch
          %452 = sbr.rel (%p450) target = $region20
        $region19: #{point_transformer_classif.10} parent=11 // pred_region
          %s454 = ssub.s32 16, 16
          %455 = vsyncadd [#allocation12], %s454
          %s457 = sshll.u32 [#allocation11], 4
          %s458 = int_to_ptr.vmem [resolvable:$true] %s457
          %460 = dma.hbm_to_vmem [thread:$0]  %s5, 16, %s458, [#allocation12]
        $region20: #{point_transformer_classif.10} parent=11 // pred_fallthru
          _
        // Predicated region
        $region21: #{point_transformer_classif.10} parent=11 // pred_check
          %p461 = pneg %p207
        $region22: #{point_transformer_classif.10} parent=11 // pred_check_branch
          %463 = sbr.rel (%p461) target = $region24
        $region23: #{point_transformer_classif.10} parent=11 // pred_region
          %s465 = ssub.s32 256, 256
          %466 = vsyncadd [#allocation12], %s465
          %s467 = sshll.u32 [#allocation13], 4
          %s468 = int_to_ptr.vmem [resolvable:$true] %s467
          %473 = dma.hbm_to_vmem [thread:$0]  %s6, 256, %s468, [#allocation12], 128, 128, 8
        $region24: #{point_transformer_classif.10} parent=11 // pred_fallthru
          _
        // Predicated region
        $region25: #{point_transformer_classif.10} parent=11 // pred_check
          %p474 = pneg %p228
        $region26: #{point_transformer_classif.10} parent=11 // pred_check_branch
          %476 = sbr.rel (%p474) target = $region28
        $region27: #{point_transformer_classif.10} parent=11 // pred_region
          %s478 = ssub.s32 16, 16
          %479 = vsyncadd [#allocation15], %s478
          %s481 = sshll.u32 [#allocation14], 4
          %s482 = int_to_ptr.vmem [resolvable:$true] %s481
          %484 = dma.hbm_to_vmem [thread:$0]  %s7, 16, %s482, [#allocation15]
        $region28: #{point_transformer_classif.10} parent=11 // pred_fallthru
          _
        // Predicated region
        $region29: #{point_transformer_classif.10} parent=11 // pred_check
          %p485 = pneg %p249
        $region30: #{point_transformer_classif.10} parent=11 // pred_check_branch
          %487 = sbr.rel (%p485) target = $region32
        $region31: #{point_transformer_classif.10} parent=11 // pred_region
          %s489 = ssub.s32 512, 512
          %490 = vsyncadd [#allocation15], %s489
          %s491 = sshll.u32 [#allocation16], 4
          %s492 = int_to_ptr.vmem [resolvable:$true] %s491
          %497 = dma.hbm_to_vmem [thread:$0]  %s8, 512, %s492, [#allocation15], 128, 128, 8
        $region32: #{point_transformer_classif.10} parent=11 // pred_fallthru
          _
        // Predicated region
        $region33: #{point_transformer_classif.10} parent=11 // pred_check
          %p498 = pneg %p270
        $region34: #{point_transformer_classif.10} parent=11 // pred_check_branch
          %500 = sbr.rel (%p498) target = $region36
        $region35: #{point_transformer_classif.10} parent=11 // pred_region
          %s502 = ssub.s32 16, 16
          %503 = vsyncadd [#allocation18], %s502
          %s505 = sshll.u32 [#allocation17], 4
          %s506 = int_to_ptr.vmem [resolvable:$true] %s505
          %508 = dma.hbm_to_vmem [thread:$0]  %s9, 16, %s506, [#allocation18]
        $region36: #{point_transformer_classif.10} parent=11 // pred_fallthru
          _
        // Predicated region
        $region37: #{point_transformer_classif.10} parent=11 // pred_check
          %p509 = pneg %p291
        $region38: #{point_transformer_classif.10} parent=11 // pred_check_branch
          %511 = sbr.rel (%p509) target = $region40
        $region39: #{point_transformer_classif.10} parent=11 // pred_region
          %s513 = ssub.s32 512, 512
          %514 = vsyncadd [#allocation18], %s513
          %s515 = sshll.u32 [#allocation19], 4
          %s516 = int_to_ptr.vmem [resolvable:$true] %s515
          %521 = dma.hbm_to_vmem [thread:$0]  %s10, 512, %s516, [#allocation18], 128, 128, 8
        $region40: #{point_transformer_classif.10} parent=11 // pred_fallthru
          _
        // Predicated region
        $region41: #{point_transformer_classif.10} parent=11 // pred_check
          %p522 = pneg %p312
        $region42: #{point_transformer_classif.10} parent=11 // pred_check_branch
          %524 = sbr.rel (%p522) target = $region44
        $region43: #{point_transformer_classif.10} parent=11 // pred_region
          %s526 = ssub.s32 16, 16
          %527 = vsyncadd [#allocation21], %s526
          %s529 = sshll.u32 [#allocation20], 4
          %s530 = int_to_ptr.vmem [resolvable:$true] %s529
          %532 = dma.hbm_to_vmem [thread:$0]  %s11, 16, %s530, [#allocation21]
        $region44: #{point_transformer_classif.10} parent=11 // pred_fallthru
          _
        // Predicated region
        $region45: #{point_transformer_classif.10} parent=11 // pred_check
          %p533 = pneg %p333
        $region46: #{point_transformer_classif.10} parent=11 // pred_check_branch
          %535 = sbr.rel (%p533) target = $region48
        $region47: #{point_transformer_classif.10} parent=11 // pred_region
          %s537 = ssub.s32 512, 512
          %538 = vsyncadd [#allocation21], %s537
          %s539 = sshll.u32 [#allocation22], 4
          %s540 = int_to_ptr.vmem [resolvable:$true] %s539
          %545 = dma.hbm_to_vmem [thread:$0]  %s12, 512, %s540, [#allocation21], 128, 128, 8
        $region48: #{point_transformer_classif.10} parent=11 // pred_fallthru
          _
        // Predicated region
        $region49: #{point_transformer_classif.10} parent=11 // pred_check
          %p546 = pneg %p354
        $region50: #{point_transformer_classif.10} parent=11 // pred_check_branch
          %548 = sbr.rel (%p546) target = $region52
        $region51: #{point_transformer_classif.10} parent=11 // pred_region
          %s550 = ssub.s32 16, 16
          %551 = vsyncadd [#allocation24], %s550
          %s553 = sshll.u32 [#allocation23], 4
          %s554 = int_to_ptr.vmem [resolvable:$true] %s553
          %556 = dma.hbm_to_vmem [thread:$0]  %s13, 16, %s554, [#allocation24]
        $region52: #{point_transformer_classif.10} parent=11 // pred_fallthru
          _
        // Predicated region
        $region53: #{point_transformer_classif.10} parent=11 // pred_check
          %p557 = pneg %p375
        $region54: #{point_transformer_classif.10} parent=11 // pred_check_branch
          %559 = sbr.rel (%p557) target = $region56
        $region55: #{point_transformer_classif.10} parent=11 // pred_region
          %s561 = ssub.s32 128, 128
          %562 = vsyncadd [#allocation24], %s561
          %s564 = sshll.u32 [#allocation25], 4
          %s565 = int_to_ptr.vmem [resolvable:$true] %s564
          %567 = dma.hbm_to_vmem [thread:$0]  %s14, 128, %s565, [#allocation24]
        $region56: #{point_transformer_classif.10} parent=11 // pred_fallthru
          _
        // Predicated region
        $region57: #{point_transformer_classif.10} parent=11 // pred_check
          %p568 = pneg %p396
        $region58: #{point_transformer_classif.10} parent=11 // pred_check_branch
          %570 = sbr.rel (%p568) target = $region60
        $region59: #{point_transformer_classif.10} parent=11 // pred_region
          %s572 = ssub.s32 16, 16
          %573 = vsyncadd [#allocation27], %s572
          %s575 = sshll.u32 [#allocation26], 4
          %s576 = int_to_ptr.vmem [resolvable:$true] %s575
          %578 = dma.hbm_to_vmem [thread:$0]  %s15, 16, %s576, [#allocation27]
        $region60: #{point_transformer_classif.10} parent=11 // pred_fallthru
          _
      $region12: #{point_transformer_classif.10} parent=5 // pred_fallthru
        _
      %p579 = scmp.lt.s32.totalorder %s40, 2
      // Predicated region
      $region61: #{point_transformer_classif.10} parent=5 // pred_check
        %p580 = pneg %p579
      $region62: #{point_transformer_classif.10} parent=5 // pred_check_branch
        %582 = sbr.rel (%p580) target = $region64
      $region63: #{point_transformer_classif.10} parent=5 // pred_region
        // Predicated region
        $region65: #{point_transformer_classif.10} parent=63 // pred_check
          %p583 = pneg %p60
        $region66: #{point_transformer_classif.10} parent=63 // pred_check_branch
          %585 = sbr.rel (%p583) target = $region68
        $region67: #{point_transformer_classif.10} parent=63 // pred_region
          %s586 = sand.u32 %s50, 1
          %s587 = scalar_lea.sflag [#allocation3], %s586
          %s588 = sand.u32 %s50, 1
          %s589 = smul.addr %s588, 16
          %s590 = scalar_lea.vmem [#allocation2], %s589
          %s591 = smul.u32 2, %s40
          %s593 = ssub.s32 256, 256
          %594 = vsyncadd %s587, %s593
          %s595 = smul.addr %s591, 128
          %s596 = scalar_lea.hbm %s0, %s595
          %s597 = sshll.u32 %s590, 4
          %s598 = int_to_ptr.vmem [resolvable:$true] %s597
          %603 = dma.hbm_to_vmem [thread:$0]  %s596, 256, %s598, %s587, 128, 128, 8
        $region68: #{point_transformer_classif.10} parent=63 // pred_fallthru
          _
        // Predicated region
        $region69: #{point_transformer_classif.10} parent=63 // pred_check
          %p604 = pneg %p86
        $region70: #{point_transformer_classif.10} parent=63 // pred_check_branch
          %606 = sbr.rel (%p604) target = $region72
        $region71: #{point_transformer_classif.10} parent=63 // pred_region
          %s607 = sand.u32 %s40, 1
          %s608 = scalar_lea.sflag [#allocation6], %s607
          %s609 = sand.u32 %s76, 1
          %s610 = smul.addr %s609, 8
          %s611 = scalar_lea.vmem [#allocation5], %s610
          %s612 = smul.u32 2, %s40
          %s614 = ssub.s32 128, 128
          %615 = vsyncadd %s608, %s614
          %s616 = smul.addr %s612, 64
          %s617 = scalar_lea.hbm %s1, %s616
          %s618 = sshll.u32 %s611, 4
          %s619 = int_to_ptr.vmem [resolvable:$true] %s618
          %624 = dma.hbm_to_vmem [thread:$0]  %s617, 128, %s619, %s608, 64, 64, 4
        $region72: #{point_transformer_classif.10} parent=63 // pred_fallthru
          _
        // Predicated region
        $region73: #{point_transformer_classif.10} parent=63 // pred_check
          %p625 = pneg %p112
        $region74: #{point_transformer_classif.10} parent=63 // pred_check_branch
          %627 = sbr.rel (%p625) target = $region76
        $region75: #{point_transformer_classif.10} parent=63 // pred_region
          %s628 = sand.u32 %s40, 1
          %s629 = scalar_lea.sflag [#allocation6], %s628
          %s630 = sand.u32 %s102, 1
          %s631 = smul.addr %s630, 8
          %s632 = scalar_lea.vmem [#allocation7], %s631
          %s633 = smul.u32 2, %s40
          %s635 = ssub.s32 128, 128
          %636 = vsyncadd %s629, %s635
          %s637 = smul.addr %s633, 64
          %s638 = scalar_lea.hbm %s2, %s637
          %s639 = sshll.u32 %s632, 4
          %s640 = int_to_ptr.vmem [resolvable:$true] %s639
          %645 = dma.hbm_to_vmem [thread:$0]  %s638, 128, %s640, %s629, 64, 64, 4
        $region76: #{point_transformer_classif.10} parent=63 // pred_fallthru
          _
        // Predicated region
        $region77: #{point_transformer_classif.10} parent=63 // pred_check
          %p646 = pneg %p138
        $region78: #{point_transformer_classif.10} parent=63 // pred_check_branch
          %648 = sbr.rel (%p646) target = $region80
        $region79: #{point_transformer_classif.10} parent=63 // pred_region
          %s649 = sand.u32 %s40, 1
          %s650 = scalar_lea.sflag [#allocation9], %s649
          %s651 = sand.u32 %s128, 1
          %s652 = smul.addr %s651, 8
          %s653 = scalar_lea.vmem [#allocation8], %s652
          %s654 = smul.u32 2, %s40
          %s656 = ssub.s32 128, 128
          %657 = vsyncadd %s650, %s656
          %s658 = smul.addr %s654, 64
          %s659 = scalar_lea.hbm %s3, %s658
          %s660 = sshll.u32 %s653, 4
          %s661 = int_to_ptr.vmem [resolvable:$true] %s660
          %666 = dma.hbm_to_vmem [thread:$0]  %s659, 128, %s661, %s650, 64, 64, 4
        $region80: #{point_transformer_classif.10} parent=63 // pred_fallthru
          _
      $region64: #{point_transformer_classif.10} parent=5 // pred_fallthru
        _
      %p667 = scmp.le.s32.totalorder 1, %s40
      %p668 = scmp.lt.s32.totalorder %s40, 3
      %p669 = pnand %p667, %p668
      %p670 = pneg %p669
      // Predicated region
      $region81: #{point_transformer_classif.10} parent=5 // pred_check
        _
      $region82: #{point_transformer_classif.10} parent=5 // pred_check_branch
        %672 = sbr.rel (%p669) target = $region84
      $region83: #{point_transformer_classif.10} parent=5 // pred_region
        %s673 = ssub.s32 %s40, 1
        %s674 = sand.u32 %s53, 1
        %s675 = scalar_lea.sflag [#allocation3], %s674
        %s676 = sand.u32 %s53, 1
        %s677 = smul.addr %s676, 16
        %s678 = scalar_lea.vmem [#allocation2], %s677
        // Predicated region
        $region85: #{point_transformer_classif.10} parent=83 // pred_check
          %p679 = pneg %p66
        $region86: #{point_transformer_classif.10} parent=83 // pred_check_branch
          %681 = sbr.rel (%p679) target = $region88
        $region87: #{point_transformer_classif.10} parent=83 // pred_region
          %682 = dma.done %s675, 256
        $region88: #{point_transformer_classif.10} parent=83 // pred_fallthru
          _
        %s683 = sand.u32 %s45, 1
        %s684 = scalar_lea.sflag [#allocation6], %s683
        %s685 = sand.u32 %s79, 1
        %s686 = smul.addr %s685, 8
        %s687 = scalar_lea.vmem [#allocation5], %s686
        // Predicated region
        $region89: #{point_transformer_classif.10} parent=83 // pred_check
          %p688 = pneg %p92
        $region90: #{point_transformer_classif.10} parent=83 // pred_check_branch
          %690 = sbr.rel (%p688) target = $region92
        $region91: #{point_transformer_classif.10} parent=83 // pred_region
          %691 = dma.done %s684, 128
        $region92: #{point_transformer_classif.10} parent=83 // pred_fallthru
          _
        %s692 = sand.u32 %s45, 1
        %s693 = scalar_lea.sflag [#allocation6], %s692
        %s694 = sand.u32 %s105, 1
        %s695 = smul.addr %s694, 8
        %s696 = scalar_lea.vmem [#allocation7], %s695
        // Predicated region
        $region93: #{point_transformer_classif.10} parent=83 // pred_check
          %p697 = pneg %p118
        $region94: #{point_transformer_classif.10} parent=83 // pred_check_branch
          %699 = sbr.rel (%p697) target = $region96
        $region95: #{point_transformer_classif.10} parent=83 // pred_region
          %700 = dma.done %s693, 128
        $region96: #{point_transformer_classif.10} parent=83 // pred_fallthru
          _
        %s701 = sand.u32 %s45, 1
        %s702 = scalar_lea.sflag [#allocation9], %s701
        %s703 = sand.u32 %s131, 1
        %s704 = smul.addr %s703, 8
        %s705 = scalar_lea.vmem [#allocation8], %s704
        // Predicated region
        $region97: #{point_transformer_classif.10} parent=83 // pred_check
          %p706 = pneg %p144
        $region98: #{point_transformer_classif.10} parent=83 // pred_check_branch
          %708 = sbr.rel (%p706) target = $region100
        $region99: #{point_transformer_classif.10} parent=83 // pred_region
          %709 = dma.done %s702, 128
        $region100: #{point_transformer_classif.10} parent=83 // pred_fallthru
          _
        // Predicated region
        $region101: #{point_transformer_classif.10} parent=83 // pred_check
          %p710 = pneg %p165
        $region102: #{point_transformer_classif.10} parent=83 // pred_check_branch
          %712 = sbr.rel (%p710) target = $region104
        $region103: #{point_transformer_classif.10} parent=83 // pred_region
          %713 = dma.done [#allocation9], 1024
        $region104: #{point_transformer_classif.10} parent=83 // pred_fallthru
          _
        // Predicated region
        $region105: #{point_transformer_classif.10} parent=83 // pred_check
          %p714 = pneg %p186
        $region106: #{point_transformer_classif.10} parent=83 // pred_check_branch
          %716 = sbr.rel (%p714) target = $region108
        $region107: #{point_transformer_classif.10} parent=83 // pred_region
          %717 = dma.done [#allocation12], 16
        $region108: #{point_transformer_classif.10} parent=83 // pred_fallthru
          _
        // Predicated region
        $region109: #{point_transformer_classif.10} parent=83 // pred_check
          %p718 = pneg %p207
        $region110: #{point_transformer_classif.10} parent=83 // pred_check_branch
          %720 = sbr.rel (%p718) target = $region112
        $region111: #{point_transformer_classif.10} parent=83 // pred_region
          %721 = dma.done [#allocation12], 256
        $region112: #{point_transformer_classif.10} parent=83 // pred_fallthru
          _
        // Predicated region
        $region113: #{point_transformer_classif.10} parent=83 // pred_check
          %p722 = pneg %p228
        $region114: #{point_transformer_classif.10} parent=83 // pred_check_branch
          %724 = sbr.rel (%p722) target = $region116
        $region115: #{point_transformer_classif.10} parent=83 // pred_region
          %725 = dma.done [#allocation15], 16
        $region116: #{point_transformer_classif.10} parent=83 // pred_fallthru
          _
        // Predicated region
        $region117: #{point_transformer_classif.10} parent=83 // pred_check
          %p726 = pneg %p249
        $region118: #{point_transformer_classif.10} parent=83 // pred_check_branch
          %728 = sbr.rel (%p726) target = $region120
        $region119: #{point_transformer_classif.10} parent=83 // pred_region
          %729 = dma.done [#allocation15], 512
        $region120: #{point_transformer_classif.10} parent=83 // pred_fallthru
          _
        // Predicated region
        $region121: #{point_transformer_classif.10} parent=83 // pred_check
          %p730 = pneg %p270
        $region122: #{point_transformer_classif.10} parent=83 // pred_check_branch
          %732 = sbr.rel (%p730) target = $region124
        $region123: #{point_transformer_classif.10} parent=83 // pred_region
          %733 = dma.done [#allocation18], 16
        $region124: #{point_transformer_classif.10} parent=83 // pred_fallthru
          _
        // Predicated region
        $region125: #{point_transformer_classif.10} parent=83 // pred_check
          %p734 = pneg %p291
        $region126: #{point_transformer_classif.10} parent=83 // pred_check_branch
          %736 = sbr.rel (%p734) target = $region128
        $region127: #{point_transformer_classif.10} parent=83 // pred_region
          %737 = dma.done [#allocation18], 512
        $region128: #{point_transformer_classif.10} parent=83 // pred_fallthru
          _
        // Predicated region
        $region129: #{point_transformer_classif.10} parent=83 // pred_check
          %p738 = pneg %p312
        $region130: #{point_transformer_classif.10} parent=83 // pred_check_branch
          %740 = sbr.rel (%p738) target = $region132
        $region131: #{point_transformer_classif.10} parent=83 // pred_region
          %741 = dma.done [#allocation21], 16
        $region132: #{point_transformer_classif.10} parent=83 // pred_fallthru
          _
        // Predicated region
        $region133: #{point_transformer_classif.10} parent=83 // pred_check
          %p742 = pneg %p333
        $region134: #{point_transformer_classif.10} parent=83 // pred_check_branch
          %744 = sbr.rel (%p742) target = $region136
        $region135: #{point_transformer_classif.10} parent=83 // pred_region
          %745 = dma.done [#allocation21], 512
        $region136: #{point_transformer_classif.10} parent=83 // pred_fallthru
          _
        // Predicated region
        $region137: #{point_transformer_classif.10} parent=83 // pred_check
          %p746 = pneg %p354
        $region138: #{point_transformer_classif.10} parent=83 // pred_check_branch
          %748 = sbr.rel (%p746) target = $region140
        $region139: #{point_transformer_classif.10} parent=83 // pred_region
          %749 = dma.done [#allocation24], 16
        $region140: #{point_transformer_classif.10} parent=83 // pred_fallthru
          _
        // Predicated region
        $region141: #{point_transformer_classif.10} parent=83 // pred_check
          %p750 = pneg %p375
        $region142: #{point_transformer_classif.10} parent=83 // pred_check_branch
          %752 = sbr.rel (%p750) target = $region144
        $region143: #{point_transformer_classif.10} parent=83 // pred_region
          %753 = dma.done [#allocation24], 128
        $region144: #{point_transformer_classif.10} parent=83 // pred_fallthru
          _
        // Predicated region
        $region145: #{point_transformer_classif.10} parent=83 // pred_check
          %p754 = pneg %p396
        $region146: #{point_transformer_classif.10} parent=83 // pred_check_branch
          %756 = sbr.rel (%p754) target = $region148
        $region147: #{point_transformer_classif.10} parent=83 // pred_region
          %757 = dma.done [#allocation27], 16
        $region148: #{point_transformer_classif.10} parent=83 // pred_fallthru
          _
        %s758 = sand.u32 %s53, 1
        %s759 = scalar_lea.sflag [#allocation3], %s758
        %s760 = sand.u32 %s53, 1
        %s761 = smul.addr %s760, 16
        %s762 = scalar_lea.vmem [#allocation2], %s761
        %p763 = pneg %p66
        %p764 = pneg %p63
        %s765 = sand.u32 %s45, 1
        %s766 = scalar_lea.sflag [#allocation6], %s765
        %s767 = sand.u32 %s79, 1
        %s768 = smul.addr %s767, 8
        %s769 = scalar_lea.vmem [#allocation5], %s768
        %p770 = pneg %p92
        %p771 = pneg %p89
        %s772 = sand.u32 %s45, 1
        %s773 = scalar_lea.sflag [#allocation6], %s772
        %s774 = sand.u32 %s105, 1
        %s775 = smul.addr %s774, 8
        %s776 = scalar_lea.vmem [#allocation7], %s775
        %p777 = pneg %p118
        %p778 = pneg %p115
        %s779 = sand.u32 %s45, 1
        %s780 = scalar_lea.sflag [#allocation9], %s779
        %s781 = sand.u32 %s131, 1
        %s782 = smul.addr %s781, 8
        %s783 = scalar_lea.vmem [#allocation8], %s782
        %p784 = pneg %p144
        %p785 = pneg %p141
        %p786 = pneg %p165
        %p787 = pneg %p162
        %p788 = pneg %p186
        %p789 = pneg %p183
        %p790 = pneg %p207
        %p791 = pneg %p204
        %p792 = pneg %p228
        %p793 = pneg %p225
        %p794 = pneg %p249
        %p795 = pneg %p246
        %p796 = pneg %p270
        %p797 = pneg %p267
        %p798 = pneg %p291
        %p799 = pneg %p288
        %p800 = pneg %p312
        %p801 = pneg %p309
        %p802 = pneg %p333
        %p803 = pneg %p330
        %p804 = pneg %p354
        %p805 = pneg %p351
        %p806 = pneg %p375
        %p807 = pneg %p372
        %p808 = pneg %p396
        %p809 = pneg %p393
        %p810 = pneg %p422
        %p811 = pneg %p419
        %s812 = sand.u32 %s409, 1
        %s813 = scalar_lea.sflag [#allocation4], %s812
        %s814 = sand.u32 %s409, 1
        %s815 = smul.addr %s814, 16
        %s816 = scalar_lea.vmem [#allocation28], %s815
        %s817 = smul.u32 2, %s45
        %s818 = smul.u32 2, %s45
        %s819 = smul.u32 2, %s45
        %s820 = smul.u32 2, %s45
        %s821 = smul.u32 2, %s45
        %v822 = vld [vmem:[%s678] sm:$0xff]
        %v823 = vld [vmem:[%s678 + $0x8] sm:$0xff]
        %v824 = vld [vmem:[#allocation10] sm:$0xff]
        %v825 = vld [vmem:[#allocation10 + $0x8] sm:$0xff]
        %v826 = vld [vmem:[#allocation10 + $0x10] sm:$0xff]
        %v827 = vld [vmem:[#allocation10 + $0x18] sm:$0xff]
        %v828 = vld [vmem:[#allocation10 + $0x20] sm:$0xff]
        %v829 = vld [vmem:[#allocation10 + $0x28] sm:$0xff]
        %v830 = vld [vmem:[#allocation10 + $0x30] sm:$0xff]
        %v831 = vld [vmem:[#allocation10 + $0x38] sm:$0xff]
        %v832 = vld [vmem:[#allocation11] sm:$0x1]
        %v834 = vlaneseq
        %v835 = vshrl.u32 %v834, 7
        %v836 = vsub.s32 0, %v835
        %v837 = vrot.slane %v832, %v836
        %vm839 = vcmask 523264
        %v841 = vsel %vm839, %v822, 0
        %v844 = vsel %vm839, %v823, 0
        %846 = vmatprep.subr.mxu0 0.0
        %847 = vmatpush1.msra.mxu0 %v824
        %848 = vmatprep.subr.mxu0 0.0
        %849 = vmatpush1.msra.mxu0 %v825
        %850 = vmatprep.subr.mxu0 0.0
        %851 = vmatpush1.msra.mxu0 %v826
        %852 = vmatprep.subr.mxu0 0.0
        %853 = vmatpush1.msra.mxu0 %v827
        %854 = vmatprep.subr.mxu0 0.0
        %855 = vmatpush1.msra.mxu0 %v828
        %856 = vmatprep.subr.mxu0 0.0
        %857 = vmatpush1.msra.mxu0 %v829
        %858 = vmatprep.subr.mxu0 0.0
        %859 = vmatpush1.msra.mxu0 %v830
        %860 = vmatprep.subr.mxu0 0.0
        %861 = vmatpush1.msra.mxu0 %v831
        %862 = vmatprep.subr.mxu0 0.0
        %863 = vmatpush1.msra.mxu0 0.0
        %864 = vmatprep.subr.mxu0 0.0
        %865 = vmatpush1.msra.mxu0 0.0
        %866 = vmatprep.subr.mxu0 0.0
        %867 = vmatpush1.msra.mxu0 0.0
        %868 = vmatprep.subr.mxu0 0.0
        %869 = vmatpush1.msra.mxu0 0.0
        %870 = vmatprep.subr.mxu0 0.0
        %871 = vmatpush1.msra.mxu0 0.0
        %872 = vmatprep.subr.mxu0 0.0
        %873 = vmatpush1.msra.mxu0 0.0
        %874 = vmatprep.subr.mxu0 0.0
        %875 = vmatpush1.msra.mxu0 0.0
        %876 = vmatprep.subr.mxu0 0.0
        %877 = vmatpush1.msra.mxu0 0.0
        %878 = vmatprep.subr.mxu0 0.0
        %879 = vmatpush1.msra.mxu0 0.0
        %880 = vmatprep.subr.mxu0 0.0
        %881 = vmatpush1.msra.mxu0 0.0
        %882 = vmatprep.subr.mxu0 0.0
        %883 = vmatpush1.msra.mxu0 0.0
        %884 = vmatprep.subr.mxu0 0.0
        %885 = vmatpush1.msra.mxu0 0.0
        %886 = vmatprep.subr.mxu0 0.0
        %887 = vmatpush1.msra.mxu0 0.0
        %888 = vmatprep.subr.mxu0 0.0
        %889 = vmatpush1.msra.mxu0 0.0
        %890 = vmatprep.subr.mxu0 0.0
        %891 = vmatpush1.msra.mxu0 0.0
        %892 = vmatprep.subr.mxu0 0.0
        %893 = vmatpush1.msra.mxu0 0.0
        %894 = vmatprep.subr.mxu0 0.0
        %895 = vmatpush1.msra.mxu0 0.0
        %896 = vmatprep.subr.mxu0 0.0
        %897 = vmatpush1.msra.mxu0 0.0
        %898 = vmatprep.subr.mxu0 0.0
        %899 = vmatpush1.msra.mxu0 0.0
        %900 = vmatprep.subr.mxu0 0.0
        %901 = vmatpush1.msra.mxu0 0.0
        %902 = vmatprep.subr.mxu0 0.0
        %903 = vmatpush1.msra.mxu0 0.0
        %904 = vmatprep.subr.mxu0 0.0
        %905 = vmatpush1.msra.mxu0 0.0
        %906 = vmatprep.subr.mxu0 0.0
        %907 = vmatpush1.msra.mxu0 0.0
        %908 = vmatprep.subr.mxu0 0.0
        %909 = vmatpush1.msra.mxu0 0.0
        %910 = vmatprep.mubr.f32.mxu0 0.0
        %911 = vmatmul.mubr.f32.gmra.mrb[0].mxu0 %v841
        %v912 = vpop.f32.mrb[0].mxu0
        %v913 = vadd.f32 %v837, %v912
        %v914 = vpop.f32.mrb[0].mxu0
        %915 = vmatprep.mubr.f32.mxu0 0.0
        %916 = vmatmul.mubr.f32.gmra.mrb[0].mxu0 %v844
        %v917 = vpop.f32.mrb[0].mxu0
        %v918 = vadd.f32 %v837, %v917
        %v919 = vpop.f32.mrb[0].mxu0
        %920 = vdwg.mxu0
        %923 = vrot.lane.b32.xlu0 %v913, 8
        %v924 = vpop.permute.xlu0 %923
        %925 = vrot.lane.b32.xlu0 %v918, 8
        %v926 = vpop.permute.xlu0 %925
        %929 = vrot.lane.b32.xlu0 %v913, 16
        %v930 = vpop.permute.xlu0 %929
        %931 = vrot.lane.b32.xlu0 %v918, 16
        %v932 = vpop.permute.xlu0 %931
        %935 = vrot.lane.b32.xlu0 %v913, 24
        %v936 = vpop.permute.xlu0 %935
        %937 = vrot.lane.b32.xlu0 %v918, 24
        %v938 = vpop.permute.xlu0 %937
        %vm941 = vcmask 64512
        %v942 = vsel %vm941, %v913, %v924
        %v943 = vsel %vm941, %v918, %v926
        %vm944 = vcmask 130048
        %v945 = vsel %vm944, %v942, %v930
        %v946 = vsel %vm944, %v943, %v932
        %vm947 = vcmask 195584
        %v948 = vsel %vm947, %v945, %v936
        %v949 = vsel %vm947, %v946, %v938
        %v950 = vld [vmem:[%s705] sm:$0xf]
        %v951 = vld [vmem:[%s705 + $0x4] sm:$0xf]
        %v952 = vunpack.c.l.bf16 %v950
        %v953 = vunpack.c.l.bf16 %v951
        %v954 = vld [vmem:[#allocation13] sm:$0xff]
        %v955 = vld [vmem:[#allocation13 + $0x8] sm:$0xf]
        %v956 = vld [vmem:[#allocation14] sm:$0x1]
        %v958 = vlaneseq
        %v959 = vshrl.u32 %v958, 7
        %v960 = vsub.s32 0, %v959
        %v961 = vrot.slane %v956, %v960
        %vm963 = vcmask 97280
        %v965 = vsel %vm963, %v952, 0
        %v968 = vsel %vm963, %v953, 0
        %vm970 = vcmask 1043456
        %v972 = vsel %vm970, %v955, 0
        %974 = vmatprep.subr.mxu0 0.0
        %975 = vmatpush1.msra.mxu0 %v954
        %976 = vmatprep.subr.mxu0 0.0
        %977 = vmatpush1.msra.mxu0 %v972
        %978 = vmatprep.subr.mxu0 0.0
        %979 = vmatpush1.msra.mxu0 0.0
        %980 = vmatprep.subr.mxu0 0.0
        %981 = vmatpush1.msra.mxu0 0.0
        %982 = vmatprep.subr.mxu0 0.0
        %983 = vmatpush1.msra.mxu0 0.0
        %984 = vmatprep.subr.mxu0 0.0
        %985 = vmatpush1.msra.mxu0 0.0
        %986 = vmatprep.subr.mxu0 0.0
        %987 = vmatpush1.msra.mxu0 0.0
        %988 = vmatprep.subr.mxu0 0.0
        %989 = vmatpush1.msra.mxu0 0.0
        %990 = vmatprep.subr.mxu0 0.0
        %991 = vmatpush1.msra.mxu0 0.0
        %992 = vmatprep.subr.mxu0 0.0
        %993 = vmatpush1.msra.mxu0 0.0
        %994 = vmatprep.subr.mxu0 0.0
        %995 = vmatpush1.msra.mxu0 0.0
        %996 = vmatprep.subr.mxu0 0.0
        %997 = vmatpush1.msra.mxu0 0.0
        %998 = vmatprep.subr.mxu0 0.0
        %999 = vmatpush1.msra.mxu0 0.0
        %1000 = vmatprep.subr.mxu0 0.0
        %1001 = vmatpush1.msra.mxu0 0.0
        %1002 = vmatprep.subr.mxu0 0.0
        %1003 = vmatpush1.msra.mxu0 0.0
        %1004 = vmatprep.subr.mxu0 0.0
        %1005 = vmatpush1.msra.mxu0 0.0
        %1006 = vmatprep.subr.mxu0 0.0
        %1007 = vmatpush1.msra.mxu0 0.0
        %1008 = vmatprep.subr.mxu0 0.0
        %1009 = vmatpush1.msra.mxu0 0.0
        %1010 = vmatprep.subr.mxu0 0.0
        %1011 = vmatpush1.msra.mxu0 0.0
        %1012 = vmatprep.subr.mxu0 0.0
        %1013 = vmatpush1.msra.mxu0 0.0
        %1014 = vmatprep.subr.mxu0 0.0
        %1015 = vmatpush1.msra.mxu0 0.0
        %1016 = vmatprep.subr.mxu0 0.0
        %1017 = vmatpush1.msra.mxu0 0.0
        %1018 = vmatprep.subr.mxu0 0.0
        %1019 = vmatpush1.msra.mxu0 0.0
        %1020 = vmatprep.subr.mxu0 0.0
        %1021 = vmatpush1.msra.mxu0 0.0
        %1022 = vmatprep.subr.mxu0 0.0
        %1023 = vmatpush1.msra.mxu0 0.0
        %1024 = vmatprep.subr.mxu0 0.0
        %1025 = vmatpush1.msra.mxu0 0.0
        %1026 = vmatprep.subr.mxu0 0.0
        %1027 = vmatpush1.msra.mxu0 0.0
        %1028 = vmatprep.subr.mxu0 0.0
        %1029 = vmatpush1.msra.mxu0 0.0
        %1030 = vmatprep.subr.mxu0 0.0
        %1031 = vmatpush1.msra.mxu0 0.0
        %1032 = vmatprep.subr.mxu0 0.0
        %1033 = vmatpush1.msra.mxu0 0.0
        %1034 = vmatprep.subr.mxu0 0.0
        %1035 = vmatpush1.msra.mxu0 0.0
        %1036 = vmatprep.subr.mxu0 0.0
        %1037 = vmatpush1.msra.mxu0 0.0
        %1038 = vmatprep.mubr.f32.mxu0 0.0
        %1039 = vmatmul.mubr.f32.gmra.mrb[0].mxu0 %v965
        %v1040 = vpop.f32.mrb[0].mxu0
        %v1041 = vadd.f32 %v961, %v1040
        %v1042 = vpop.f32.mrb[0].mxu0
        %1043 = vmatprep.mubr.f32.mxu0 0.0
        %1044 = vmatmul.mubr.f32.gmra.mrb[0].mxu0 %v968
        %v1045 = vpop.f32.mrb[0].mxu0
        %v1046 = vadd.f32 %v961, %v1045
        %v1047 = vpop.f32.mrb[0].mxu0
        %1048 = vdwg.mxu0
        %v1049 = vmax.f32 %v1041, 0.0
        %v1050 = vmax.f32 %v1046, 0.0
        %v1051 = vld [vmem:[#allocation16] sm:$0xff]
        %v1052 = vld [vmem:[#allocation16 + $0x8] sm:$0xff]
        %v1053 = vld [vmem:[#allocation16 + $0x10] sm:$0xff]
        %v1054 = vld [vmem:[#allocation16 + $0x18] sm:$0xff]
        %v1055 = vld [vmem:[#allocation17] sm:$0x1]
        %v1057 = vlaneseq
        %v1058 = vshrl.u32 %v1057, 7
        %v1059 = vsub.s32 0, %v1058
        %v1060 = vrot.slane %v1055, %v1059
        %vm1062 = vcmask 261120
        %v1064 = vsel %vm1062, %v1049, 0
        %v1067 = vsel %vm1062, %v1050, 0
        %1069 = vmatprep.subr.mxu0 0.0
        %1070 = vmatpush1.msra.mxu0 %v1051
        %1071 = vmatprep.subr.mxu0 0.0
        %1072 = vmatpush1.msra.mxu0 %v1052
        %1073 = vmatprep.subr.mxu0 0.0
        %1074 = vmatpush1.msra.mxu0 %v1053
        %1075 = vmatprep.subr.mxu0 0.0
        %1076 = vmatpush1.msra.mxu0 %v1054
        %1077 = vmatprep.subr.mxu0 0.0
        %1078 = vmatpush1.msra.mxu0 0.0
        %1079 = vmatprep.subr.mxu0 0.0
        %1080 = vmatpush1.msra.mxu0 0.0
        %1081 = vmatprep.subr.mxu0 0.0
        %1082 = vmatpush1.msra.mxu0 0.0
        %1083 = vmatprep.subr.mxu0 0.0
        %1084 = vmatpush1.msra.mxu0 0.0
        %1085 = vmatprep.subr.mxu0 0.0
        %1086 = vmatpush1.msra.mxu0 0.0
        %1087 = vmatprep.subr.mxu0 0.0
        %1088 = vmatpush1.msra.mxu0 0.0
        %1089 = vmatprep.subr.mxu0 0.0
        %1090 = vmatpush1.msra.mxu0 0.0
        %1091 = vmatprep.subr.mxu0 0.0
        %1092 = vmatpush1.msra.mxu0 0.0
        %1093 = vmatprep.subr.mxu0 0.0
        %1094 = vmatpush1.msra.mxu0 0.0
        %1095 = vmatprep.subr.mxu0 0.0
        %1096 = vmatpush1.msra.mxu0 0.0
        %1097 = vmatprep.subr.mxu0 0.0
        %1098 = vmatpush1.msra.mxu0 0.0
        %1099 = vmatprep.subr.mxu0 0.0
        %1100 = vmatpush1.msra.mxu0 0.0
        %1101 = vmatprep.subr.mxu0 0.0
        %1102 = vmatpush1.msra.mxu0 0.0
        %1103 = vmatprep.subr.mxu0 0.0
        %1104 = vmatpush1.msra.mxu0 0.0
        %1105 = vmatprep.subr.mxu0 0.0
        %1106 = vmatpush1.msra.mxu0 0.0
        %1107 = vmatprep.subr.mxu0 0.0
        %1108 = vmatpush1.msra.mxu0 0.0
        %1109 = vmatprep.subr.mxu0 0.0
        %1110 = vmatpush1.msra.mxu0 0.0
        %1111 = vmatprep.subr.mxu0 0.0
        %1112 = vmatpush1.msra.mxu0 0.0
        %1113 = vmatprep.subr.mxu0 0.0
        %1114 = vmatpush1.msra.mxu0 0.0
        %1115 = vmatprep.subr.mxu0 0.0
        %1116 = vmatpush1.msra.mxu0 0.0
        %1117 = vmatprep.subr.mxu0 0.0
        %1118 = vmatpush1.msra.mxu0 0.0
        %1119 = vmatprep.subr.mxu0 0.0
        %1120 = vmatpush1.msra.mxu0 0.0
        %1121 = vmatprep.subr.mxu0 0.0
        %1122 = vmatpush1.msra.mxu0 0.0
        %1123 = vmatprep.subr.mxu0 0.0
        %1124 = vmatpush1.msra.mxu0 0.0
        %1125 = vmatprep.subr.mxu0 0.0
        %1126 = vmatpush1.msra.mxu0 0.0
        %1127 = vmatprep.subr.mxu0 0.0
        %1128 = vmatpush1.msra.mxu0 0.0
        %1129 = vmatprep.subr.mxu0 0.0
        %1130 = vmatpush1.msra.mxu0 0.0
        %1131 = vmatprep.subr.mxu0 0.0
        %1132 = vmatpush1.msra.mxu0 0.0
        %1133 = vmatprep.mubr.f32.mxu0 0.0
        %1134 = vmatmul.mubr.f32.gmra.mrb[0].mxu0 %v1064
        %v1135 = vpop.f32.mrb[0].mxu0
        %v1136 = vadd.f32 %v1060, %v1135
        %v1137 = vpop.f32.mrb[0].mxu0
        %1138 = vmatprep.mubr.f32.mxu0 0.0
        %1139 = vmatmul.mubr.f32.gmra.mrb[0].mxu0 %v1067
        %v1140 = vpop.f32.mrb[0].mxu0
        %v1141 = vadd.f32 %v1060, %v1140
        %v1142 = vpop.f32.mrb[0].mxu0
        %1143 = vdwg.mxu0
        %v1144 = vld [vmem:[%s687] sm:$0xf]
        %v1145 = vld [vmem:[%s687 + $0x4] sm:$0xf]
        %v1146 = vunpack.c.l.bf16 %v1144
        %v1147 = vunpack.c.l.bf16 %v1145
        %v1148 = vsub.f32 %v948, %v1146
        %v1149 = vsub.f32 %v949, %v1147
        %v1150 = vadd.f32 %v1148, %v1136
        %v1151 = vadd.f32 %v1149, %v1141
        %v1152 = vld [vmem:[#allocation19] sm:$0xff]
        %v1153 = vld [vmem:[#allocation19 + $0x8] sm:$0xff]
        %v1154 = vld [vmem:[#allocation19 + $0x10] sm:$0xff]
        %v1155 = vld [vmem:[#allocation19 + $0x18] sm:$0xff]
        %v1156 = vld [vmem:[#allocation20] sm:$0x1]
        %v1158 = vlaneseq
        %v1159 = vshrl.u32 %v1158, 7
        %v1160 = vsub.s32 0, %v1159
        %v1161 = vrot.slane %v1156, %v1160
        %v1164 = vsel %vm1062, %v1150, 0
        %v1167 = vsel %vm1062, %v1151, 0
        %1169 = vmatprep.subr.mxu0 0.0
        %1170 = vmatpush1.msra.mxu0 %v1152
        %1171 = vmatprep.subr.mxu0 0.0
        %1172 = vmatpush1.msra.mxu0 %v1153
        %1173 = vmatprep.subr.mxu0 0.0
        %1174 = vmatpush1.msra.mxu0 %v1154
        %1175 = vmatprep.subr.mxu0 0.0
        %1176 = vmatpush1.msra.mxu0 %v1155
        %1177 = vmatprep.subr.mxu0 0.0
        %1178 = vmatpush1.msra.mxu0 0.0
        %1179 = vmatprep.subr.mxu0 0.0
        %1180 = vmatpush1.msra.mxu0 0.0
        %1181 = vmatprep.subr.mxu0 0.0
        %1182 = vmatpush1.msra.mxu0 0.0
        %1183 = vmatprep.subr.mxu0 0.0
        %1184 = vmatpush1.msra.mxu0 0.0
        %1185 = vmatprep.subr.mxu0 0.0
        %1186 = vmatpush1.msra.mxu0 0.0
        %1187 = vmatprep.subr.mxu0 0.0
        %1188 = vmatpush1.msra.mxu0 0.0
        %1189 = vmatprep.subr.mxu0 0.0
        %1190 = vmatpush1.msra.mxu0 0.0
        %1191 = vmatprep.subr.mxu0 0.0
        %1192 = vmatpush1.msra.mxu0 0.0
        %1193 = vmatprep.subr.mxu0 0.0
        %1194 = vmatpush1.msra.mxu0 0.0
        %1195 = vmatprep.subr.mxu0 0.0
        %1196 = vmatpush1.msra.mxu0 0.0
        %1197 = vmatprep.subr.mxu0 0.0
        %1198 = vmatpush1.msra.mxu0 0.0
        %1199 = vmatprep.subr.mxu0 0.0
        %1200 = vmatpush1.msra.mxu0 0.0
        %1201 = vmatprep.subr.mxu0 0.0
        %1202 = vmatpush1.msra.mxu0 0.0
        %1203 = vmatprep.subr.mxu0 0.0
        %1204 = vmatpush1.msra.mxu0 0.0
        %1205 = vmatprep.subr.mxu0 0.0
        %1206 = vmatpush1.msra.mxu0 0.0
        %1207 = vmatprep.subr.mxu0 0.0
        %1208 = vmatpush1.msra.mxu0 0.0
        %1209 = vmatprep.subr.mxu0 0.0
        %1210 = vmatpush1.msra.mxu0 0.0
        %1211 = vmatprep.subr.mxu0 0.0
        %1212 = vmatpush1.msra.mxu0 0.0
        %1213 = vmatprep.subr.mxu0 0.0
        %1214 = vmatpush1.msra.mxu0 0.0
        %1215 = vmatprep.subr.mxu0 0.0
        %1216 = vmatpush1.msra.mxu0 0.0
        %1217 = vmatprep.subr.mxu0 0.0
        %1218 = vmatpush1.msra.mxu0 0.0
        %1219 = vmatprep.subr.mxu0 0.0
        %1220 = vmatpush1.msra.mxu0 0.0
        %1221 = vmatprep.subr.mxu0 0.0
        %1222 = vmatpush1.msra.mxu0 0.0
        %1223 = vmatprep.subr.mxu0 0.0
        %1224 = vmatpush1.msra.mxu0 0.0
        %1225 = vmatprep.subr.mxu0 0.0
        %1226 = vmatpush1.msra.mxu0 0.0
        %1227 = vmatprep.subr.mxu0 0.0
        %1228 = vmatpush1.msra.mxu0 0.0
        %1229 = vmatprep.subr.mxu0 0.0
        %1230 = vmatpush1.msra.mxu0 0.0
        %1231 = vmatprep.subr.mxu0 0.0
        %1232 = vmatpush1.msra.mxu0 0.0
        %1233 = vmatprep.mubr.f32.mxu0 0.0
        %1234 = vmatmul.mubr.f32.gmra.mrb[0].mxu0 %v1164
        %v1235 = vpop.f32.mrb[0].mxu0
        %v1236 = vadd.f32 %v1161, %v1235
        %v1237 = vpop.f32.mrb[0].mxu0
        %1238 = vmatprep.mubr.f32.mxu0 0.0
        %1239 = vmatmul.mubr.f32.gmra.mrb[0].mxu0 %v1167
        %v1240 = vpop.f32.mrb[0].mxu0
        %v1241 = vadd.f32 %v1161, %v1240
        %v1242 = vpop.f32.mrb[0].mxu0
        %1243 = vdwg.mxu0
        %v1244 = vmax.f32 %v1236, 0.0
        %v1245 = vmax.f32 %v1241, 0.0
        %v1246 = vld [vmem:[#allocation22] sm:$0xff]
        %v1247 = vld [vmem:[#allocation22 + $0x8] sm:$0xff]
        %v1248 = vld [vmem:[#allocation22 + $0x10] sm:$0xff]
        %v1249 = vld [vmem:[#allocation22 + $0x18] sm:$0xff]
        %v1250 = vld [vmem:[#allocation23] sm:$0x1]
        %v1252 = vlaneseq
        %v1253 = vshrl.u32 %v1252, 7
        %v1254 = vsub.s32 0, %v1253
        %v1255 = vrot.slane %v1250, %v1254
        %v1258 = vsel %vm1062, %v1244, 0
        %v1261 = vsel %vm1062, %v1245, 0
        %1263 = vmatprep.subr.mxu0 0.0
        %1264 = vmatpush1.msra.mxu0 %v1246
        %1265 = vmatprep.subr.mxu0 0.0
        %1266 = vmatpush1.msra.mxu0 %v1247
        %1267 = vmatprep.subr.mxu0 0.0
        %1268 = vmatpush1.msra.mxu0 %v1248
        %1269 = vmatprep.subr.mxu0 0.0
        %1270 = vmatpush1.msra.mxu0 %v1249
        %1271 = vmatprep.subr.mxu0 0.0
        %1272 = vmatpush1.msra.mxu0 0.0
        %1273 = vmatprep.subr.mxu0 0.0
        %1274 = vmatpush1.msra.mxu0 0.0
        %1275 = vmatprep.subr.mxu0 0.0
        %1276 = vmatpush1.msra.mxu0 0.0
        %1277 = vmatprep.subr.mxu0 0.0
        %1278 = vmatpush1.msra.mxu0 0.0
        %1279 = vmatprep.subr.mxu0 0.0
        %1280 = vmatpush1.msra.mxu0 0.0
        %1281 = vmatprep.subr.mxu0 0.0
        %1282 = vmatpush1.msra.mxu0 0.0
        %1283 = vmatprep.subr.mxu0 0.0
        %1284 = vmatpush1.msra.mxu0 0.0
        %1285 = vmatprep.subr.mxu0 0.0
        %1286 = vmatpush1.msra.mxu0 0.0
        %1287 = vmatprep.subr.mxu0 0.0
        %1288 = vmatpush1.msra.mxu0 0.0
        %1289 = vmatprep.subr.mxu0 0.0
        %1290 = vmatpush1.msra.mxu0 0.0
        %1291 = vmatprep.subr.mxu0 0.0
        %1292 = vmatpush1.msra.mxu0 0.0
        %1293 = vmatprep.subr.mxu0 0.0
        %1294 = vmatpush1.msra.mxu0 0.0
        %1295 = vmatprep.subr.mxu0 0.0
        %1296 = vmatpush1.msra.mxu0 0.0
        %1297 = vmatprep.subr.mxu0 0.0
        %1298 = vmatpush1.msra.mxu0 0.0
        %1299 = vmatprep.subr.mxu0 0.0
        %1300 = vmatpush1.msra.mxu0 0.0
        %1301 = vmatprep.subr.mxu0 0.0
        %1302 = vmatpush1.msra.mxu0 0.0
        %1303 = vmatprep.subr.mxu0 0.0
        %1304 = vmatpush1.msra.mxu0 0.0
        %1305 = vmatprep.subr.mxu0 0.0
        %1306 = vmatpush1.msra.mxu0 0.0
        %1307 = vmatprep.subr.mxu0 0.0
        %1308 = vmatpush1.msra.mxu0 0.0
        %1309 = vmatprep.subr.mxu0 0.0
        %1310 = vmatpush1.msra.mxu0 0.0
        %1311 = vmatprep.subr.mxu0 0.0
        %1312 = vmatpush1.msra.mxu0 0.0
        %1313 = vmatprep.subr.mxu0 0.0
        %1314 = vmatpush1.msra.mxu0 0.0
        %1315 = vmatprep.subr.mxu0 0.0
        %1316 = vmatpush1.msra.mxu0 0.0
        %1317 = vmatprep.subr.mxu0 0.0
        %1318 = vmatpush1.msra.mxu0 0.0
        %1319 = vmatprep.subr.mxu0 0.0
        %1320 = vmatpush1.msra.mxu0 0.0
        %1321 = vmatprep.subr.mxu0 0.0
        %1322 = vmatpush1.msra.mxu0 0.0
        %1323 = vmatprep.subr.mxu0 0.0
        %1324 = vmatpush1.msra.mxu0 0.0
        %1325 = vmatprep.subr.mxu0 0.0
        %1326 = vmatpush1.msra.mxu0 0.0
        %1327 = vmatprep.mubr.f32.mxu0 0.0
        %1328 = vmatmul.mubr.f32.gmra.mrb[0].mxu0 %v1258
        %v1329 = vpop.f32.mrb[0].mxu0
        %v1330 = vadd.f32 %v1255, %v1329
        %v1331 = vpop.f32.mrb[0].mxu0
        %1332 = vmatprep.mubr.f32.mxu0 0.0
        %1333 = vmatmul.mubr.f32.gmra.mrb[0].mxu0 %v1261
        %v1334 = vpop.f32.mrb[0].mxu0
        %v1335 = vadd.f32 %v1255, %v1334
        %v1336 = vpop.f32.mrb[0].mxu0
        %1337 = vdwg.mxu0
        %v1338 = vmul.f32 %v1330, 0.35355338
        %v1339 = vmul.f32 %v1335, 0.35355338
        %v1340 = vld [vmem:[%s696] sm:$0xf]
        %v1341 = vld [vmem:[%s696 + $0x4] sm:$0xf]
        %v1342 = vunpack.c.l.bf16 %v1340
        %v1343 = vunpack.c.l.bf16 %v1341
        %v1344 = vadd.f32 %v1342, %v1136
        %v1345 = vadd.f32 %v1343, %v1141
        %1348 = vrot.lane.b32.xlu0 %v1338, 120
        %v1349 = vpop.permute.xlu0 %1348
        %1350 = vrot.lane.b32.xlu0 %v1339, 120
        %v1351 = vpop.permute.xlu0 %1350
        %v1354 = vmax.f32 %v1338, %v1349
        %v1355 = vmax.f32 %v1339, %v1351
        %1356 = vrot.lane.b32.xlu0 %v1338, 112
        %v1357 = vpop.permute.xlu0 %1356
        %1358 = vrot.lane.b32.xlu0 %v1339, 112
        %v1359 = vpop.permute.xlu0 %1358
        %v1362 = vmax.f32 %v1354, %v1357
        %v1363 = vmax.f32 %v1355, %v1359
        %1364 = vrot.lane.b32.xlu0 %v1338, 104
        %v1365 = vpop.permute.xlu0 %1364
        %1366 = vrot.lane.b32.xlu0 %v1339, 104
        %v1367 = vpop.permute.xlu0 %1366
        %v1370 = vmax.f32 %v1362, %v1365
        %v1371 = vmax.f32 %v1363, %v1367
        %v1372 = vsub.f32 %v1338, %v1370
        %v1373 = vsub.f32 %v1339, %v1371
        %v1374 = vmul.f32 %v1372, 1.442695
        %v1375 = vpow.pop %v1374
        %v1376 = vmul.f32 %v1373, 1.442695
        %v1377 = vpow.pop %v1376
        %v1378 = vmul.f32 %v1375, %v1344
        %v1379 = vmul.f32 %v1377, %v1345
        %1382 = vrot.lane.b32.xlu0 %v1370, 8
        %v1383 = vpop.permute.xlu0 %1382
        %1384 = vrot.lane.b32.xlu0 %v1371, 8
        %v1385 = vpop.permute.xlu0 %1384
        %v1388 = vsub.f32 %v1338, %v1383
        %v1389 = vsub.f32 %v1339, %v1385
        %v1390 = vmul.f32 %v1388, 1.442695
        %v1391 = vpow.pop %v1390
        %v1392 = vmul.f32 %v1389, 1.442695
        %v1393 = vpow.pop %v1392
        %1396 = vrot.lane.b32.xlu0 %v1391, 120
        %v1397 = vpop.permute.xlu0 %1396
        %1398 = vrot.lane.b32.xlu0 %v1393, 120
        %v1399 = vpop.permute.xlu0 %1398
        %v1402 = vadd.f32 %v1375, %v1397
        %v1403 = vadd.f32 %v1377, %v1399
        %v1404 = vmul.f32 %v1391, %v1344
        %v1405 = vmul.f32 %v1393, %v1345
        %1408 = vrot.lane.b32.xlu0 %v1404, 120
        %v1409 = vpop.permute.xlu0 %1408
        %1410 = vrot.lane.b32.xlu0 %v1405, 120
        %v1411 = vpop.permute.xlu0 %1410
        %v1414 = vadd.f32 %v1378, %v1409
        %v1415 = vadd.f32 %v1379, %v1411
        %1416 = vrot.lane.b32.xlu0 %v1370, 16
        %v1417 = vpop.permute.xlu0 %1416
        %1418 = vrot.lane.b32.xlu0 %v1371, 16
        %v1419 = vpop.permute.xlu0 %1418
        %v1422 = vsub.f32 %v1338, %v1417
        %v1423 = vsub.f32 %v1339, %v1419
        %v1424 = vmul.f32 %v1422, 1.442695
        %v1425 = vpow.pop %v1424
        %v1426 = vmul.f32 %v1423, 1.442695
        %v1427 = vpow.pop %v1426
        %1430 = vrot.lane.b32.xlu0 %v1425, 112
        %v1431 = vpop.permute.xlu0 %1430
        %1432 = vrot.lane.b32.xlu0 %v1427, 112
        %v1433 = vpop.permute.xlu0 %1432
        %v1436 = vadd.f32 %v1402, %v1431
        %v1437 = vadd.f32 %v1403, %v1433
        %v1438 = vmul.f32 %v1425, %v1344
        %v1439 = vmul.f32 %v1427, %v1345
        %1442 = vrot.lane.b32.xlu0 %v1438, 112
        %v1443 = vpop.permute.xlu0 %1442
        %1444 = vrot.lane.b32.xlu0 %v1439, 112
        %v1445 = vpop.permute.xlu0 %1444
        %v1448 = vadd.f32 %v1414, %v1443
        %v1449 = vadd.f32 %v1415, %v1445
        %1450 = vrot.lane.b32.xlu0 %v1370, 24
        %v1451 = vpop.permute.xlu0 %1450
        %1452 = vrot.lane.b32.xlu0 %v1371, 24
        %v1453 = vpop.permute.xlu0 %1452
        %v1456 = vsub.f32 %v1338, %v1451
        %v1457 = vsub.f32 %v1339, %v1453
        %v1458 = vmul.f32 %v1456, 1.442695
        %v1459 = vpow.pop %v1458
        %v1460 = vmul.f32 %v1457, 1.442695
        %v1461 = vpow.pop %v1460
        %1464 = vrot.lane.b32.xlu0 %v1459, 104
        %v1465 = vpop.permute.xlu0 %1464
        %1466 = vrot.lane.b32.xlu0 %v1461, 104
        %v1467 = vpop.permute.xlu0 %1466
        %v1470 = vadd.f32 %v1436, %v1465
        %v1471 = vadd.f32 %v1437, %v1467
        %v1472 = vmul.f32 %v1459, %v1344
        %v1473 = vmul.f32 %v1461, %v1345
        %1476 = vrot.lane.b32.xlu0 %v1472, 104
        %v1477 = vpop.permute.xlu0 %1476
        %1478 = vrot.lane.b32.xlu0 %v1473, 104
        %v1479 = vpop.permute.xlu0 %1478
        %v1482 = vadd.f32 %v1448, %v1477
        %v1483 = vadd.f32 %v1449, %v1479
        %v1484 = vrcp.pop %v1470
        %v1485 = vrcp.pop %v1471
        %v1486 = vmul.f32 %v1482, %v1484
        %v1487 = vmul.f32 %v1483, %v1485
        %v1488 = vld [vmem:[#allocation25] sm:$0xff]
        %v1489 = vld [vmem:[#allocation26] sm:$0x1]
        %v1491 = vlaneseq
        %v1492 = vshrl.u32 %v1491, 7
        %v1493 = vsub.s32 0, %v1492
        %v1494 = vrot.slane %v1489, %v1493
        %v1497 = vsel %vm941, %v1486, 0
        %v1500 = vsel %vm941, %v1487, 0
        %1502 = vmatprep.subr.mxu0 0.0
        %1503 = vmatpush1.msra.mxu0 %v1488
        %1504 = vmatprep.subr.mxu0 0.0
        %1505 = vmatpush1.msra.mxu0 0.0
        %1506 = vmatprep.subr.mxu0 0.0
        %1507 = vmatpush1.msra.mxu0 0.0
        %1508 = vmatprep.subr.mxu0 0.0
        %1509 = vmatpush1.msra.mxu0 0.0
        %1510 = vmatprep.subr.mxu0 0.0
        %1511 = vmatpush1.msra.mxu0 0.0
        %1512 = vmatprep.subr.mxu0 0.0
        %1513 = vmatpush1.msra.mxu0 0.0
        %1514 = vmatprep.subr.mxu0 0.0
        %1515 = vmatpush1.msra.mxu0 0.0
        %1516 = vmatprep.subr.mxu0 0.0
        %1517 = vmatpush1.msra.mxu0 0.0
        %1518 = vmatprep.subr.mxu0 0.0
        %1519 = vmatpush1.msra.mxu0 0.0
        %1520 = vmatprep.subr.mxu0 0.0
        %1521 = vmatpush1.msra.mxu0 0.0
        %1522 = vmatprep.subr.mxu0 0.0
        %1523 = vmatpush1.msra.mxu0 0.0
        %1524 = vmatprep.subr.mxu0 0.0
        %1525 = vmatpush1.msra.mxu0 0.0
        %1526 = vmatprep.subr.mxu0 0.0
        %1527 = vmatpush1.msra.mxu0 0.0
        %1528 = vmatprep.subr.mxu0 0.0
        %1529 = vmatpush1.msra.mxu0 0.0
        %1530 = vmatprep.subr.mxu0 0.0
        %1531 = vmatpush1.msra.mxu0 0.0
        %1532 = vmatprep.subr.mxu0 0.0
        %1533 = vmatpush1.msra.mxu0 0.0
        %1534 = vmatprep.subr.mxu0 0.0
        %1535 = vmatpush1.msra.mxu0 0.0
        %1536 = vmatprep.subr.mxu0 0.0
        %1537 = vmatpush1.msra.mxu0 0.0
        %1538 = vmatprep.subr.mxu0 0.0
        %1539 = vmatpush1.msra.mxu0 0.0
        %1540 = vmatprep.subr.mxu0 0.0
        %1541 = vmatpush1.msra.mxu0 0.0
        %1542 = vmatprep.subr.mxu0 0.0
        %1543 = vmatpush1.msra.mxu0 0.0
        %1544 = vmatprep.subr.mxu0 0.0
        %1545 = vmatpush1.msra.mxu0 0.0
        %1546 = vmatprep.subr.mxu0 0.0
        %1547 = vmatpush1.msra.mxu0 0.0
        %1548 = vmatprep.subr.mxu0 0.0
        %1549 = vmatpush1.msra.mxu0 0.0
        %1550 = vmatprep.subr.mxu0 0.0
        %1551 = vmatpush1.msra.mxu0 0.0
        %1552 = vmatprep.subr.mxu0 0.0
        %1553 = vmatpush1.msra.mxu0 0.0
        %1554 = vmatprep.subr.mxu0 0.0
        %1555 = vmatpush1.msra.mxu0 0.0
        %1556 = vmatprep.subr.mxu0 0.0
        %1557 = vmatpush1.msra.mxu0 0.0
        %1558 = vmatprep.subr.mxu0 0.0
        %1559 = vmatpush1.msra.mxu0 0.0
        %1560 = vmatprep.subr.mxu0 0.0
        %1561 = vmatpush1.msra.mxu0 0.0
        %1562 = vmatprep.subr.mxu0 0.0
        %1563 = vmatpush1.msra.mxu0 0.0
        %1564 = vmatprep.subr.mxu0 0.0
        %1565 = vmatpush1.msra.mxu0 0.0
        %1566 = vmatprep.mubr.f32.mxu0 0.0
        %1567 = vmatmul.mubr.f32.gmra.mrb[0].mxu0 %v1497
        %v1568 = vpop.f32.mrb[0].mxu0
        %v1569 = vadd.f32 %v1494, %v1568
        %v1570 = vpop.f32.mrb[0].mxu0
        %1571 = vmatprep.mubr.f32.mxu0 0.0
        %1572 = vmatmul.mubr.f32.gmra.mrb[0].mxu0 %v1500
        %v1573 = vpop.f32.mrb[0].mxu0
        %v1574 = vadd.f32 %v1494, %v1573
        %v1575 = vpop.f32.mrb[0].mxu0
        %1576 = vdwg.mxu0
        %v1577 = vadd.f32 %v1569, %v822
        %v1578 = vadd.f32 %v1574, %v823
        %1579 = vst.msk [vmem:[%s816] sm:$0xff] %vm839, %v1577
        %1580 = vst.msk [vmem:[%s816 + $0x8] sm:$0xff] %vm839, %v1578
        %s1581 = sand.u32 %s409, 1
        %s1582 = scalar_lea.sflag [#allocation4], %s1581
        %s1583 = sand.u32 %s409, 1
        %s1584 = smul.addr %s1583, 16
        %s1585 = scalar_lea.vmem [#allocation28], %s1584
        // Predicated region
        $region149: #{point_transformer_classif.10} parent=83 // pred_check
          %p1586 = pneg %p419
        $region150: #{point_transformer_classif.10} parent=83 // pred_check_branch
          %1588 = sbr.rel (%p1586) target = $region152
        $region151: #{point_transformer_classif.10} parent=83 // pred_region
          %s1589 = smul.u32 2, %s45
          %s1591 = ssub.s32 256, 256
          %1592 = vsyncadd %s1582, %s1591
          %s1593 = smul.addr %s1589, 128
          %s1594 = scalar_lea.hbm %s16, %s1593
          %s1595 = sshll.u32 %s1585, 4
          %s1596 = int_to_ptr.vmem [resolvable:$true] %s1595
          %1601 = dma.vmem_to_hbm [thread:$0]  %s1596, 256, %s1594, %s1582, 128, 128, 8
        $region152: #{point_transformer_classif.10} parent=83 // pred_fallthru
          _
      $region84: #{point_transformer_classif.10} parent=5 // pred_fallthru
        _
      %p1602 = scmp.le.s32.totalorder 2, %s40
      // Predicated region
      $region153: #{point_transformer_classif.10} parent=5 // pred_check
        %p1603 = pneg %p1602
      $region154: #{point_transformer_classif.10} parent=5 // pred_check_branch
        %1605 = sbr.rel (%p1603) target = $region156
      $region155: #{point_transformer_classif.10} parent=5 // pred_region
        %s1606 = ssub.s32 %s40, 2
        // Predicated region
        $region157: #{point_transformer_classif.10} parent=155 // pred_check
          %p1607 = pneg %p425
        $region158: #{point_transformer_classif.10} parent=155 // pred_check_branch
          %1609 = sbr.rel (%p1607) target = $region160
        $region159: #{point_transformer_classif.10} parent=155 // pred_region
          %s1610 = sand.u32 %s410, 1
          %s1611 = scalar_lea.sflag [#allocation4], %s1610
          %s1612 = sand.u32 %s410, 1
          %s1613 = smul.addr %s1612, 16
          %s1614 = scalar_lea.vmem [#allocation28], %s1613
          %1615 = dma.done %s1611, 256
        $region160: #{point_transformer_classif.10} parent=155 // pred_fallthru
          _
      $region156: #{point_transformer_classif.10} parent=5 // pred_fallthru
        _
    $region6: #{point_transformer_classif.10} parent=1 // loop_footer
      %s44 = sadd.s32 1, %s40
    $region7: #{point_transformer_classif.10} parent=1 // loop_footer_branch
      %39 = sbr.rel target = $region3
    $region8: #{point_transformer_classif.10} parent=1 // loop_exit
      _
    %1616 = vsyncpa [#allocation3], 1
    %s1617 = scalar_lea.sflag [#allocation3], 1
    %1618 = vsyncpa %s1617, 1
    %1619 = vsyncpa [#allocation6], 1
    %s1620 = scalar_lea.sflag [#allocation6], 1
    %1621 = vsyncpa %s1620, 1
    %1622 = vsyncpa [#allocation9], 1
    %s1623 = scalar_lea.sflag [#allocation9], 1
    %1624 = vsyncpa %s1623, 1
    %1625 = vsyncpa [#allocation12], 1
    %1626 = vsyncpa [#allocation15], 1
    %1627 = vsyncpa [#allocation18], 1
    %1628 = vsyncpa [#allocation21], 1
    %1629 = vsyncpa [#allocation24], 1
    %1630 = vsyncpa [#allocation27], 1
    %1631 = vsyncpa [#allocation4], 1
    %s1632 = scalar_lea.sflag [#allocation4], 1
    %1633 = vsyncpa %s1632, 1

// kernel: point_transformer_classif.11
$region0: #{point_transformer_classif.11}
  #allocation0 [shape = 'u32[]', space=smem, size = 0x4, offset = 0x4, fixed_abs, tag = 'smem constant byte address 0x4 - core index']
  #allocation1 [shape = 'u32[144,128]{1,0:T(1,128)}', space=vmem, size = 0x12000, scoped, tag = 'internal scratch']
  %s0 = inlined_call_operand.hbm [shape: f32[4,8,67], index: 0, kind: input, shape index: {}]
  %s1 = inlined_call_operand.hbm [shape: f32[67,128], index: 1, kind: input, shape index: {}]
  %s2 = inlined_call_operand.hbm [shape: f32[1,128], index: 2, kind: input, shape index: {}]
  %s3 = inlined_call_operand.hbm [shape: f32[128,8], index: 3, kind: input, shape index: {}]
  %s4 = inlined_call_operand.hbm [shape: f32[1,8], index: 4, kind: input, shape index: {}]
  %s5 = inlined_call_operand.hbm [shape: f32[128,8], index: 5, kind: input, shape index: {}]
  %s6 = inlined_call_operand.hbm [shape: f32[1,8], index: 6, kind: input, shape index: {}]
  %s7 = inlined_call_operand.hbm [shape: f32[8,128], index: 7, kind: output, shape index: {0}]
  %s8 = inlined_call_operand.hbm [shape: bf16[8,8], index: 8, kind: output, shape index: {1}]
  %s9 = inlined_call_operand.hbm [shape: bf16[8,8], index: 9, kind: output, shape index: {2}]
  %10 = xla_tuple %s7, %s8, %s9
  %s11 = sld [smem:[#allocation0]]
  $region82: #{point_transformer_classif.11} parent=0
    _
  %s13 = ssub.s32 1, %s11
  %s14 = scalar_select 0, %s13, %s11
  $region1: #{point_transformer_classif.11} parent=0
    #allocation2 [shape = 'u8[16384]{0}', space=vmem, size = 0x4000, scoped, tag = 'input window, operand 0, single buffered']
    #allocation3 [shape = 's32[1]{0}', space=sflag, size = 0x4, scoped, tag = 'scoped memory for point_transformer_classif.11']
    #allocation4 [shape = 's32[1]{0}', space=sflag, size = 0x4, scoped, tag = 'scoped memory for point_transformer_classif.11']
    #allocation5 [shape = 'u8[36864]{0}', space=vmem, size = 0x9000, scoped, tag = 'input window, operand 1, single buffered']
    #allocation6 [shape = 's32[1]{0}', space=sflag, size = 0x4, scoped, tag = 'scoped memory for point_transformer_classif.11']
    #allocation7 [shape = 'u8[512]{0}', space=vmem, size = 0x400, scoped, tag = 'input window, operand 2, single buffered']
    #allocation8 [shape = 'u8[65536]{0}', space=vmem, size = 0x10000, scoped, tag = 'input window, operand 3, single buffered']
    #allocation9 [shape = 's32[1]{0}', space=sflag, size = 0x4, scoped, tag = 'scoped memory for point_transformer_classif.11']
    #allocation10 [shape = 'u8[512]{0}', space=vmem, size = 0x400, scoped, tag = 'input window, operand 4, single buffered']
    #allocation11 [shape = 'u8[65536]{0}', space=vmem, size = 0x10000, scoped, tag = 'input window, operand 5, single buffered']
    #allocation12 [shape = 's32[1]{0}', space=sflag, size = 0x4, scoped, tag = 'scoped memory for point_transformer_classif.11']
    #allocation13 [shape = 'u8[512]{0}', space=vmem, size = 0x400, scoped, tag = 'input window, operand 6, single buffered']
    #allocation14 [shape = 'u8[4096]{0}', space=vmem, size = 0x1000, scoped, tag = 'output window, operand 0, single buffered']
    #allocation15 [shape = 'u8[2048]{0}', space=vmem, size = 0x800, scoped, tag = 'output window, operand 1, single buffered']
    #allocation16 [shape = 's32[1]{0}', space=sflag, size = 0x4, scoped, tag = 'scoped memory for point_transformer_classif.11']
    #allocation17 [shape = 'u8[2048]{0}', space=vmem, size = 0x800, scoped, tag = 'output window, operand 2, single buffered']
    %15 = vsyncpa [#allocation3], 0
    %16 = vsyncpa [#allocation6], 0
    %17 = vsyncpa [#allocation9], 0
    %18 = vsyncpa [#allocation12], 0
    %19 = vsyncpa [#allocation4], 0
    %20 = vsyncpa [#allocation16], 0
    // Predicated region
    $region2: #{point_transformer_classif.11} parent=1 // pred_check
      _
    $region3: #{point_transformer_classif.11} parent=1 // pred_check_branch
      %22 = sbr.rel (0) target = $region5
    $region4: #{point_transformer_classif.11} parent=1 // pred_region
      %s24 = ssub.s32 512, 512
      %25 = vsyncadd [#allocation3], %s24
      %s26 = sshll.u32 [#allocation2], 4
      %s27 = int_to_ptr.vmem [resolvable:$true] %s26
      %32 = dma.hbm_to_vmem [thread:$0]  %s0, 512, %s27, [#allocation3], 128, 128, 8
    $region5: #{point_transformer_classif.11} parent=1 // pred_fallthru
      _
    // Predicated region
    $region6: #{point_transformer_classif.11} parent=1 // pred_check
      _
    $region7: #{point_transformer_classif.11} parent=1 // pred_check_branch
      %34 = sbr.rel (0) target = $region9
    $region8: #{point_transformer_classif.11} parent=1 // pred_region
      %s36 = ssub.s32 1152, 1152
      %37 = vsyncadd [#allocation6], %s36
      %s38 = sshll.u32 [#allocation5], 4
      %s39 = int_to_ptr.vmem [resolvable:$true] %s38
      %44 = dma.hbm_to_vmem [thread:$0]  %s1, 1152, %s39, [#allocation6], 128, 128, 8
    $region9: #{point_transformer_classif.11} parent=1 // pred_fallthru
      _
    // Predicated region
    $region10: #{point_transformer_classif.11} parent=1 // pred_check
      _
    $region11: #{point_transformer_classif.11} parent=1 // pred_check_branch
      %46 = sbr.rel (0) target = $region13
    $region12: #{point_transformer_classif.11} parent=1 // pred_region
      %s48 = ssub.s32 16, 16
      %49 = vsyncadd [#allocation6], %s48
      %s51 = sshll.u32 [#allocation7], 4
      %s52 = int_to_ptr.vmem [resolvable:$true] %s51
      %54 = dma.hbm_to_vmem [thread:$0]  %s2, 16, %s52, [#allocation6]
    $region13: #{point_transformer_classif.11} parent=1 // pred_fallthru
      _
    // Predicated region
    $region14: #{point_transformer_classif.11} parent=1 // pred_check
      _
    $region15: #{point_transformer_classif.11} parent=1 // pred_check_branch
      %56 = sbr.rel (0) target = $region17
    $region16: #{point_transformer_classif.11} parent=1 // pred_region
      %s58 = ssub.s32 2048, 2048
      %59 = vsyncadd [#allocation9], %s58
      %s60 = sshll.u32 [#allocation8], 4
      %s61 = int_to_ptr.vmem [resolvable:$true] %s60
      %66 = dma.hbm_to_vmem [thread:$0]  %s3, 2048, %s61, [#allocation9], 128, 128, 8
    $region17: #{point_transformer_classif.11} parent=1 // pred_fallthru
      _
    // Predicated region
    $region18: #{point_transformer_classif.11} parent=1 // pred_check
      _
    $region19: #{point_transformer_classif.11} parent=1 // pred_check_branch
      %68 = sbr.rel (0) target = $region21
    $region20: #{point_transformer_classif.11} parent=1 // pred_region
      %s70 = ssub.s32 16, 16
      %71 = vsyncadd [#allocation9], %s70
      %s73 = sshll.u32 [#allocation10], 4
      %s74 = int_to_ptr.vmem [resolvable:$true] %s73
      %76 = dma.hbm_to_vmem [thread:$0]  %s4, 16, %s74, [#allocation9]
    $region21: #{point_transformer_classif.11} parent=1 // pred_fallthru
      _
    // Predicated region
    $region22: #{point_transformer_classif.11} parent=1 // pred_check
      _
    $region23: #{point_transformer_classif.11} parent=1 // pred_check_branch
      %78 = sbr.rel (0) target = $region25
    $region24: #{point_transformer_classif.11} parent=1 // pred_region
      %s80 = ssub.s32 2048, 2048
      %81 = vsyncadd [#allocation12], %s80
      %s82 = sshll.u32 [#allocation11], 4
      %s83 = int_to_ptr.vmem [resolvable:$true] %s82
      %88 = dma.hbm_to_vmem [thread:$0]  %s5, 2048, %s83, [#allocation12], 128, 128, 8
    $region25: #{point_transformer_classif.11} parent=1 // pred_fallthru
      _
    // Predicated region
    $region26: #{point_transformer_classif.11} parent=1 // pred_check
      _
    $region27: #{point_transformer_classif.11} parent=1 // pred_check_branch
      %90 = sbr.rel (0) target = $region29
    $region28: #{point_transformer_classif.11} parent=1 // pred_region
      %s92 = ssub.s32 16, 16
      %93 = vsyncadd [#allocation12], %s92
      %s95 = sshll.u32 [#allocation13], 4
      %s96 = int_to_ptr.vmem [resolvable:$true] %s95
      %98 = dma.hbm_to_vmem [thread:$0]  %s6, 16, %s96, [#allocation12]
    $region29: #{point_transformer_classif.11} parent=1 // pred_fallthru
      _
    // Predicated region
    $region30: #{point_transformer_classif.11} parent=1 // pred_check
      _
    $region31: #{point_transformer_classif.11} parent=1 // pred_check_branch
      %100 = sbr.rel (0) target = $region33
    $region32: #{point_transformer_classif.11} parent=1 // pred_region
      %101 = dma.done [#allocation3], 512
    $region33: #{point_transformer_classif.11} parent=1 // pred_fallthru
      _
    // Predicated region
    $region34: #{point_transformer_classif.11} parent=1 // pred_check
      _
    $region35: #{point_transformer_classif.11} parent=1 // pred_check_branch
      %103 = sbr.rel (0) target = $region37
    $region36: #{point_transformer_classif.11} parent=1 // pred_region
      %104 = dma.done [#allocation6], 1152
    $region37: #{point_transformer_classif.11} parent=1 // pred_fallthru
      _
    // Predicated region
    $region38: #{point_transformer_classif.11} parent=1 // pred_check
      _
    $region39: #{point_transformer_classif.11} parent=1 // pred_check_branch
      %106 = sbr.rel (0) target = $region41
    $region40: #{point_transformer_classif.11} parent=1 // pred_region
      %107 = dma.done [#allocation6], 16
    $region41: #{point_transformer_classif.11} parent=1 // pred_fallthru
      _
    // Predicated region
    $region42: #{point_transformer_classif.11} parent=1 // pred_check
      _
    $region43: #{point_transformer_classif.11} parent=1 // pred_check_branch
      %109 = sbr.rel (0) target = $region45
    $region44: #{point_transformer_classif.11} parent=1 // pred_region
      %110 = dma.done [#allocation9], 2048
    $region45: #{point_transformer_classif.11} parent=1 // pred_fallthru
      _
    // Predicated region
    $region46: #{point_transformer_classif.11} parent=1 // pred_check
      _
    $region47: #{point_transformer_classif.11} parent=1 // pred_check_branch
      %112 = sbr.rel (0) target = $region49
    $region48: #{point_transformer_classif.11} parent=1 // pred_region
      %113 = dma.done [#allocation9], 16
    $region49: #{point_transformer_classif.11} parent=1 // pred_fallthru
      _
    // Predicated region
    $region50: #{point_transformer_classif.11} parent=1 // pred_check
      _
    $region51: #{point_transformer_classif.11} parent=1 // pred_check_branch
      %115 = sbr.rel (0) target = $region53
    $region52: #{point_transformer_classif.11} parent=1 // pred_region
      %116 = dma.done [#allocation12], 2048
    $region53: #{point_transformer_classif.11} parent=1 // pred_fallthru
      _
    // Predicated region
    $region54: #{point_transformer_classif.11} parent=1 // pred_check
      _
    $region55: #{point_transformer_classif.11} parent=1 // pred_check_branch
      %118 = sbr.rel (0) target = $region57
    $region56: #{point_transformer_classif.11} parent=1 // pred_region
      %119 = dma.done [#allocation12], 16
    $region57: #{point_transformer_classif.11} parent=1 // pred_fallthru
      _
    %v120 = vld [vmem:[#allocation2] sm:$0xff]
    %v121 = vld [vmem:[#allocation2 + $0x8] sm:$0xff]
    %v122 = vld [vmem:[#allocation2 + $0x10] sm:$0xff]
    %v123 = vld [vmem:[#allocation2 + $0x18] sm:$0xff]
    %v124 = vld [vmem:[#allocation5] sm:$0xff]
    %v125 = vld [vmem:[#allocation5 + $0x8] sm:$0xff]
    %v126 = vld [vmem:[#allocation5 + $0x10] sm:$0xff]
    %v127 = vld [vmem:[#allocation5 + $0x18] sm:$0xff]
    %v128 = vld [vmem:[#allocation5 + $0x20] sm:$0xff]
    %v129 = vld [vmem:[#allocation5 + $0x28] sm:$0xff]
    %v130 = vld [vmem:[#allocation5 + $0x30] sm:$0xff]
    %v131 = vld [vmem:[#allocation5 + $0x38] sm:$0xff]
    %v132 = vld [vmem:[#allocation5 + $0x40] sm:$0x7]
    %v133 = vld [vmem:[#allocation7] sm:$0x1]
    %v135 = vlaneseq
    %v136 = vshrl.u32 %v135, 7
    %v137 = vsub.s32 0, %v136
    %v138 = vrot.slane %v133, %v137
    %vm140 = vcmask 547840
    %v142 = vsel %vm140, %v120, 0
    %v145 = vsel %vm140, %v121, 0
    %v148 = vsel %vm140, %v122, 0
    %v151 = vsel %vm140, %v123, 0
    %vm153 = vcmask 1042432
    %v155 = vsel %vm153, %v132, 0
    %157 = vmatprep.subr.mxu0 0.0
    %158 = vmatpush1.msra.mxu0 %v124
    %159 = vmatprep.subr.mxu0 0.0
    %160 = vmatpush1.msra.mxu0 %v125
    %161 = vmatprep.subr.mxu0 0.0
    %162 = vmatpush1.msra.mxu0 %v126
    %163 = vmatprep.subr.mxu0 0.0
    %164 = vmatpush1.msra.mxu0 %v127
    %165 = vmatprep.subr.mxu0 0.0
    %166 = vmatpush1.msra.mxu0 %v128
    %167 = vmatprep.subr.mxu0 0.0
    %168 = vmatpush1.msra.mxu0 %v129
    %169 = vmatprep.subr.mxu0 0.0
    %170 = vmatpush1.msra.mxu0 %v130
    %171 = vmatprep.subr.mxu0 0.0
    %172 = vmatpush1.msra.mxu0 %v131
    %173 = vmatprep.subr.mxu0 0.0
    %174 = vmatpush1.msra.mxu0 %v155
    %175 = vmatprep.subr.mxu0 0.0
    %176 = vmatpush1.msra.mxu0 0.0
    %177 = vmatprep.subr.mxu0 0.0
    %178 = vmatpush1.msra.mxu0 0.0
    %179 = vmatprep.subr.mxu0 0.0
    %180 = vmatpush1.msra.mxu0 0.0
    %181 = vmatprep.subr.mxu0 0.0
    %182 = vmatpush1.msra.mxu0 0.0
    %183 = vmatprep.subr.mxu0 0.0
    %184 = vmatpush1.msra.mxu0 0.0
    %185 = vmatprep.subr.mxu0 0.0
    %186 = vmatpush1.msra.mxu0 0.0
    %187 = vmatprep.subr.mxu0 0.0
    %188 = vmatpush1.msra.mxu0 0.0
    %189 = vmatprep.subr.mxu0 0.0
    %190 = vmatpush1.msra.mxu0 0.0
    %191 = vmatprep.subr.mxu0 0.0
    %192 = vmatpush1.msra.mxu0 0.0
    %193 = vmatprep.subr.mxu0 0.0
    %194 = vmatpush1.msra.mxu0 0.0
    %195 = vmatprep.subr.mxu0 0.0
    %196 = vmatpush1.msra.mxu0 0.0
    %197 = vmatprep.subr.mxu0 0.0
    %198 = vmatpush1.msra.mxu0 0.0
    %199 = vmatprep.subr.mxu0 0.0
    %200 = vmatpush1.msra.mxu0 0.0
    %201 = vmatprep.subr.mxu0 0.0
    %202 = vmatpush1.msra.mxu0 0.0
    %203 = vmatprep.subr.mxu0 0.0
    %204 = vmatpush1.msra.mxu0 0.0
    %205 = vmatprep.subr.mxu0 0.0
    %206 = vmatpush1.msra.mxu0 0.0
    %207 = vmatprep.subr.mxu0 0.0
    %208 = vmatpush1.msra.mxu0 0.0
    %209 = vmatprep.subr.mxu0 0.0
    %210 = vmatpush1.msra.mxu0 0.0
    %211 = vmatprep.subr.mxu0 0.0
    %212 = vmatpush1.msra.mxu0 0.0
    %213 = vmatprep.subr.mxu0 0.0
    %214 = vmatpush1.msra.mxu0 0.0
    %215 = vmatprep.subr.mxu0 0.0
    %216 = vmatpush1.msra.mxu0 0.0
    %217 = vmatprep.subr.mxu0 0.0
    %218 = vmatpush1.msra.mxu0 0.0
    %219 = vmatprep.subr.mxu0 0.0
    %220 = vmatpush1.msra.mxu0 0.0
    %221 = vmatprep.mubr.f32.mxu0 0.0
    %222 = vmatmul.mubr.f32.gmra.mrb[0].mxu0 %v142
    %v223 = vpop.f32.mrb[0].mxu0
    %v224 = vadd.f32 %v138, %v223
    %v225 = vpop.f32.mrb[0].mxu0
    %226 = vmatprep.mubr.f32.mxu0 0.0
    %227 = vmatmul.mubr.f32.gmra.mrb[0].mxu0 %v145
    %v228 = vpop.f32.mrb[0].mxu0
    %v229 = vadd.f32 %v138, %v228
    %v230 = vpop.f32.mrb[0].mxu0
    %231 = vmatprep.mubr.f32.mxu0 0.0
    %232 = vmatmul.mubr.f32.gmra.mrb[0].mxu0 %v148
    %v233 = vpop.f32.mrb[0].mxu0
    %v234 = vadd.f32 %v138, %v233
    %v235 = vpop.f32.mrb[0].mxu0
    %236 = vmatprep.mubr.f32.mxu0 0.0
    %237 = vmatmul.mubr.f32.gmra.mrb[0].mxu0 %v151
    %v238 = vpop.f32.mrb[0].mxu0
    %v239 = vadd.f32 %v138, %v238
    %v240 = vpop.f32.mrb[0].mxu0
    %241 = vdwg.mxu0
    %v242 = vmax.f32 %v224, 0.0
    %v243 = vmax.f32 %v229, 0.0
    %v244 = vmax.f32 %v234, 0.0
    %v245 = vmax.f32 %v239, 0.0
    %v246 = vmax.f32 %v242, %v243
    %v247 = vmax.f32 %v246, %v244
    %v248 = vmax.f32 %v247, %v245
    %249 = vst [vmem:[#allocation14] sm:$0xff] %v248
    %v250 = vld [vmem:[#allocation8] sm:$0xff]
    %v251 = vld [vmem:[#allocation8 + $0x8] sm:$0xff]
    %v252 = vld [vmem:[#allocation8 + $0x10] sm:$0xff]
    %v253 = vld [vmem:[#allocation8 + $0x18] sm:$0xff]
    %v254 = vld [vmem:[#allocation8 + $0x20] sm:$0xff]
    %v255 = vld [vmem:[#allocation8 + $0x28] sm:$0xff]
    %v256 = vld [vmem:[#allocation8 + $0x30] sm:$0xff]
    %v257 = vld [vmem:[#allocation8 + $0x38] sm:$0xff]
    %v258 = vld [vmem:[#allocation8 + $0x40] sm:$0xff]
    %v259 = vld [vmem:[#allocation8 + $0x48] sm:$0xff]
    %v260 = vld [vmem:[#allocation8 + $0x50] sm:$0xff]
    %v261 = vld [vmem:[#allocation8 + $0x58] sm:$0xff]
    %v262 = vld [vmem:[#allocation8 + $0x60] sm:$0xff]
    %v263 = vld [vmem:[#allocation8 + $0x68] sm:$0xff]
    %v264 = vld [vmem:[#allocation8 + $0x70] sm:$0xff]
    %v265 = vld [vmem:[#allocation8 + $0x78] sm:$0xff]
    %v266 = vld [vmem:[#allocation10] sm:$0x1]
    %v268 = vlaneseq
    %v269 = vshrl.u32 %v268, 7
    %v270 = vsub.s32 0, %v269
    %v271 = vrot.slane %v266, %v270
    %273 = vmatprep.subr.mxu0 0.0
    %274 = vmatpush1.msra.mxu0 %v250
    %275 = vmatprep.subr.mxu0 0.0
    %276 = vmatpush1.msra.mxu0 %v251
    %277 = vmatprep.subr.mxu0 0.0
    %278 = vmatpush1.msra.mxu0 %v252
    %279 = vmatprep.subr.mxu0 0.0
    %280 = vmatpush1.msra.mxu0 %v253
    %281 = vmatprep.subr.mxu0 0.0
    %282 = vmatpush1.msra.mxu0 %v254
    %283 = vmatprep.subr.mxu0 0.0
    %284 = vmatpush1.msra.mxu0 %v255
    %285 = vmatprep.subr.mxu0 0.0
    %286 = vmatpush1.msra.mxu0 %v256
    %287 = vmatprep.subr.mxu0 0.0
    %288 = vmatpush1.msra.mxu0 %v257
    %289 = vmatprep.subr.mxu0 0.0
    %290 = vmatpush1.msra.mxu0 %v258
    %291 = vmatprep.subr.mxu0 0.0
    %292 = vmatpush1.msra.mxu0 %v259
    %293 = vmatprep.subr.mxu0 0.0
    %294 = vmatpush1.msra.mxu0 %v260
    %295 = vmatprep.subr.mxu0 0.0
    %296 = vmatpush1.msra.mxu0 %v261
    %297 = vmatprep.subr.mxu0 0.0
    %298 = vmatpush1.msra.mxu0 %v262
    %299 = vmatprep.subr.mxu0 0.0
    %300 = vmatpush1.msra.mxu0 %v263
    %301 = vmatprep.subr.mxu0 0.0
    %302 = vmatpush1.msra.mxu0 %v264
    %303 = vmatprep.subr.mxu0 0.0
    %304 = vmatpush1.msra.mxu0 %v265
    %305 = vmatprep.subr.mxu0 0.0
    %306 = vmatpush1.msra.mxu0 0.0
    %307 = vmatprep.subr.mxu0 0.0
    %308 = vmatpush1.msra.mxu0 0.0
    %309 = vmatprep.subr.mxu0 0.0
    %310 = vmatpush1.msra.mxu0 0.0
    %311 = vmatprep.subr.mxu0 0.0
    %312 = vmatpush1.msra.mxu0 0.0
    %313 = vmatprep.subr.mxu0 0.0
    %314 = vmatpush1.msra.mxu0 0.0
    %315 = vmatprep.subr.mxu0 0.0
    %316 = vmatpush1.msra.mxu0 0.0
    %317 = vmatprep.subr.mxu0 0.0
    %318 = vmatpush1.msra.mxu0 0.0
    %319 = vmatprep.subr.mxu0 0.0
    %320 = vmatpush1.msra.mxu0 0.0
    %321 = vmatprep.subr.mxu0 0.0
    %322 = vmatpush1.msra.mxu0 0.0
    %323 = vmatprep.subr.mxu0 0.0
    %324 = vmatpush1.msra.mxu0 0.0
    %325 = vmatprep.subr.mxu0 0.0
    %326 = vmatpush1.msra.mxu0 0.0
    %327 = vmatprep.subr.mxu0 0.0
    %328 = vmatpush1.msra.mxu0 0.0
    %329 = vmatprep.subr.mxu0 0.0
    %330 = vmatpush1.msra.mxu0 0.0
    %331 = vmatprep.subr.mxu0 0.0
    %332 = vmatpush1.msra.mxu0 0.0
    %333 = vmatprep.subr.mxu0 0.0
    %334 = vmatpush1.msra.mxu0 0.0
    %335 = vmatprep.subr.mxu0 0.0
    %336 = vmatpush1.msra.mxu0 0.0
    %337 = vmatprep.mubr.f32.mxu0 0.0
    %338 = vmatmul.mubr.f32.gmra.mrb[0].mxu0 %v248
    %v339 = vpop.f32.mrb[0].mxu0
    %v340 = vadd.f32 %v271, %v339
    %v341 = vpop.f32.mrb[0].mxu0
    %342 = vdwg.mxu0
    %v343 = vpack.c.bf16 %v340, %v340
    %vm344 = vcmask 60416
    %345 = vst.msk [vmem:[#allocation15] sm:$0xf] %vm344, %v343
    %v346 = vld [vmem:[#allocation11] sm:$0xff]
    %v347 = vld [vmem:[#allocation11 + $0x8] sm:$0xff]
    %v348 = vld [vmem:[#allocation11 + $0x10] sm:$0xff]
    %v349 = vld [vmem:[#allocation11 + $0x18] sm:$0xff]
    %v350 = vld [vmem:[#allocation11 + $0x20] sm:$0xff]
    %v351 = vld [vmem:[#allocation11 + $0x28] sm:$0xff]
    %v352 = vld [vmem:[#allocation11 + $0x30] sm:$0xff]
    %v353 = vld [vmem:[#allocation11 + $0x38] sm:$0xff]
    %v354 = vld [vmem:[#allocation11 + $0x40] sm:$0xff]
    %v355 = vld [vmem:[#allocation11 + $0x48] sm:$0xff]
    %v356 = vld [vmem:[#allocation11 + $0x50] sm:$0xff]
    %v357 = vld [vmem:[#allocation11 + $0x58] sm:$0xff]
    %v358 = vld [vmem:[#allocation11 + $0x60] sm:$0xff]
    %v359 = vld [vmem:[#allocation11 + $0x68] sm:$0xff]
    %v360 = vld [vmem:[#allocation11 + $0x70] sm:$0xff]
    %v361 = vld [vmem:[#allocation11 + $0x78] sm:$0xff]
    %v362 = vld [vmem:[#allocation13] sm:$0x1]
    %v364 = vlaneseq
    %v365 = vshrl.u32 %v364, 7
    %v366 = vsub.s32 0, %v365
    %v367 = vrot.slane %v362, %v366
    %369 = vmatprep.subr.mxu0 0.0
    %370 = vmatpush1.msra.mxu0 %v346
    %371 = vmatprep.subr.mxu0 0.0
    %372 = vmatpush1.msra.mxu0 %v347
    %373 = vmatprep.subr.mxu0 0.0
    %374 = vmatpush1.msra.mxu0 %v348
    %375 = vmatprep.subr.mxu0 0.0
    %376 = vmatpush1.msra.mxu0 %v349
    %377 = vmatprep.subr.mxu0 0.0
    %378 = vmatpush1.msra.mxu0 %v350
    %379 = vmatprep.subr.mxu0 0.0
    %380 = vmatpush1.msra.mxu0 %v351
    %381 = vmatprep.subr.mxu0 0.0
    %382 = vmatpush1.msra.mxu0 %v352
    %383 = vmatprep.subr.mxu0 0.0
    %384 = vmatpush1.msra.mxu0 %v353
    %385 = vmatprep.subr.mxu0 0.0
    %386 = vmatpush1.msra.mxu0 %v354
    %387 = vmatprep.subr.mxu0 0.0
    %388 = vmatpush1.msra.mxu0 %v355
    %389 = vmatprep.subr.mxu0 0.0
    %390 = vmatpush1.msra.mxu0 %v356
    %391 = vmatprep.subr.mxu0 0.0
    %392 = vmatpush1.msra.mxu0 %v357
    %393 = vmatprep.subr.mxu0 0.0
    %394 = vmatpush1.msra.mxu0 %v358
    %395 = vmatprep.subr.mxu0 0.0
    %396 = vmatpush1.msra.mxu0 %v359
    %397 = vmatprep.subr.mxu0 0.0
    %398 = vmatpush1.msra.mxu0 %v360
    %399 = vmatprep.subr.mxu0 0.0
    %400 = vmatpush1.msra.mxu0 %v361
    %401 = vmatprep.subr.mxu0 0.0
    %402 = vmatpush1.msra.mxu0 0.0
    %403 = vmatprep.subr.mxu0 0.0
    %404 = vmatpush1.msra.mxu0 0.0
    %405 = vmatprep.subr.mxu0 0.0
    %406 = vmatpush1.msra.mxu0 0.0
    %407 = vmatprep.subr.mxu0 0.0
    %408 = vmatpush1.msra.mxu0 0.0
    %409 = vmatprep.subr.mxu0 0.0
    %410 = vmatpush1.msra.mxu0 0.0
    %411 = vmatprep.subr.mxu0 0.0
    %412 = vmatpush1.msra.mxu0 0.0
    %413 = vmatprep.subr.mxu0 0.0
    %414 = vmatpush1.msra.mxu0 0.0
    %415 = vmatprep.subr.mxu0 0.0
    %416 = vmatpush1.msra.mxu0 0.0
    %417 = vmatprep.subr.mxu0 0.0
    %418 = vmatpush1.msra.mxu0 0.0
    %419 = vmatprep.subr.mxu0 0.0
    %420 = vmatpush1.msra.mxu0 0.0
    %421 = vmatprep.subr.mxu0 0.0
    %422 = vmatpush1.msra.mxu0 0.0
    %423 = vmatprep.subr.mxu0 0.0
    %424 = vmatpush1.msra.mxu0 0.0
    %425 = vmatprep.subr.mxu0 0.0
    %426 = vmatpush1.msra.mxu0 0.0
    %427 = vmatprep.subr.mxu0 0.0
    %428 = vmatpush1.msra.mxu0 0.0
    %429 = vmatprep.subr.mxu0 0.0
    %430 = vmatpush1.msra.mxu0 0.0
    %431 = vmatprep.subr.mxu0 0.0
    %432 = vmatpush1.msra.mxu0 0.0
    %433 = vmatprep.mubr.f32.mxu0 0.0
    %434 = vmatmul.mubr.f32.gmra.mrb[0].mxu0 %v248
    %v435 = vpop.f32.mrb[0].mxu0
    %v436 = vadd.f32 %v367, %v435
    %v437 = vpop.f32.mrb[0].mxu0
    %438 = vdwg.mxu0
    %v439 = vpack.c.bf16 %v436, %v436
    %440 = vst.msk [vmem:[#allocation17] sm:$0xf] %vm344, %v439
    // Predicated region
    $region58: #{point_transformer_classif.11} parent=1 // pred_check
      _
    $region59: #{point_transformer_classif.11} parent=1 // pred_check_branch
      %442 = sbr.rel (0) target = $region61
    $region60: #{point_transformer_classif.11} parent=1 // pred_region
      %s444 = ssub.s32 128, 128
      %445 = vsyncadd [#allocation4], %s444
      %s447 = sshll.u32 [#allocation14], 4
      %s448 = int_to_ptr.vmem [resolvable:$true] %s447
      %450 = dma.vmem_to_hbm [thread:$0]  %s448, 128, %s7, [#allocation4]
    $region61: #{point_transformer_classif.11} parent=1 // pred_fallthru
      _
    // Predicated region
    $region62: #{point_transformer_classif.11} parent=1 // pred_check
      _
    $region63: #{point_transformer_classif.11} parent=1 // pred_check_branch
      %452 = sbr.rel (0) target = $region65
    $region64: #{point_transformer_classif.11} parent=1 // pred_region
      %s454 = ssub.s32 64, 64
      %455 = vsyncadd [#allocation16], %s454
      %s457 = sshll.u32 [#allocation15], 4
      %s458 = int_to_ptr.vmem [resolvable:$true] %s457
      %460 = dma.vmem_to_hbm [thread:$0]  %s458, 64, %s8, [#allocation16]
    $region65: #{point_transformer_classif.11} parent=1 // pred_fallthru
      _
    // Predicated region
    $region66: #{point_transformer_classif.11} parent=1 // pred_check
      _
    $region67: #{point_transformer_classif.11} parent=1 // pred_check_branch
      %462 = sbr.rel (0) target = $region69
    $region68: #{point_transformer_classif.11} parent=1 // pred_region
      %s464 = ssub.s32 64, 64
      %465 = vsyncadd [#allocation16], %s464
      %s467 = sshll.u32 [#allocation17], 4
      %s468 = int_to_ptr.vmem [resolvable:$true] %s467
      %470 = dma.vmem_to_hbm [thread:$0]  %s468, 64, %s9, [#allocation16]
    $region69: #{point_transformer_classif.11} parent=1 // pred_fallthru
      _
    // Predicated region
    $region70: #{point_transformer_classif.11} parent=1 // pred_check
      _
    $region71: #{point_transformer_classif.11} parent=1 // pred_check_branch
      %472 = sbr.rel (0) target = $region73
    $region72: #{point_transformer_classif.11} parent=1 // pred_region
      %473 = dma.done [#allocation4], 128
    $region73: #{point_transformer_classif.11} parent=1 // pred_fallthru
      _
    // Predicated region
    $region74: #{point_transformer_classif.11} parent=1 // pred_check
      _
    $region75: #{point_transformer_classif.11} parent=1 // pred_check_branch
      %475 = sbr.rel (0) target = $region77
    $region76: #{point_transformer_classif.11} parent=1 // pred_region
      %476 = dma.done [#allocation16], 64
    $region77: #{point_transformer_classif.11} parent=1 // pred_fallthru
      _
    // Predicated region
    $region78: #{point_transformer_classif.11} parent=1 // pred_check
      _
    $region79: #{point_transformer_classif.11} parent=1 // pred_check_branch
      %478 = sbr.rel (0) target = $region81
    $region80: #{point_transformer_classif.11} parent=1 // pred_region
      %479 = dma.done [#allocation16], 64
    $region81: #{point_transformer_classif.11} parent=1 // pred_fallthru
      _
    %480 = vsyncpa [#allocation3], 1
    %481 = vsyncpa [#allocation6], 1
    %482 = vsyncpa [#allocation9], 1
    %483 = vsyncpa [#allocation12], 1
    %484 = vsyncpa [#allocation4], 1
    %485 = vsyncpa [#allocation16], 1

// kernel: point_transformer_classif.13
$region0: #{point_transformer_classif.13}
  #allocation0 [shape = 'u32[]', space=smem, size = 0x4, offset = 0x4, fixed_abs, tag = 'smem constant byte address 0x4 - core index']
  #allocation1 [shape = 'u32[144,128]{1,0:T(1,128)}', space=vmem, size = 0x12000, scoped, tag = 'internal scratch']
  %s0 = inlined_call_operand.vmem [shape: f32[2,4,128], index: 0, kind: input, shape index: {}]
  %s1 = inlined_call_operand.vmem [shape: f32[128,256], index: 1, kind: input, shape index: {}]
  %s2 = inlined_call_operand.vmem [shape: f32[1,256], index: 2, kind: input, shape index: {}]
  %s3 = inlined_call_operand.vmem [shape: f32[256,64], index: 3, kind: input, shape index: {}]
  %s4 = inlined_call_operand.vmem [shape: f32[1,64], index: 4, kind: input, shape index: {}]
  %s5 = inlined_call_operand.vmem [shape: f32[64,10], index: 5, kind: input, shape index: {}]
  %s6 = inlined_call_operand.vmem [shape: f32[1,10], index: 6, kind: input, shape index: {}]
  %s7 = inlined_call_operand.hbm [shape: f32[2,10], index: 7, kind: output, shape index: {}]
  %s8 = sld [smem:[#allocation0]]
  $region38: #{point_transformer_classif.13} parent=0
    _
  %s10 = ssub.s32 1, %s8
  %s11 = scalar_select 0, %s10, %s8
  $region1: #{point_transformer_classif.13} parent=0
    #allocation2 [shape = 'u8[1024]{0}', space=vmem, size = 0x400, scoped, tag = 'output window, operand 0, single buffered']
    #allocation3 [shape = 's32[1]{0}', space=sflag, size = 0x4, scoped, tag = 'scoped memory for point_transformer_classif.13']
    %12 = vsyncpa [#allocation3], 0
    // Predicated region
    $region2: #{point_transformer_classif.13} parent=1 // pred_check
      _
    $region3: #{point_transformer_classif.13} parent=1 // pred_check_branch
      %14 = sbr.rel (0) target = $region5
    $region4: #{point_transformer_classif.13} parent=1 // pred_region
      _
    $region5: #{point_transformer_classif.13} parent=1 // pred_fallthru
      _
    // Predicated region
    $region6: #{point_transformer_classif.13} parent=1 // pred_check
      _
    $region7: #{point_transformer_classif.13} parent=1 // pred_check_branch
      %16 = sbr.rel (0) target = $region9
    $region8: #{point_transformer_classif.13} parent=1 // pred_region
      _
    $region9: #{point_transformer_classif.13} parent=1 // pred_fallthru
      _
    // Predicated region
    $region10: #{point_transformer_classif.13} parent=1 // pred_check
      _
    $region11: #{point_transformer_classif.13} parent=1 // pred_check_branch
      %18 = sbr.rel (0) target = $region13
    $region12: #{point_transformer_classif.13} parent=1 // pred_region
      _
    $region13: #{point_transformer_classif.13} parent=1 // pred_fallthru
      _
    // Predicated region
    $region14: #{point_transformer_classif.13} parent=1 // pred_check
      _
    $region15: #{point_transformer_classif.13} parent=1 // pred_check_branch
      %20 = sbr.rel (0) target = $region17
    $region16: #{point_transformer_classif.13} parent=1 // pred_region
      _
    $region17: #{point_transformer_classif.13} parent=1 // pred_fallthru
      _
    // Predicated region
    $region18: #{point_transformer_classif.13} parent=1 // pred_check
      _
    $region19: #{point_transformer_classif.13} parent=1 // pred_check_branch
      %22 = sbr.rel (0) target = $region21
    $region20: #{point_transformer_classif.13} parent=1 // pred_region
      _
    $region21: #{point_transformer_classif.13} parent=1 // pred_fallthru
      _
    // Predicated region
    $region22: #{point_transformer_classif.13} parent=1 // pred_check
      _
    $region23: #{point_transformer_classif.13} parent=1 // pred_check_branch
      %24 = sbr.rel (0) target = $region25
    $region24: #{point_transformer_classif.13} parent=1 // pred_region
      _
    $region25: #{point_transformer_classif.13} parent=1 // pred_fallthru
      _
    // Predicated region
    $region26: #{point_transformer_classif.13} parent=1 // pred_check
      _
    $region27: #{point_transformer_classif.13} parent=1 // pred_check_branch
      %26 = sbr.rel (0) target = $region29
    $region28: #{point_transformer_classif.13} parent=1 // pred_region
      _
    $region29: #{point_transformer_classif.13} parent=1 // pred_fallthru
      _
    %v27 = vld [vmem:[%s0] sm:$0xf]
    %v28 = vld [vmem:[%s0 + $0x4] sm:$0xf]
    %vm29 = vcmask 1043456
    %v30 = vsel %vm29, %v27, 0.0
    %v31 = vrot.slane %v30, 4
    %v32 = vadd.f32 %v30, %v31
    %v33 = vrot.slane %v32, 2
    %v34 = vadd.f32 %v32, %v33
    %v35 = vrot.slane %v34, 1
    %v36 = vadd.f32 %v34, %v35
    %v37 = vsel %vm29, %v28, 0.0
    %v38 = vrot.slane %v37, 4
    %v39 = vadd.f32 %v37, %v38
    %v40 = vrot.slane %v39, 2
    %v41 = vadd.f32 %v39, %v40
    %v42 = vrot.slane %v41, 1
    %v43 = vadd.f32 %v41, %v42
    %v44 = vrcp.pop 4.0
    %v45 = vmul.f32 %v36, %v44
    %v46 = vmul.f32 %v43, %v44
    %v47 = vld [vmem:[%s1] sm:$0xff]
    %v48 = vld [vmem:[%s1 + $0x8] sm:$0xff]
    %v49 = vld [vmem:[%s1 + $0x10] sm:$0xff]
    %v50 = vld [vmem:[%s1 + $0x18] sm:$0xff]
    %v51 = vld [vmem:[%s1 + $0x20] sm:$0xff]
    %v52 = vld [vmem:[%s1 + $0x28] sm:$0xff]
    %v53 = vld [vmem:[%s1 + $0x30] sm:$0xff]
    %v54 = vld [vmem:[%s1 + $0x38] sm:$0xff]
    %v55 = vld [vmem:[%s1 + $0x40] sm:$0xff]
    %v56 = vld [vmem:[%s1 + $0x48] sm:$0xff]
    %v57 = vld [vmem:[%s1 + $0x50] sm:$0xff]
    %v58 = vld [vmem:[%s1 + $0x58] sm:$0xff]
    %v59 = vld [vmem:[%s1 + $0x60] sm:$0xff]
    %v60 = vld [vmem:[%s1 + $0x68] sm:$0xff]
    %v61 = vld [vmem:[%s1 + $0x70] sm:$0xff]
    %v62 = vld [vmem:[%s1 + $0x78] sm:$0xff]
    %v63 = vld [vmem:[%s1 + $0x80] sm:$0xff]
    %v64 = vld [vmem:[%s1 + $0x88] sm:$0xff]
    %v65 = vld [vmem:[%s1 + $0x90] sm:$0xff]
    %v66 = vld [vmem:[%s1 + $0x98] sm:$0xff]
    %v67 = vld [vmem:[%s1 + $0xa0] sm:$0xff]
    %v68 = vld [vmem:[%s1 + $0xa8] sm:$0xff]
    %v69 = vld [vmem:[%s1 + $0xb0] sm:$0xff]
    %v70 = vld [vmem:[%s1 + $0xb8] sm:$0xff]
    %v71 = vld [vmem:[%s1 + $0xc0] sm:$0xff]
    %v72 = vld [vmem:[%s1 + $0xc8] sm:$0xff]
    %v73 = vld [vmem:[%s1 + $0xd0] sm:$0xff]
    %v74 = vld [vmem:[%s1 + $0xd8] sm:$0xff]
    %v75 = vld [vmem:[%s1 + $0xe0] sm:$0xff]
    %v76 = vld [vmem:[%s1 + $0xe8] sm:$0xff]
    %v77 = vld [vmem:[%s1 + $0xf0] sm:$0xff]
    %v78 = vld [vmem:[%s1 + $0xf8] sm:$0xff]
    %v79 = vld [vmem:[%s2] sm:$0x3]
    %v81 = vlaneseq
    %v82 = vshrl.u32 %v81, 7
    %v83 = vsub.s32 0, %v82
    %v84 = vrot.slane %v79, %v83
    %v85 = vlaneseq
    %v86 = vshrl.u32 %v85, 7
    %v87 = vsub.s32 1, %v86
    %v88 = vrot.slane %v79, %v87
    %vm93 = vcmask 1041409
    %v94 = vsel %vm93, %v46, %v45
    %96 = vmatprep.subr.mxu0 %v48
    %97 = vmatpush1.msra.mxu0 %v47
    %98 = vmatprep.subr.mxu0 %v50
    %99 = vmatpush1.msra.mxu0 %v49
    %100 = vmatprep.subr.mxu0 %v52
    %101 = vmatpush1.msra.mxu0 %v51
    %102 = vmatprep.subr.mxu0 %v54
    %103 = vmatpush1.msra.mxu0 %v53
    %104 = vmatprep.subr.mxu0 %v56
    %105 = vmatpush1.msra.mxu0 %v55
    %106 = vmatprep.subr.mxu0 %v58
    %107 = vmatpush1.msra.mxu0 %v57
    %108 = vmatprep.subr.mxu0 %v60
    %109 = vmatpush1.msra.mxu0 %v59
    %110 = vmatprep.subr.mxu0 %v62
    %111 = vmatpush1.msra.mxu0 %v61
    %112 = vmatprep.subr.mxu0 %v64
    %113 = vmatpush1.msra.mxu0 %v63
    %114 = vmatprep.subr.mxu0 %v66
    %115 = vmatpush1.msra.mxu0 %v65
    %116 = vmatprep.subr.mxu0 %v68
    %117 = vmatpush1.msra.mxu0 %v67
    %118 = vmatprep.subr.mxu0 %v70
    %119 = vmatpush1.msra.mxu0 %v69
    %120 = vmatprep.subr.mxu0 %v72
    %121 = vmatpush1.msra.mxu0 %v71
    %122 = vmatprep.subr.mxu0 %v74
    %123 = vmatpush1.msra.mxu0 %v73
    %124 = vmatprep.subr.mxu0 %v76
    %125 = vmatpush1.msra.mxu0 %v75
    %126 = vmatprep.subr.mxu0 %v78
    %127 = vmatpush1.msra.mxu0 %v77
    %128 = vmatprep.subr.mxu0 0.0
    %129 = vmatpush1.msra.mxu0 0.0
    %130 = vmatprep.subr.mxu0 0.0
    %131 = vmatpush1.msra.mxu0 0.0
    %132 = vmatprep.subr.mxu0 0.0
    %133 = vmatpush1.msra.mxu0 0.0
    %134 = vmatprep.subr.mxu0 0.0
    %135 = vmatpush1.msra.mxu0 0.0
    %136 = vmatprep.subr.mxu0 0.0
    %137 = vmatpush1.msra.mxu0 0.0
    %138 = vmatprep.subr.mxu0 0.0
    %139 = vmatpush1.msra.mxu0 0.0
    %140 = vmatprep.subr.mxu0 0.0
    %141 = vmatpush1.msra.mxu0 0.0
    %142 = vmatprep.subr.mxu0 0.0
    %143 = vmatpush1.msra.mxu0 0.0
    %144 = vmatprep.subr.mxu0 0.0
    %145 = vmatpush1.msra.mxu0 0.0
    %146 = vmatprep.subr.mxu0 0.0
    %147 = vmatpush1.msra.mxu0 0.0
    %148 = vmatprep.subr.mxu0 0.0
    %149 = vmatpush1.msra.mxu0 0.0
    %150 = vmatprep.subr.mxu0 0.0
    %151 = vmatpush1.msra.mxu0 0.0
    %152 = vmatprep.subr.mxu0 0.0
    %153 = vmatpush1.msra.mxu0 0.0
    %154 = vmatprep.subr.mxu0 0.0
    %155 = vmatpush1.msra.mxu0 0.0
    %156 = vmatprep.subr.mxu0 0.0
    %157 = vmatpush1.msra.mxu0 0.0
    %158 = vmatprep.subr.mxu0 0.0
    %159 = vmatpush1.msra.mxu0 0.0
    %160 = vmatprep.mubr.f32.mxu0 0.0
    %161 = vmatmul.mubr.f32.gmra.mrb[0].mxu0 %v94
    %v162 = vpop.f32.mrb[0].mxu0
    %v163 = vadd.f32 %v84, %v162
    %v164 = vpop.f32.mrb[0].mxu0
    %v165 = vadd.f32 %v88, %v164
    %166 = vdwg.mxu0
    %v167 = vmax.f32 %v163, 0.0
    %v168 = vmax.f32 %v165, 0.0
    %v169 = vld [vmem:[%s3] sm:$0xff]
    %v170 = vld [vmem:[%s3 + $0x8] sm:$0xff]
    %v171 = vld [vmem:[%s3 + $0x10] sm:$0xff]
    %v172 = vld [vmem:[%s3 + $0x18] sm:$0xff]
    %v173 = vld [vmem:[%s3 + $0x20] sm:$0xff]
    %v174 = vld [vmem:[%s3 + $0x28] sm:$0xff]
    %v175 = vld [vmem:[%s3 + $0x30] sm:$0xff]
    %v176 = vld [vmem:[%s3 + $0x38] sm:$0xff]
    %v177 = vld [vmem:[%s3 + $0x40] sm:$0xff]
    %v178 = vld [vmem:[%s3 + $0x48] sm:$0xff]
    %v179 = vld [vmem:[%s3 + $0x50] sm:$0xff]
    %v180 = vld [vmem:[%s3 + $0x58] sm:$0xff]
    %v181 = vld [vmem:[%s3 + $0x60] sm:$0xff]
    %v182 = vld [vmem:[%s3 + $0x68] sm:$0xff]
    %v183 = vld [vmem:[%s3 + $0x70] sm:$0xff]
    %v184 = vld [vmem:[%s3 + $0x78] sm:$0xff]
    %v185 = vld [vmem:[%s3 + $0x80] sm:$0xff]
    %v186 = vld [vmem:[%s3 + $0x88] sm:$0xff]
    %v187 = vld [vmem:[%s3 + $0x90] sm:$0xff]
    %v188 = vld [vmem:[%s3 + $0x98] sm:$0xff]
    %v189 = vld [vmem:[%s3 + $0xa0] sm:$0xff]
    %v190 = vld [vmem:[%s3 + $0xa8] sm:$0xff]
    %v191 = vld [vmem:[%s3 + $0xb0] sm:$0xff]
    %v192 = vld [vmem:[%s3 + $0xb8] sm:$0xff]
    %v193 = vld [vmem:[%s3 + $0xc0] sm:$0xff]
    %v194 = vld [vmem:[%s3 + $0xc8] sm:$0xff]
    %v195 = vld [vmem:[%s3 + $0xd0] sm:$0xff]
    %v196 = vld [vmem:[%s3 + $0xd8] sm:$0xff]
    %v197 = vld [vmem:[%s3 + $0xe0] sm:$0xff]
    %v198 = vld [vmem:[%s3 + $0xe8] sm:$0xff]
    %v199 = vld [vmem:[%s3 + $0xf0] sm:$0xff]
    %v200 = vld [vmem:[%s3 + $0xf8] sm:$0xff]
    %v201 = vld [vmem:[%s4] sm:$0x1]
    %v203 = vlaneseq
    %v204 = vshrl.u32 %v203, 7
    %v205 = vsub.s32 0, %v204
    %v206 = vrot.slane %v201, %v205
    %208 = vmatprep.subr.mxu0 0.0
    %209 = vmatpush1.msra.mxu0 %v169
    %210 = vmatprep.subr.mxu0 0.0
    %211 = vmatpush1.msra.mxu0 %v170
    %212 = vmatprep.subr.mxu0 0.0
    %213 = vmatpush1.msra.mxu0 %v171
    %214 = vmatprep.subr.mxu0 0.0
    %215 = vmatpush1.msra.mxu0 %v172
    %216 = vmatprep.subr.mxu0 0.0
    %217 = vmatpush1.msra.mxu0 %v173
    %218 = vmatprep.subr.mxu0 0.0
    %219 = vmatpush1.msra.mxu0 %v174
    %220 = vmatprep.subr.mxu0 0.0
    %221 = vmatpush1.msra.mxu0 %v175
    %222 = vmatprep.subr.mxu0 0.0
    %223 = vmatpush1.msra.mxu0 %v176
    %224 = vmatprep.subr.mxu0 0.0
    %225 = vmatpush1.msra.mxu0 %v177
    %226 = vmatprep.subr.mxu0 0.0
    %227 = vmatpush1.msra.mxu0 %v178
    %228 = vmatprep.subr.mxu0 0.0
    %229 = vmatpush1.msra.mxu0 %v179
    %230 = vmatprep.subr.mxu0 0.0
    %231 = vmatpush1.msra.mxu0 %v180
    %232 = vmatprep.subr.mxu0 0.0
    %233 = vmatpush1.msra.mxu0 %v181
    %234 = vmatprep.subr.mxu0 0.0
    %235 = vmatpush1.msra.mxu0 %v182
    %236 = vmatprep.subr.mxu0 0.0
    %237 = vmatpush1.msra.mxu0 %v183
    %238 = vmatprep.subr.mxu0 0.0
    %239 = vmatpush1.msra.mxu0 %v184
    %240 = vmatprep.subr.mxu0 0.0
    %241 = vmatpush1.msra.mxu0 %v185
    %242 = vmatprep.subr.mxu0 0.0
    %243 = vmatpush1.msra.mxu0 %v186
    %244 = vmatprep.subr.mxu0 0.0
    %245 = vmatpush1.msra.mxu0 %v187
    %246 = vmatprep.subr.mxu0 0.0
    %247 = vmatpush1.msra.mxu0 %v188
    %248 = vmatprep.subr.mxu0 0.0
    %249 = vmatpush1.msra.mxu0 %v189
    %250 = vmatprep.subr.mxu0 0.0
    %251 = vmatpush1.msra.mxu0 %v190
    %252 = vmatprep.subr.mxu0 0.0
    %253 = vmatpush1.msra.mxu0 %v191
    %254 = vmatprep.subr.mxu0 0.0
    %255 = vmatpush1.msra.mxu0 %v192
    %256 = vmatprep.subr.mxu0 0.0
    %257 = vmatpush1.msra.mxu0 %v193
    %258 = vmatprep.subr.mxu0 0.0
    %259 = vmatpush1.msra.mxu0 %v194
    %260 = vmatprep.subr.mxu0 0.0
    %261 = vmatpush1.msra.mxu0 %v195
    %262 = vmatprep.subr.mxu0 0.0
    %263 = vmatpush1.msra.mxu0 %v196
    %264 = vmatprep.subr.mxu0 0.0
    %265 = vmatpush1.msra.mxu0 %v197
    %266 = vmatprep.subr.mxu0 0.0
    %267 = vmatpush1.msra.mxu0 %v198
    %268 = vmatprep.subr.mxu0 0.0
    %269 = vmatpush1.msra.mxu0 %v199
    %270 = vmatprep.subr.mxu0 0.0
    %271 = vmatpush1.msra.mxu0 %v200
    %272 = vmatprep.mubr.f32.mxu0 %v168
    %273 = vmatmul.mubr.f32.gmra.mrb[0].mxu0 %v167
    %v274 = vpop.f32.mrb[0].mxu0
    %v275 = vadd.f32 %v206, %v274
    %v276 = vpop.f32.mrb[0].mxu0
    %277 = vdwg.mxu0
    %v278 = vmax.f32 %v275, 0.0
    %v279 = vld [vmem:[%s5] sm:$0xff]
    %v280 = vld [vmem:[%s5 + $0x8] sm:$0xff]
    %v281 = vld [vmem:[%s5 + $0x10] sm:$0xff]
    %v282 = vld [vmem:[%s5 + $0x18] sm:$0xff]
    %v283 = vld [vmem:[%s5 + $0x20] sm:$0xff]
    %v284 = vld [vmem:[%s5 + $0x28] sm:$0xff]
    %v285 = vld [vmem:[%s5 + $0x30] sm:$0xff]
    %v286 = vld [vmem:[%s5 + $0x38] sm:$0xff]
    %v287 = vld [vmem:[%s6] sm:$0x1]
    %v289 = vlaneseq
    %v290 = vshrl.u32 %v289, 7
    %v291 = vsub.s32 0, %v290
    %v292 = vrot.slane %v287, %v291
    %vm294 = vcmask 523264
    %v296 = vsel %vm294, %v278, 0
    %298 = vmatprep.subr.mxu0 0.0
    %299 = vmatpush1.msra.mxu0 %v279
    %300 = vmatprep.subr.mxu0 0.0
    %301 = vmatpush1.msra.mxu0 %v280
    %302 = vmatprep.subr.mxu0 0.0
    %303 = vmatpush1.msra.mxu0 %v281
    %304 = vmatprep.subr.mxu0 0.0
    %305 = vmatpush1.msra.mxu0 %v282
    %306 = vmatprep.subr.mxu0 0.0
    %307 = vmatpush1.msra.mxu0 %v283
    %308 = vmatprep.subr.mxu0 0.0
    %309 = vmatpush1.msra.mxu0 %v284
    %310 = vmatprep.subr.mxu0 0.0
    %311 = vmatpush1.msra.mxu0 %v285
    %312 = vmatprep.subr.mxu0 0.0
    %313 = vmatpush1.msra.mxu0 %v286
    %314 = vmatprep.subr.mxu0 0.0
    %315 = vmatpush1.msra.mxu0 0.0
    %316 = vmatprep.subr.mxu0 0.0
    %317 = vmatpush1.msra.mxu0 0.0
    %318 = vmatprep.subr.mxu0 0.0
    %319 = vmatpush1.msra.mxu0 0.0
    %320 = vmatprep.subr.mxu0 0.0
    %321 = vmatpush1.msra.mxu0 0.0
    %322 = vmatprep.subr.mxu0 0.0
    %323 = vmatpush1.msra.mxu0 0.0
    %324 = vmatprep.subr.mxu0 0.0
    %325 = vmatpush1.msra.mxu0 0.0
    %326 = vmatprep.subr.mxu0 0.0
    %327 = vmatpush1.msra.mxu0 0.0
    %328 = vmatprep.subr.mxu0 0.0
    %329 = vmatpush1.msra.mxu0 0.0
    %330 = vmatprep.subr.mxu0 0.0
    %331 = vmatpush1.msra.mxu0 0.0
    %332 = vmatprep.subr.mxu0 0.0
    %333 = vmatpush1.msra.mxu0 0.0
    %334 = vmatprep.subr.mxu0 0.0
    %335 = vmatpush1.msra.mxu0 0.0
    %336 = vmatprep.subr.mxu0 0.0
    %337 = vmatpush1.msra.mxu0 0.0
    %338 = vmatprep.subr.mxu0 0.0
    %339 = vmatpush1.msra.mxu0 0.0
    %340 = vmatprep.subr.mxu0 0.0
    %341 = vmatpush1.msra.mxu0 0.0
    %342 = vmatprep.subr.mxu0 0.0
    %343 = vmatpush1.msra.mxu0 0.0
    %344 = vmatprep.subr.mxu0 0.0
    %345 = vmatpush1.msra.mxu0 0.0
    %346 = vmatprep.subr.mxu0 0.0
    %347 = vmatpush1.msra.mxu0 0.0
    %348 = vmatprep.subr.mxu0 0.0
    %349 = vmatpush1.msra.mxu0 0.0
    %350 = vmatprep.subr.mxu0 0.0
    %351 = vmatpush1.msra.mxu0 0.0
    %352 = vmatprep.subr.mxu0 0.0
    %353 = vmatpush1.msra.mxu0 0.0
    %354 = vmatprep.subr.mxu0 0.0
    %355 = vmatpush1.msra.mxu0 0.0
    %356 = vmatprep.subr.mxu0 0.0
    %357 = vmatpush1.msra.mxu0 0.0
    %358 = vmatprep.subr.mxu0 0.0
    %359 = vmatpush1.msra.mxu0 0.0
    %360 = vmatprep.subr.mxu0 0.0
    %361 = vmatpush1.msra.mxu0 0.0
    %362 = vmatprep.mubr.f32.mxu0 0.0
    %363 = vmatmul.mubr.f32.gmra.mrb[0].mxu0 %v296
    %v364 = vpop.f32.mrb[0].mxu0
    %v365 = vadd.f32 %v292, %v364
    %v366 = vpop.f32.mrb[0].mxu0
    %367 = vdwg.mxu0
    %vm368 = vcmask 74752
    %369 = vst.msk [vmem:[#allocation2] sm:$0x3] %vm368, %v365
    // Predicated region
    $region30: #{point_transformer_classif.13} parent=1 // pred_check
      _
    $region31: #{point_transformer_classif.13} parent=1 // pred_check_branch
      %371 = sbr.rel (0) target = $region33
    $region32: #{point_transformer_classif.13} parent=1 // pred_region
      %s373 = ssub.s32 32, 32
      %374 = vsyncadd [#allocation3], %s373
      %s376 = sshll.u32 [#allocation2], 4
      %s377 = int_to_ptr.vmem [resolvable:$true] %s376
      %379 = dma.vmem_to_hbm [thread:$0]  %s377, 32, %s7, [#allocation3]
    $region33: #{point_transformer_classif.13} parent=1 // pred_fallthru
      _
    // Predicated region
    $region34: #{point_transformer_classif.13} parent=1 // pred_check
      _
    $region35: #{point_transformer_classif.13} parent=1 // pred_check_branch
      %381 = sbr.rel (0) target = $region37
    $region36: #{point_transformer_classif.13} parent=1 // pred_region
      %382 = dma.done [#allocation3], 32
    $region37: #{point_transformer_classif.13} parent=1 // pred_fallthru
      _
    %383 = vsyncpa [#allocation3], 1

// kernel: point_transformer_classif.12
$region0: #{point_transformer_classif.12}
  #allocation0 [shape = 'u32[]', space=smem, size = 0x4, offset = 0x4, fixed_abs, tag = 'smem constant byte address 0x4 - core index']
  #allocation1 [shape = 'u32[144,128]{1,0:T(1,128)}', space=vmem, size = 0x12000, scoped, tag = 'internal scratch']
  %s0 = inlined_call_operand.hbm [shape: f32[8,128], index: 0, kind: input, shape index: {}]
  %s1 = inlined_call_operand.hbm [shape: bf16[8,32], index: 1, kind: input, shape index: {}]
  %s2 = inlined_call_operand.hbm [shape: bf16[8,32], index: 2, kind: input, shape index: {}]
  %s3 = inlined_call_operand.hbm [shape: bf16[8,12], index: 3, kind: input, shape index: {}]
  %s4 = inlined_call_operand.hbm [shape: f32[128,8], index: 4, kind: input, shape index: {}]
  %s5 = inlined_call_operand.hbm [shape: f32[1,8], index: 5, kind: input, shape index: {}]
  %s6 = inlined_call_operand.hbm [shape: f32[12,32], index: 6, kind: input, shape index: {}]
  %s7 = inlined_call_operand.hbm [shape: f32[1,32], index: 7, kind: input, shape index: {}]
  %s8 = inlined_call_operand.hbm [shape: f32[32,32], index: 8, kind: input, shape index: {}]
  %s9 = inlined_call_operand.hbm [shape: f32[1,32], index: 9, kind: input, shape index: {}]
  %s10 = inlined_call_operand.hbm [shape: f32[32,32], index: 10, kind: input, shape index: {}]
  %s11 = inlined_call_operand.hbm [shape: f32[1,32], index: 11, kind: input, shape index: {}]
  %s12 = inlined_call_operand.hbm [shape: f32[32,32], index: 12, kind: input, shape index: {}]
  %s13 = inlined_call_operand.hbm [shape: f32[1,32], index: 13, kind: input, shape index: {}]
  %s14 = inlined_call_operand.hbm [shape: f32[8,128], index: 14, kind: input, shape index: {}]
  %s15 = inlined_call_operand.hbm [shape: f32[1,128], index: 15, kind: input, shape index: {}]
  %s16 = inlined_call_operand.hbm [shape: f32[8,128], index: 16, kind: output, shape index: {}]
  %s17 = sld [smem:[#allocation0]]
  $region138: #{point_transformer_classif.12} parent=0
    _
  %s19 = ssub.s32 1, %s17
  %s20 = scalar_select 0, %s19, %s17
  $region1: #{point_transformer_classif.12} parent=0
    #allocation2 [shape = 'u8[4096]{0}', space=vmem, size = 0x1000, scoped, tag = 'input window, operand 0, single buffered']
    #allocation3 [shape = 's32[1]{0}', space=sflag, size = 0x4, scoped, tag = 'scoped memory for point_transformer_classif.12']
    #allocation4 [shape = 's32[1]{0}', space=sflag, size = 0x4, scoped, tag = 'scoped memory for point_transformer_classif.12']
    #allocation5 [shape = 'u8[2048]{0}', space=vmem, size = 0x800, scoped, tag = 'input window, operand 1, single buffered']
    #allocation6 [shape = 's32[1]{0}', space=sflag, size = 0x4, scoped, tag = 'scoped memory for point_transformer_classif.12']
    #allocation7 [shape = 'u8[2048]{0}', space=vmem, size = 0x800, scoped, tag = 'input window, operand 2, single buffered']
    #allocation8 [shape = 'u8[2048]{0}', space=vmem, size = 0x800, scoped, tag = 'input window, operand 3, single buffered']
    #allocation9 [shape = 's32[1]{0}', space=sflag, size = 0x4, scoped, tag = 'scoped memory for point_transformer_classif.12']
    #allocation10 [shape = 'u8[65536]{0}', space=vmem, size = 0x10000, scoped, tag = 'input window, operand 4, single buffered']
    #allocation11 [shape = 'u8[512]{0}', space=vmem, size = 0x400, scoped, tag = 'input window, operand 5, single buffered']
    #allocation12 [shape = 's32[1]{0}', space=sflag, size = 0x4, scoped, tag = 'scoped memory for point_transformer_classif.12']
    #allocation13 [shape = 'u8[8192]{0}', space=vmem, size = 0x2000, scoped, tag = 'input window, operand 6, single buffered']
    #allocation14 [shape = 'u8[512]{0}', space=vmem, size = 0x400, scoped, tag = 'input window, operand 7, single buffered']
    #allocation15 [shape = 's32[1]{0}', space=sflag, size = 0x4, scoped, tag = 'scoped memory for point_transformer_classif.12']
    #allocation16 [shape = 'u8[16384]{0}', space=vmem, size = 0x4000, scoped, tag = 'input window, operand 8, single buffered']
    #allocation17 [shape = 'u8[512]{0}', space=vmem, size = 0x400, scoped, tag = 'input window, operand 9, single buffered']
    #allocation18 [shape = 's32[1]{0}', space=sflag, size = 0x4, scoped, tag = 'scoped memory for point_transformer_classif.12']
    #allocation19 [shape = 'u8[16384]{0}', space=vmem, size = 0x4000, scoped, tag = 'input window, operand 10, single buffered']
    #allocation20 [shape = 'u8[512]{0}', space=vmem, size = 0x400, scoped, tag = 'input window, operand 11, single buffered']
    #allocation21 [shape = 's32[1]{0}', space=sflag, size = 0x4, scoped, tag = 'scoped memory for point_transformer_classif.12']
    #allocation22 [shape = 'u8[16384]{0}', space=vmem, size = 0x4000, scoped, tag = 'input window, operand 12, single buffered']
    #allocation23 [shape = 'u8[512]{0}', space=vmem, size = 0x400, scoped, tag = 'input window, operand 13, single buffered']
    #allocation24 [shape = 's32[1]{0}', space=sflag, size = 0x4, scoped, tag = 'scoped memory for point_transformer_classif.12']
    #allocation25 [shape = 'u8[4096]{0}', space=vmem, size = 0x1000, scoped, tag = 'input window, operand 14, single buffered']
    #allocation26 [shape = 'u8[512]{0}', space=vmem, size = 0x400, scoped, tag = 'input window, operand 15, single buffered']
    #allocation27 [shape = 's32[1]{0}', space=sflag, size = 0x4, scoped, tag = 'scoped memory for point_transformer_classif.12']
    #allocation28 [shape = 'u8[4096]{0}', space=vmem, size = 0x1000, scoped, tag = 'output window, operand 0, single buffered']
    %21 = vsyncpa [#allocation3], 0
    %22 = vsyncpa [#allocation6], 0
    %23 = vsyncpa [#allocation9], 0
    %24 = vsyncpa [#allocation12], 0
    %25 = vsyncpa [#allocation15], 0
    %26 = vsyncpa [#allocation18], 0
    %27 = vsyncpa [#allocation21], 0
    %28 = vsyncpa [#allocation24], 0
    %29 = vsyncpa [#allocation27], 0
    %30 = vsyncpa [#allocation4], 0
    // Predicated region
    $region2: #{point_transformer_classif.12} parent=1 // pred_check
      _
    $region3: #{point_transformer_classif.12} parent=1 // pred_check_branch
      %32 = sbr.rel (0) target = $region5
    $region4: #{point_transformer_classif.12} parent=1 // pred_region
      %s34 = ssub.s32 128, 128
      %35 = vsyncadd [#allocation3], %s34
      %s37 = sshll.u32 [#allocation2], 4
      %s38 = int_to_ptr.vmem [resolvable:$true] %s37
      %40 = dma.hbm_to_vmem [thread:$0]  %s0, 128, %s38, [#allocation3]
    $region5: #{point_transformer_classif.12} parent=1 // pred_fallthru
      _
    // Predicated region
    $region6: #{point_transformer_classif.12} parent=1 // pred_check
      _
    $region7: #{point_transformer_classif.12} parent=1 // pred_check_branch
      %42 = sbr.rel (0) target = $region9
    $region8: #{point_transformer_classif.12} parent=1 // pred_region
      %s44 = ssub.s32 64, 64
      %45 = vsyncadd [#allocation6], %s44
      %s47 = sshll.u32 [#allocation5], 4
      %s48 = int_to_ptr.vmem [resolvable:$true] %s47
      %50 = dma.hbm_to_vmem [thread:$0]  %s1, 64, %s48, [#allocation6]
    $region9: #{point_transformer_classif.12} parent=1 // pred_fallthru
      _
    // Predicated region
    $region10: #{point_transformer_classif.12} parent=1 // pred_check
      _
    $region11: #{point_transformer_classif.12} parent=1 // pred_check_branch
      %52 = sbr.rel (0) target = $region13
    $region12: #{point_transformer_classif.12} parent=1 // pred_region
      %s54 = ssub.s32 64, 64
      %55 = vsyncadd [#allocation6], %s54
      %s57 = sshll.u32 [#allocation7], 4
      %s58 = int_to_ptr.vmem [resolvable:$true] %s57
      %60 = dma.hbm_to_vmem [thread:$0]  %s2, 64, %s58, [#allocation6]
    $region13: #{point_transformer_classif.12} parent=1 // pred_fallthru
      _
    // Predicated region
    $region14: #{point_transformer_classif.12} parent=1 // pred_check
      _
    $region15: #{point_transformer_classif.12} parent=1 // pred_check_branch
      %62 = sbr.rel (0) target = $region17
    $region16: #{point_transformer_classif.12} parent=1 // pred_region
      %s64 = ssub.s32 64, 64
      %65 = vsyncadd [#allocation9], %s64
      %s67 = sshll.u32 [#allocation8], 4
      %s68 = int_to_ptr.vmem [resolvable:$true] %s67
      %70 = dma.hbm_to_vmem [thread:$0]  %s3, 64, %s68, [#allocation9]
    $region17: #{point_transformer_classif.12} parent=1 // pred_fallthru
      _
    // Predicated region
    $region18: #{point_transformer_classif.12} parent=1 // pred_check
      _
    $region19: #{point_transformer_classif.12} parent=1 // pred_check_branch
      %72 = sbr.rel (0) target = $region21
    $region20: #{point_transformer_classif.12} parent=1 // pred_region
      %s74 = ssub.s32 2048, 2048
      %75 = vsyncadd [#allocation9], %s74
      %s76 = sshll.u32 [#allocation10], 4
      %s77 = int_to_ptr.vmem [resolvable:$true] %s76
      %82 = dma.hbm_to_vmem [thread:$0]  %s4, 2048, %s77, [#allocation9], 128, 128, 8
    $region21: #{point_transformer_classif.12} parent=1 // pred_fallthru
      _
    // Predicated region
    $region22: #{point_transformer_classif.12} parent=1 // pred_check
      _
    $region23: #{point_transformer_classif.12} parent=1 // pred_check_branch
      %84 = sbr.rel (0) target = $region25
    $region24: #{point_transformer_classif.12} parent=1 // pred_region
      %s86 = ssub.s32 16, 16
      %87 = vsyncadd [#allocation12], %s86
      %s89 = sshll.u32 [#allocation11], 4
      %s90 = int_to_ptr.vmem [resolvable:$true] %s89
      %92 = dma.hbm_to_vmem [thread:$0]  %s5, 16, %s90, [#allocation12]
    $region25: #{point_transformer_classif.12} parent=1 // pred_fallthru
      _
    // Predicated region
    $region26: #{point_transformer_classif.12} parent=1 // pred_check
      _
    $region27: #{point_transformer_classif.12} parent=1 // pred_check_branch
      %94 = sbr.rel (0) target = $region29
    $region28: #{point_transformer_classif.12} parent=1 // pred_region
      %s96 = ssub.s32 256, 256
      %97 = vsyncadd [#allocation12], %s96
      %s98 = sshll.u32 [#allocation13], 4
      %s99 = int_to_ptr.vmem [resolvable:$true] %s98
      %104 = dma.hbm_to_vmem [thread:$0]  %s6, 256, %s99, [#allocation12], 128, 128, 8
    $region29: #{point_transformer_classif.12} parent=1 // pred_fallthru
      _
    // Predicated region
    $region30: #{point_transformer_classif.12} parent=1 // pred_check
      _
    $region31: #{point_transformer_classif.12} parent=1 // pred_check_branch
      %106 = sbr.rel (0) target = $region33
    $region32: #{point_transformer_classif.12} parent=1 // pred_region
      %s108 = ssub.s32 16, 16
      %109 = vsyncadd [#allocation15], %s108
      %s111 = sshll.u32 [#allocation14], 4
      %s112 = int_to_ptr.vmem [resolvable:$true] %s111
      %114 = dma.hbm_to_vmem [thread:$0]  %s7, 16, %s112, [#allocation15]
    $region33: #{point_transformer_classif.12} parent=1 // pred_fallthru
      _
    // Predicated region
    $region34: #{point_transformer_classif.12} parent=1 // pred_check
      _
    $region35: #{point_transformer_classif.12} parent=1 // pred_check_branch
      %116 = sbr.rel (0) target = $region37
    $region36: #{point_transformer_classif.12} parent=1 // pred_region
      %s118 = ssub.s32 512, 512
      %119 = vsyncadd [#allocation15], %s118
      %s120 = sshll.u32 [#allocation16], 4
      %s121 = int_to_ptr.vmem [resolvable:$true] %s120
      %126 = dma.hbm_to_vmem [thread:$0]  %s8, 512, %s121, [#allocation15], 128, 128, 8
    $region37: #{point_transformer_classif.12} parent=1 // pred_fallthru
      _
    // Predicated region
    $region38: #{point_transformer_classif.12} parent=1 // pred_check
      _
    $region39: #{point_transformer_classif.12} parent=1 // pred_check_branch
      %128 = sbr.rel (0) target = $region41
    $region40: #{point_transformer_classif.12} parent=1 // pred_region
      %s130 = ssub.s32 16, 16
      %131 = vsyncadd [#allocation18], %s130
      %s133 = sshll.u32 [#allocation17], 4
      %s134 = int_to_ptr.vmem [resolvable:$true] %s133
      %136 = dma.hbm_to_vmem [thread:$0]  %s9, 16, %s134, [#allocation18]
    $region41: #{point_transformer_classif.12} parent=1 // pred_fallthru
      _
    // Predicated region
    $region42: #{point_transformer_classif.12} parent=1 // pred_check
      _
    $region43: #{point_transformer_classif.12} parent=1 // pred_check_branch
      %138 = sbr.rel (0) target = $region45
    $region44: #{point_transformer_classif.12} parent=1 // pred_region
      %s140 = ssub.s32 512, 512
      %141 = vsyncadd [#allocation18], %s140
      %s142 = sshll.u32 [#allocation19], 4
      %s143 = int_to_ptr.vmem [resolvable:$true] %s142
      %148 = dma.hbm_to_vmem [thread:$0]  %s10, 512, %s143, [#allocation18], 128, 128, 8
    $region45: #{point_transformer_classif.12} parent=1 // pred_fallthru
      _
    // Predicated region
    $region46: #{point_transformer_classif.12} parent=1 // pred_check
      _
    $region47: #{point_transformer_classif.12} parent=1 // pred_check_branch
      %150 = sbr.rel (0) target = $region49
    $region48: #{point_transformer_classif.12} parent=1 // pred_region
      %s152 = ssub.s32 16, 16
      %153 = vsyncadd [#allocation21], %s152
      %s155 = sshll.u32 [#allocation20], 4
      %s156 = int_to_ptr.vmem [resolvable:$true] %s155
      %158 = dma.hbm_to_vmem [thread:$0]  %s11, 16, %s156, [#allocation21]
    $region49: #{point_transformer_classif.12} parent=1 // pred_fallthru
      _
    // Predicated region
    $region50: #{point_transformer_classif.12} parent=1 // pred_check
      _
    $region51: #{point_transformer_classif.12} parent=1 // pred_check_branch
      %160 = sbr.rel (0) target = $region53
    $region52: #{point_transformer_classif.12} parent=1 // pred_region
      %s162 = ssub.s32 512, 512
      %163 = vsyncadd [#allocation21], %s162
      %s164 = sshll.u32 [#allocation22], 4
      %s165 = int_to_ptr.vmem [resolvable:$true] %s164
      %170 = dma.hbm_to_vmem [thread:$0]  %s12, 512, %s165, [#allocation21], 128, 128, 8
    $region53: #{point_transformer_classif.12} parent=1 // pred_fallthru
      _
    // Predicated region
    $region54: #{point_transformer_classif.12} parent=1 // pred_check
      _
    $region55: #{point_transformer_classif.12} parent=1 // pred_check_branch
      %172 = sbr.rel (0) target = $region57
    $region56: #{point_transformer_classif.12} parent=1 // pred_region
      %s174 = ssub.s32 16, 16
      %175 = vsyncadd [#allocation24], %s174
      %s177 = sshll.u32 [#allocation23], 4
      %s178 = int_to_ptr.vmem [resolvable:$true] %s177
      %180 = dma.hbm_to_vmem [thread:$0]  %s13, 16, %s178, [#allocation24]
    $region57: #{point_transformer_classif.12} parent=1 // pred_fallthru
      _
    // Predicated region
    $region58: #{point_transformer_classif.12} parent=1 // pred_check
      _
    $region59: #{point_transformer_classif.12} parent=1 // pred_check_branch
      %182 = sbr.rel (0) target = $region61
    $region60: #{point_transformer_classif.12} parent=1 // pred_region
      %s184 = ssub.s32 128, 128
      %185 = vsyncadd [#allocation24], %s184
      %s187 = sshll.u32 [#allocation25], 4
      %s188 = int_to_ptr.vmem [resolvable:$true] %s187
      %190 = dma.hbm_to_vmem [thread:$0]  %s14, 128, %s188, [#allocation24]
    $region61: #{point_transformer_classif.12} parent=1 // pred_fallthru
      _
    // Predicated region
    $region62: #{point_transformer_classif.12} parent=1 // pred_check
      _
    $region63: #{point_transformer_classif.12} parent=1 // pred_check_branch
      %192 = sbr.rel (0) target = $region65
    $region64: #{point_transformer_classif.12} parent=1 // pred_region
      %s194 = ssub.s32 16, 16
      %195 = vsyncadd [#allocation27], %s194
      %s197 = sshll.u32 [#allocation26], 4
      %s198 = int_to_ptr.vmem [resolvable:$true] %s197
      %200 = dma.hbm_to_vmem [thread:$0]  %s15, 16, %s198, [#allocation27]
    $region65: #{point_transformer_classif.12} parent=1 // pred_fallthru
      _
    // Predicated region
    $region66: #{point_transformer_classif.12} parent=1 // pred_check
      _
    $region67: #{point_transformer_classif.12} parent=1 // pred_check_branch
      %202 = sbr.rel (0) target = $region69
    $region68: #{point_transformer_classif.12} parent=1 // pred_region
      %203 = dma.done [#allocation3], 128
    $region69: #{point_transformer_classif.12} parent=1 // pred_fallthru
      _
    // Predicated region
    $region70: #{point_transformer_classif.12} parent=1 // pred_check
      _
    $region71: #{point_transformer_classif.12} parent=1 // pred_check_branch
      %205 = sbr.rel (0) target = $region73
    $region72: #{point_transformer_classif.12} parent=1 // pred_region
      %206 = dma.done [#allocation6], 64
    $region73: #{point_transformer_classif.12} parent=1 // pred_fallthru
      _
    // Predicated region
    $region74: #{point_transformer_classif.12} parent=1 // pred_check
      _
    $region75: #{point_transformer_classif.12} parent=1 // pred_check_branch
      %208 = sbr.rel (0) target = $region77
    $region76: #{point_transformer_classif.12} parent=1 // pred_region
      %209 = dma.done [#allocation6], 64
    $region77: #{point_transformer_classif.12} parent=1 // pred_fallthru
      _
    // Predicated region
    $region78: #{point_transformer_classif.12} parent=1 // pred_check
      _
    $region79: #{point_transformer_classif.12} parent=1 // pred_check_branch
      %211 = sbr.rel (0) target = $region81
    $region80: #{point_transformer_classif.12} parent=1 // pred_region
      %212 = dma.done [#allocation9], 64
    $region81: #{point_transformer_classif.12} parent=1 // pred_fallthru
      _
    // Predicated region
    $region82: #{point_transformer_classif.12} parent=1 // pred_check
      _
    $region83: #{point_transformer_classif.12} parent=1 // pred_check_branch
      %214 = sbr.rel (0) target = $region85
    $region84: #{point_transformer_classif.12} parent=1 // pred_region
      %215 = dma.done [#allocation9], 2048
    $region85: #{point_transformer_classif.12} parent=1 // pred_fallthru
      _
    // Predicated region
    $region86: #{point_transformer_classif.12} parent=1 // pred_check
      _
    $region87: #{point_transformer_classif.12} parent=1 // pred_check_branch
      %217 = sbr.rel (0) target = $region89
    $region88: #{point_transformer_classif.12} parent=1 // pred_region
      %218 = dma.done [#allocation12], 16
    $region89: #{point_transformer_classif.12} parent=1 // pred_fallthru
      _
    // Predicated region
    $region90: #{point_transformer_classif.12} parent=1 // pred_check
      _
    $region91: #{point_transformer_classif.12} parent=1 // pred_check_branch
      %220 = sbr.rel (0) target = $region93
    $region92: #{point_transformer_classif.12} parent=1 // pred_region
      %221 = dma.done [#allocation12], 256
    $region93: #{point_transformer_classif.12} parent=1 // pred_fallthru
      _
    // Predicated region
    $region94: #{point_transformer_classif.12} parent=1 // pred_check
      _
    $region95: #{point_transformer_classif.12} parent=1 // pred_check_branch
      %223 = sbr.rel (0) target = $region97
    $region96: #{point_transformer_classif.12} parent=1 // pred_region
      %224 = dma.done [#allocation15], 16
    $region97: #{point_transformer_classif.12} parent=1 // pred_fallthru
      _
    // Predicated region
    $region98: #{point_transformer_classif.12} parent=1 // pred_check
      _
    $region99: #{point_transformer_classif.12} parent=1 // pred_check_branch
      %226 = sbr.rel (0) target = $region101
    $region100: #{point_transformer_classif.12} parent=1 // pred_region
      %227 = dma.done [#allocation15], 512
    $region101: #{point_transformer_classif.12} parent=1 // pred_fallthru
      _
    // Predicated region
    $region102: #{point_transformer_classif.12} parent=1 // pred_check
      _
    $region103: #{point_transformer_classif.12} parent=1 // pred_check_branch
      %229 = sbr.rel (0) target = $region105
    $region104: #{point_transformer_classif.12} parent=1 // pred_region
      %230 = dma.done [#allocation18], 16
    $region105: #{point_transformer_classif.12} parent=1 // pred_fallthru
      _
    // Predicated region
    $region106: #{point_transformer_classif.12} parent=1 // pred_check
      _
    $region107: #{point_transformer_classif.12} parent=1 // pred_check_branch
      %232 = sbr.rel (0) target = $region109
    $region108: #{point_transformer_classif.12} parent=1 // pred_region
      %233 = dma.done [#allocation18], 512
    $region109: #{point_transformer_classif.12} parent=1 // pred_fallthru
      _
    // Predicated region
    $region110: #{point_transformer_classif.12} parent=1 // pred_check
      _
    $region111: #{point_transformer_classif.12} parent=1 // pred_check_branch
      %235 = sbr.rel (0) target = $region113
    $region112: #{point_transformer_classif.12} parent=1 // pred_region
      %236 = dma.done [#allocation21], 16
    $region113: #{point_transformer_classif.12} parent=1 // pred_fallthru
      _
    // Predicated region
    $region114: #{point_transformer_classif.12} parent=1 // pred_check
      _
    $region115: #{point_transformer_classif.12} parent=1 // pred_check_branch
      %238 = sbr.rel (0) target = $region117
    $region116: #{point_transformer_classif.12} parent=1 // pred_region
      %239 = dma.done [#allocation21], 512
    $region117: #{point_transformer_classif.12} parent=1 // pred_fallthru
      _
    // Predicated region
    $region118: #{point_transformer_classif.12} parent=1 // pred_check
      _
    $region119: #{point_transformer_classif.12} parent=1 // pred_check_branch
      %241 = sbr.rel (0) target = $region121
    $region120: #{point_transformer_classif.12} parent=1 // pred_region
      %242 = dma.done [#allocation24], 16
    $region121: #{point_transformer_classif.12} parent=1 // pred_fallthru
      _
    // Predicated region
    $region122: #{point_transformer_classif.12} parent=1 // pred_check
      _
    $region123: #{point_transformer_classif.12} parent=1 // pred_check_branch
      %244 = sbr.rel (0) target = $region125
    $region124: #{point_transformer_classif.12} parent=1 // pred_region
      %245 = dma.done [#allocation24], 128
    $region125: #{point_transformer_classif.12} parent=1 // pred_fallthru
      _
    // Predicated region
    $region126: #{point_transformer_classif.12} parent=1 // pred_check
      _
    $region127: #{point_transformer_classif.12} parent=1 // pred_check_branch
      %247 = sbr.rel (0) target = $region129
    $region128: #{point_transformer_classif.12} parent=1 // pred_region
      %248 = dma.done [#allocation27], 16
    $region129: #{point_transformer_classif.12} parent=1 // pred_fallthru
      _
    %v249 = vld [vmem:[#allocation2] sm:$0xff]
    %v250 = vld [vmem:[#allocation10] sm:$0xff]
    %v251 = vld [vmem:[#allocation10 + $0x8] sm:$0xff]
    %v252 = vld [vmem:[#allocation10 + $0x10] sm:$0xff]
    %v253 = vld [vmem:[#allocation10 + $0x18] sm:$0xff]
    %v254 = vld [vmem:[#allocation10 + $0x20] sm:$0xff]
    %v255 = vld [vmem:[#allocation10 + $0x28] sm:$0xff]
    %v256 = vld [vmem:[#allocation10 + $0x30] sm:$0xff]
    %v257 = vld [vmem:[#allocation10 + $0x38] sm:$0xff]
    %v258 = vld [vmem:[#allocation10 + $0x40] sm:$0xff]
    %v259 = vld [vmem:[#allocation10 + $0x48] sm:$0xff]
    %v260 = vld [vmem:[#allocation10 + $0x50] sm:$0xff]
    %v261 = vld [vmem:[#allocation10 + $0x58] sm:$0xff]
    %v262 = vld [vmem:[#allocation10 + $0x60] sm:$0xff]
    %v263 = vld [vmem:[#allocation10 + $0x68] sm:$0xff]
    %v264 = vld [vmem:[#allocation10 + $0x70] sm:$0xff]
    %v265 = vld [vmem:[#allocation10 + $0x78] sm:$0xff]
    %v266 = vld [vmem:[#allocation11] sm:$0x1]
    %v268 = vlaneseq
    %v269 = vshrl.u32 %v268, 7
    %v270 = vsub.s32 0, %v269
    %v271 = vrot.slane %v266, %v270
    %273 = vmatprep.subr.mxu0 0.0
    %274 = vmatpush1.msra.mxu0 %v250
    %275 = vmatprep.subr.mxu0 0.0
    %276 = vmatpush1.msra.mxu0 %v251
    %277 = vmatprep.subr.mxu0 0.0
    %278 = vmatpush1.msra.mxu0 %v252
    %279 = vmatprep.subr.mxu0 0.0
    %280 = vmatpush1.msra.mxu0 %v253
    %281 = vmatprep.subr.mxu0 0.0
    %282 = vmatpush1.msra.mxu0 %v254
    %283 = vmatprep.subr.mxu0 0.0
    %284 = vmatpush1.msra.mxu0 %v255
    %285 = vmatprep.subr.mxu0 0.0
    %286 = vmatpush1.msra.mxu0 %v256
    %287 = vmatprep.subr.mxu0 0.0
    %288 = vmatpush1.msra.mxu0 %v257
    %289 = vmatprep.subr.mxu0 0.0
    %290 = vmatpush1.msra.mxu0 %v258
    %291 = vmatprep.subr.mxu0 0.0
    %292 = vmatpush1.msra.mxu0 %v259
    %293 = vmatprep.subr.mxu0 0.0
    %294 = vmatpush1.msra.mxu0 %v260
    %295 = vmatprep.subr.mxu0 0.0
    %296 = vmatpush1.msra.mxu0 %v261
    %297 = vmatprep.subr.mxu0 0.0
    %298 = vmatpush1.msra.mxu0 %v262
    %299 = vmatprep.subr.mxu0 0.0
    %300 = vmatpush1.msra.mxu0 %v263
    %301 = vmatprep.subr.mxu0 0.0
    %302 = vmatpush1.msra.mxu0 %v264
    %303 = vmatprep.subr.mxu0 0.0
    %304 = vmatpush1.msra.mxu0 %v265
    %305 = vmatprep.subr.mxu0 0.0
    %306 = vmatpush1.msra.mxu0 0.0
    %307 = vmatprep.subr.mxu0 0.0
    %308 = vmatpush1.msra.mxu0 0.0
    %309 = vmatprep.subr.mxu0 0.0
    %310 = vmatpush1.msra.mxu0 0.0
    %311 = vmatprep.subr.mxu0 0.0
    %312 = vmatpush1.msra.mxu0 0.0
    %313 = vmatprep.subr.mxu0 0.0
    %314 = vmatpush1.msra.mxu0 0.0
    %315 = vmatprep.subr.mxu0 0.0
    %316 = vmatpush1.msra.mxu0 0.0
    %317 = vmatprep.subr.mxu0 0.0
    %318 = vmatpush1.msra.mxu0 0.0
    %319 = vmatprep.subr.mxu0 0.0
    %320 = vmatpush1.msra.mxu0 0.0
    %321 = vmatprep.subr.mxu0 0.0
    %322 = vmatpush1.msra.mxu0 0.0
    %323 = vmatprep.subr.mxu0 0.0
    %324 = vmatpush1.msra.mxu0 0.0
    %325 = vmatprep.subr.mxu0 0.0
    %326 = vmatpush1.msra.mxu0 0.0
    %327 = vmatprep.subr.mxu0 0.0
    %328 = vmatpush1.msra.mxu0 0.0
    %329 = vmatprep.subr.mxu0 0.0
    %330 = vmatpush1.msra.mxu0 0.0
    %331 = vmatprep.subr.mxu0 0.0
    %332 = vmatpush1.msra.mxu0 0.0
    %333 = vmatprep.subr.mxu0 0.0
    %334 = vmatpush1.msra.mxu0 0.0
    %335 = vmatprep.subr.mxu0 0.0
    %336 = vmatpush1.msra.mxu0 0.0
    %337 = vmatprep.mubr.f32.mxu0 0.0
    %338 = vmatmul.mubr.f32.gmra.mrb[0].mxu0 %v249
    %v339 = vpop.f32.mrb[0].mxu0
    %v340 = vadd.f32 %v271, %v339
    %v341 = vpop.f32.mrb[0].mxu0
    %342 = vdwg.mxu0
    %344 = vrot.lane.b32.xlu0 %v340, 8
    %v345 = vpop.permute.xlu0 %344
    %347 = vrot.lane.b32.xlu0 %v340, 16
    %v348 = vpop.permute.xlu0 %347
    %350 = vrot.lane.b32.xlu0 %v340, 24
    %v351 = vpop.permute.xlu0 %350
    %vm353 = vcmask 64512
    %v354 = vsel %vm353, %v340, %v345
    %vm355 = vcmask 130048
    %v356 = vsel %vm355, %v354, %v348
    %vm357 = vcmask 195584
    %v358 = vsel %vm357, %v356, %v351
    %v359 = vld [vmem:[#allocation8] sm:$0xf]
    %v360 = vunpack.c.l.bf16 %v359
    %v361 = vld [vmem:[#allocation13] sm:$0xff]
    %v362 = vld [vmem:[#allocation13 + $0x8] sm:$0xf]
    %v363 = vld [vmem:[#allocation14] sm:$0x1]
    %v365 = vlaneseq
    %v366 = vshrl.u32 %v365, 7
    %v367 = vsub.s32 0, %v366
    %v368 = vrot.slane %v363, %v367
    %vm370 = vcmask 97280
    %v372 = vsel %vm370, %v360, 0
    %vm374 = vcmask 1043456
    %v376 = vsel %vm374, %v362, 0
    %378 = vmatprep.subr.mxu0 0.0
    %379 = vmatpush1.msra.mxu0 %v361
    %380 = vmatprep.subr.mxu0 0.0
    %381 = vmatpush1.msra.mxu0 %v376
    %382 = vmatprep.subr.mxu0 0.0
    %383 = vmatpush1.msra.mxu0 0.0
    %384 = vmatprep.subr.mxu0 0.0
    %385 = vmatpush1.msra.mxu0 0.0
    %386 = vmatprep.subr.mxu0 0.0
    %387 = vmatpush1.msra.mxu0 0.0
    %388 = vmatprep.subr.mxu0 0.0
    %389 = vmatpush1.msra.mxu0 0.0
    %390 = vmatprep.subr.mxu0 0.0
    %391 = vmatpush1.msra.mxu0 0.0
    %392 = vmatprep.subr.mxu0 0.0
    %393 = vmatpush1.msra.mxu0 0.0
    %394 = vmatprep.subr.mxu0 0.0
    %395 = vmatpush1.msra.mxu0 0.0
    %396 = vmatprep.subr.mxu0 0.0
    %397 = vmatpush1.msra.mxu0 0.0
    %398 = vmatprep.subr.mxu0 0.0
    %399 = vmatpush1.msra.mxu0 0.0
    %400 = vmatprep.subr.mxu0 0.0
    %401 = vmatpush1.msra.mxu0 0.0
    %402 = vmatprep.subr.mxu0 0.0
    %403 = vmatpush1.msra.mxu0 0.0
    %404 = vmatprep.subr.mxu0 0.0
    %405 = vmatpush1.msra.mxu0 0.0
    %406 = vmatprep.subr.mxu0 0.0
    %407 = vmatpush1.msra.mxu0 0.0
    %408 = vmatprep.subr.mxu0 0.0
    %409 = vmatpush1.msra.mxu0 0.0
    %410 = vmatprep.subr.mxu0 0.0
    %411 = vmatpush1.msra.mxu0 0.0
    %412 = vmatprep.subr.mxu0 0.0
    %413 = vmatpush1.msra.mxu0 0.0
    %414 = vmatprep.subr.mxu0 0.0
    %415 = vmatpush1.msra.mxu0 0.0
    %416 = vmatprep.subr.mxu0 0.0
    %417 = vmatpush1.msra.mxu0 0.0
    %418 = vmatprep.subr.mxu0 0.0
    %419 = vmatpush1.msra.mxu0 0.0
    %420 = vmatprep.subr.mxu0 0.0
    %421 = vmatpush1.msra.mxu0 0.0
    %422 = vmatprep.subr.mxu0 0.0
    %423 = vmatpush1.msra.mxu0 0.0
    %424 = vmatprep.subr.mxu0 0.0
    %425 = vmatpush1.msra.mxu0 0.0
    %426 = vmatprep.subr.mxu0 0.0
    %427 = vmatpush1.msra.mxu0 0.0
    %428 = vmatprep.subr.mxu0 0.0
    %429 = vmatpush1.msra.mxu0 0.0
    %430 = vmatprep.subr.mxu0 0.0
    %431 = vmatpush1.msra.mxu0 0.0
    %432 = vmatprep.subr.mxu0 0.0
    %433 = vmatpush1.msra.mxu0 0.0
    %434 = vmatprep.subr.mxu0 0.0
    %435 = vmatpush1.msra.mxu0 0.0
    %436 = vmatprep.subr.mxu0 0.0
    %437 = vmatpush1.msra.mxu0 0.0
    %438 = vmatprep.subr.mxu0 0.0
    %439 = vmatpush1.msra.mxu0 0.0
    %440 = vmatprep.subr.mxu0 0.0
    %441 = vmatpush1.msra.mxu0 0.0
    %442 = vmatprep.mubr.f32.mxu0 0.0
    %443 = vmatmul.mubr.f32.gmra.mrb[0].mxu0 %v372
    %v444 = vpop.f32.mrb[0].mxu0
    %v445 = vadd.f32 %v368, %v444
    %v446 = vpop.f32.mrb[0].mxu0
    %447 = vdwg.mxu0
    %v448 = vmax.f32 %v445, 0.0
    %v449 = vld [vmem:[#allocation16] sm:$0xff]
    %v450 = vld [vmem:[#allocation16 + $0x8] sm:$0xff]
    %v451 = vld [vmem:[#allocation16 + $0x10] sm:$0xff]
    %v452 = vld [vmem:[#allocation16 + $0x18] sm:$0xff]
    %v453 = vld [vmem:[#allocation17] sm:$0x1]
    %v455 = vlaneseq
    %v456 = vshrl.u32 %v455, 7
    %v457 = vsub.s32 0, %v456
    %v458 = vrot.slane %v453, %v457
    %vm460 = vcmask 261120
    %v462 = vsel %vm460, %v448, 0
    %464 = vmatprep.subr.mxu0 0.0
    %465 = vmatpush1.msra.mxu0 %v449
    %466 = vmatprep.subr.mxu0 0.0
    %467 = vmatpush1.msra.mxu0 %v450
    %468 = vmatprep.subr.mxu0 0.0
    %469 = vmatpush1.msra.mxu0 %v451
    %470 = vmatprep.subr.mxu0 0.0
    %471 = vmatpush1.msra.mxu0 %v452
    %472 = vmatprep.subr.mxu0 0.0
    %473 = vmatpush1.msra.mxu0 0.0
    %474 = vmatprep.subr.mxu0 0.0
    %475 = vmatpush1.msra.mxu0 0.0
    %476 = vmatprep.subr.mxu0 0.0
    %477 = vmatpush1.msra.mxu0 0.0
    %478 = vmatprep.subr.mxu0 0.0
    %479 = vmatpush1.msra.mxu0 0.0
    %480 = vmatprep.subr.mxu0 0.0
    %481 = vmatpush1.msra.mxu0 0.0
    %482 = vmatprep.subr.mxu0 0.0
    %483 = vmatpush1.msra.mxu0 0.0
    %484 = vmatprep.subr.mxu0 0.0
    %485 = vmatpush1.msra.mxu0 0.0
    %486 = vmatprep.subr.mxu0 0.0
    %487 = vmatpush1.msra.mxu0 0.0
    %488 = vmatprep.subr.mxu0 0.0
    %489 = vmatpush1.msra.mxu0 0.0
    %490 = vmatprep.subr.mxu0 0.0
    %491 = vmatpush1.msra.mxu0 0.0
    %492 = vmatprep.subr.mxu0 0.0
    %493 = vmatpush1.msra.mxu0 0.0
    %494 = vmatprep.subr.mxu0 0.0
    %495 = vmatpush1.msra.mxu0 0.0
    %496 = vmatprep.subr.mxu0 0.0
    %497 = vmatpush1.msra.mxu0 0.0
    %498 = vmatprep.subr.mxu0 0.0
    %499 = vmatpush1.msra.mxu0 0.0
    %500 = vmatprep.subr.mxu0 0.0
    %501 = vmatpush1.msra.mxu0 0.0
    %502 = vmatprep.subr.mxu0 0.0
    %503 = vmatpush1.msra.mxu0 0.0
    %504 = vmatprep.subr.mxu0 0.0
    %505 = vmatpush1.msra.mxu0 0.0
    %506 = vmatprep.subr.mxu0 0.0
    %507 = vmatpush1.msra.mxu0 0.0
    %508 = vmatprep.subr.mxu0 0.0
    %509 = vmatpush1.msra.mxu0 0.0
    %510 = vmatprep.subr.mxu0 0.0
    %511 = vmatpush1.msra.mxu0 0.0
    %512 = vmatprep.subr.mxu0 0.0
    %513 = vmatpush1.msra.mxu0 0.0
    %514 = vmatprep.subr.mxu0 0.0
    %515 = vmatpush1.msra.mxu0 0.0
    %516 = vmatprep.subr.mxu0 0.0
    %517 = vmatpush1.msra.mxu0 0.0
    %518 = vmatprep.subr.mxu0 0.0
    %519 = vmatpush1.msra.mxu0 0.0
    %520 = vmatprep.subr.mxu0 0.0
    %521 = vmatpush1.msra.mxu0 0.0
    %522 = vmatprep.subr.mxu0 0.0
    %523 = vmatpush1.msra.mxu0 0.0
    %524 = vmatprep.subr.mxu0 0.0
    %525 = vmatpush1.msra.mxu0 0.0
    %526 = vmatprep.subr.mxu0 0.0
    %527 = vmatpush1.msra.mxu0 0.0
    %528 = vmatprep.mubr.f32.mxu0 0.0
    %529 = vmatmul.mubr.f32.gmra.mrb[0].mxu0 %v462
    %v530 = vpop.f32.mrb[0].mxu0
    %v531 = vadd.f32 %v458, %v530
    %v532 = vpop.f32.mrb[0].mxu0
    %533 = vdwg.mxu0
    %v534 = vld [vmem:[#allocation5] sm:$0xf]
    %v535 = vunpack.c.l.bf16 %v534
    %v536 = vsub.f32 %v358, %v535
    %v537 = vadd.f32 %v536, %v531
    %v538 = vld [vmem:[#allocation19] sm:$0xff]
    %v539 = vld [vmem:[#allocation19 + $0x8] sm:$0xff]
    %v540 = vld [vmem:[#allocation19 + $0x10] sm:$0xff]
    %v541 = vld [vmem:[#allocation19 + $0x18] sm:$0xff]
    %v542 = vld [vmem:[#allocation20] sm:$0x1]
    %v544 = vlaneseq
    %v545 = vshrl.u32 %v544, 7
    %v546 = vsub.s32 0, %v545
    %v547 = vrot.slane %v542, %v546
    %v550 = vsel %vm460, %v537, 0
    %552 = vmatprep.subr.mxu0 0.0
    %553 = vmatpush1.msra.mxu0 %v538
    %554 = vmatprep.subr.mxu0 0.0
    %555 = vmatpush1.msra.mxu0 %v539
    %556 = vmatprep.subr.mxu0 0.0
    %557 = vmatpush1.msra.mxu0 %v540
    %558 = vmatprep.subr.mxu0 0.0
    %559 = vmatpush1.msra.mxu0 %v541
    %560 = vmatprep.subr.mxu0 0.0
    %561 = vmatpush1.msra.mxu0 0.0
    %562 = vmatprep.subr.mxu0 0.0
    %563 = vmatpush1.msra.mxu0 0.0
    %564 = vmatprep.subr.mxu0 0.0
    %565 = vmatpush1.msra.mxu0 0.0
    %566 = vmatprep.subr.mxu0 0.0
    %567 = vmatpush1.msra.mxu0 0.0
    %568 = vmatprep.subr.mxu0 0.0
    %569 = vmatpush1.msra.mxu0 0.0
    %570 = vmatprep.subr.mxu0 0.0
    %571 = vmatpush1.msra.mxu0 0.0
    %572 = vmatprep.subr.mxu0 0.0
    %573 = vmatpush1.msra.mxu0 0.0
    %574 = vmatprep.subr.mxu0 0.0
    %575 = vmatpush1.msra.mxu0 0.0
    %576 = vmatprep.subr.mxu0 0.0
    %577 = vmatpush1.msra.mxu0 0.0
    %578 = vmatprep.subr.mxu0 0.0
    %579 = vmatpush1.msra.mxu0 0.0
    %580 = vmatprep.subr.mxu0 0.0
    %581 = vmatpush1.msra.mxu0 0.0
    %582 = vmatprep.subr.mxu0 0.0
    %583 = vmatpush1.msra.mxu0 0.0
    %584 = vmatprep.subr.mxu0 0.0
    %585 = vmatpush1.msra.mxu0 0.0
    %586 = vmatprep.subr.mxu0 0.0
    %587 = vmatpush1.msra.mxu0 0.0
    %588 = vmatprep.subr.mxu0 0.0
    %589 = vmatpush1.msra.mxu0 0.0
    %590 = vmatprep.subr.mxu0 0.0
    %591 = vmatpush1.msra.mxu0 0.0
    %592 = vmatprep.subr.mxu0 0.0
    %593 = vmatpush1.msra.mxu0 0.0
    %594 = vmatprep.subr.mxu0 0.0
    %595 = vmatpush1.msra.mxu0 0.0
    %596 = vmatprep.subr.mxu0 0.0
    %597 = vmatpush1.msra.mxu0 0.0
    %598 = vmatprep.subr.mxu0 0.0
    %599 = vmatpush1.msra.mxu0 0.0
    %600 = vmatprep.subr.mxu0 0.0
    %601 = vmatpush1.msra.mxu0 0.0
    %602 = vmatprep.subr.mxu0 0.0
    %603 = vmatpush1.msra.mxu0 0.0
    %604 = vmatprep.subr.mxu0 0.0
    %605 = vmatpush1.msra.mxu0 0.0
    %606 = vmatprep.subr.mxu0 0.0
    %607 = vmatpush1.msra.mxu0 0.0
    %608 = vmatprep.subr.mxu0 0.0
    %609 = vmatpush1.msra.mxu0 0.0
    %610 = vmatprep.subr.mxu0 0.0
    %611 = vmatpush1.msra.mxu0 0.0
    %612 = vmatprep.subr.mxu0 0.0
    %613 = vmatpush1.msra.mxu0 0.0
    %614 = vmatprep.subr.mxu0 0.0
    %615 = vmatpush1.msra.mxu0 0.0
    %616 = vmatprep.mubr.f32.mxu0 0.0
    %617 = vmatmul.mubr.f32.gmra.mrb[0].mxu0 %v550
    %v618 = vpop.f32.mrb[0].mxu0
    %v619 = vadd.f32 %v547, %v618
    %v620 = vpop.f32.mrb[0].mxu0
    %621 = vdwg.mxu0
    %v622 = vmax.f32 %v619, 0.0
    %v623 = vld [vmem:[#allocation22] sm:$0xff]
    %v624 = vld [vmem:[#allocation22 + $0x8] sm:$0xff]
    %v625 = vld [vmem:[#allocation22 + $0x10] sm:$0xff]
    %v626 = vld [vmem:[#allocation22 + $0x18] sm:$0xff]
    %v627 = vld [vmem:[#allocation23] sm:$0x1]
    %v629 = vlaneseq
    %v630 = vshrl.u32 %v629, 7
    %v631 = vsub.s32 0, %v630
    %v632 = vrot.slane %v627, %v631
    %v635 = vsel %vm460, %v622, 0
    %637 = vmatprep.subr.mxu0 0.0
    %638 = vmatpush1.msra.mxu0 %v623
    %639 = vmatprep.subr.mxu0 0.0
    %640 = vmatpush1.msra.mxu0 %v624
    %641 = vmatprep.subr.mxu0 0.0
    %642 = vmatpush1.msra.mxu0 %v625
    %643 = vmatprep.subr.mxu0 0.0
    %644 = vmatpush1.msra.mxu0 %v626
    %645 = vmatprep.subr.mxu0 0.0
    %646 = vmatpush1.msra.mxu0 0.0
    %647 = vmatprep.subr.mxu0 0.0
    %648 = vmatpush1.msra.mxu0 0.0
    %649 = vmatprep.subr.mxu0 0.0
    %650 = vmatpush1.msra.mxu0 0.0
    %651 = vmatprep.subr.mxu0 0.0
    %652 = vmatpush1.msra.mxu0 0.0
    %653 = vmatprep.subr.mxu0 0.0
    %654 = vmatpush1.msra.mxu0 0.0
    %655 = vmatprep.subr.mxu0 0.0
    %656 = vmatpush1.msra.mxu0 0.0
    %657 = vmatprep.subr.mxu0 0.0
    %658 = vmatpush1.msra.mxu0 0.0
    %659 = vmatprep.subr.mxu0 0.0
    %660 = vmatpush1.msra.mxu0 0.0
    %661 = vmatprep.subr.mxu0 0.0
    %662 = vmatpush1.msra.mxu0 0.0
    %663 = vmatprep.subr.mxu0 0.0
    %664 = vmatpush1.msra.mxu0 0.0
    %665 = vmatprep.subr.mxu0 0.0
    %666 = vmatpush1.msra.mxu0 0.0
    %667 = vmatprep.subr.mxu0 0.0
    %668 = vmatpush1.msra.mxu0 0.0
    %669 = vmatprep.subr.mxu0 0.0
    %670 = vmatpush1.msra.mxu0 0.0
    %671 = vmatprep.subr.mxu0 0.0
    %672 = vmatpush1.msra.mxu0 0.0
    %673 = vmatprep.subr.mxu0 0.0
    %674 = vmatpush1.msra.mxu0 0.0
    %675 = vmatprep.subr.mxu0 0.0
    %676 = vmatpush1.msra.mxu0 0.0
    %677 = vmatprep.subr.mxu0 0.0
    %678 = vmatpush1.msra.mxu0 0.0
    %679 = vmatprep.subr.mxu0 0.0
    %680 = vmatpush1.msra.mxu0 0.0
    %681 = vmatprep.subr.mxu0 0.0
    %682 = vmatpush1.msra.mxu0 0.0
    %683 = vmatprep.subr.mxu0 0.0
    %684 = vmatpush1.msra.mxu0 0.0
    %685 = vmatprep.subr.mxu0 0.0
    %686 = vmatpush1.msra.mxu0 0.0
    %687 = vmatprep.subr.mxu0 0.0
    %688 = vmatpush1.msra.mxu0 0.0
    %689 = vmatprep.subr.mxu0 0.0
    %690 = vmatpush1.msra.mxu0 0.0
    %691 = vmatprep.subr.mxu0 0.0
    %692 = vmatpush1.msra.mxu0 0.0
    %693 = vmatprep.subr.mxu0 0.0
    %694 = vmatpush1.msra.mxu0 0.0
    %695 = vmatprep.subr.mxu0 0.0
    %696 = vmatpush1.msra.mxu0 0.0
    %697 = vmatprep.subr.mxu0 0.0
    %698 = vmatpush1.msra.mxu0 0.0
    %699 = vmatprep.subr.mxu0 0.0
    %700 = vmatpush1.msra.mxu0 0.0
    %701 = vmatprep.mubr.f32.mxu0 0.0
    %702 = vmatmul.mubr.f32.gmra.mrb[0].mxu0 %v635
    %v703 = vpop.f32.mrb[0].mxu0
    %v704 = vadd.f32 %v632, %v703
    %v705 = vpop.f32.mrb[0].mxu0
    %706 = vdwg.mxu0
    %v707 = vmul.f32 %v704, 0.35355338
    %v708 = vld [vmem:[#allocation7] sm:$0xf]
    %v709 = vunpack.c.l.bf16 %v708
    %v710 = vadd.f32 %v709, %v531
    %712 = vrot.lane.b32.xlu0 %v707, 120
    %v713 = vpop.permute.xlu0 %712
    %v715 = vmax.f32 %v707, %v713
    %716 = vrot.lane.b32.xlu0 %v707, 112
    %v717 = vpop.permute.xlu0 %716
    %v719 = vmax.f32 %v715, %v717
    %720 = vrot.lane.b32.xlu0 %v707, 104
    %v721 = vpop.permute.xlu0 %720
    %v723 = vmax.f32 %v719, %v721
    %v724 = vsub.f32 %v707, %v723
    %v725 = vmul.f32 %v724, 1.442695
    %v726 = vpow.pop %v725
    %v727 = vmul.f32 %v726, %v710
    %729 = vrot.lane.b32.xlu0 %v723, 8
    %v730 = vpop.permute.xlu0 %729
    %v732 = vsub.f32 %v707, %v730
    %v733 = vmul.f32 %v732, 1.442695
    %v734 = vpow.pop %v733
    %736 = vrot.lane.b32.xlu0 %v734, 120
    %v737 = vpop.permute.xlu0 %736
    %v739 = vadd.f32 %v726, %v737
    %v740 = vmul.f32 %v734, %v710
    %742 = vrot.lane.b32.xlu0 %v740, 120
    %v743 = vpop.permute.xlu0 %742
    %v745 = vadd.f32 %v727, %v743
    %746 = vrot.lane.b32.xlu0 %v723, 16
    %v747 = vpop.permute.xlu0 %746
    %v749 = vsub.f32 %v707, %v747
    %v750 = vmul.f32 %v749, 1.442695
    %v751 = vpow.pop %v750
    %753 = vrot.lane.b32.xlu0 %v751, 112
    %v754 = vpop.permute.xlu0 %753
    %v756 = vadd.f32 %v739, %v754
    %v757 = vmul.f32 %v751, %v710
    %759 = vrot.lane.b32.xlu0 %v757, 112
    %v760 = vpop.permute.xlu0 %759
    %v762 = vadd.f32 %v745, %v760
    %763 = vrot.lane.b32.xlu0 %v723, 24
    %v764 = vpop.permute.xlu0 %763
    %v766 = vsub.f32 %v707, %v764
    %v767 = vmul.f32 %v766, 1.442695
    %v768 = vpow.pop %v767
    %770 = vrot.lane.b32.xlu0 %v768, 104
    %v771 = vpop.permute.xlu0 %770
    %v773 = vadd.f32 %v756, %v771
    %v774 = vmul.f32 %v768, %v710
    %776 = vrot.lane.b32.xlu0 %v774, 104
    %v777 = vpop.permute.xlu0 %776
    %v779 = vadd.f32 %v762, %v777
    %v780 = vrcp.pop %v773
    %v781 = vmul.f32 %v779, %v780
    %v782 = vld [vmem:[#allocation25] sm:$0xff]
    %v783 = vld [vmem:[#allocation26] sm:$0x1]
    %v785 = vlaneseq
    %v786 = vshrl.u32 %v785, 7
    %v787 = vsub.s32 0, %v786
    %v788 = vrot.slane %v783, %v787
    %v791 = vsel %vm353, %v781, 0
    %793 = vmatprep.subr.mxu0 0.0
    %794 = vmatpush1.msra.mxu0 %v782
    %795 = vmatprep.subr.mxu0 0.0
    %796 = vmatpush1.msra.mxu0 0.0
    %797 = vmatprep.subr.mxu0 0.0
    %798 = vmatpush1.msra.mxu0 0.0
    %799 = vmatprep.subr.mxu0 0.0
    %800 = vmatpush1.msra.mxu0 0.0
    %801 = vmatprep.subr.mxu0 0.0
    %802 = vmatpush1.msra.mxu0 0.0
    %803 = vmatprep.subr.mxu0 0.0
    %804 = vmatpush1.msra.mxu0 0.0
    %805 = vmatprep.subr.mxu0 0.0
    %806 = vmatpush1.msra.mxu0 0.0
    %807 = vmatprep.subr.mxu0 0.0
    %808 = vmatpush1.msra.mxu0 0.0
    %809 = vmatprep.subr.mxu0 0.0
    %810 = vmatpush1.msra.mxu0 0.0
    %811 = vmatprep.subr.mxu0 0.0
    %812 = vmatpush1.msra.mxu0 0.0
    %813 = vmatprep.subr.mxu0 0.0
    %814 = vmatpush1.msra.mxu0 0.0
    %815 = vmatprep.subr.mxu0 0.0
    %816 = vmatpush1.msra.mxu0 0.0
    %817 = vmatprep.subr.mxu0 0.0
    %818 = vmatpush1.msra.mxu0 0.0
    %819 = vmatprep.subr.mxu0 0.0
    %820 = vmatpush1.msra.mxu0 0.0
    %821 = vmatprep.subr.mxu0 0.0
    %822 = vmatpush1.msra.mxu0 0.0
    %823 = vmatprep.subr.mxu0 0.0
    %824 = vmatpush1.msra.mxu0 0.0
    %825 = vmatprep.subr.mxu0 0.0
    %826 = vmatpush1.msra.mxu0 0.0
    %827 = vmatprep.subr.mxu0 0.0
    %828 = vmatpush1.msra.mxu0 0.0
    %829 = vmatprep.subr.mxu0 0.0
    %830 = vmatpush1.msra.mxu0 0.0
    %831 = vmatprep.subr.mxu0 0.0
    %832 = vmatpush1.msra.mxu0 0.0
    %833 = vmatprep.subr.mxu0 0.0
    %834 = vmatpush1.msra.mxu0 0.0
    %835 = vmatprep.subr.mxu0 0.0
    %836 = vmatpush1.msra.mxu0 0.0
    %837 = vmatprep.subr.mxu0 0.0
    %838 = vmatpush1.msra.mxu0 0.0
    %839 = vmatprep.subr.mxu0 0.0
    %840 = vmatpush1.msra.mxu0 0.0
    %841 = vmatprep.subr.mxu0 0.0
    %842 = vmatpush1.msra.mxu0 0.0
    %843 = vmatprep.subr.mxu0 0.0
    %844 = vmatpush1.msra.mxu0 0.0
    %845 = vmatprep.subr.mxu0 0.0
    %846 = vmatpush1.msra.mxu0 0.0
    %847 = vmatprep.subr.mxu0 0.0
    %848 = vmatpush1.msra.mxu0 0.0
    %849 = vmatprep.subr.mxu0 0.0
    %850 = vmatpush1.msra.mxu0 0.0
    %851 = vmatprep.subr.mxu0 0.0
    %852 = vmatpush1.msra.mxu0 0.0
    %853 = vmatprep.subr.mxu0 0.0
    %854 = vmatpush1.msra.mxu0 0.0
    %855 = vmatprep.subr.mxu0 0.0
    %856 = vmatpush1.msra.mxu0 0.0
    %857 = vmatprep.mubr.f32.mxu0 0.0
    %858 = vmatmul.mubr.f32.gmra.mrb[0].mxu0 %v791
    %v859 = vpop.f32.mrb[0].mxu0
    %v860 = vadd.f32 %v788, %v859
    %v861 = vpop.f32.mrb[0].mxu0
    %862 = vdwg.mxu0
    %v863 = vadd.f32 %v860, %v249
    %864 = vst [vmem:[#allocation28] sm:$0xff] %v863
    // Predicated region
    $region130: #{point_transformer_classif.12} parent=1 // pred_check
      _
    $region131: #{point_transformer_classif.12} parent=1 // pred_check_branch
      %866 = sbr.rel (0) target = $region133
    $region132: #{point_transformer_classif.12} parent=1 // pred_region
      %s868 = ssub.s32 128, 128
      %869 = vsyncadd [#allocation4], %s868
      %s871 = sshll.u32 [#allocation28], 4
      %s872 = int_to_ptr.vmem [resolvable:$true] %s871
      %874 = dma.vmem_to_hbm [thread:$0]  %s872, 128, %s16, [#allocation4]
    $region133: #{point_transformer_classif.12} parent=1 // pred_fallthru
      _
    // Predicated region
    $region134: #{point_transformer_classif.12} parent=1 // pred_check
      _
    $region135: #{point_transformer_classif.12} parent=1 // pred_check_branch
      %876 = sbr.rel (0) target = $region137
    $region136: #{point_transformer_classif.12} parent=1 // pred_region
      %877 = dma.done [#allocation4], 128
    $region137: #{point_transformer_classif.12} parent=1 // pred_fallthru
      _
    %878 = vsyncpa [#allocation3], 1
    %879 = vsyncpa [#allocation6], 1
    %880 = vsyncpa [#allocation9], 1
    %881 = vsyncpa [#allocation12], 1
    %882 = vsyncpa [#allocation15], 1
    %883 = vsyncpa [#allocation18], 1
    %884 = vsyncpa [#allocation21], 1
    %885 = vsyncpa [#allocation24], 1
    %886 = vsyncpa [#allocation27], 1
    %887 = vsyncpa [#allocation4], 1

</llo_original>
